<compile_context>
chip_gen: v5e
topology: v5e:2x2
jax: 0.10.0
libtpu: 0.0.40
codegen_flags: <defaults>
</compile_context>

<pallas_src>
import functools

import jax
import jax.numpy as jnp
from jax import lax
from jax.experimental import pallas as pl
from jax.experimental.pallas import tpu as pltpu

LANE = 128
ROW_TILE = 256                        # row tile for projection / head kernels
HN_RESIDENT_BYTES = 8 * 1024 * 1024   # keep hn VMEM-resident when it fits
VMEM_LIMIT = 48 * 1024 * 1024         # safe on v7x (64 MiB), ample on v5e/v6e


def round_up(x, m):
    return (x + m - 1) // m * m


def pad_to(a, shape):
    pads = [(0, s - d) for s, d in zip(shape, a.shape)]
    return jnp.pad(a, pads)


def _choose_tile(n_p):
    # n_p is always a multiple of 256; pick the biggest tile that divides it.
    for t in (1024, 512, 256):
        if n_p % t == 0:
            return t
    return 256


# ---------------------------------------------------------------------------
# Kernel 1: per-layer feature projection  h @ [W_self | W_neigh] (+ bias)
# ---------------------------------------------------------------------------
def _project_kernel(h_ref, wcat_ref, b_ref, hsb_ref, hn_ref, *, f_out):
    proj = jnp.dot(h_ref[...], wcat_ref[...],
                   preferred_element_type=jnp.float32)            # (TM, 2*F_out)
    hsb_ref[...] = (proj[:, :f_out] + b_ref[...]).astype(hsb_ref.dtype)  # self + bias
    hn_ref[...] = proj[:, f_out:].astype(hn_ref.dtype)            # neighbor projection


def sage_project(h, w_cat, bias, *, tm=ROW_TILE):
    n_p, f_in = h.shape
    f_out = w_cat.shape[1] // 2
    tm = min(tm, n_p)
    return pl.pallas_call(
        functools.partial(_project_kernel, f_out=f_out),
        out_shape=(jax.ShapeDtypeStruct((n_p, f_out), jnp.bfloat16),   # hsb (bf16 per review)
                   jax.ShapeDtypeStruct((n_p, f_out), jnp.bfloat16)),  # hn
        grid_spec=pltpu.PrefetchScalarGridSpec(
            num_scalar_prefetch=0, grid=(n_p // tm,),
            in_specs=[pl.BlockSpec((tm, f_in), lambda i: (i, 0)),
                      pl.BlockSpec((f_in, 2 * f_out), lambda i: (0, 0)),
                      pl.BlockSpec((1, f_out), lambda i: (0, 0))],
            out_specs=[pl.BlockSpec((tm, f_out), lambda i: (i, 0)),
                       pl.BlockSpec((tm, f_out), lambda i: (i, 0))]),
        compiler_params=pltpu.CompilerParams(
            dimension_semantics=("parallel",),
            vmem_limit_bytes=VMEM_LIMIT),
    )(h, w_cat, bias)


# ---------------------------------------------------------------------------
# Kernel 2: tiled mean aggregation  out = ReLU(self+bias + inv_deg * (A_bin @ hn))
#   A_bin is int8 0/1 (halves the dominant HBM stream), inv_deg is exact f32.
# ---------------------------------------------------------------------------
def _aggregate_kernel(adj_ref, hn_ref, hsb_ref, invd_ref, o_ref, acc_ref,
                      *, tk, hn_resident):
    k = pl.program_id(1)

    @pl.when(k == 0)
    def _():
        acc_ref[...] = jnp.zeros_like(acc_ref)

    a = adj_ref[...].astype(jnp.bfloat16)           # int8 0/1 -> bf16 (VPU slack slot)
    if hn_resident:
        off = pl.multiple_of(k * tk, tk)            # hn fully resident: slice in VMEM
        hn = hn_ref[pl.ds(off, tk), :]
    else:
        hn = hn_ref[...]
    acc_ref[...] += jnp.dot(a, hn, preferred_element_type=jnp.float32)

    @pl.when(k == pl.num_programs(1) - 1)
    def _():
        # exact mean: inv_deg * (A_bin @ hn); ReLU fused (covers per-layer
        # activation AND the post-loop activation of the reference).
        h = hsb_ref[...].astype(jnp.float32) + invd_ref[...] * acc_ref[...]
        o_ref[...] = jnp.maximum(h, 0.0).astype(o_ref.dtype)


def sage_aggregate(adj, hn, hsb, inv_deg, *, tm=None, tk=None):
    n_p = adj.shape[0]
    f_out = hn.shape[1]
    if tm is None:
        tm = _choose_tile(n_p)
    if tk is None:
        tk = _choose_tile(n_p)
    hn_resident = (n_p * f_out * 2) <= HN_RESIDENT_BYTES
    if hn_resident:
        # full-height block, index never changes -> DMA'd once, stays in VMEM
        hn_spec = pl.BlockSpec((n_p, f_out), lambda i, k: (0, 0))
    else:
        hn_spec = pl.BlockSpec((tk, f_out), lambda i, k: (k, 0))
    return pl.pallas_call(
        functools.partial(_aggregate_kernel, tk=tk, hn_resident=hn_resident),
        out_shape=jax.ShapeDtypeStruct((n_p, f_out), jnp.bfloat16),
        grid_spec=pltpu.PrefetchScalarGridSpec(
            num_scalar_prefetch=0, grid=(n_p // tm, n_p // tk),
            in_specs=[pl.BlockSpec((tm, tk), lambda i, k: (i, k)),      # A (int8)
                      hn_spec,                                          # hn
                      pl.BlockSpec((tm, f_out), lambda i, k: (i, 0)),   # self+bias
                      pl.BlockSpec((tm, 1), lambda i, k: (i, 0))],      # inv_degree
            out_specs=pl.BlockSpec((tm, f_out), lambda i, k: (i, 0)),
            scratch_shapes=[pltpu.VMEM((tm, f_out), jnp.float32)]),
        compiler_params=pltpu.CompilerParams(
            dimension_semantics=("parallel", "arbitrary"),
            vmem_limit_bytes=VMEM_LIMIT),
    )(adj, hn, hsb, inv_deg)


# ---------------------------------------------------------------------------
# Kernel 3: fused head — implicit concat + prompt scores + argmax routing +
#           all per-center classifiers, using ONE combined weight pair
#           (2 matmuls total) + vreg-aligned select.
# ---------------------------------------------------------------------------
def _head_kernel(h_ref, hd_ref, wt_ref, wb_ref, o_ref, *, center_num, blk):
    h = h_ref[...]                                                # (TM, Fp) bf16
    hd = jnp.maximum(hd_ref[...], 0).astype(h.dtype)              # h_dst = activation(h_dst)

    # one wide matmul pair: [prompt | pp_0 | ... | pp_{C-1}] on the implicit concat
    full = (jnp.dot(h, wt_ref[...], preferred_element_type=jnp.float32)
            + jnp.dot(hd, wb_ref[...], preferred_element_type=jnp.float32))

    scores = full[:, :blk]                                        # first 128-lane block
    col = lax.broadcasted_iota(jnp.int32, scores.shape, 1)
    scores = jnp.where(col < center_num, scores, -jnp.inf)        # mask padded centers
    max_s = jnp.max(scores, axis=1, keepdims=True)
    idx = jnp.min(jnp.where(scores == max_s, col, scores.shape[1]),
                  axis=1, keepdims=True)                          # first-occurrence argmax

    out = jnp.zeros(o_ref.shape, jnp.float32)
    for c in range(center_num):                                   # select only, no matmul
        out = jnp.where(idx == c, full[:, (1 + c) * blk:(2 + c) * blk], out)
    o_ref[...] = out


def prompt_head(h, h_dst, w_top, w_bot, *, center_num, tm=ROW_TILE):
    n_p, f_out = h.shape
    tm = min(tm, n_p)
    return pl.pallas_call(
        functools.partial(_head_kernel, center_num=center_num, blk=LANE),
        out_shape=jax.ShapeDtypeStruct((n_p, LANE), jnp.float32),
        grid_spec=pltpu.PrefetchScalarGridSpec(
            num_scalar_prefetch=0, grid=(n_p // tm,),
            in_specs=[pl.BlockSpec((tm, f_out), lambda i: (i, 0)),
                      pl.BlockSpec((tm, h_dst.shape[1]), lambda i: (i, 0)),
                      pl.BlockSpec(w_top.shape, lambda i: (0, 0)),
                      pl.BlockSpec(w_bot.shape, lambda i: (0, 0))],
            out_specs=pl.BlockSpec((tm, LANE), lambda i: (i, 0))),
        compiler_params=pltpu.CompilerParams(
            dimension_semantics=("parallel",),
            vmem_limit_bytes=VMEM_LIMIT),
    )(h, h_dst, w_top, w_bot)


# ---------------------------------------------------------------------------
# Full forward (glue only; every FLOP-heavy step is a Pallas kernel)
# ---------------------------------------------------------------------------
def graphsage_forward(x_p, adj_p, inv_deg, layer_params, head_params, *,
                      center_num, n_real, n_classes):
    h = x_p                       # dropout == identity (eval mode)
    h_dst_prev = h
    for (w_cat, b) in layer_params:
        h_dst_prev = h            # input of the current (eventually last) layer
        hsb, hn = sage_project(h, w_cat, b)
        h = sage_aggregate(adj_p, hn, hsb, inv_deg)   # ReLU fused in-kernel
    out_p = prompt_head(h, h_dst_prev, *head_params, center_num=center_num)
    return out_p[:n_real, :n_classes]


# ---------------------------------------------------------------------------
# Parameter init (PyTorch-like raw shapes) + padding / bf16 / fusion prep
# ---------------------------------------------------------------------------
def init_params(key, in_feats, n_hidden, n_classes, n_layers, center_num):
    ks = jax.random.split(key, 3 * n_layers + 2)
    w_self, w_neigh, bias = [], [], []
    f_in = in_feats
    for l in range(n_layers):
        w_self.append(0.1 * jax.random.normal(ks[3 * l + 0], (f_in, n_hidden), jnp.float32))
        w_neigh.append(0.1 * jax.random.normal(ks[3 * l + 1], (f_in, n_hidden), jnp.float32))
        bias.append(0.1 * jax.random.normal(ks[3 * l + 2], (n_hidden,), jnp.float32))
        f_in = n_hidden
    # prompt: nn.Linear(2H, C, bias=False) -> stored as W^T (2H, C)
    prompt_w = 0.1 * jax.random.normal(ks[-2], (2 * n_hidden, center_num), jnp.float32)
    # pp[c]: nn.Linear(2H, n_classes, bias=False) -> stored as W^T, stacked (C, 2H, ncls)
    pp_w = 0.1 * jax.random.normal(ks[-1], (center_num, 2 * n_hidden, n_classes), jnp.float32)
    return dict(w_self=w_self, w_neigh=w_neigh, bias=bias,
                prompt_w=prompt_w, pp_w=pp_w)


def prepare_params(params, n_hidden, n_classes, center_num):
    fp = round_up(n_hidden, LANE)
    layer_params = []
    for w_s, w_n, b in zip(params["w_self"], params["w_neigh"], params["bias"]):
        fin_p = round_up(w_s.shape[0], LANE)
        w_cat = jnp.concatenate([pad_to(w_s, (fin_p, fp)),
                                 pad_to(w_n, (fin_p, fp))], axis=1).astype(jnp.bfloat16)
        b_p = pad_to(b.reshape(1, -1), (1, fp)).astype(jnp.float32)
        layer_params.append((w_cat, b_p))

    H = n_hidden
    # One combined weight pair for the whole head: block 0 = prompt scores,
    # block 1+c = per-center classifier c. Top half acts on h, bottom on h_dst.
    width = (1 + center_num) * LANE
    w_top = jnp.zeros((fp, width), jnp.float32)
    w_bot = jnp.zeros((fp, width), jnp.float32)
    w_top = w_top.at[:H, :center_num].set(params["prompt_w"][:H])
    w_bot = w_bot.at[:H, :center_num].set(params["prompt_w"][H:])
    for c in range(center_num):
        col0 = (1 + c) * LANE
        w_top = w_top.at[:H, col0:col0 + n_classes].set(params["pp_w"][c][:H])
        w_bot = w_bot.at[:H, col0:col0 + n_classes].set(params["pp_w"][c][H:])
    head_params = (w_top.astype(jnp.bfloat16), w_bot.astype(jnp.bfloat16))
    return layer_params, head_params


if __name__ == "__main__":
    N, in_feats, n_hidden = 300, 16, 32
    n_classes, n_layers, center_num = 4, 2, 4

    key = jax.random.PRNGKey(0)
    k_x, k_adj, k_par = jax.random.split(key, 3)

    x = jax.random.normal(k_x, (N, in_feats), jnp.float32)

    # random binary graph with self-loops; mean aggregation = inv_degree * (A_bin @ h)
    adj_bin = (jax.random.uniform(k_adj, (N, N)) < 0.1).astype(jnp.float32)
    adj_bin = jnp.maximum(adj_bin, jnp.eye(N, dtype=jnp.float32))
    deg = jnp.sum(adj_bin, axis=1, keepdims=True)

    params = init_params(k_par, in_feats, n_hidden, n_classes, n_layers, center_num)
    layer_params, head_params = prepare_params(params, n_hidden, n_classes, center_num)

    # pad graph/features to a SMALL fixed multiple (256), not lcm of big tiles;
    # padded rows/cols are exact zeros so real nodes are unaffected and padded
    # outputs are sliced off at the end.
    n_p = round_up(N, 256)
    fin_p = round_up(in_feats, LANE)
    adj_p = pad_to(adj_bin, (n_p, n_p)).astype(jnp.int8)           # binary int8: halves A bytes
    inv_deg = pad_to(1.0 / jnp.maximum(deg, 1.0), (n_p, 1)).astype(jnp.float32)
    x_p = pad_to(x, (n_p, fin_p)).astype(jnp.bfloat16)

    fwd = jax.jit(functools.partial(graphsage_forward, center_num=center_num,
                                    n_real=N, n_classes=n_classes))
    out = fwd(x_p, adj_p, inv_deg, layer_params, head_params)
    out = jax.block_until_ready(out)
    assert out.shape == (N, n_classes) and out.dtype == jnp.float32
    assert bool(jnp.all(jnp.isfinite(out)))
    print("KERNEL_OK")
</pallas_src>

<mosaic_0001>
module attributes {stable_mosaic.version = 11 : i64} {
  func.func @_project_kernel(%arg0: i32, %arg1: memref<256x128xbf16, #tpu.memory_space<vmem>>, %arg2: memref<128x256xbf16, #tpu.memory_space<vmem>>, %arg3: memref<1x128xf32, #tpu.memory_space<vmem>>, %arg4: memref<256x128xbf16, #tpu.memory_space<vmem>>, %arg5: memref<256x128xbf16, #tpu.memory_space<vmem>>) attributes {dimension_semantics = [#tpu.dimension_semantics<parallel>], iteration_bounds = array<i64: 2>, scalar_prefetch = 0 : i64, scratch_operands = 0 : i64, tpu.core_type = #tpu.core_type<tc>, window_params = [{transform_indices = @transform_0, window_bounds = array<i64: 256, 128>}, {pipeline_mode = #tpu.pipeline_mode<synchronous>, transform_indices = @transform_1, window_bounds = array<i64: 128, 256>}, {pipeline_mode = #tpu.pipeline_mode<synchronous>, transform_indices = @transform_2, window_bounds = array<i64: 1, 128>}, {transform_indices = @transform_3, window_bounds = array<i64: 256, 128>}, {transform_indices = @transform_4, window_bounds = array<i64: 256, 128>}]} {
    %c0 = arith.constant 0 : index
    %c0_0 = arith.constant 0 : index
    %0 = vector.load %arg1[%c0, %c0_0] : memref<256x128xbf16, #tpu.memory_space<vmem>>, vector<256x128xbf16>
    %c0_1 = arith.constant 0 : index
    %c0_2 = arith.constant 0 : index
    %1 = vector.load %arg2[%c0_1, %c0_2] : memref<128x256xbf16, #tpu.memory_space<vmem>>, vector<128x256xbf16>
    %cst = arith.constant dense<0.000000e+00> : vector<256x256xf32>
    %2 = tpu.matmul %0, %1, %cst {dimension_numbers = #tpu.dot_dimension_numbers<[1], [0], [0], [1], [0, 0, 1, 1], [], []>} : vector<256x128xbf16>, vector<128x256xbf16>, vector<256x256xf32> -> vector<256x256xf32>
    %3 = vector.extract_strided_slice %2 {offsets = [0, 0], sizes = [256, 128], strides = [1, 1]} : vector<256x256xf32> to vector<256x128xf32>
    %c0_3 = arith.constant 0 : index
    %c0_4 = arith.constant 0 : index
    %4 = vector.load %arg3[%c0_3, %c0_4] : memref<1x128xf32, #tpu.memory_space<vmem>>, vector<1x128xf32>
    %5 = vector.broadcast %4 : vector<1x128xf32> to vector<256x128xf32>
    %6 = arith.addf %3, %5 : vector<256x128xf32>
    %7 = arith.truncf %6 : vector<256x128xf32> to vector<256x128xbf16>
    %c0_5 = arith.constant 0 : index
    %c0_6 = arith.constant 0 : index
    %8 = vector.load %arg4[%c0_5, %c0_6] : memref<256x128xbf16, #tpu.memory_space<vmem>>, vector<256x128xbf16>
    tpu.vector_store %arg4[%c0_5, %c0_6], %7 {strides = array<i32>} : memref<256x128xbf16, #tpu.memory_space<vmem>>, vector<256x128xbf16>,
    %9 = vector.extract_strided_slice %2 {offsets = [0, 128], sizes = [256, 128], strides = [1, 1]} : vector<256x256xf32> to vector<256x128xf32>
    %10 = arith.truncf %9 : vector<256x128xf32> to vector<256x128xbf16>
    %c0_7 = arith.constant 0 : index
    %c0_8 = arith.constant 0 : index
    %11 = vector.load %arg5[%c0_7, %c0_8] : memref<256x128xbf16, #tpu.memory_space<vmem>>, vector<256x128xbf16>
    tpu.vector_store %arg5[%c0_7, %c0_8], %10 {strides = array<i32>} : memref<256x128xbf16, #tpu.memory_space<vmem>>, vector<256x128xbf16>,
    return
  }
  func.func @transform_0(%arg0: i32) -> (i32, i32) {
    %c0_i32 = arith.constant 0 : i32
    %c0_i32_0 = arith.constant 0 : i32
    return %arg0, %c0_i32 : i32, i32
  }
  func.func @transform_1(%arg0: i32) -> (i32, i32) {
    %c0_i32 = arith.constant 0 : i32
    %c0_i32_0 = arith.constant 0 : i32
    %c0_i32_1 = arith.constant 0 : i32
    return %c0_i32, %c0_i32_0 : i32, i32
  }
  func.func @transform_2(%arg0: i32) -> (i32, i32) {
    %c0_i32 = arith.constant 0 : i32
    %c0_i32_0 = arith.constant 0 : i32
    %c0_i32_1 = arith.constant 0 : i32
    return %c0_i32, %c0_i32_0 : i32, i32
  }
  func.func @transform_3(%arg0: i32) -> (i32, i32) {
    %c0_i32 = arith.constant 0 : i32
    %c0_i32_0 = arith.constant 0 : i32
    return %arg0, %c0_i32 : i32, i32
  }
  func.func @transform_4(%arg0: i32) -> (i32, i32) {
    %c0_i32 = arith.constant 0 : i32
    %c0_i32_0 = arith.constant 0 : i32
    return %arg0, %c0_i32 : i32, i32
  }
}

module attributes {stable_mosaic.version = 11 : i64} {
  func.func @_aggregate_kernel(%arg0: i32, %arg1: i32, %arg2: memref<512x512xi8, #tpu.memory_space<vmem>>, %arg3: memref<512x128xbf16, #tpu.memory_space<vmem>>, %arg4: memref<512x128xbf16, #tpu.memory_space<vmem>>, %arg5: memref<512x1xf32, #tpu.memory_space<vmem>>, %arg6: memref<512x128xbf16, #tpu.memory_space<vmem>>, %arg7: memref<512x128xf32, #tpu.memory_space<vmem>>) attributes {dimension_semantics = [#tpu.dimension_semantics<parallel>, #tpu.dimension_semantics<arbitrary>], iteration_bounds = array<i64: 1, 1>, scalar_prefetch = 0 : i64, scratch_operands = 1 : i64, tpu.core_type = #tpu.core_type<tc>, window_params = [{transform_indices = @transform_0, window_bounds = array<i64: 512, 512>}, {pipeline_mode = #tpu.pipeline_mode<synchronous>, transform_indices = @transform_1, window_bounds = array<i64: 512, 128>}, {transform_indices = @transform_2, window_bounds = array<i64: 512, 128>}, {transform_indices = @transform_3, window_bounds = array<i64: 512, 1>}, {transform_indices = @transform_4, window_bounds = array<i64: 512, 128>}]} {
    %c0_i32 = arith.constant 0 : i32
    %0 = arith.cmpi eq, %arg1, %c0_i32 : i32
    %1 = arith.extui %0 : i1 to i32
    %c0_i32_0 = arith.constant 0 : i32
    %2 = arith.cmpi ne, %1, %c0_i32_0 : i32
    scf.if %2 {
      %cst_9 = arith.constant 0.000000e+00 : f32
      %16 = vector.broadcast %cst_9 : f32 to vector<512x128xf32>
      %c0_10 = arith.constant 0 : index
      %c0_11 = arith.constant 0 : index
      %17 = vector.load %arg7[%c0_10, %c0_11] : memref<512x128xf32, #tpu.memory_space<vmem>>, vector<512x128xf32>
      tpu.vector_store %arg7[%c0_10, %c0_11], %16 {strides = array<i32>} : memref<512x128xf32, #tpu.memory_space<vmem>>, vector<512x128xf32>,
    } else {
    }
    %c0 = arith.constant 0 : index
    %c0_1 = arith.constant 0 : index
    %3 = vector.load %arg2[%c0, %c0_1] : memref<512x512xi8, #tpu.memory_space<vmem>>, vector<512x512xi8>
    %4 = arith.sitofp %3 : vector<512x512xi8> to vector<512x512xbf16>
    %c512_i32 = arith.constant 512 : i32
    %5 = arith.muli %arg1, %c512_i32 : i32
    %6 = tpu.assume_multiple %5, 512 : i32
    %7 = arith.index_cast %6 : i32 to index
    %c0_2 = arith.constant 0 : index
    %8 = vector.load %arg3[%7, %c0_2] : memref<512x128xbf16, #tpu.memory_space<vmem>>, vector<512x128xbf16>
    %c0_3 = arith.constant 0 : index
    %c0_4 = arith.constant 0 : index
    %9 = vector.load %arg7[%c0_3, %c0_4] : memref<512x128xf32, #tpu.memory_space<vmem>>, vector<512x128xf32>
    %cst = arith.constant dense<0.000000e+00> : vector<512x128xf32>
    %10 = tpu.matmul %4, %8, %cst {dimension_numbers = #tpu.dot_dimension_numbers<[1], [0], [0], [1], [0, 0, 1, 1], [], []>} : vector<512x512xbf16>, vector<512x128xbf16>, vector<512x128xf32> -> vector<512x128xf32>
    %11 = arith.addf %9, %10 : vector<512x128xf32>
    %c0_5 = arith.constant 0 : index
    %c0_6 = arith.constant 0 : index
    %12 = vector.load %arg7[%c0_5, %c0_6] : memref<512x128xf32, #tpu.memory_space<vmem>>, vector<512x128xf32>
    tpu.vector_store %arg7[%c0_5, %c0_6], %11 {strides = array<i32>} : memref<512x128xf32, #tpu.memory_space<vmem>>, vector<512x128xf32>,
    %c0_i32_7 = arith.constant 0 : i32
    %13 = arith.cmpi eq, %arg1, %c0_i32_7 : i32
    %14 = arith.extui %13 : i1 to i32
    %c0_i32_8 = arith.constant 0 : i32
    %15 = arith.cmpi ne, %14, %c0_i32_8 : i32
    scf.if %15 {
      %c0_9 = arith.constant 0 : index
      %c0_10 = arith.constant 0 : index
      %16 = vector.load %arg4[%c0_9, %c0_10] : memref<512x128xbf16, #tpu.memory_space<vmem>>, vector<512x128xbf16>
      %17 = arith.extf %16 : vector<512x128xbf16> to vector<512x128xf32>
      %c0_11 = arith.constant 0 : index
      %c0_12 = arith.constant 0 : index
      %18 = vector.load %arg5[%c0_11, %c0_12] : memref<512x1xf32, #tpu.memory_space<vmem>>, vector<512x1xf32>
      %c0_13 = arith.constant 0 : index
      %c0_14 = arith.constant 0 : index
      %19 = vector.load %arg7[%c0_13, %c0_14] : memref<512x128xf32, #tpu.memory_space<vmem>>, vector<512x128xf32>
      %20 = vector.broadcast %18 : vector<512x1xf32> to vector<512x128xf32>
      %21 = arith.mulf %20, %19 : vector<512x128xf32>
      %22 = arith.addf %17, %21 : vector<512x128xf32>
      %cst_15 = arith.constant 0.000000e+00 : f32
      %23 = vector.broadcast %cst_15 : f32 to vector<512x128xf32>
      %24 = arith.maximumf %22, %23 : vector<512x128xf32>
      %25 = arith.truncf %24 : vector<512x128xf32> to vector<512x128xbf16>
      %c0_16 = arith.constant 0 : index
      %c0_17 = arith.constant 0 : index
      %26 = vector.load %arg6[%c0_16, %c0_17] : memref<512x128xbf16, #tpu.memory_space<vmem>>, vector<512x128xbf16>
      tpu.vector_store %arg6[%c0_16, %c0_17], %25 {strides = array<i32>} : memref<512x128xbf16, #tpu.memory_space<vmem>>, vector<512x128xbf16>,
    } else {
    }
    return
  }
  func.func @transform_0(%arg0: i32, %arg1: i32) -> (i32, i32) {
    %c0_i32 = arith.constant 0 : i32
    return %arg0, %arg1 : i32, i32
  }
  func.func @transform_1(%arg0: i32, %arg1: i32) -> (i32, i32) {
    %c0_i32 = arith.constant 0 : i32
    %c0_i32_0 = arith.constant 0 : i32
    %c0_i32_1 = arith.constant 0 : i32
    return %c0_i32, %c0_i32_0 : i32, i32
  }
  func.func @transform_2(%arg0: i32, %arg1: i32) -> (i32, i32) {
    %c0_i32 = arith.constant 0 : i32
    %c0_i32_0 = arith.constant 0 : i32
    return %arg0, %c0_i32 : i32, i32
  }
  func.func @transform_3(%arg0: i32, %arg1: i32) -> (i32, i32) {
    %c0_i32 = arith.constant 0 : i32
    %c0_i32_0 = arith.constant 0 : i32
    return %arg0, %c0_i32 : i32, i32
  }
  func.func @transform_4(%arg0: i32, %arg1: i32) -> (i32, i32) {
    %c0_i32 = arith.constant 0 : i32
    %c0_i32_0 = arith.constant 0 : i32
    return %arg0, %c0_i32 : i32, i32
  }
}

module attributes {stable_mosaic.version = 11 : i64} {
  func.func @_project_kernel(%arg0: i32, %arg1: memref<256x128xbf16, #tpu.memory_space<vmem>>, %arg2: memref<128x256xbf16, #tpu.memory_space<vmem>>, %arg3: memref<1x128xf32, #tpu.memory_space<vmem>>, %arg4: memref<256x128xbf16, #tpu.memory_space<vmem>>, %arg5: memref<256x128xbf16, #tpu.memory_space<vmem>>) attributes {dimension_semantics = [#tpu.dimension_semantics<parallel>], iteration_bounds = array<i64: 2>, scalar_prefetch = 0 : i64, scratch_operands = 0 : i64, tpu.core_type = #tpu.core_type<tc>, window_params = [{transform_indices = @transform_0, window_bounds = array<i64: 256, 128>}, {pipeline_mode = #tpu.pipeline_mode<synchronous>, transform_indices = @transform_1, window_bounds = array<i64: 128, 256>}, {pipeline_mode = #tpu.pipeline_mode<synchronous>, transform_indices = @transform_2, window_bounds = array<i64: 1, 128>}, {transform_indices = @transform_3, window_bounds = array<i64: 256, 128>}, {transform_indices = @transform_4, window_bounds = array<i64: 256, 128>}]} {
    %c0 = arith.constant 0 : index
    %c0_0 = arith.constant 0 : index
    %0 = vector.load %arg1[%c0, %c0_0] : memref<256x128xbf16, #tpu.memory_space<vmem>>, vector<256x128xbf16>
    %c0_1 = arith.constant 0 : index
    %c0_2 = arith.constant 0 : index
    %1 = vector.load %arg2[%c0_1, %c0_2] : memref<128x256xbf16, #tpu.memory_space<vmem>>, vector<128x256xbf16>
    %cst = arith.constant dense<0.000000e+00> : vector<256x256xf32>
    %2 = tpu.matmul %0, %1, %cst {dimension_numbers = #tpu.dot_dimension_numbers<[1], [0], [0], [1], [0, 0, 1, 1], [], []>} : vector<256x128xbf16>, vector<128x256xbf16>, vector<256x256xf32> -> vector<256x256xf32>
    %3 = vector.extract_strided_slice %2 {offsets = [0, 0], sizes = [256, 128], strides = [1, 1]} : vector<256x256xf32> to vector<256x128xf32>
    %c0_3 = arith.constant 0 : index
    %c0_4 = arith.constant 0 : index
    %4 = vector.load %arg3[%c0_3, %c0_4] : memref<1x128xf32, #tpu.memory_space<vmem>>, vector<1x128xf32>
    %5 = vector.broadcast %4 : vector<1x128xf32> to vector<256x128xf32>
    %6 = arith.addf %3, %5 : vector<256x128xf32>
    %7 = arith.truncf %6 : vector<256x128xf32> to vector<256x128xbf16>
    %c0_5 = arith.constant 0 : index
    %c0_6 = arith.constant 0 : index
    %8 = vector.load %arg4[%c0_5, %c0_6] : memref<256x128xbf16, #tpu.memory_space<vmem>>, vector<256x128xbf16>
    tpu.vector_store %arg4[%c0_5, %c0_6], %7 {strides = array<i32>} : memref<256x128xbf16, #tpu.memory_space<vmem>>, vector<256x128xbf16>,
    %9 = vector.extract_strided_slice %2 {offsets = [0, 128], sizes = [256, 128], strides = [1, 1]} : vector<256x256xf32> to vector<256x128xf32>
    %10 = arith.truncf %9 : vector<256x128xf32> to vector<256x128xbf16>
    %c0_7 = arith.constant 0 : index
    %c0_8 = arith.constant 0 : index
    %11 = vector.load %arg5[%c0_7, %c0_8] : memref<256x128xbf16, #tpu.memory_space<vmem>>, vector<256x128xbf16>
    tpu.vector_store %arg5[%c0_7, %c0_8], %10 {strides = array<i32>} : memref<256x128xbf16, #tpu.memory_space<vmem>>, vector<256x128xbf16>,
    return
  }
  func.func @transform_0(%arg0: i32) -> (i32, i32) {
    %c0_i32 = arith.constant 0 : i32
    %c0_i32_0 = arith.constant 0 : i32
    return %arg0, %c0_i32 : i32, i32
  }
  func.func @transform_1(%arg0: i32) -> (i32, i32) {
    %c0_i32 = arith.constant 0 : i32
    %c0_i32_0 = arith.constant 0 : i32
    %c0_i32_1 = arith.constant 0 : i32
    return %c0_i32, %c0_i32_0 : i32, i32
  }
  func.func @transform_2(%arg0: i32) -> (i32, i32) {
    %c0_i32 = arith.constant 0 : i32
    %c0_i32_0 = arith.constant 0 : i32
    %c0_i32_1 = arith.constant 0 : i32
    return %c0_i32, %c0_i32_0 : i32, i32
  }
  func.func @transform_3(%arg0: i32) -> (i32, i32) {
    %c0_i32 = arith.constant 0 : i32
    %c0_i32_0 = arith.constant 0 : i32
    return %arg0, %c0_i32 : i32, i32
  }
  func.func @transform_4(%arg0: i32) -> (i32, i32) {
    %c0_i32 = arith.constant 0 : i32
    %c0_i32_0 = arith.constant 0 : i32
    return %arg0, %c0_i32 : i32, i32
  }
}

module attributes {stable_mosaic.version = 11 : i64} {
  func.func @_head_kernel(%arg0: i32, %arg1: memref<256x128xbf16, #tpu.memory_space<vmem>>, %arg2: memref<256x128xbf16, #tpu.memory_space<vmem>>, %arg3: memref<128x640xbf16, #tpu.memory_space<vmem>>, %arg4: memref<128x640xbf16, #tpu.memory_space<vmem>>, %arg5: memref<256x128xf32, #tpu.memory_space<vmem>>) attributes {dimension_semantics = [#tpu.dimension_semantics<parallel>], iteration_bounds = array<i64: 2>, scalar_prefetch = 0 : i64, scratch_operands = 0 : i64, tpu.core_type = #tpu.core_type<tc>, window_params = [{transform_indices = @transform_0, window_bounds = array<i64: 256, 128>}, {transform_indices = @transform_1, window_bounds = array<i64: 256, 128>}, {pipeline_mode = #tpu.pipeline_mode<synchronous>, transform_indices = @transform_2, window_bounds = array<i64: 128, 640>}, {pipeline_mode = #tpu.pipeline_mode<synchronous>, transform_indices = @transform_3, window_bounds = array<i64: 128, 640>}, {transform_indices = @transform_4, window_bounds = array<i64: 256, 128>}]} {
    %c0 = arith.constant 0 : index
    %c0_0 = arith.constant 0 : index
    %0 = vector.load %arg1[%c0, %c0_0] : memref<256x128xbf16, #tpu.memory_space<vmem>>, vector<256x128xbf16>
    %c0_1 = arith.constant 0 : index
    %c0_2 = arith.constant 0 : index
    %1 = vector.load %arg2[%c0_1, %c0_2] : memref<256x128xbf16, #tpu.memory_space<vmem>>, vector<256x128xbf16>
    %cst = arith.constant 0.000000e+00 : bf16
    %2 = vector.broadcast %cst : bf16 to vector<256x128xbf16>
    %3 = arith.maximumf %1, %2 : vector<256x128xbf16>
    %c0_3 = arith.constant 0 : index
    %c0_4 = arith.constant 0 : index
    %4 = vector.load %arg3[%c0_3, %c0_4] : memref<128x640xbf16, #tpu.memory_space<vmem>>, vector<128x640xbf16>
    %cst_5 = arith.constant dense<0.000000e+00> : vector<256x640xf32>
    %5 = tpu.matmul %0, %4, %cst_5 {dimension_numbers = #tpu.dot_dimension_numbers<[1], [0], [0], [1], [0, 0, 1, 1], [], []>} : vector<256x128xbf16>, vector<128x640xbf16>, vector<256x640xf32> -> vector<256x640xf32>
    %c0_6 = arith.constant 0 : index
    %c0_7 = arith.constant 0 : index
    %6 = vector.load %arg4[%c0_6, %c0_7] : memref<128x640xbf16, #tpu.memory_space<vmem>>, vector<128x640xbf16>
    %cst_8 = arith.constant dense<0.000000e+00> : vector<256x640xf32>
    %7 = tpu.matmul %3, %6, %cst_8 {dimension_numbers = #tpu.dot_dimension_numbers<[1], [0], [0], [1], [0, 0, 1, 1], [], []>} : vector<256x128xbf16>, vector<128x640xbf16>, vector<256x640xf32> -> vector<256x640xf32>
    %8 = arith.addf %5, %7 : vector<256x640xf32>
    %9 = vector.extract_strided_slice %8 {offsets = [0, 0], sizes = [256, 128], strides = [1, 1]} : vector<256x640xf32> to vector<256x128xf32>
    %10 = tpu.iota {dimensions = array<i32: 1>} : vector<256x128xi32>
    %c4_i32 = arith.constant 4 : i32
    %11 = vector.broadcast %c4_i32 : i32 to vector<256x128xi32>
    %12 = arith.cmpi slt, %10, %11 : vector<256x128xi32>
    %cst_9 = arith.constant 0xFF800000 : f32
    %13 = vector.broadcast %cst_9 : f32 to vector<256x128xf32>
    %14 = arith.select %12, %9, %13 : vector<256x128xi1>, vector<256x128xf32>
    %cst_10 = arith.constant dense<0xFF800000> : vector<256xf32>
    %15 = vector.multi_reduction <maximumf>, %14, %cst_10 [1] : vector<256x128xf32> to vector<256xf32>
    %16 = vector.shape_cast %15 : vector<256xf32> to vector<256x1xf32>
    %17 = vector.broadcast %16 : vector<256x1xf32> to vector<256x128xf32>
    %18 = arith.cmpf oeq, %14, %17 : vector<256x128xf32>
    %c128_i32 = arith.constant 128 : i32
    %19 = vector.broadcast %c128_i32 : i32 to vector<256x128xi32>
    %20 = arith.select %18, %10, %19 : vector<256x128xi1>, vector<256x128xi32>
    %cst_11 = arith.constant dense<2147483647> : vector<256xi32>
    %21 = vector.multi_reduction <minsi>, %20, %cst_11 [1] : vector<256x128xi32> to vector<256xi32>
    %22 = vector.shape_cast %21 : vector<256xi32> to vector<256x1xi32>
    %cst_12 = arith.constant 0.000000e+00 : f32
    %23 = vector.broadcast %cst_12 : f32 to vector<256x128xf32>
    %c0_i32 = arith.constant 0 : i32
    %24 = vector.broadcast %c0_i32 : i32 to vector<256x1xi32>
    %25 = arith.cmpi eq, %22, %24 : vector<256x1xi32>
    %26 = vector.extract_strided_slice %8 {offsets = [0, 128], sizes = [256, 128], strides = [1, 1]} : vector<256x640xf32> to vector<256x128xf32>
    %27 = vector.shape_cast %25 : vector<256x1xi1> to vector<256x1xi1>
    %28 = vector.broadcast %27 : vector<256x1xi1> to vector<256x128xi1>
    %29 = arith.select %28, %26, %23 : vector<256x128xi1>, vector<256x128xf32>
    %c1_i32 = arith.constant 1 : i32
    %30 = vector.broadcast %c1_i32 : i32 to vector<256x1xi32>
    %31 = arith.cmpi eq, %22, %30 : vector<256x1xi32>
    %32 = vector.extract_strided_slice %8 {offsets = [0, 256], sizes = [256, 128], strides = [1, 1]} : vector<256x640xf32> to vector<256x128xf32>
    %33 = vector.shape_cast %31 : vector<256x1xi1> to vector<256x1xi1>
    %34 = vector.broadcast %33 : vector<256x1xi1> to vector<256x128xi1>
    %35 = arith.select %34, %32, %29 : vector<256x128xi1>, vector<256x128xf32>
    %c2_i32 = arith.constant 2 : i32
    %36 = vector.broadcast %c2_i32 : i32 to vector<256x1xi32>
    %37 = arith.cmpi eq, %22, %36 : vector<256x1xi32>
    %38 = vector.extract_strided_slice %8 {offsets = [0, 384], sizes = [256, 128], strides = [1, 1]} : vector<256x640xf32> to vector<256x128xf32>
    %39 = vector.shape_cast %37 : vector<256x1xi1> to vector<256x1xi1>
    %40 = vector.broadcast %39 : vector<256x1xi1> to vector<256x128xi1>
    %41 = arith.select %40, %38, %35 : vector<256x128xi1>, vector<256x128xf32>
    %c3_i32 = arith.constant 3 : i32
    %42 = vector.broadcast %c3_i32 : i32 to vector<256x1xi32>
    %43 = arith.cmpi eq, %22, %42 : vector<256x1xi32>
    %44 = vector.extract_strided_slice %8 {offsets = [0, 512], sizes = [256, 128], strides = [1, 1]} : vector<256x640xf32> to vector<256x128xf32>
    %45 = vector.shape_cast %43 : vector<256x1xi1> to vector<256x1xi1>
    %46 = vector.broadcast %45 : vector<256x1xi1> to vector<256x128xi1>
    %47 = arith.select %46, %44, %41 : vector<256x128xi1>, vector<256x128xf32>
    %c0_13 = arith.constant 0 : index
    %c0_14 = arith.constant 0 : index
    %48 = vector.load %arg5[%c0_13, %c0_14] : memref<256x128xf32, #tpu.memory_space<vmem>>, vector<256x128xf32>
    tpu.vector_store %arg5[%c0_13, %c0_14], %47 {strides = array<i32>} : memref<256x128xf32, #tpu.memory_space<vmem>>, vector<256x128xf32>,
    return
  }
  func.func @transform_0(%arg0: i32) -> (i32, i32) {
    %c0_i32 = arith.constant 0 : i32
    %c0_i32_0 = arith.constant 0 : i32
    return %arg0, %c0_i32 : i32, i32
  }
  func.func @transform_1(%arg0: i32) -> (i32, i32) {
    %c0_i32 = arith.constant 0 : i32
    %c0_i32_0 = arith.constant 0 : i32
    return %arg0, %c0_i32 : i32, i32
  }
  func.func @transform_2(%arg0: i32) -> (i32, i32) {
    %c0_i32 = arith.constant 0 : i32
    %c0_i32_0 = arith.constant 0 : i32
    %c0_i32_1 = arith.constant 0 : i32
    return %c0_i32, %c0_i32_0 : i32, i32
  }
  func.func @transform_3(%arg0: i32) -> (i32, i32) {
    %c0_i32 = arith.constant 0 : i32
    %c0_i32_0 = arith.constant 0 : i32
    %c0_i32_1 = arith.constant 0 : i32
    return %c0_i32, %c0_i32_0 : i32, i32
  }
  func.func @transform_4(%arg0: i32) -> (i32, i32) {
    %c0_i32 = arith.constant 0 : i32
    %c0_i32_0 = arith.constant 0 : i32
    return %arg0, %c0_i32 : i32, i32
  }
}

</mosaic_0001>

<llo_original>
// kernel: graphsage_forward.5
$region0: #{graphsage_forward.5}
  #allocation0 [shape = 'u32[]', space=smem, size = 0x4, offset = 0x4, fixed_abs, tag = 'smem constant byte address 0x4 - core index']
  #allocation1 [shape = 'u32[72,128]{1,0:T(1,128)}', space=vmem, size = 0x9000, scoped, tag = 'internal scratch']
  %s0 = inlined_call_operand.hbm [shape: bf16[512,128], index: 0, kind: input, shape index: {}]
  %s1 = inlined_call_operand.hbm [shape: bf16[128,256], index: 1, kind: input, shape index: {}]
  %s2 = inlined_call_operand.vmem [shape: f32[1,128], index: 2, kind: input, shape index: {}]
  %s3 = inlined_call_operand.vmem [shape: bf16[512,128], index: 3, kind: output, shape index: {0}]
  %s4 = inlined_call_operand.vmem [shape: bf16[512,128], index: 4, kind: output, shape index: {1}]
  %5 = xla_tuple %s3, %s4
  %s6 = sld [smem:[#allocation0]]
  $region61: #{graphsage_forward.5} parent=0
    _
  %s8 = ssub.s32 1, %s6
  %s9 = scalar_select 0, %s8, %s6
  $region1: #{graphsage_forward.5} parent=0
    #allocation2 [shape = 'u8[131072]{0}', space=vmem, size = 0x20000, scoped, tag = 'input window, operand 0']
    #allocation3 [shape = 's32[2]{0}', space=sflag, size = 0x8, scoped, tag = 'scoped memory for graphsage_forward.5']
    #allocation4 [shape = 'u8[65536]{0}', space=vmem, size = 0x10000, scoped, tag = 'input window, operand 1, single buffered']
    #allocation5 [shape = 's32[1]{0}', space=sflag, size = 0x4, scoped, tag = 'scoped memory for graphsage_forward.5']
    %10 = vsyncpa [#allocation3], 0
    %s11 = scalar_lea.sflag [#allocation3], 1
    %12 = vsyncpa %s11, 0
    %13 = vsyncpa [#allocation5], 0
    loop: start=0, step=1, limit=4
    $region2: #{graphsage_forward.5} parent=1 // loop_pre_header
      _
    $region3: #{graphsage_forward.5} parent=1 // loop_header
      %s15 = sphi 0, %s19
      %p16 = scmp.ge.s32.totalorder %s15, 4
      %s25 = sphi 0, %s27
      %s28 = sphi 0, %s25
      %s29 = sphi 0, %s28
      %s45 = sphi 0, %s29
      %s49 = sphi 0, %s49
      %s51 = sphi 0, %s49
      %s52 = sphi 0, %s51
      %s66 = sphi 0, %s52
      %s70 = sphi 0, %s70
      %s72 = sphi 0, %s70
      %s73 = sphi 0, %s72
      %s87 = sphi 0, %s73
      %s93 = sphi 0, %s95
      %s96 = sphi 0, %s93
      %s97 = sphi 0, %s96
      %s113 = sphi 0, %s97
      %s119 = sphi 0, %s121
      %s122 = sphi 0, %s119
      %s123 = sphi 0, %s122
      %s139 = sphi 0, %s123
    $region4: #{graphsage_forward.5} parent=1 // loop_header_branch
      %18 = sbr.rel (%p16) target = $region8
    $region5: #{graphsage_forward.5} parent=1 // loop_body
      %s20 = ssub.s32 %s15, 1
      %s21 = ssub.s32 %s15, 2
      %s22 = sadd.s32 %s15, 1
      %s23 = ssub.s32 %s15, %s22
      %p24 = scmp.eq.s32.totalorder %s23, 0
      %s26 = sadd.s32 %s25, 1
      %s27 = scalar_select %p24, %s25, %s26
      %p30 = pneg %p24
      %p31 = scmp.eq.s32.totalorder %s15, 1
      %p32 = por %p30, %p31
      %p33 = scmp.ne.s32.totalorder %s25, %s28
      %p34 = scmp.eq.s32.totalorder %s15, 0
      %p35 = por %p33, %p34
      %p36 = scmp.ne.s32.totalorder %s25, %s28
      %p37 = scmp.eq.s32.totalorder %s20, 1
      %p38 = por %p36, %p37
      %p39 = scmp.ne.s32.totalorder %s28, %s29
      %p40 = scmp.eq.s32.totalorder %s20, 0
      %p41 = por %p39, %p40
      %p42 = scmp.ne.s32.totalorder %s28, %s29
      %p43 = scmp.eq.s32.totalorder %s21, 1
      %p44 = por %p42, %p43
      %p46 = scmp.ne.s32.totalorder %s29, %s45
      %p47 = scmp.eq.s32.totalorder %s21, 0
      %p48 = por %p46, %p47
      %s50 = sadd.s32 %s49, 1
      %p53 = scmp.eq.s32.totalorder %s15, 1
      %p54 = scmp.ne.s32.totalorder %s49, %s51
      %p55 = scmp.eq.s32.totalorder %s15, 0
      %p56 = por %p54, %p55
      %p57 = scmp.ne.s32.totalorder %s49, %s51
      %p58 = scmp.eq.s32.totalorder %s20, 1
      %p59 = por %p57, %p58
      %p60 = scmp.ne.s32.totalorder %s51, %s52
      %p61 = scmp.eq.s32.totalorder %s20, 0
      %p62 = por %p60, %p61
      %p63 = scmp.ne.s32.totalorder %s51, %s52
      %p64 = scmp.eq.s32.totalorder %s21, 1
      %p65 = por %p63, %p64
      %p67 = scmp.ne.s32.totalorder %s52, %s66
      %p68 = scmp.eq.s32.totalorder %s21, 0
      %p69 = por %p67, %p68
      %s71 = sadd.s32 %s70, 1
      %p74 = scmp.eq.s32.totalorder %s15, 1
      %p75 = scmp.ne.s32.totalorder %s70, %s72
      %p76 = scmp.eq.s32.totalorder %s15, 0
      %p77 = por %p75, %p76
      %p78 = scmp.ne.s32.totalorder %s70, %s72
      %p79 = scmp.eq.s32.totalorder %s20, 1
      %p80 = por %p78, %p79
      %p81 = scmp.ne.s32.totalorder %s72, %s73
      %p82 = scmp.eq.s32.totalorder %s20, 0
      %p83 = por %p81, %p82
      %p84 = scmp.ne.s32.totalorder %s72, %s73
      %p85 = scmp.eq.s32.totalorder %s21, 1
      %p86 = por %p84, %p85
      %p88 = scmp.ne.s32.totalorder %s73, %s87
      %p89 = scmp.eq.s32.totalorder %s21, 0
      %p90 = por %p88, %p89
      %s91 = ssub.s32 %s15, %s22
      %p92 = scmp.eq.s32.totalorder %s91, 0
      %s94 = sadd.s32 %s93, 1
      %s95 = scalar_select %p92, %s93, %s94
      %p98 = pneg %p92
      %p99 = scmp.eq.s32.totalorder %s15, 1
      %p100 = por %p98, %p99
      %p101 = scmp.ne.s32.totalorder %s93, %s96
      %p102 = scmp.eq.s32.totalorder %s15, 0
      %p103 = por %p101, %p102
      %p104 = scmp.ne.s32.totalorder %s93, %s96
      %p105 = scmp.eq.s32.totalorder %s20, 1
      %p106 = por %p104, %p105
      %p107 = scmp.ne.s32.totalorder %s96, %s97
      %p108 = scmp.eq.s32.totalorder %s20, 0
      %p109 = por %p107, %p108
      %p110 = scmp.ne.s32.totalorder %s96, %s97
      %p111 = scmp.eq.s32.totalorder %s21, 1
      %p112 = por %p110, %p111
      %p114 = scmp.ne.s32.totalorder %s97, %s113
      %p115 = scmp.eq.s32.totalorder %s21, 0
      %p116 = por %p114, %p115
      %s117 = ssub.s32 %s15, %s22
      %p118 = scmp.eq.s32.totalorder %s117, 0
      %s120 = sadd.s32 %s119, 1
      %s121 = scalar_select %p118, %s119, %s120
      %p124 = pneg %p118
      %p125 = scmp.eq.s32.totalorder %s15, 1
      %p126 = por %p124, %p125
      %p127 = scmp.ne.s32.totalorder %s119, %s122
      %p128 = scmp.eq.s32.totalorder %s15, 0
      %p129 = por %p127, %p128
      %p130 = scmp.ne.s32.totalorder %s119, %s122
      %p131 = scmp.eq.s32.totalorder %s20, 1
      %p132 = por %p130, %p131
      %p133 = scmp.ne.s32.totalorder %s122, %s123
      %p134 = scmp.eq.s32.totalorder %s20, 0
      %p135 = por %p133, %p134
      %p136 = scmp.ne.s32.totalorder %s122, %s123
      %p137 = scmp.eq.s32.totalorder %s21, 1
      %p138 = por %p136, %p137
      %p140 = scmp.ne.s32.totalorder %s123, %s139
      %p141 = scmp.eq.s32.totalorder %s21, 0
      %p142 = por %p140, %p141
      %p143 = scmp.le.s32.totalorder 1, %s15
      %p144 = scmp.lt.s32.totalorder %s15, 3
      %p145 = pnand %p143, %p144
      %p146 = pneg %p145
      // Predicated region
      $region9: #{graphsage_forward.5} parent=5 // pred_check
        _
      $region10: #{graphsage_forward.5} parent=5 // pred_check_branch
        %148 = sbr.rel (%p145) target = $region12
      $region11: #{graphsage_forward.5} parent=5 // pred_region
        %s149 = ssub.s32 %s15, 1
        // Predicated region
        $region13: #{graphsage_forward.5} parent=11 // pred_check
          %p150 = pneg %p62
        $region14: #{graphsage_forward.5} parent=11 // pred_check_branch
          %152 = sbr.rel (%p150) target = $region16
        $region15: #{graphsage_forward.5} parent=11 // pred_region
          %154 = vsyncadd [#allocation5], 0
          %s155 = sshll.u32 %s1, 4
          %s156 = int_to_ptr.hbm [resolvable:$true] %s155
          %s157 = sshll.u32 [#allocation4], 4
          %s158 = int_to_ptr.vmem [resolvable:$true] %s157
          %163 = dma.hbm_to_vmem [thread:$0]  %s156, 2048, %s158, [#allocation5], 128, 128, 8
        $region16: #{graphsage_forward.5} parent=11 // pred_fallthru
          _
        // Predicated region
        $region17: #{graphsage_forward.5} parent=11 // pred_check
          %p164 = pneg %p83
        $region18: #{graphsage_forward.5} parent=11 // pred_check_branch
          %166 = sbr.rel (%p164) target = $region20
        $region19: #{graphsage_forward.5} parent=11 // pred_region
          _
        $region20: #{graphsage_forward.5} parent=11 // pred_fallthru
          _
      $region12: #{graphsage_forward.5} parent=5 // pred_fallthru
        _
      %p167 = scmp.lt.s32.totalorder %s15, 2
      // Predicated region
      $region21: #{graphsage_forward.5} parent=5 // pred_check
        %p168 = pneg %p167
      $region22: #{graphsage_forward.5} parent=5 // pred_check_branch
        %170 = sbr.rel (%p168) target = $region24
      $region23: #{graphsage_forward.5} parent=5 // pred_region
        // Predicated region
        $region25: #{graphsage_forward.5} parent=23 // pred_check
          %p171 = pneg %p35
        $region26: #{graphsage_forward.5} parent=23 // pred_check_branch
          %173 = sbr.rel (%p171) target = $region28
        $region27: #{graphsage_forward.5} parent=23 // pred_region
          %s174 = sand.u32 %s25, 1
          %s175 = scalar_lea.sflag [#allocation3], %s174
          %s176 = sand.u32 %s25, 1
          %s177 = smul.addr %s176, 128
          %s178 = scalar_lea.vmem [#allocation2], %s177
          %s179 = smul.u32 32, %s15
          %181 = vsyncadd %s175, 0
          %s182 = smul.addr %s179, 4
          %s183 = scalar_lea.hbm %s0, %s182
          %s184 = sshll.u32 %s183, 4
          %s185 = int_to_ptr.hbm [resolvable:$true] %s184
          %s186 = sshll.u32 %s178, 4
          %s187 = int_to_ptr.vmem [resolvable:$true] %s186
          %192 = dma.hbm_to_vmem [thread:$0]  %s185, 2048, %s187, %s175, 64, 64, 4
        $region28: #{graphsage_forward.5} parent=23 // pred_fallthru
          _
      $region24: #{graphsage_forward.5} parent=5 // pred_fallthru
        _
      %p193 = scmp.le.s32.totalorder 1, %s15
      %p194 = scmp.lt.s32.totalorder %s15, 3
      %p195 = pnand %p193, %p194
      %p196 = pneg %p195
      // Predicated region
      $region29: #{graphsage_forward.5} parent=5 // pred_check
        _
      $region30: #{graphsage_forward.5} parent=5 // pred_check_branch
        %198 = sbr.rel (%p195) target = $region32
      $region31: #{graphsage_forward.5} parent=5 // pred_region
        %s199 = ssub.s32 %s15, 1
        %s200 = sand.u32 %s28, 1
        %s201 = scalar_lea.sflag [#allocation3], %s200
        %s202 = sand.u32 %s28, 1
        %s203 = smul.addr %s202, 128
        %s204 = scalar_lea.vmem [#allocation2], %s203
        // Predicated region
        $region33: #{graphsage_forward.5} parent=31 // pred_check
          %p205 = pneg %p41
        $region34: #{graphsage_forward.5} parent=31 // pred_check_branch
          %207 = sbr.rel (%p205) target = $region36
        $region35: #{graphsage_forward.5} parent=31 // pred_region
          %209 = dma.done %s201, 2048
        $region36: #{graphsage_forward.5} parent=31 // pred_fallthru
          _
        // Predicated region
        $region37: #{graphsage_forward.5} parent=31 // pred_check
          %p210 = pneg %p62
        $region38: #{graphsage_forward.5} parent=31 // pred_check_branch
          %212 = sbr.rel (%p210) target = $region40
        $region39: #{graphsage_forward.5} parent=31 // pred_region
          %214 = dma.done [#allocation5], 2048
        $region40: #{graphsage_forward.5} parent=31 // pred_fallthru
          _
        %s215 = sand.u32 %s28, 1
        %s216 = scalar_lea.sflag [#allocation3], %s215
        %s217 = sand.u32 %s28, 1
        %s218 = smul.addr %s217, 128
        %s219 = scalar_lea.vmem [#allocation2], %s218
        %p220 = pneg %p41
        %p221 = pneg %p38
        %p222 = pneg %p62
        %p223 = pneg %p59
        %p224 = pneg %p83
        %p225 = pneg %p80
        %p226 = pneg %p109
        %p227 = pneg %p106
        %s228 = smul.u32 32, %s20
        %p229 = scmp.lt.s32.totalorder %s228, 63
        %s230 = scalar_select %p229, %s228, 63
        %s231 = smul.addr %s230, 4
        %s232 = scalar_lea.vmem %s3, %s231
        %p233 = pneg %p135
        %p234 = pneg %p132
        %s235 = smul.u32 32, %s20
        %p236 = scmp.lt.s32.totalorder %s235, 63
        %s237 = scalar_select %p236, %s235, 63
        %s238 = smul.addr %s237, 4
        %s239 = scalar_lea.vmem %s4, %s238
        %s240 = smul.u32 32, %s20
        %s241 = smul.u32 32, %s20
        %p242 = scmp.lt.s32.totalorder %s241, 63
        %s243 = scalar_select %p242, %s241, 63
        %s244 = smul.addr %s243, 4
        %s245 = scalar_lea.vmem %s3, %s244
        %s246 = smul.u32 32, %s20
        %s247 = smul.u32 32, %s20
        %p248 = scmp.lt.s32.totalorder %s247, 63
        %s249 = scalar_select %p248, %s247, 63
        %s250 = smul.addr %s249, 4
        %s251 = scalar_lea.vmem %s4, %s250
        %s252 = smul.u32 32, %s20
        %v253 = vld [vmem:[%s204] sm:$0xf]
        %v254 = vld [vmem:[%s204 + $0x4] sm:$0xf]
        %v255 = vld [vmem:[%s204 + $0x8] sm:$0xf]
        %v256 = vld [vmem:[%s204 + $0xc] sm:$0xf]
        %v257 = vld [vmem:[%s204 + $0x10] sm:$0xf]
        %v258 = vld [vmem:[%s204 + $0x14] sm:$0xf]
        %v259 = vld [vmem:[%s204 + $0x18] sm:$0xf]
        %v260 = vld [vmem:[%s204 + $0x1c] sm:$0xf]
        %v261 = vld [vmem:[%s204 + $0x20] sm:$0xf]
        %v262 = vld [vmem:[%s204 + $0x24] sm:$0xf]
        %v263 = vld [vmem:[%s204 + $0x28] sm:$0xf]
        %v264 = vld [vmem:[%s204 + $0x2c] sm:$0xf]
        %v265 = vld [vmem:[%s204 + $0x30] sm:$0xf]
        %v266 = vld [vmem:[%s204 + $0x34] sm:$0xf]
        %v267 = vld [vmem:[%s204 + $0x38] sm:$0xf]
        %v268 = vld [vmem:[%s204 + $0x3c] sm:$0xf]
        %v269 = vld [vmem:[%s204 + $0x40] sm:$0xf]
        %v270 = vld [vmem:[%s204 + $0x44] sm:$0xf]
        %v271 = vld [vmem:[%s204 + $0x48] sm:$0xf]
        %v272 = vld [vmem:[%s204 + $0x4c] sm:$0xf]
        %v273 = vld [vmem:[%s204 + $0x50] sm:$0xf]
        %v274 = vld [vmem:[%s204 + $0x54] sm:$0xf]
        %v275 = vld [vmem:[%s204 + $0x58] sm:$0xf]
        %v276 = vld [vmem:[%s204 + $0x5c] sm:$0xf]
        %v277 = vld [vmem:[%s204 + $0x60] sm:$0xf]
        %v278 = vld [vmem:[%s204 + $0x64] sm:$0xf]
        %v279 = vld [vmem:[%s204 + $0x68] sm:$0xf]
        %v280 = vld [vmem:[%s204 + $0x6c] sm:$0xf]
        %v281 = vld [vmem:[%s204 + $0x70] sm:$0xf]
        %v282 = vld [vmem:[%s204 + $0x74] sm:$0xf]
        %v283 = vld [vmem:[%s204 + $0x78] sm:$0xf]
        %v284 = vld [vmem:[%s204 + $0x7c] sm:$0xf]
        %v285 = vld [vmem:[#allocation4] sm:$0xff]
        %v286 = vld [vmem:[#allocation4 + $0x8] sm:$0xff]
        %v287 = vld [vmem:[#allocation4 + $0x10] sm:$0xff]
        %v288 = vld [vmem:[#allocation4 + $0x18] sm:$0xff]
        %v289 = vld [vmem:[#allocation4 + $0x20] sm:$0xff]
        %v290 = vld [vmem:[#allocation4 + $0x28] sm:$0xff]
        %v291 = vld [vmem:[#allocation4 + $0x30] sm:$0xff]
        %v292 = vld [vmem:[#allocation4 + $0x38] sm:$0xff]
        %v293 = vld [vmem:[#allocation4 + $0x40] sm:$0xff]
        %v294 = vld [vmem:[#allocation4 + $0x48] sm:$0xff]
        %v295 = vld [vmem:[#allocation4 + $0x50] sm:$0xff]
        %v296 = vld [vmem:[#allocation4 + $0x58] sm:$0xff]
        %v297 = vld [vmem:[#allocation4 + $0x60] sm:$0xff]
        %v298 = vld [vmem:[#allocation4 + $0x68] sm:$0xff]
        %v299 = vld [vmem:[#allocation4 + $0x70] sm:$0xff]
        %v300 = vld [vmem:[#allocation4 + $0x78] sm:$0xff]
        %v333 = vunpack.c.l.b16 %v253
        %v334 = vunpack.c.l.b16 %v254
        %v335 = vunpack.c.l.b16 %v255
        %v336 = vunpack.c.l.b16 %v256
        %v337 = vunpack.c.l.b16 %v257
        %v338 = vunpack.c.l.b16 %v258
        %v339 = vunpack.c.l.b16 %v259
        %v340 = vunpack.c.l.b16 %v260
        %v341 = vunpack.c.l.b16 %v261
        %v342 = vunpack.c.l.b16 %v262
        %v343 = vunpack.c.l.b16 %v263
        %v344 = vunpack.c.l.b16 %v264
        %v345 = vunpack.c.l.b16 %v265
        %v346 = vunpack.c.l.b16 %v266
        %v347 = vunpack.c.l.b16 %v267
        %v348 = vunpack.c.l.b16 %v268
        %v349 = vunpack.c.l.b16 %v269
        %v350 = vunpack.c.l.b16 %v270
        %v351 = vunpack.c.l.b16 %v271
        %v352 = vunpack.c.l.b16 %v272
        %v353 = vunpack.c.l.b16 %v273
        %v354 = vunpack.c.l.b16 %v274
        %v355 = vunpack.c.l.b16 %v275
        %v356 = vunpack.c.l.b16 %v276
        %v357 = vunpack.c.l.b16 %v277
        %v358 = vunpack.c.l.b16 %v278
        %v359 = vunpack.c.l.b16 %v279
        %v360 = vunpack.c.l.b16 %v280
        %v361 = vunpack.c.l.b16 %v281
        %v362 = vunpack.c.l.b16 %v282
        %v363 = vunpack.c.l.b16 %v283
        %v364 = vunpack.c.l.b16 %v284
        %v365 = vpack.c.b16 %v334, %v333
        %v366 = vpack.c.b16 %v336, %v335
        %v367 = vpack.c.b16 %v338, %v337
        %v368 = vpack.c.b16 %v340, %v339
        %v369 = vpack.c.b16 %v342, %v341
        %v370 = vpack.c.b16 %v344, %v343
        %v371 = vpack.c.b16 %v346, %v345
        %v372 = vpack.c.b16 %v348, %v347
        %v373 = vpack.c.b16 %v350, %v349
        %v374 = vpack.c.b16 %v352, %v351
        %v375 = vpack.c.b16 %v354, %v353
        %v376 = vpack.c.b16 %v356, %v355
        %v377 = vpack.c.b16 %v358, %v357
        %v378 = vpack.c.b16 %v360, %v359
        %v379 = vpack.c.b16 %v362, %v361
        %v380 = vpack.c.b16 %v364, %v363
        %v413 = vunpack.c.l.b16 %v285
        %v414 = vunpack.c.h.b16 %v285
        %v415 = vunpack.c.l.b16 %v286
        %v416 = vunpack.c.h.b16 %v286
        %v417 = vunpack.c.l.b16 %v287
        %v418 = vunpack.c.h.b16 %v287
        %v419 = vunpack.c.l.b16 %v288
        %v420 = vunpack.c.h.b16 %v288
        %v421 = vunpack.c.l.b16 %v289
        %v422 = vunpack.c.h.b16 %v289
        %v423 = vunpack.c.l.b16 %v290
        %v424 = vunpack.c.h.b16 %v290
        %v425 = vunpack.c.l.b16 %v291
        %v426 = vunpack.c.h.b16 %v291
        %v427 = vunpack.c.l.b16 %v292
        %v428 = vunpack.c.h.b16 %v292
        %v429 = vunpack.c.l.b16 %v293
        %v430 = vunpack.c.h.b16 %v293
        %v431 = vunpack.c.l.b16 %v294
        %v432 = vunpack.c.h.b16 %v294
        %v433 = vunpack.c.l.b16 %v295
        %v434 = vunpack.c.h.b16 %v295
        %v435 = vunpack.c.l.b16 %v296
        %v436 = vunpack.c.h.b16 %v296
        %v437 = vunpack.c.l.b16 %v297
        %v438 = vunpack.c.h.b16 %v297
        %v439 = vunpack.c.l.b16 %v298
        %v440 = vunpack.c.h.b16 %v298
        %v441 = vunpack.c.l.b16 %v299
        %v442 = vunpack.c.h.b16 %v299
        %v443 = vunpack.c.l.b16 %v300
        %v444 = vunpack.c.h.b16 %v300
        %v445 = vpack.c.b16 %v415, %v413
        %v446 = vpack.c.b16 %v416, %v414
        %v447 = vpack.c.b16 %v419, %v417
        %v448 = vpack.c.b16 %v420, %v418
        %v449 = vpack.c.b16 %v423, %v421
        %v450 = vpack.c.b16 %v424, %v422
        %v451 = vpack.c.b16 %v427, %v425
        %v452 = vpack.c.b16 %v428, %v426
        %v453 = vpack.c.b16 %v431, %v429
        %v454 = vpack.c.b16 %v432, %v430
        %v455 = vpack.c.b16 %v435, %v433
        %v456 = vpack.c.b16 %v436, %v434
        %v457 = vpack.c.b16 %v439, %v437
        %v458 = vpack.c.b16 %v440, %v438
        %v459 = vpack.c.b16 %v443, %v441
        %v460 = vpack.c.b16 %v444, %v442
        %477 = vmatpush.bf16.msra.mxu0 %v459
        %478 = vmatpush.bf16.msra.mxu0 %v457
        %479 = vmatpush.bf16.msra.mxu0 %v455
        %480 = vmatpush.bf16.msra.mxu0 %v453
        %481 = vmatpush.bf16.msra.mxu0 %v451
        %482 = vmatpush.bf16.msra.mxu0 %v449
        %483 = vmatpush.bf16.msra.mxu0 %v447
        %484 = vmatpush.bf16.msra.mxu0 %v445
        %485 = vmatmul.bf16.gmra.mxu0 %v365
        %v486 = vpop.f32.mrf.mxu0
        %v487 = vadd.f32 0.0, %v486
        %v488 = vpop.f32.mrf.mxu0
        %v489 = vadd.f32 0.0, %v488
        %490 = vmatmul.bf16.gmra.mxu0 %v366
        %v491 = vpop.f32.mrf.mxu0
        %v492 = vadd.f32 0.0, %v491
        %v493 = vpop.f32.mrf.mxu0
        %v494 = vadd.f32 0.0, %v493
        %495 = vmatmul.bf16.gmra.mxu0 %v367
        %v496 = vpop.f32.mrf.mxu0
        %v497 = vadd.f32 0.0, %v496
        %v498 = vpop.f32.mrf.mxu0
        %v499 = vadd.f32 0.0, %v498
        %500 = vmatmul.bf16.gmra.mxu0 %v368
        %v501 = vpop.f32.mrf.mxu0
        %v502 = vadd.f32 0.0, %v501
        %v503 = vpop.f32.mrf.mxu0
        %v504 = vadd.f32 0.0, %v503
        %505 = vmatmul.bf16.gmra.mxu0 %v369
        %v506 = vpop.f32.mrf.mxu0
        %v507 = vadd.f32 0.0, %v506
        %v508 = vpop.f32.mrf.mxu0
        %v509 = vadd.f32 0.0, %v508
        %510 = vmatmul.bf16.gmra.mxu0 %v370
        %v511 = vpop.f32.mrf.mxu0
        %v512 = vadd.f32 0.0, %v511
        %v513 = vpop.f32.mrf.mxu0
        %v514 = vadd.f32 0.0, %v513
        %515 = vmatmul.bf16.gmra.mxu0 %v371
        %v516 = vpop.f32.mrf.mxu0
        %v517 = vadd.f32 0.0, %v516
        %v518 = vpop.f32.mrf.mxu0
        %v519 = vadd.f32 0.0, %v518
        %520 = vmatmul.bf16.gmra.mxu0 %v372
        %v521 = vpop.f32.mrf.mxu0
        %v522 = vadd.f32 0.0, %v521
        %v523 = vpop.f32.mrf.mxu0
        %v524 = vadd.f32 0.0, %v523
        %525 = vmatmul.bf16.gmra.mxu0 %v373
        %v526 = vpop.f32.mrf.mxu0
        %v527 = vadd.f32 0.0, %v526
        %v528 = vpop.f32.mrf.mxu0
        %v529 = vadd.f32 0.0, %v528
        %530 = vmatmul.bf16.gmra.mxu0 %v374
        %v531 = vpop.f32.mrf.mxu0
        %v532 = vadd.f32 0.0, %v531
        %v533 = vpop.f32.mrf.mxu0
        %v534 = vadd.f32 0.0, %v533
        %535 = vmatmul.bf16.gmra.mxu0 %v375
        %v536 = vpop.f32.mrf.mxu0
        %v537 = vadd.f32 0.0, %v536
        %v538 = vpop.f32.mrf.mxu0
        %v539 = vadd.f32 0.0, %v538
        %540 = vmatmul.bf16.gmra.mxu0 %v376
        %v541 = vpop.f32.mrf.mxu0
        %v542 = vadd.f32 0.0, %v541
        %v543 = vpop.f32.mrf.mxu0
        %v544 = vadd.f32 0.0, %v543
        %545 = vmatmul.bf16.gmra.mxu0 %v377
        %v546 = vpop.f32.mrf.mxu0
        %v547 = vadd.f32 0.0, %v546
        %v548 = vpop.f32.mrf.mxu0
        %v549 = vadd.f32 0.0, %v548
        %550 = vmatmul.bf16.gmra.mxu0 %v378
        %v551 = vpop.f32.mrf.mxu0
        %v552 = vadd.f32 0.0, %v551
        %v553 = vpop.f32.mrf.mxu0
        %v554 = vadd.f32 0.0, %v553
        %555 = vmatmul.bf16.gmra.mxu0 %v379
        %v556 = vpop.f32.mrf.mxu0
        %v557 = vadd.f32 0.0, %v556
        %v558 = vpop.f32.mrf.mxu0
        %v559 = vadd.f32 0.0, %v558
        %560 = vmatmul.bf16.gmra.mxu0 %v380
        %v561 = vpop.f32.mrf.mxu0
        %v562 = vadd.f32 0.0, %v561
        %v563 = vpop.f32.mrf.mxu0
        %v564 = vadd.f32 0.0, %v563
        %565 = vdwg.mxu0
        %566 = vmatpush.bf16.msra.mxu0 %v460
        %567 = vmatpush.bf16.msra.mxu0 %v458
        %568 = vmatpush.bf16.msra.mxu0 %v456
        %569 = vmatpush.bf16.msra.mxu0 %v454
        %570 = vmatpush.bf16.msra.mxu0 %v452
        %571 = vmatpush.bf16.msra.mxu0 %v450
        %572 = vmatpush.bf16.msra.mxu0 %v448
        %573 = vmatpush.bf16.msra.mxu0 %v446
        %574 = vmatmul.bf16.gmra.mxu0 %v365
        %v575 = vpop.f32.mrf.mxu0
        %v576 = vadd.f32 0.0, %v575
        %v577 = vpop.f32.mrf.mxu0
        %v578 = vadd.f32 0.0, %v577
        %579 = vmatmul.bf16.gmra.mxu0 %v366
        %v580 = vpop.f32.mrf.mxu0
        %v581 = vadd.f32 0.0, %v580
        %v582 = vpop.f32.mrf.mxu0
        %v583 = vadd.f32 0.0, %v582
        %584 = vmatmul.bf16.gmra.mxu0 %v367
        %v585 = vpop.f32.mrf.mxu0
        %v586 = vadd.f32 0.0, %v585
        %v587 = vpop.f32.mrf.mxu0
        %v588 = vadd.f32 0.0, %v587
        %589 = vmatmul.bf16.gmra.mxu0 %v368
        %v590 = vpop.f32.mrf.mxu0
        %v591 = vadd.f32 0.0, %v590
        %v592 = vpop.f32.mrf.mxu0
        %v593 = vadd.f32 0.0, %v592
        %594 = vmatmul.bf16.gmra.mxu0 %v369
        %v595 = vpop.f32.mrf.mxu0
        %v596 = vadd.f32 0.0, %v595
        %v597 = vpop.f32.mrf.mxu0
        %v598 = vadd.f32 0.0, %v597
        %599 = vmatmul.bf16.gmra.mxu0 %v370
        %v600 = vpop.f32.mrf.mxu0
        %v601 = vadd.f32 0.0, %v600
        %v602 = vpop.f32.mrf.mxu0
        %v603 = vadd.f32 0.0, %v602
        %604 = vmatmul.bf16.gmra.mxu0 %v371
        %v605 = vpop.f32.mrf.mxu0
        %v606 = vadd.f32 0.0, %v605
        %v607 = vpop.f32.mrf.mxu0
        %v608 = vadd.f32 0.0, %v607
        %609 = vmatmul.bf16.gmra.mxu0 %v372
        %v610 = vpop.f32.mrf.mxu0
        %v611 = vadd.f32 0.0, %v610
        %v612 = vpop.f32.mrf.mxu0
        %v613 = vadd.f32 0.0, %v612
        %614 = vmatmul.bf16.gmra.mxu0 %v373
        %v615 = vpop.f32.mrf.mxu0
        %v616 = vadd.f32 0.0, %v615
        %v617 = vpop.f32.mrf.mxu0
        %v618 = vadd.f32 0.0, %v617
        %619 = vmatmul.bf16.gmra.mxu0 %v374
        %v620 = vpop.f32.mrf.mxu0
        %v621 = vadd.f32 0.0, %v620
        %v622 = vpop.f32.mrf.mxu0
        %v623 = vadd.f32 0.0, %v622
        %624 = vmatmul.bf16.gmra.mxu0 %v375
        %v625 = vpop.f32.mrf.mxu0
        %v626 = vadd.f32 0.0, %v625
        %v627 = vpop.f32.mrf.mxu0
        %v628 = vadd.f32 0.0, %v627
        %629 = vmatmul.bf16.gmra.mxu0 %v376
        %v630 = vpop.f32.mrf.mxu0
        %v631 = vadd.f32 0.0, %v630
        %v632 = vpop.f32.mrf.mxu0
        %v633 = vadd.f32 0.0, %v632
        %634 = vmatmul.bf16.gmra.mxu0 %v377
        %v635 = vpop.f32.mrf.mxu0
        %v636 = vadd.f32 0.0, %v635
        %v637 = vpop.f32.mrf.mxu0
        %v638 = vadd.f32 0.0, %v637
        %639 = vmatmul.bf16.gmra.mxu0 %v378
        %v640 = vpop.f32.mrf.mxu0
        %v641 = vadd.f32 0.0, %v640
        %v642 = vpop.f32.mrf.mxu0
        %v643 = vadd.f32 0.0, %v642
        %644 = vmatmul.bf16.gmra.mxu0 %v379
        %v645 = vpop.f32.mrf.mxu0
        %v646 = vadd.f32 0.0, %v645
        %v647 = vpop.f32.mrf.mxu0
        %v648 = vadd.f32 0.0, %v647
        %649 = vmatmul.bf16.gmra.mxu0 %v380
        %v650 = vpop.f32.mrf.mxu0
        %v651 = vadd.f32 0.0, %v650
        %v652 = vpop.f32.mrf.mxu0
        %v653 = vadd.f32 0.0, %v652
        %654 = vdwg.mxu0
        %v655 = vld [vmem:[%s2] sm:$0x1]
        %v657 = vperm.slane %v655, 0
        %v659 = vadd.f32 %v487, %v657
        %v660 = vadd.f32 %v489, %v657
        %v661 = vadd.f32 %v492, %v657
        %v662 = vadd.f32 %v494, %v657
        %v663 = vadd.f32 %v497, %v657
        %v664 = vadd.f32 %v499, %v657
        %v665 = vadd.f32 %v502, %v657
        %v666 = vadd.f32 %v504, %v657
        %v667 = vadd.f32 %v507, %v657
        %v668 = vadd.f32 %v509, %v657
        %v669 = vadd.f32 %v512, %v657
        %v670 = vadd.f32 %v514, %v657
        %v671 = vadd.f32 %v517, %v657
        %v672 = vadd.f32 %v519, %v657
        %v673 = vadd.f32 %v522, %v657
        %v674 = vadd.f32 %v524, %v657
        %v675 = vadd.f32 %v527, %v657
        %v676 = vadd.f32 %v529, %v657
        %v677 = vadd.f32 %v532, %v657
        %v678 = vadd.f32 %v534, %v657
        %v679 = vadd.f32 %v537, %v657
        %v680 = vadd.f32 %v539, %v657
        %v681 = vadd.f32 %v542, %v657
        %v682 = vadd.f32 %v544, %v657
        %v683 = vadd.f32 %v547, %v657
        %v684 = vadd.f32 %v549, %v657
        %v685 = vadd.f32 %v552, %v657
        %v686 = vadd.f32 %v554, %v657
        %v687 = vadd.f32 %v557, %v657
        %v688 = vadd.f32 %v559, %v657
        %v689 = vadd.f32 %v562, %v657
        %v690 = vadd.f32 %v564, %v657
        %v691 = vpack.c.bf16 %v659, %v659
        %v692 = vpack.c.bf16 %v660, %v660
        %v693 = vpack.c.bf16 %v661, %v661
        %v694 = vpack.c.bf16 %v662, %v662
        %v695 = vpack.c.bf16 %v663, %v663
        %v696 = vpack.c.bf16 %v664, %v664
        %v697 = vpack.c.bf16 %v665, %v665
        %v698 = vpack.c.bf16 %v666, %v666
        %v699 = vpack.c.bf16 %v667, %v667
        %v700 = vpack.c.bf16 %v668, %v668
        %v701 = vpack.c.bf16 %v669, %v669
        %v702 = vpack.c.bf16 %v670, %v670
        %v703 = vpack.c.bf16 %v671, %v671
        %v704 = vpack.c.bf16 %v672, %v672
        %v705 = vpack.c.bf16 %v673, %v673
        %v706 = vpack.c.bf16 %v674, %v674
        %v707 = vpack.c.bf16 %v675, %v675
        %v708 = vpack.c.bf16 %v676, %v676
        %v709 = vpack.c.bf16 %v677, %v677
        %v710 = vpack.c.bf16 %v678, %v678
        %v711 = vpack.c.bf16 %v679, %v679
        %v712 = vpack.c.bf16 %v680, %v680
        %v713 = vpack.c.bf16 %v681, %v681
        %v714 = vpack.c.bf16 %v682, %v682
        %v715 = vpack.c.bf16 %v683, %v683
        %v716 = vpack.c.bf16 %v684, %v684
        %v717 = vpack.c.bf16 %v685, %v685
        %v718 = vpack.c.bf16 %v686, %v686
        %v719 = vpack.c.bf16 %v687, %v687
        %v720 = vpack.c.bf16 %v688, %v688
        %v721 = vpack.c.bf16 %v689, %v689
        %v722 = vpack.c.bf16 %v690, %v690
        %723 = vst [vmem:[%s245] sm:$0xf] %v691
        %724 = vst [vmem:[%s245 + $0x4] sm:$0xf] %v692
        %725 = vst [vmem:[%s245 + $0x8] sm:$0xf] %v693
        %726 = vst [vmem:[%s245 + $0xc] sm:$0xf] %v694
        %727 = vst [vmem:[%s245 + $0x10] sm:$0xf] %v695
        %728 = vst [vmem:[%s245 + $0x14] sm:$0xf] %v696
        %729 = vst [vmem:[%s245 + $0x18] sm:$0xf] %v697
        %730 = vst [vmem:[%s245 + $0x1c] sm:$0xf] %v698
        %731 = vst [vmem:[%s245 + $0x20] sm:$0xf] %v699
        %732 = vst [vmem:[%s245 + $0x24] sm:$0xf] %v700
        %733 = vst [vmem:[%s245 + $0x28] sm:$0xf] %v701
        %734 = vst [vmem:[%s245 + $0x2c] sm:$0xf] %v702
        %735 = vst [vmem:[%s245 + $0x30] sm:$0xf] %v703
        %736 = vst [vmem:[%s245 + $0x34] sm:$0xf] %v704
        %737 = vst [vmem:[%s245 + $0x38] sm:$0xf] %v705
        %738 = vst [vmem:[%s245 + $0x3c] sm:$0xf] %v706
        %739 = vst [vmem:[%s245 + $0x40] sm:$0xf] %v707
        %740 = vst [vmem:[%s245 + $0x44] sm:$0xf] %v708
        %741 = vst [vmem:[%s245 + $0x48] sm:$0xf] %v709
        %742 = vst [vmem:[%s245 + $0x4c] sm:$0xf] %v710
        %743 = vst [vmem:[%s245 + $0x50] sm:$0xf] %v711
        %744 = vst [vmem:[%s245 + $0x54] sm:$0xf] %v712
        %745 = vst [vmem:[%s245 + $0x58] sm:$0xf] %v713
        %746 = vst [vmem:[%s245 + $0x5c] sm:$0xf] %v714
        %747 = vst [vmem:[%s245 + $0x60] sm:$0xf] %v715
        %748 = vst [vmem:[%s245 + $0x64] sm:$0xf] %v716
        %749 = vst [vmem:[%s245 + $0x68] sm:$0xf] %v717
        %750 = vst [vmem:[%s245 + $0x6c] sm:$0xf] %v718
        %751 = vst [vmem:[%s245 + $0x70] sm:$0xf] %v719
        %752 = vst [vmem:[%s245 + $0x74] sm:$0xf] %v720
        %753 = vst [vmem:[%s245 + $0x78] sm:$0xf] %v721
        %754 = vst [vmem:[%s245 + $0x7c] sm:$0xf] %v722
        %v755 = vpack.c.bf16 %v576, %v576
        %v756 = vpack.c.bf16 %v578, %v578
        %v757 = vpack.c.bf16 %v581, %v581
        %v758 = vpack.c.bf16 %v583, %v583
        %v759 = vpack.c.bf16 %v586, %v586
        %v760 = vpack.c.bf16 %v588, %v588
        %v761 = vpack.c.bf16 %v591, %v591
        %v762 = vpack.c.bf16 %v593, %v593
        %v763 = vpack.c.bf16 %v596, %v596
        %v764 = vpack.c.bf16 %v598, %v598
        %v765 = vpack.c.bf16 %v601, %v601
        %v766 = vpack.c.bf16 %v603, %v603
        %v767 = vpack.c.bf16 %v606, %v606
        %v768 = vpack.c.bf16 %v608, %v608
        %v769 = vpack.c.bf16 %v611, %v611
        %v770 = vpack.c.bf16 %v613, %v613
        %v771 = vpack.c.bf16 %v616, %v616
        %v772 = vpack.c.bf16 %v618, %v618
        %v773 = vpack.c.bf16 %v621, %v621
        %v774 = vpack.c.bf16 %v623, %v623
        %v775 = vpack.c.bf16 %v626, %v626
        %v776 = vpack.c.bf16 %v628, %v628
        %v777 = vpack.c.bf16 %v631, %v631
        %v778 = vpack.c.bf16 %v633, %v633
        %v779 = vpack.c.bf16 %v636, %v636
        %v780 = vpack.c.bf16 %v638, %v638
        %v781 = vpack.c.bf16 %v641, %v641
        %v782 = vpack.c.bf16 %v643, %v643
        %v783 = vpack.c.bf16 %v646, %v646
        %v784 = vpack.c.bf16 %v648, %v648
        %v785 = vpack.c.bf16 %v651, %v651
        %v786 = vpack.c.bf16 %v653, %v653
        %787 = vst [vmem:[%s251] sm:$0xf] %v755
        %788 = vst [vmem:[%s251 + $0x4] sm:$0xf] %v756
        %789 = vst [vmem:[%s251 + $0x8] sm:$0xf] %v757
        %790 = vst [vmem:[%s251 + $0xc] sm:$0xf] %v758
        %791 = vst [vmem:[%s251 + $0x10] sm:$0xf] %v759
        %792 = vst [vmem:[%s251 + $0x14] sm:$0xf] %v760
        %793 = vst [vmem:[%s251 + $0x18] sm:$0xf] %v761
        %794 = vst [vmem:[%s251 + $0x1c] sm:$0xf] %v762
        %795 = vst [vmem:[%s251 + $0x20] sm:$0xf] %v763
        %796 = vst [vmem:[%s251 + $0x24] sm:$0xf] %v764
        %797 = vst [vmem:[%s251 + $0x28] sm:$0xf] %v765
        %798 = vst [vmem:[%s251 + $0x2c] sm:$0xf] %v766
        %799 = vst [vmem:[%s251 + $0x30] sm:$0xf] %v767
        %800 = vst [vmem:[%s251 + $0x34] sm:$0xf] %v768
        %801 = vst [vmem:[%s251 + $0x38] sm:$0xf] %v769
        %802 = vst [vmem:[%s251 + $0x3c] sm:$0xf] %v770
        %803 = vst [vmem:[%s251 + $0x40] sm:$0xf] %v771
        %804 = vst [vmem:[%s251 + $0x44] sm:$0xf] %v772
        %805 = vst [vmem:[%s251 + $0x48] sm:$0xf] %v773
        %806 = vst [vmem:[%s251 + $0x4c] sm:$0xf] %v774
        %807 = vst [vmem:[%s251 + $0x50] sm:$0xf] %v775
        %808 = vst [vmem:[%s251 + $0x54] sm:$0xf] %v776
        %809 = vst [vmem:[%s251 + $0x58] sm:$0xf] %v777
        %810 = vst [vmem:[%s251 + $0x5c] sm:$0xf] %v778
        %811 = vst [vmem:[%s251 + $0x60] sm:$0xf] %v779
        %812 = vst [vmem:[%s251 + $0x64] sm:$0xf] %v780
        %813 = vst [vmem:[%s251 + $0x68] sm:$0xf] %v781
        %814 = vst [vmem:[%s251 + $0x6c] sm:$0xf] %v782
        %815 = vst [vmem:[%s251 + $0x70] sm:$0xf] %v783
        %816 = vst [vmem:[%s251 + $0x74] sm:$0xf] %v784
        %817 = vst [vmem:[%s251 + $0x78] sm:$0xf] %v785
        %818 = vst [vmem:[%s251 + $0x7c] sm:$0xf] %v786
        %s819 = smul.u32 32, %s20
        %p820 = scmp.lt.s32.totalorder %s819, 63
        %s821 = scalar_select %p820, %s819, 63
        %s822 = smul.addr %s821, 4
        %s823 = scalar_lea.vmem %s3, %s822
        %s824 = smul.u32 32, %s20
        %p825 = scmp.lt.s32.totalorder %s824, 63
        %s826 = scalar_select %p825, %s824, 63
        %s827 = smul.addr %s826, 4
        %s828 = scalar_lea.vmem %s4, %s827
        // Predicated region
        $region41: #{graphsage_forward.5} parent=31 // pred_check
          %p829 = pneg %p106
        $region42: #{graphsage_forward.5} parent=31 // pred_check_branch
          %831 = sbr.rel (%p829) target = $region44
        $region43: #{graphsage_forward.5} parent=31 // pred_region
          %s832 = smul.u32 32, %s20
        $region44: #{graphsage_forward.5} parent=31 // pred_fallthru
          _
        // Predicated region
        $region45: #{graphsage_forward.5} parent=31 // pred_check
          %p833 = pneg %p132
        $region46: #{graphsage_forward.5} parent=31 // pred_check_branch
          %835 = sbr.rel (%p833) target = $region48
        $region47: #{graphsage_forward.5} parent=31 // pred_region
          %s836 = smul.u32 32, %s20
        $region48: #{graphsage_forward.5} parent=31 // pred_fallthru
          _
      $region32: #{graphsage_forward.5} parent=5 // pred_fallthru
        _
      %p837 = scmp.le.s32.totalorder 2, %s15
      // Predicated region
      $region49: #{graphsage_forward.5} parent=5 // pred_check
        %p838 = pneg %p837
      $region50: #{graphsage_forward.5} parent=5 // pred_check_branch
        %840 = sbr.rel (%p838) target = $region52
      $region51: #{graphsage_forward.5} parent=5 // pred_region
        %s841 = ssub.s32 %s15, 2
        // Predicated region
        $region53: #{graphsage_forward.5} parent=51 // pred_check
          %p842 = pneg %p112
        $region54: #{graphsage_forward.5} parent=51 // pred_check_branch
          %844 = sbr.rel (%p842) target = $region56
        $region55: #{graphsage_forward.5} parent=51 // pred_region
          %s845 = smul.u32 32, %s21
          %p846 = scmp.lt.s32.totalorder %s845, 63
          %s847 = scalar_select %p846, %s845, 63
          %s848 = smul.addr %s847, 4
          %s849 = scalar_lea.vmem %s3, %s848
        $region56: #{graphsage_forward.5} parent=51 // pred_fallthru
          _
        // Predicated region
        $region57: #{graphsage_forward.5} parent=51 // pred_check
          %p850 = pneg %p138
        $region58: #{graphsage_forward.5} parent=51 // pred_check_branch
          %852 = sbr.rel (%p850) target = $region60
        $region59: #{graphsage_forward.5} parent=51 // pred_region
          %s853 = smul.u32 32, %s21
          %p854 = scmp.lt.s32.totalorder %s853, 63
          %s855 = scalar_select %p854, %s853, 63
          %s856 = smul.addr %s855, 4
          %s857 = scalar_lea.vmem %s4, %s856
        $region60: #{graphsage_forward.5} parent=51 // pred_fallthru
          _
      $region52: #{graphsage_forward.5} parent=5 // pred_fallthru
        _
    $region6: #{graphsage_forward.5} parent=1 // loop_footer
      %s19 = sadd.s32 1, %s15
    $region7: #{graphsage_forward.5} parent=1 // loop_footer_branch
      %14 = sbr.rel target = $region3
    $region8: #{graphsage_forward.5} parent=1 // loop_exit
      _
    %858 = vsyncpa [#allocation3], 1
    %s859 = scalar_lea.sflag [#allocation3], 1
    %860 = vsyncpa %s859, 1
    %861 = vsyncpa [#allocation5], 1

// kernel: graphsage_forward.7
$region0: #{graphsage_forward.7}
  #allocation0 [shape = 'u32[]', space=smem, size = 0x4, offset = 0x4, fixed_abs, tag = 'smem constant byte address 0x4 - core index']
  #allocation1 [shape = 'u32[72,128]{1,0:T(1,128)}', space=vmem, size = 0x9000, scoped, tag = 'internal scratch']
  %s0 = inlined_call_operand.vmem [shape: bf16[512,128], index: 0, kind: input, shape index: {}]
  %s1 = inlined_call_operand.hbm [shape: bf16[128,256], index: 1, kind: input, shape index: {}]
  %s2 = inlined_call_operand.vmem [shape: f32[1,128], index: 2, kind: input, shape index: {}]
  %s3 = inlined_call_operand.vmem [shape: bf16[512,128], index: 3, kind: output, shape index: {0}]
  %s4 = inlined_call_operand.vmem [shape: bf16[512,128], index: 4, kind: output, shape index: {1}]
  %5 = xla_tuple %s3, %s4
  %s6 = sld [smem:[#allocation0]]
  $region57: #{graphsage_forward.7} parent=0
    _
  %s8 = ssub.s32 1, %s6
  %s9 = scalar_select 0, %s8, %s6
  $region1: #{graphsage_forward.7} parent=0
    #allocation2 [shape = 'u8[65536]{0}', space=vmem, size = 0x10000, scoped, tag = 'input window, operand 1, single buffered']
    #allocation3 [shape = 's32[2]{0}', space=sflag, size = 0x8, scoped, tag = 'scoped memory for graphsage_forward.7']
    %10 = vsyncpa [#allocation3], 0
    loop: start=0, step=1, limit=4
    $region2: #{graphsage_forward.7} parent=1 // loop_pre_header
      _
    $region3: #{graphsage_forward.7} parent=1 // loop_header
      %s12 = sphi 0, %s16
      %p13 = scmp.ge.s32.totalorder %s12, 4
      %s22 = sphi 0, %s24
      %s25 = sphi 0, %s22
      %s26 = sphi 0, %s25
      %s42 = sphi 0, %s26
      %s46 = sphi 0, %s46
      %s48 = sphi 0, %s46
      %s49 = sphi 0, %s48
      %s63 = sphi 0, %s49
      %s67 = sphi 0, %s67
      %s69 = sphi 0, %s67
      %s70 = sphi 0, %s69
      %s84 = sphi 0, %s70
      %s90 = sphi 0, %s92
      %s93 = sphi 0, %s90
      %s94 = sphi 0, %s93
      %s110 = sphi 0, %s94
      %s116 = sphi 0, %s118
      %s119 = sphi 0, %s116
      %s120 = sphi 0, %s119
      %s136 = sphi 0, %s120
    $region4: #{graphsage_forward.7} parent=1 // loop_header_branch
      %15 = sbr.rel (%p13) target = $region8
    $region5: #{graphsage_forward.7} parent=1 // loop_body
      %s17 = ssub.s32 %s12, 1
      %s18 = ssub.s32 %s12, 2
      %s19 = sadd.s32 %s12, 1
      %s20 = ssub.s32 %s12, %s19
      %p21 = scmp.eq.s32.totalorder %s20, 0
      %s23 = sadd.s32 %s22, 1
      %s24 = scalar_select %p21, %s22, %s23
      %p27 = pneg %p21
      %p28 = scmp.eq.s32.totalorder %s12, 1
      %p29 = por %p27, %p28
      %p30 = scmp.ne.s32.totalorder %s22, %s25
      %p31 = scmp.eq.s32.totalorder %s12, 0
      %p32 = por %p30, %p31
      %p33 = scmp.ne.s32.totalorder %s22, %s25
      %p34 = scmp.eq.s32.totalorder %s17, 1
      %p35 = por %p33, %p34
      %p36 = scmp.ne.s32.totalorder %s25, %s26
      %p37 = scmp.eq.s32.totalorder %s17, 0
      %p38 = por %p36, %p37
      %p39 = scmp.ne.s32.totalorder %s25, %s26
      %p40 = scmp.eq.s32.totalorder %s18, 1
      %p41 = por %p39, %p40
      %p43 = scmp.ne.s32.totalorder %s26, %s42
      %p44 = scmp.eq.s32.totalorder %s18, 0
      %p45 = por %p43, %p44
      %s47 = sadd.s32 %s46, 1
      %p50 = scmp.eq.s32.totalorder %s12, 1
      %p51 = scmp.ne.s32.totalorder %s46, %s48
      %p52 = scmp.eq.s32.totalorder %s12, 0
      %p53 = por %p51, %p52
      %p54 = scmp.ne.s32.totalorder %s46, %s48
      %p55 = scmp.eq.s32.totalorder %s17, 1
      %p56 = por %p54, %p55
      %p57 = scmp.ne.s32.totalorder %s48, %s49
      %p58 = scmp.eq.s32.totalorder %s17, 0
      %p59 = por %p57, %p58
      %p60 = scmp.ne.s32.totalorder %s48, %s49
      %p61 = scmp.eq.s32.totalorder %s18, 1
      %p62 = por %p60, %p61
      %p64 = scmp.ne.s32.totalorder %s49, %s63
      %p65 = scmp.eq.s32.totalorder %s18, 0
      %p66 = por %p64, %p65
      %s68 = sadd.s32 %s67, 1
      %p71 = scmp.eq.s32.totalorder %s12, 1
      %p72 = scmp.ne.s32.totalorder %s67, %s69
      %p73 = scmp.eq.s32.totalorder %s12, 0
      %p74 = por %p72, %p73
      %p75 = scmp.ne.s32.totalorder %s67, %s69
      %p76 = scmp.eq.s32.totalorder %s17, 1
      %p77 = por %p75, %p76
      %p78 = scmp.ne.s32.totalorder %s69, %s70
      %p79 = scmp.eq.s32.totalorder %s17, 0
      %p80 = por %p78, %p79
      %p81 = scmp.ne.s32.totalorder %s69, %s70
      %p82 = scmp.eq.s32.totalorder %s18, 1
      %p83 = por %p81, %p82
      %p85 = scmp.ne.s32.totalorder %s70, %s84
      %p86 = scmp.eq.s32.totalorder %s18, 0
      %p87 = por %p85, %p86
      %s88 = ssub.s32 %s12, %s19
      %p89 = scmp.eq.s32.totalorder %s88, 0
      %s91 = sadd.s32 %s90, 1
      %s92 = scalar_select %p89, %s90, %s91
      %p95 = pneg %p89
      %p96 = scmp.eq.s32.totalorder %s12, 1
      %p97 = por %p95, %p96
      %p98 = scmp.ne.s32.totalorder %s90, %s93
      %p99 = scmp.eq.s32.totalorder %s12, 0
      %p100 = por %p98, %p99
      %p101 = scmp.ne.s32.totalorder %s90, %s93
      %p102 = scmp.eq.s32.totalorder %s17, 1
      %p103 = por %p101, %p102
      %p104 = scmp.ne.s32.totalorder %s93, %s94
      %p105 = scmp.eq.s32.totalorder %s17, 0
      %p106 = por %p104, %p105
      %p107 = scmp.ne.s32.totalorder %s93, %s94
      %p108 = scmp.eq.s32.totalorder %s18, 1
      %p109 = por %p107, %p108
      %p111 = scmp.ne.s32.totalorder %s94, %s110
      %p112 = scmp.eq.s32.totalorder %s18, 0
      %p113 = por %p111, %p112
      %s114 = ssub.s32 %s12, %s19
      %p115 = scmp.eq.s32.totalorder %s114, 0
      %s117 = sadd.s32 %s116, 1
      %s118 = scalar_select %p115, %s116, %s117
      %p121 = pneg %p115
      %p122 = scmp.eq.s32.totalorder %s12, 1
      %p123 = por %p121, %p122
      %p124 = scmp.ne.s32.totalorder %s116, %s119
      %p125 = scmp.eq.s32.totalorder %s12, 0
      %p126 = por %p124, %p125
      %p127 = scmp.ne.s32.totalorder %s116, %s119
      %p128 = scmp.eq.s32.totalorder %s17, 1
      %p129 = por %p127, %p128
      %p130 = scmp.ne.s32.totalorder %s119, %s120
      %p131 = scmp.eq.s32.totalorder %s17, 0
      %p132 = por %p130, %p131
      %p133 = scmp.ne.s32.totalorder %s119, %s120
      %p134 = scmp.eq.s32.totalorder %s18, 1
      %p135 = por %p133, %p134
      %p137 = scmp.ne.s32.totalorder %s120, %s136
      %p138 = scmp.eq.s32.totalorder %s18, 0
      %p139 = por %p137, %p138
      %p140 = scmp.le.s32.totalorder 1, %s12
      %p141 = scmp.lt.s32.totalorder %s12, 3
      %p142 = pnand %p140, %p141
      %p143 = pneg %p142
      // Predicated region
      $region9: #{graphsage_forward.7} parent=5 // pred_check
        _
      $region10: #{graphsage_forward.7} parent=5 // pred_check_branch
        %145 = sbr.rel (%p142) target = $region12
      $region11: #{graphsage_forward.7} parent=5 // pred_region
        %s146 = ssub.s32 %s12, 1
        // Predicated region
        $region13: #{graphsage_forward.7} parent=11 // pred_check
          %p147 = pneg %p59
        $region14: #{graphsage_forward.7} parent=11 // pred_check_branch
          %149 = sbr.rel (%p147) target = $region16
        $region15: #{graphsage_forward.7} parent=11 // pred_region
          %151 = vsyncadd [#allocation3], 0
          %s152 = sshll.u32 %s1, 4
          %s153 = int_to_ptr.hbm [resolvable:$true] %s152
          %s154 = sshll.u32 [#allocation2], 4
          %s155 = int_to_ptr.vmem [resolvable:$true] %s154
          %160 = dma.hbm_to_vmem [thread:$0]  %s153, 2048, %s155, [#allocation3], 128, 128, 8
        $region16: #{graphsage_forward.7} parent=11 // pred_fallthru
          _
        // Predicated region
        $region17: #{graphsage_forward.7} parent=11 // pred_check
          %p161 = pneg %p80
        $region18: #{graphsage_forward.7} parent=11 // pred_check_branch
          %163 = sbr.rel (%p161) target = $region20
        $region19: #{graphsage_forward.7} parent=11 // pred_region
          _
        $region20: #{graphsage_forward.7} parent=11 // pred_fallthru
          _
      $region12: #{graphsage_forward.7} parent=5 // pred_fallthru
        _
      %p164 = scmp.lt.s32.totalorder %s12, 2
      // Predicated region
      $region21: #{graphsage_forward.7} parent=5 // pred_check
        %p165 = pneg %p164
      $region22: #{graphsage_forward.7} parent=5 // pred_check_branch
        %167 = sbr.rel (%p165) target = $region24
      $region23: #{graphsage_forward.7} parent=5 // pred_region
        // Predicated region
        $region25: #{graphsage_forward.7} parent=23 // pred_check
          %p168 = pneg %p32
        $region26: #{graphsage_forward.7} parent=23 // pred_check_branch
          %170 = sbr.rel (%p168) target = $region28
        $region27: #{graphsage_forward.7} parent=23 // pred_region
          %s171 = smul.u32 32, %s12
          %p172 = scmp.lt.s32.totalorder %s171, 63
          %s173 = scalar_select %p172, %s171, 63
          %s174 = smul.addr %s173, 4
          %s175 = scalar_lea.vmem %s0, %s174
          %s176 = smul.u32 32, %s12
        $region28: #{graphsage_forward.7} parent=23 // pred_fallthru
          _
      $region24: #{graphsage_forward.7} parent=5 // pred_fallthru
        _
      %p177 = scmp.le.s32.totalorder 1, %s12
      %p178 = scmp.lt.s32.totalorder %s12, 3
      %p179 = pnand %p177, %p178
      %p180 = pneg %p179
      // Predicated region
      $region29: #{graphsage_forward.7} parent=5 // pred_check
        _
      $region30: #{graphsage_forward.7} parent=5 // pred_check_branch
        %182 = sbr.rel (%p179) target = $region32
      $region31: #{graphsage_forward.7} parent=5 // pred_region
        %s183 = ssub.s32 %s12, 1
        // Predicated region
        $region33: #{graphsage_forward.7} parent=31 // pred_check
          %p184 = pneg %p59
        $region34: #{graphsage_forward.7} parent=31 // pred_check_branch
          %186 = sbr.rel (%p184) target = $region36
        $region35: #{graphsage_forward.7} parent=31 // pred_region
          %188 = dma.done [#allocation3], 2048
        $region36: #{graphsage_forward.7} parent=31 // pred_fallthru
          _
        %s189 = smul.u32 32, %s17
        %p190 = scmp.lt.s32.totalorder %s189, 63
        %s191 = scalar_select %p190, %s189, 63
        %s192 = smul.addr %s191, 4
        %s193 = scalar_lea.vmem %s0, %s192
        %p194 = pneg %p38
        %p195 = pneg %p35
        %p196 = pneg %p59
        %p197 = pneg %p56
        %p198 = pneg %p80
        %p199 = pneg %p77
        %p200 = pneg %p106
        %p201 = pneg %p103
        %s202 = smul.u32 32, %s17
        %p203 = scmp.lt.s32.totalorder %s202, 63
        %s204 = scalar_select %p203, %s202, 63
        %s205 = smul.addr %s204, 4
        %s206 = scalar_lea.vmem %s3, %s205
        %p207 = pneg %p132
        %p208 = pneg %p129
        %s209 = smul.u32 32, %s17
        %p210 = scmp.lt.s32.totalorder %s209, 63
        %s211 = scalar_select %p210, %s209, 63
        %s212 = smul.addr %s211, 4
        %s213 = scalar_lea.vmem %s4, %s212
        %s214 = smul.u32 32, %s17
        %p215 = scmp.lt.s32.totalorder %s214, 63
        %s216 = scalar_select %p215, %s214, 63
        %s217 = smul.addr %s216, 4
        %s218 = scalar_lea.vmem %s0, %s217
        %s219 = smul.u32 32, %s17
        %s220 = smul.u32 32, %s17
        %p221 = scmp.lt.s32.totalorder %s220, 63
        %s222 = scalar_select %p221, %s220, 63
        %s223 = smul.addr %s222, 4
        %s224 = scalar_lea.vmem %s3, %s223
        %s225 = smul.u32 32, %s17
        %s226 = smul.u32 32, %s17
        %p227 = scmp.lt.s32.totalorder %s226, 63
        %s228 = scalar_select %p227, %s226, 63
        %s229 = smul.addr %s228, 4
        %s230 = scalar_lea.vmem %s4, %s229
        %s231 = smul.u32 32, %s17
        %v232 = vld [vmem:[%s218] sm:$0xf]
        %v233 = vld [vmem:[%s218 + $0x4] sm:$0xf]
        %v234 = vld [vmem:[%s218 + $0x8] sm:$0xf]
        %v235 = vld [vmem:[%s218 + $0xc] sm:$0xf]
        %v236 = vld [vmem:[%s218 + $0x10] sm:$0xf]
        %v237 = vld [vmem:[%s218 + $0x14] sm:$0xf]
        %v238 = vld [vmem:[%s218 + $0x18] sm:$0xf]
        %v239 = vld [vmem:[%s218 + $0x1c] sm:$0xf]
        %v240 = vld [vmem:[%s218 + $0x20] sm:$0xf]
        %v241 = vld [vmem:[%s218 + $0x24] sm:$0xf]
        %v242 = vld [vmem:[%s218 + $0x28] sm:$0xf]
        %v243 = vld [vmem:[%s218 + $0x2c] sm:$0xf]
        %v244 = vld [vmem:[%s218 + $0x30] sm:$0xf]
        %v245 = vld [vmem:[%s218 + $0x34] sm:$0xf]
        %v246 = vld [vmem:[%s218 + $0x38] sm:$0xf]
        %v247 = vld [vmem:[%s218 + $0x3c] sm:$0xf]
        %v248 = vld [vmem:[%s218 + $0x40] sm:$0xf]
        %v249 = vld [vmem:[%s218 + $0x44] sm:$0xf]
        %v250 = vld [vmem:[%s218 + $0x48] sm:$0xf]
        %v251 = vld [vmem:[%s218 + $0x4c] sm:$0xf]
        %v252 = vld [vmem:[%s218 + $0x50] sm:$0xf]
        %v253 = vld [vmem:[%s218 + $0x54] sm:$0xf]
        %v254 = vld [vmem:[%s218 + $0x58] sm:$0xf]
        %v255 = vld [vmem:[%s218 + $0x5c] sm:$0xf]
        %v256 = vld [vmem:[%s218 + $0x60] sm:$0xf]
        %v257 = vld [vmem:[%s218 + $0x64] sm:$0xf]
        %v258 = vld [vmem:[%s218 + $0x68] sm:$0xf]
        %v259 = vld [vmem:[%s218 + $0x6c] sm:$0xf]
        %v260 = vld [vmem:[%s218 + $0x70] sm:$0xf]
        %v261 = vld [vmem:[%s218 + $0x74] sm:$0xf]
        %v262 = vld [vmem:[%s218 + $0x78] sm:$0xf]
        %v263 = vld [vmem:[%s218 + $0x7c] sm:$0xf]
        %v264 = vld [vmem:[#allocation2] sm:$0xff]
        %v265 = vld [vmem:[#allocation2 + $0x8] sm:$0xff]
        %v266 = vld [vmem:[#allocation2 + $0x10] sm:$0xff]
        %v267 = vld [vmem:[#allocation2 + $0x18] sm:$0xff]
        %v268 = vld [vmem:[#allocation2 + $0x20] sm:$0xff]
        %v269 = vld [vmem:[#allocation2 + $0x28] sm:$0xff]
        %v270 = vld [vmem:[#allocation2 + $0x30] sm:$0xff]
        %v271 = vld [vmem:[#allocation2 + $0x38] sm:$0xff]
        %v272 = vld [vmem:[#allocation2 + $0x40] sm:$0xff]
        %v273 = vld [vmem:[#allocation2 + $0x48] sm:$0xff]
        %v274 = vld [vmem:[#allocation2 + $0x50] sm:$0xff]
        %v275 = vld [vmem:[#allocation2 + $0x58] sm:$0xff]
        %v276 = vld [vmem:[#allocation2 + $0x60] sm:$0xff]
        %v277 = vld [vmem:[#allocation2 + $0x68] sm:$0xff]
        %v278 = vld [vmem:[#allocation2 + $0x70] sm:$0xff]
        %v279 = vld [vmem:[#allocation2 + $0x78] sm:$0xff]
        %v312 = vunpack.c.l.b16 %v232
        %v313 = vunpack.c.l.b16 %v233
        %v314 = vunpack.c.l.b16 %v234
        %v315 = vunpack.c.l.b16 %v235
        %v316 = vunpack.c.l.b16 %v236
        %v317 = vunpack.c.l.b16 %v237
        %v318 = vunpack.c.l.b16 %v238
        %v319 = vunpack.c.l.b16 %v239
        %v320 = vunpack.c.l.b16 %v240
        %v321 = vunpack.c.l.b16 %v241
        %v322 = vunpack.c.l.b16 %v242
        %v323 = vunpack.c.l.b16 %v243
        %v324 = vunpack.c.l.b16 %v244
        %v325 = vunpack.c.l.b16 %v245
        %v326 = vunpack.c.l.b16 %v246
        %v327 = vunpack.c.l.b16 %v247
        %v328 = vunpack.c.l.b16 %v248
        %v329 = vunpack.c.l.b16 %v249
        %v330 = vunpack.c.l.b16 %v250
        %v331 = vunpack.c.l.b16 %v251
        %v332 = vunpack.c.l.b16 %v252
        %v333 = vunpack.c.l.b16 %v253
        %v334 = vunpack.c.l.b16 %v254
        %v335 = vunpack.c.l.b16 %v255
        %v336 = vunpack.c.l.b16 %v256
        %v337 = vunpack.c.l.b16 %v257
        %v338 = vunpack.c.l.b16 %v258
        %v339 = vunpack.c.l.b16 %v259
        %v340 = vunpack.c.l.b16 %v260
        %v341 = vunpack.c.l.b16 %v261
        %v342 = vunpack.c.l.b16 %v262
        %v343 = vunpack.c.l.b16 %v263
        %v344 = vpack.c.b16 %v313, %v312
        %v345 = vpack.c.b16 %v315, %v314
        %v346 = vpack.c.b16 %v317, %v316
        %v347 = vpack.c.b16 %v319, %v318
        %v348 = vpack.c.b16 %v321, %v320
        %v349 = vpack.c.b16 %v323, %v322
        %v350 = vpack.c.b16 %v325, %v324
        %v351 = vpack.c.b16 %v327, %v326
        %v352 = vpack.c.b16 %v329, %v328
        %v353 = vpack.c.b16 %v331, %v330
        %v354 = vpack.c.b16 %v333, %v332
        %v355 = vpack.c.b16 %v335, %v334
        %v356 = vpack.c.b16 %v337, %v336
        %v357 = vpack.c.b16 %v339, %v338
        %v358 = vpack.c.b16 %v341, %v340
        %v359 = vpack.c.b16 %v343, %v342
        %v392 = vunpack.c.l.b16 %v264
        %v393 = vunpack.c.h.b16 %v264
        %v394 = vunpack.c.l.b16 %v265
        %v395 = vunpack.c.h.b16 %v265
        %v396 = vunpack.c.l.b16 %v266
        %v397 = vunpack.c.h.b16 %v266
        %v398 = vunpack.c.l.b16 %v267
        %v399 = vunpack.c.h.b16 %v267
        %v400 = vunpack.c.l.b16 %v268
        %v401 = vunpack.c.h.b16 %v268
        %v402 = vunpack.c.l.b16 %v269
        %v403 = vunpack.c.h.b16 %v269
        %v404 = vunpack.c.l.b16 %v270
        %v405 = vunpack.c.h.b16 %v270
        %v406 = vunpack.c.l.b16 %v271
        %v407 = vunpack.c.h.b16 %v271
        %v408 = vunpack.c.l.b16 %v272
        %v409 = vunpack.c.h.b16 %v272
        %v410 = vunpack.c.l.b16 %v273
        %v411 = vunpack.c.h.b16 %v273
        %v412 = vunpack.c.l.b16 %v274
        %v413 = vunpack.c.h.b16 %v274
        %v414 = vunpack.c.l.b16 %v275
        %v415 = vunpack.c.h.b16 %v275
        %v416 = vunpack.c.l.b16 %v276
        %v417 = vunpack.c.h.b16 %v276
        %v418 = vunpack.c.l.b16 %v277
        %v419 = vunpack.c.h.b16 %v277
        %v420 = vunpack.c.l.b16 %v278
        %v421 = vunpack.c.h.b16 %v278
        %v422 = vunpack.c.l.b16 %v279
        %v423 = vunpack.c.h.b16 %v279
        %v424 = vpack.c.b16 %v394, %v392
        %v425 = vpack.c.b16 %v395, %v393
        %v426 = vpack.c.b16 %v398, %v396
        %v427 = vpack.c.b16 %v399, %v397
        %v428 = vpack.c.b16 %v402, %v400
        %v429 = vpack.c.b16 %v403, %v401
        %v430 = vpack.c.b16 %v406, %v404
        %v431 = vpack.c.b16 %v407, %v405
        %v432 = vpack.c.b16 %v410, %v408
        %v433 = vpack.c.b16 %v411, %v409
        %v434 = vpack.c.b16 %v414, %v412
        %v435 = vpack.c.b16 %v415, %v413
        %v436 = vpack.c.b16 %v418, %v416
        %v437 = vpack.c.b16 %v419, %v417
        %v438 = vpack.c.b16 %v422, %v420
        %v439 = vpack.c.b16 %v423, %v421
        %456 = vmatpush.bf16.msra.mxu0 %v438
        %457 = vmatpush.bf16.msra.mxu0 %v436
        %458 = vmatpush.bf16.msra.mxu0 %v434
        %459 = vmatpush.bf16.msra.mxu0 %v432
        %460 = vmatpush.bf16.msra.mxu0 %v430
        %461 = vmatpush.bf16.msra.mxu0 %v428
        %462 = vmatpush.bf16.msra.mxu0 %v426
        %463 = vmatpush.bf16.msra.mxu0 %v424
        %464 = vmatmul.bf16.gmra.mxu0 %v344
        %v465 = vpop.f32.mrf.mxu0
        %v466 = vadd.f32 0.0, %v465
        %v467 = vpop.f32.mrf.mxu0
        %v468 = vadd.f32 0.0, %v467
        %469 = vmatmul.bf16.gmra.mxu0 %v345
        %v470 = vpop.f32.mrf.mxu0
        %v471 = vadd.f32 0.0, %v470
        %v472 = vpop.f32.mrf.mxu0
        %v473 = vadd.f32 0.0, %v472
        %474 = vmatmul.bf16.gmra.mxu0 %v346
        %v475 = vpop.f32.mrf.mxu0
        %v476 = vadd.f32 0.0, %v475
        %v477 = vpop.f32.mrf.mxu0
        %v478 = vadd.f32 0.0, %v477
        %479 = vmatmul.bf16.gmra.mxu0 %v347
        %v480 = vpop.f32.mrf.mxu0
        %v481 = vadd.f32 0.0, %v480
        %v482 = vpop.f32.mrf.mxu0
        %v483 = vadd.f32 0.0, %v482
        %484 = vmatmul.bf16.gmra.mxu0 %v348
        %v485 = vpop.f32.mrf.mxu0
        %v486 = vadd.f32 0.0, %v485
        %v487 = vpop.f32.mrf.mxu0
        %v488 = vadd.f32 0.0, %v487
        %489 = vmatmul.bf16.gmra.mxu0 %v349
        %v490 = vpop.f32.mrf.mxu0
        %v491 = vadd.f32 0.0, %v490
        %v492 = vpop.f32.mrf.mxu0
        %v493 = vadd.f32 0.0, %v492
        %494 = vmatmul.bf16.gmra.mxu0 %v350
        %v495 = vpop.f32.mrf.mxu0
        %v496 = vadd.f32 0.0, %v495
        %v497 = vpop.f32.mrf.mxu0
        %v498 = vadd.f32 0.0, %v497
        %499 = vmatmul.bf16.gmra.mxu0 %v351
        %v500 = vpop.f32.mrf.mxu0
        %v501 = vadd.f32 0.0, %v500
        %v502 = vpop.f32.mrf.mxu0
        %v503 = vadd.f32 0.0, %v502
        %504 = vmatmul.bf16.gmra.mxu0 %v352
        %v505 = vpop.f32.mrf.mxu0
        %v506 = vadd.f32 0.0, %v505
        %v507 = vpop.f32.mrf.mxu0
        %v508 = vadd.f32 0.0, %v507
        %509 = vmatmul.bf16.gmra.mxu0 %v353
        %v510 = vpop.f32.mrf.mxu0
        %v511 = vadd.f32 0.0, %v510
        %v512 = vpop.f32.mrf.mxu0
        %v513 = vadd.f32 0.0, %v512
        %514 = vmatmul.bf16.gmra.mxu0 %v354
        %v515 = vpop.f32.mrf.mxu0
        %v516 = vadd.f32 0.0, %v515
        %v517 = vpop.f32.mrf.mxu0
        %v518 = vadd.f32 0.0, %v517
        %519 = vmatmul.bf16.gmra.mxu0 %v355
        %v520 = vpop.f32.mrf.mxu0
        %v521 = vadd.f32 0.0, %v520
        %v522 = vpop.f32.mrf.mxu0
        %v523 = vadd.f32 0.0, %v522
        %524 = vmatmul.bf16.gmra.mxu0 %v356
        %v525 = vpop.f32.mrf.mxu0
        %v526 = vadd.f32 0.0, %v525
        %v527 = vpop.f32.mrf.mxu0
        %v528 = vadd.f32 0.0, %v527
        %529 = vmatmul.bf16.gmra.mxu0 %v357
        %v530 = vpop.f32.mrf.mxu0
        %v531 = vadd.f32 0.0, %v530
        %v532 = vpop.f32.mrf.mxu0
        %v533 = vadd.f32 0.0, %v532
        %534 = vmatmul.bf16.gmra.mxu0 %v358
        %v535 = vpop.f32.mrf.mxu0
        %v536 = vadd.f32 0.0, %v535
        %v537 = vpop.f32.mrf.mxu0
        %v538 = vadd.f32 0.0, %v537
        %539 = vmatmul.bf16.gmra.mxu0 %v359
        %v540 = vpop.f32.mrf.mxu0
        %v541 = vadd.f32 0.0, %v540
        %v542 = vpop.f32.mrf.mxu0
        %v543 = vadd.f32 0.0, %v542
        %544 = vdwg.mxu0
        %545 = vmatpush.bf16.msra.mxu0 %v439
        %546 = vmatpush.bf16.msra.mxu0 %v437
        %547 = vmatpush.bf16.msra.mxu0 %v435
        %548 = vmatpush.bf16.msra.mxu0 %v433
        %549 = vmatpush.bf16.msra.mxu0 %v431
        %550 = vmatpush.bf16.msra.mxu0 %v429
        %551 = vmatpush.bf16.msra.mxu0 %v427
        %552 = vmatpush.bf16.msra.mxu0 %v425
        %553 = vmatmul.bf16.gmra.mxu0 %v344
        %v554 = vpop.f32.mrf.mxu0
        %v555 = vadd.f32 0.0, %v554
        %v556 = vpop.f32.mrf.mxu0
        %v557 = vadd.f32 0.0, %v556
        %558 = vmatmul.bf16.gmra.mxu0 %v345
        %v559 = vpop.f32.mrf.mxu0
        %v560 = vadd.f32 0.0, %v559
        %v561 = vpop.f32.mrf.mxu0
        %v562 = vadd.f32 0.0, %v561
        %563 = vmatmul.bf16.gmra.mxu0 %v346
        %v564 = vpop.f32.mrf.mxu0
        %v565 = vadd.f32 0.0, %v564
        %v566 = vpop.f32.mrf.mxu0
        %v567 = vadd.f32 0.0, %v566
        %568 = vmatmul.bf16.gmra.mxu0 %v347
        %v569 = vpop.f32.mrf.mxu0
        %v570 = vadd.f32 0.0, %v569
        %v571 = vpop.f32.mrf.mxu0
        %v572 = vadd.f32 0.0, %v571
        %573 = vmatmul.bf16.gmra.mxu0 %v348
        %v574 = vpop.f32.mrf.mxu0
        %v575 = vadd.f32 0.0, %v574
        %v576 = vpop.f32.mrf.mxu0
        %v577 = vadd.f32 0.0, %v576
        %578 = vmatmul.bf16.gmra.mxu0 %v349
        %v579 = vpop.f32.mrf.mxu0
        %v580 = vadd.f32 0.0, %v579
        %v581 = vpop.f32.mrf.mxu0
        %v582 = vadd.f32 0.0, %v581
        %583 = vmatmul.bf16.gmra.mxu0 %v350
        %v584 = vpop.f32.mrf.mxu0
        %v585 = vadd.f32 0.0, %v584
        %v586 = vpop.f32.mrf.mxu0
        %v587 = vadd.f32 0.0, %v586
        %588 = vmatmul.bf16.gmra.mxu0 %v351
        %v589 = vpop.f32.mrf.mxu0
        %v590 = vadd.f32 0.0, %v589
        %v591 = vpop.f32.mrf.mxu0
        %v592 = vadd.f32 0.0, %v591
        %593 = vmatmul.bf16.gmra.mxu0 %v352
        %v594 = vpop.f32.mrf.mxu0
        %v595 = vadd.f32 0.0, %v594
        %v596 = vpop.f32.mrf.mxu0
        %v597 = vadd.f32 0.0, %v596
        %598 = vmatmul.bf16.gmra.mxu0 %v353
        %v599 = vpop.f32.mrf.mxu0
        %v600 = vadd.f32 0.0, %v599
        %v601 = vpop.f32.mrf.mxu0
        %v602 = vadd.f32 0.0, %v601
        %603 = vmatmul.bf16.gmra.mxu0 %v354
        %v604 = vpop.f32.mrf.mxu0
        %v605 = vadd.f32 0.0, %v604
        %v606 = vpop.f32.mrf.mxu0
        %v607 = vadd.f32 0.0, %v606
        %608 = vmatmul.bf16.gmra.mxu0 %v355
        %v609 = vpop.f32.mrf.mxu0
        %v610 = vadd.f32 0.0, %v609
        %v611 = vpop.f32.mrf.mxu0
        %v612 = vadd.f32 0.0, %v611
        %613 = vmatmul.bf16.gmra.mxu0 %v356
        %v614 = vpop.f32.mrf.mxu0
        %v615 = vadd.f32 0.0, %v614
        %v616 = vpop.f32.mrf.mxu0
        %v617 = vadd.f32 0.0, %v616
        %618 = vmatmul.bf16.gmra.mxu0 %v357
        %v619 = vpop.f32.mrf.mxu0
        %v620 = vadd.f32 0.0, %v619
        %v621 = vpop.f32.mrf.mxu0
        %v622 = vadd.f32 0.0, %v621
        %623 = vmatmul.bf16.gmra.mxu0 %v358
        %v624 = vpop.f32.mrf.mxu0
        %v625 = vadd.f32 0.0, %v624
        %v626 = vpop.f32.mrf.mxu0
        %v627 = vadd.f32 0.0, %v626
        %628 = vmatmul.bf16.gmra.mxu0 %v359
        %v629 = vpop.f32.mrf.mxu0
        %v630 = vadd.f32 0.0, %v629
        %v631 = vpop.f32.mrf.mxu0
        %v632 = vadd.f32 0.0, %v631
        %633 = vdwg.mxu0
        %v634 = vld [vmem:[%s2] sm:$0x1]
        %v636 = vperm.slane %v634, 0
        %v638 = vadd.f32 %v466, %v636
        %v639 = vadd.f32 %v468, %v636
        %v640 = vadd.f32 %v471, %v636
        %v641 = vadd.f32 %v473, %v636
        %v642 = vadd.f32 %v476, %v636
        %v643 = vadd.f32 %v478, %v636
        %v644 = vadd.f32 %v481, %v636
        %v645 = vadd.f32 %v483, %v636
        %v646 = vadd.f32 %v486, %v636
        %v647 = vadd.f32 %v488, %v636
        %v648 = vadd.f32 %v491, %v636
        %v649 = vadd.f32 %v493, %v636
        %v650 = vadd.f32 %v496, %v636
        %v651 = vadd.f32 %v498, %v636
        %v652 = vadd.f32 %v501, %v636
        %v653 = vadd.f32 %v503, %v636
        %v654 = vadd.f32 %v506, %v636
        %v655 = vadd.f32 %v508, %v636
        %v656 = vadd.f32 %v511, %v636
        %v657 = vadd.f32 %v513, %v636
        %v658 = vadd.f32 %v516, %v636
        %v659 = vadd.f32 %v518, %v636
        %v660 = vadd.f32 %v521, %v636
        %v661 = vadd.f32 %v523, %v636
        %v662 = vadd.f32 %v526, %v636
        %v663 = vadd.f32 %v528, %v636
        %v664 = vadd.f32 %v531, %v636
        %v665 = vadd.f32 %v533, %v636
        %v666 = vadd.f32 %v536, %v636
        %v667 = vadd.f32 %v538, %v636
        %v668 = vadd.f32 %v541, %v636
        %v669 = vadd.f32 %v543, %v636
        %v670 = vpack.c.bf16 %v638, %v638
        %v671 = vpack.c.bf16 %v639, %v639
        %v672 = vpack.c.bf16 %v640, %v640
        %v673 = vpack.c.bf16 %v641, %v641
        %v674 = vpack.c.bf16 %v642, %v642
        %v675 = vpack.c.bf16 %v643, %v643
        %v676 = vpack.c.bf16 %v644, %v644
        %v677 = vpack.c.bf16 %v645, %v645
        %v678 = vpack.c.bf16 %v646, %v646
        %v679 = vpack.c.bf16 %v647, %v647
        %v680 = vpack.c.bf16 %v648, %v648
        %v681 = vpack.c.bf16 %v649, %v649
        %v682 = vpack.c.bf16 %v650, %v650
        %v683 = vpack.c.bf16 %v651, %v651
        %v684 = vpack.c.bf16 %v652, %v652
        %v685 = vpack.c.bf16 %v653, %v653
        %v686 = vpack.c.bf16 %v654, %v654
        %v687 = vpack.c.bf16 %v655, %v655
        %v688 = vpack.c.bf16 %v656, %v656
        %v689 = vpack.c.bf16 %v657, %v657
        %v690 = vpack.c.bf16 %v658, %v658
        %v691 = vpack.c.bf16 %v659, %v659
        %v692 = vpack.c.bf16 %v660, %v660
        %v693 = vpack.c.bf16 %v661, %v661
        %v694 = vpack.c.bf16 %v662, %v662
        %v695 = vpack.c.bf16 %v663, %v663
        %v696 = vpack.c.bf16 %v664, %v664
        %v697 = vpack.c.bf16 %v665, %v665
        %v698 = vpack.c.bf16 %v666, %v666
        %v699 = vpack.c.bf16 %v667, %v667
        %v700 = vpack.c.bf16 %v668, %v668
        %v701 = vpack.c.bf16 %v669, %v669
        %702 = vst [vmem:[%s224] sm:$0xf] %v670
        %703 = vst [vmem:[%s224 + $0x4] sm:$0xf] %v671
        %704 = vst [vmem:[%s224 + $0x8] sm:$0xf] %v672
        %705 = vst [vmem:[%s224 + $0xc] sm:$0xf] %v673
        %706 = vst [vmem:[%s224 + $0x10] sm:$0xf] %v674
        %707 = vst [vmem:[%s224 + $0x14] sm:$0xf] %v675
        %708 = vst [vmem:[%s224 + $0x18] sm:$0xf] %v676
        %709 = vst [vmem:[%s224 + $0x1c] sm:$0xf] %v677
        %710 = vst [vmem:[%s224 + $0x20] sm:$0xf] %v678
        %711 = vst [vmem:[%s224 + $0x24] sm:$0xf] %v679
        %712 = vst [vmem:[%s224 + $0x28] sm:$0xf] %v680
        %713 = vst [vmem:[%s224 + $0x2c] sm:$0xf] %v681
        %714 = vst [vmem:[%s224 + $0x30] sm:$0xf] %v682
        %715 = vst [vmem:[%s224 + $0x34] sm:$0xf] %v683
        %716 = vst [vmem:[%s224 + $0x38] sm:$0xf] %v684
        %717 = vst [vmem:[%s224 + $0x3c] sm:$0xf] %v685
        %718 = vst [vmem:[%s224 + $0x40] sm:$0xf] %v686
        %719 = vst [vmem:[%s224 + $0x44] sm:$0xf] %v687
        %720 = vst [vmem:[%s224 + $0x48] sm:$0xf] %v688
        %721 = vst [vmem:[%s224 + $0x4c] sm:$0xf] %v689
        %722 = vst [vmem:[%s224 + $0x50] sm:$0xf] %v690
        %723 = vst [vmem:[%s224 + $0x54] sm:$0xf] %v691
        %724 = vst [vmem:[%s224 + $0x58] sm:$0xf] %v692
        %725 = vst [vmem:[%s224 + $0x5c] sm:$0xf] %v693
        %726 = vst [vmem:[%s224 + $0x60] sm:$0xf] %v694
        %727 = vst [vmem:[%s224 + $0x64] sm:$0xf] %v695
        %728 = vst [vmem:[%s224 + $0x68] sm:$0xf] %v696
        %729 = vst [vmem:[%s224 + $0x6c] sm:$0xf] %v697
        %730 = vst [vmem:[%s224 + $0x70] sm:$0xf] %v698
        %731 = vst [vmem:[%s224 + $0x74] sm:$0xf] %v699
        %732 = vst [vmem:[%s224 + $0x78] sm:$0xf] %v700
        %733 = vst [vmem:[%s224 + $0x7c] sm:$0xf] %v701
        %v734 = vpack.c.bf16 %v555, %v555
        %v735 = vpack.c.bf16 %v557, %v557
        %v736 = vpack.c.bf16 %v560, %v560
        %v737 = vpack.c.bf16 %v562, %v562
        %v738 = vpack.c.bf16 %v565, %v565
        %v739 = vpack.c.bf16 %v567, %v567
        %v740 = vpack.c.bf16 %v570, %v570
        %v741 = vpack.c.bf16 %v572, %v572
        %v742 = vpack.c.bf16 %v575, %v575
        %v743 = vpack.c.bf16 %v577, %v577
        %v744 = vpack.c.bf16 %v580, %v580
        %v745 = vpack.c.bf16 %v582, %v582
        %v746 = vpack.c.bf16 %v585, %v585
        %v747 = vpack.c.bf16 %v587, %v587
        %v748 = vpack.c.bf16 %v590, %v590
        %v749 = vpack.c.bf16 %v592, %v592
        %v750 = vpack.c.bf16 %v595, %v595
        %v751 = vpack.c.bf16 %v597, %v597
        %v752 = vpack.c.bf16 %v600, %v600
        %v753 = vpack.c.bf16 %v602, %v602
        %v754 = vpack.c.bf16 %v605, %v605
        %v755 = vpack.c.bf16 %v607, %v607
        %v756 = vpack.c.bf16 %v610, %v610
        %v757 = vpack.c.bf16 %v612, %v612
        %v758 = vpack.c.bf16 %v615, %v615
        %v759 = vpack.c.bf16 %v617, %v617
        %v760 = vpack.c.bf16 %v620, %v620
        %v761 = vpack.c.bf16 %v622, %v622
        %v762 = vpack.c.bf16 %v625, %v625
        %v763 = vpack.c.bf16 %v627, %v627
        %v764 = vpack.c.bf16 %v630, %v630
        %v765 = vpack.c.bf16 %v632, %v632
        %766 = vst [vmem:[%s230] sm:$0xf] %v734
        %767 = vst [vmem:[%s230 + $0x4] sm:$0xf] %v735
        %768 = vst [vmem:[%s230 + $0x8] sm:$0xf] %v736
        %769 = vst [vmem:[%s230 + $0xc] sm:$0xf] %v737
        %770 = vst [vmem:[%s230 + $0x10] sm:$0xf] %v738
        %771 = vst [vmem:[%s230 + $0x14] sm:$0xf] %v739
        %772 = vst [vmem:[%s230 + $0x18] sm:$0xf] %v740
        %773 = vst [vmem:[%s230 + $0x1c] sm:$0xf] %v741
        %774 = vst [vmem:[%s230 + $0x20] sm:$0xf] %v742
        %775 = vst [vmem:[%s230 + $0x24] sm:$0xf] %v743
        %776 = vst [vmem:[%s230 + $0x28] sm:$0xf] %v744
        %777 = vst [vmem:[%s230 + $0x2c] sm:$0xf] %v745
        %778 = vst [vmem:[%s230 + $0x30] sm:$0xf] %v746
        %779 = vst [vmem:[%s230 + $0x34] sm:$0xf] %v747
        %780 = vst [vmem:[%s230 + $0x38] sm:$0xf] %v748
        %781 = vst [vmem:[%s230 + $0x3c] sm:$0xf] %v749
        %782 = vst [vmem:[%s230 + $0x40] sm:$0xf] %v750
        %783 = vst [vmem:[%s230 + $0x44] sm:$0xf] %v751
        %784 = vst [vmem:[%s230 + $0x48] sm:$0xf] %v752
        %785 = vst [vmem:[%s230 + $0x4c] sm:$0xf] %v753
        %786 = vst [vmem:[%s230 + $0x50] sm:$0xf] %v754
        %787 = vst [vmem:[%s230 + $0x54] sm:$0xf] %v755
        %788 = vst [vmem:[%s230 + $0x58] sm:$0xf] %v756
        %789 = vst [vmem:[%s230 + $0x5c] sm:$0xf] %v757
        %790 = vst [vmem:[%s230 + $0x60] sm:$0xf] %v758
        %791 = vst [vmem:[%s230 + $0x64] sm:$0xf] %v759
        %792 = vst [vmem:[%s230 + $0x68] sm:$0xf] %v760
        %793 = vst [vmem:[%s230 + $0x6c] sm:$0xf] %v761
        %794 = vst [vmem:[%s230 + $0x70] sm:$0xf] %v762
        %795 = vst [vmem:[%s230 + $0x74] sm:$0xf] %v763
        %796 = vst [vmem:[%s230 + $0x78] sm:$0xf] %v764
        %797 = vst [vmem:[%s230 + $0x7c] sm:$0xf] %v765
        %s798 = smul.u32 32, %s17
        %p799 = scmp.lt.s32.totalorder %s798, 63
        %s800 = scalar_select %p799, %s798, 63
        %s801 = smul.addr %s800, 4
        %s802 = scalar_lea.vmem %s3, %s801
        %s803 = smul.u32 32, %s17
        %p804 = scmp.lt.s32.totalorder %s803, 63
        %s805 = scalar_select %p804, %s803, 63
        %s806 = smul.addr %s805, 4
        %s807 = scalar_lea.vmem %s4, %s806
        // Predicated region
        $region37: #{graphsage_forward.7} parent=31 // pred_check
          %p808 = pneg %p103
        $region38: #{graphsage_forward.7} parent=31 // pred_check_branch
          %810 = sbr.rel (%p808) target = $region40
        $region39: #{graphsage_forward.7} parent=31 // pred_region
          %s811 = smul.u32 32, %s17
        $region40: #{graphsage_forward.7} parent=31 // pred_fallthru
          _
        // Predicated region
        $region41: #{graphsage_forward.7} parent=31 // pred_check
          %p812 = pneg %p129
        $region42: #{graphsage_forward.7} parent=31 // pred_check_branch
          %814 = sbr.rel (%p812) target = $region44
        $region43: #{graphsage_forward.7} parent=31 // pred_region
          %s815 = smul.u32 32, %s17
        $region44: #{graphsage_forward.7} parent=31 // pred_fallthru
          _
      $region32: #{graphsage_forward.7} parent=5 // pred_fallthru
        _
      %p816 = scmp.le.s32.totalorder 2, %s12
      // Predicated region
      $region45: #{graphsage_forward.7} parent=5 // pred_check
        %p817 = pneg %p816
      $region46: #{graphsage_forward.7} parent=5 // pred_check_branch
        %819 = sbr.rel (%p817) target = $region48
      $region47: #{graphsage_forward.7} parent=5 // pred_region
        %s820 = ssub.s32 %s12, 2
        // Predicated region
        $region49: #{graphsage_forward.7} parent=47 // pred_check
          %p821 = pneg %p109
        $region50: #{graphsage_forward.7} parent=47 // pred_check_branch
          %823 = sbr.rel (%p821) target = $region52
        $region51: #{graphsage_forward.7} parent=47 // pred_region
          %s824 = smul.u32 32, %s18
          %p825 = scmp.lt.s32.totalorder %s824, 63
          %s826 = scalar_select %p825, %s824, 63
          %s827 = smul.addr %s826, 4
          %s828 = scalar_lea.vmem %s3, %s827
        $region52: #{graphsage_forward.7} parent=47 // pred_fallthru
          _
        // Predicated region
        $region53: #{graphsage_forward.7} parent=47 // pred_check
          %p829 = pneg %p135
        $region54: #{graphsage_forward.7} parent=47 // pred_check_branch
          %831 = sbr.rel (%p829) target = $region56
        $region55: #{graphsage_forward.7} parent=47 // pred_region
          %s832 = smul.u32 32, %s18
          %p833 = scmp.lt.s32.totalorder %s832, 63
          %s834 = scalar_select %p833, %s832, 63
          %s835 = smul.addr %s834, 4
          %s836 = scalar_lea.vmem %s4, %s835
        $region56: #{graphsage_forward.7} parent=47 // pred_fallthru
          _
      $region48: #{graphsage_forward.7} parent=5 // pred_fallthru
        _
    $region6: #{graphsage_forward.7} parent=1 // loop_footer
      %s16 = sadd.s32 1, %s12
    $region7: #{graphsage_forward.7} parent=1 // loop_footer_branch
      %11 = sbr.rel target = $region3
    $region8: #{graphsage_forward.7} parent=1 // loop_exit
      _
    %837 = vsyncpa [#allocation3], 1
    %s838 = scalar_lea.sflag [#allocation3], 1
    %839 = vsyncpa %s838, 1

// kernel: graphsage_forward.9
$region0: #{graphsage_forward.9}
  #allocation0 [shape = 'u32[]', space=smem, size = 0x4, offset = 0x4, fixed_abs, tag = 'smem constant byte address 0x4 - core index']
  #allocation1 [shape = 'u32[72,128]{1,0:T(1,128)}', space=vmem, size = 0x9000, scoped, tag = 'internal scratch']
  %s0 = inlined_call_operand.vmem [shape: bf16[512,128], index: 0, kind: input, shape index: {}]
  %s1 = inlined_call_operand.vmem [shape: bf16[512,128], index: 1, kind: input, shape index: {}]
  %s2 = inlined_call_operand.hbm [shape: bf16[128,640], index: 2, kind: input, shape index: {}]
  %s3 = inlined_call_operand.hbm [shape: bf16[128,640], index: 3, kind: input, shape index: {}]
  %s4 = inlined_call_operand.vmem [shape: f32[512,128], index: 4, kind: output, shape index: {}]
  %s5 = sld [smem:[#allocation0]]
  $region57: #{graphsage_forward.9} parent=0
    _
  %s7 = ssub.s32 1, %s5
  %s8 = scalar_select 0, %s7, %s5
  $region1: #{graphsage_forward.9} parent=0
    #allocation2 [shape = 'u8[163840]{0}', space=vmem, size = 0x28000, scoped, tag = 'input window, operand 2, single buffered']
    #allocation3 [shape = 's32[2]{0}', space=sflag, size = 0x8, scoped, tag = 'scoped memory for graphsage_forward.9']
    #allocation4 [shape = 'u8[163840]{0}', space=vmem, size = 0x28000, scoped, tag = 'input window, operand 3, single buffered']
    #allocation5 [shape = 's32[1]{0}', space=sflag, size = 0x4, scoped, tag = 'scoped memory for graphsage_forward.9']
    %9 = vsyncpa [#allocation3], 0
    %10 = vsyncpa [#allocation5], 0
    loop: start=0, step=1, limit=4
    $region2: #{graphsage_forward.9} parent=1 // loop_pre_header
      _
    $region3: #{graphsage_forward.9} parent=1 // loop_header
      %s12 = sphi 0, %s16
      %p13 = scmp.ge.s32.totalorder %s12, 4
      %s22 = sphi 0, %s24
      %s25 = sphi 0, %s22
      %s26 = sphi 0, %s25
      %s42 = sphi 0, %s26
      %s48 = sphi 0, %s50
      %s51 = sphi 0, %s48
      %s52 = sphi 0, %s51
      %s68 = sphi 0, %s52
      %s72 = sphi 0, %s72
      %s74 = sphi 0, %s72
      %s75 = sphi 0, %s74
      %s89 = sphi 0, %s75
      %s93 = sphi 0, %s93
      %s95 = sphi 0, %s93
      %s96 = sphi 0, %s95
      %s110 = sphi 0, %s96
      %s116 = sphi 0, %s118
      %s119 = sphi 0, %s116
      %s120 = sphi 0, %s119
      %s136 = sphi 0, %s120
    $region4: #{graphsage_forward.9} parent=1 // loop_header_branch
      %15 = sbr.rel (%p13) target = $region8
    $region5: #{graphsage_forward.9} parent=1 // loop_body
      %s17 = ssub.s32 %s12, 1
      %s18 = ssub.s32 %s12, 2
      %s19 = sadd.s32 %s12, 1
      %s20 = ssub.s32 %s12, %s19
      %p21 = scmp.eq.s32.totalorder %s20, 0
      %s23 = sadd.s32 %s22, 1
      %s24 = scalar_select %p21, %s22, %s23
      %p27 = pneg %p21
      %p28 = scmp.eq.s32.totalorder %s12, 1
      %p29 = por %p27, %p28
      %p30 = scmp.ne.s32.totalorder %s22, %s25
      %p31 = scmp.eq.s32.totalorder %s12, 0
      %p32 = por %p30, %p31
      %p33 = scmp.ne.s32.totalorder %s22, %s25
      %p34 = scmp.eq.s32.totalorder %s17, 1
      %p35 = por %p33, %p34
      %p36 = scmp.ne.s32.totalorder %s25, %s26
      %p37 = scmp.eq.s32.totalorder %s17, 0
      %p38 = por %p36, %p37
      %p39 = scmp.ne.s32.totalorder %s25, %s26
      %p40 = scmp.eq.s32.totalorder %s18, 1
      %p41 = por %p39, %p40
      %p43 = scmp.ne.s32.totalorder %s26, %s42
      %p44 = scmp.eq.s32.totalorder %s18, 0
      %p45 = por %p43, %p44
      %s46 = ssub.s32 %s12, %s19
      %p47 = scmp.eq.s32.totalorder %s46, 0
      %s49 = sadd.s32 %s48, 1
      %s50 = scalar_select %p47, %s48, %s49
      %p53 = pneg %p47
      %p54 = scmp.eq.s32.totalorder %s12, 1
      %p55 = por %p53, %p54
      %p56 = scmp.ne.s32.totalorder %s48, %s51
      %p57 = scmp.eq.s32.totalorder %s12, 0
      %p58 = por %p56, %p57
      %p59 = scmp.ne.s32.totalorder %s48, %s51
      %p60 = scmp.eq.s32.totalorder %s17, 1
      %p61 = por %p59, %p60
      %p62 = scmp.ne.s32.totalorder %s51, %s52
      %p63 = scmp.eq.s32.totalorder %s17, 0
      %p64 = por %p62, %p63
      %p65 = scmp.ne.s32.totalorder %s51, %s52
      %p66 = scmp.eq.s32.totalorder %s18, 1
      %p67 = por %p65, %p66
      %p69 = scmp.ne.s32.totalorder %s52, %s68
      %p70 = scmp.eq.s32.totalorder %s18, 0
      %p71 = por %p69, %p70
      %s73 = sadd.s32 %s72, 1
      %p76 = scmp.eq.s32.totalorder %s12, 1
      %p77 = scmp.ne.s32.totalorder %s72, %s74
      %p78 = scmp.eq.s32.totalorder %s12, 0
      %p79 = por %p77, %p78
      %p80 = scmp.ne.s32.totalorder %s72, %s74
      %p81 = scmp.eq.s32.totalorder %s17, 1
      %p82 = por %p80, %p81
      %p83 = scmp.ne.s32.totalorder %s74, %s75
      %p84 = scmp.eq.s32.totalorder %s17, 0
      %p85 = por %p83, %p84
      %p86 = scmp.ne.s32.totalorder %s74, %s75
      %p87 = scmp.eq.s32.totalorder %s18, 1
      %p88 = por %p86, %p87
      %p90 = scmp.ne.s32.totalorder %s75, %s89
      %p91 = scmp.eq.s32.totalorder %s18, 0
      %p92 = por %p90, %p91
      %s94 = sadd.s32 %s93, 1
      %p97 = scmp.eq.s32.totalorder %s12, 1
      %p98 = scmp.ne.s32.totalorder %s93, %s95
      %p99 = scmp.eq.s32.totalorder %s12, 0
      %p100 = por %p98, %p99
      %p101 = scmp.ne.s32.totalorder %s93, %s95
      %p102 = scmp.eq.s32.totalorder %s17, 1
      %p103 = por %p101, %p102
      %p104 = scmp.ne.s32.totalorder %s95, %s96
      %p105 = scmp.eq.s32.totalorder %s17, 0
      %p106 = por %p104, %p105
      %p107 = scmp.ne.s32.totalorder %s95, %s96
      %p108 = scmp.eq.s32.totalorder %s18, 1
      %p109 = por %p107, %p108
      %p111 = scmp.ne.s32.totalorder %s96, %s110
      %p112 = scmp.eq.s32.totalorder %s18, 0
      %p113 = por %p111, %p112
      %s114 = ssub.s32 %s12, %s19
      %p115 = scmp.eq.s32.totalorder %s114, 0
      %s117 = sadd.s32 %s116, 1
      %s118 = scalar_select %p115, %s116, %s117
      %p121 = pneg %p115
      %p122 = scmp.eq.s32.totalorder %s12, 1
      %p123 = por %p121, %p122
      %p124 = scmp.ne.s32.totalorder %s116, %s119
      %p125 = scmp.eq.s32.totalorder %s12, 0
      %p126 = por %p124, %p125
      %p127 = scmp.ne.s32.totalorder %s116, %s119
      %p128 = scmp.eq.s32.totalorder %s17, 1
      %p129 = por %p127, %p128
      %p130 = scmp.ne.s32.totalorder %s119, %s120
      %p131 = scmp.eq.s32.totalorder %s17, 0
      %p132 = por %p130, %p131
      %p133 = scmp.ne.s32.totalorder %s119, %s120
      %p134 = scmp.eq.s32.totalorder %s18, 1
      %p135 = por %p133, %p134
      %p137 = scmp.ne.s32.totalorder %s120, %s136
      %p138 = scmp.eq.s32.totalorder %s18, 0
      %p139 = por %p137, %p138
      %p140 = scmp.le.s32.totalorder 1, %s12
      %p141 = scmp.lt.s32.totalorder %s12, 3
      %p142 = pnand %p140, %p141
      %p143 = pneg %p142
      // Predicated region
      $region9: #{graphsage_forward.9} parent=5 // pred_check
        _
      $region10: #{graphsage_forward.9} parent=5 // pred_check_branch
        %145 = sbr.rel (%p142) target = $region12
      $region11: #{graphsage_forward.9} parent=5 // pred_region
        %s146 = ssub.s32 %s12, 1
        // Predicated region
        $region13: #{graphsage_forward.9} parent=11 // pred_check
          %p147 = pneg %p85
        $region14: #{graphsage_forward.9} parent=11 // pred_check_branch
          %149 = sbr.rel (%p147) target = $region16
        $region15: #{graphsage_forward.9} parent=11 // pred_region
          %151 = vsyncadd [#allocation3], 0
          %s152 = sshll.u32 %s2, 4
          %s153 = int_to_ptr.hbm [resolvable:$true] %s152
          %s154 = sshll.u32 [#allocation2], 4
          %s155 = int_to_ptr.vmem [resolvable:$true] %s154
          %160 = dma.hbm_to_vmem [thread:$0]  %s153, 5120, %s155, [#allocation3], 320, 320, 20
        $region16: #{graphsage_forward.9} parent=11 // pred_fallthru
          _
        // Predicated region
        $region17: #{graphsage_forward.9} parent=11 // pred_check
          %p161 = pneg %p106
        $region18: #{graphsage_forward.9} parent=11 // pred_check_branch
          %163 = sbr.rel (%p161) target = $region20
        $region19: #{graphsage_forward.9} parent=11 // pred_region
          %165 = vsyncadd [#allocation5], 0
          %s166 = sshll.u32 %s3, 4
          %s167 = int_to_ptr.hbm [resolvable:$true] %s166
          %s168 = sshll.u32 [#allocation4], 4
          %s169 = int_to_ptr.vmem [resolvable:$true] %s168
          %174 = dma.hbm_to_vmem [thread:$0]  %s167, 5120, %s169, [#allocation5], 320, 320, 20
        $region20: #{graphsage_forward.9} parent=11 // pred_fallthru
          _
      $region12: #{graphsage_forward.9} parent=5 // pred_fallthru
        _
      %p175 = scmp.lt.s32.totalorder %s12, 2
      // Predicated region
      $region21: #{graphsage_forward.9} parent=5 // pred_check
        %p176 = pneg %p175
      $region22: #{graphsage_forward.9} parent=5 // pred_check_branch
        %178 = sbr.rel (%p176) target = $region24
      $region23: #{graphsage_forward.9} parent=5 // pred_region
        // Predicated region
        $region25: #{graphsage_forward.9} parent=23 // pred_check
          %p179 = pneg %p32
        $region26: #{graphsage_forward.9} parent=23 // pred_check_branch
          %181 = sbr.rel (%p179) target = $region28
        $region27: #{graphsage_forward.9} parent=23 // pred_region
          %s182 = smul.u32 32, %s12
          %p183 = scmp.lt.s32.totalorder %s182, 63
          %s184 = scalar_select %p183, %s182, 63
          %s185 = smul.addr %s184, 4
          %s186 = scalar_lea.vmem %s0, %s185
          %s187 = smul.u32 32, %s12
        $region28: #{graphsage_forward.9} parent=23 // pred_fallthru
          _
        // Predicated region
        $region29: #{graphsage_forward.9} parent=23 // pred_check
          %p188 = pneg %p58
        $region30: #{graphsage_forward.9} parent=23 // pred_check_branch
          %190 = sbr.rel (%p188) target = $region32
        $region31: #{graphsage_forward.9} parent=23 // pred_region
          %s191 = smul.u32 32, %s12
          %p192 = scmp.lt.s32.totalorder %s191, 63
          %s193 = scalar_select %p192, %s191, 63
          %s194 = smul.addr %s193, 4
          %s195 = scalar_lea.vmem %s1, %s194
          %s196 = smul.u32 32, %s12
        $region32: #{graphsage_forward.9} parent=23 // pred_fallthru
          _
      $region24: #{graphsage_forward.9} parent=5 // pred_fallthru
        _
      %p197 = scmp.le.s32.totalorder 1, %s12
      %p198 = scmp.lt.s32.totalorder %s12, 3
      %p199 = pnand %p197, %p198
      %p200 = pneg %p199
      // Predicated region
      $region33: #{graphsage_forward.9} parent=5 // pred_check
        _
      $region34: #{graphsage_forward.9} parent=5 // pred_check_branch
        %202 = sbr.rel (%p199) target = $region36
      $region35: #{graphsage_forward.9} parent=5 // pred_region
        %s203 = ssub.s32 %s12, 1
        // Predicated region
        $region37: #{graphsage_forward.9} parent=35 // pred_check
          %p204 = pneg %p85
        $region38: #{graphsage_forward.9} parent=35 // pred_check_branch
          %206 = sbr.rel (%p204) target = $region40
        $region39: #{graphsage_forward.9} parent=35 // pred_region
          %208 = dma.done [#allocation3], 5120
        $region40: #{graphsage_forward.9} parent=35 // pred_fallthru
          _
        // Predicated region
        $region41: #{graphsage_forward.9} parent=35 // pred_check
          %p209 = pneg %p106
        $region42: #{graphsage_forward.9} parent=35 // pred_check_branch
          %211 = sbr.rel (%p209) target = $region44
        $region43: #{graphsage_forward.9} parent=35 // pred_region
          %213 = dma.done [#allocation5], 5120
        $region44: #{graphsage_forward.9} parent=35 // pred_fallthru
          _
        %s214 = smul.u32 32, %s17
        %p215 = scmp.lt.s32.totalorder %s214, 63
        %s216 = scalar_select %p215, %s214, 63
        %s217 = smul.addr %s216, 4
        %s218 = scalar_lea.vmem %s0, %s217
        %p219 = pneg %p38
        %p220 = pneg %p35
        %s221 = smul.u32 32, %s17
        %p222 = scmp.lt.s32.totalorder %s221, 63
        %s223 = scalar_select %p222, %s221, 63
        %s224 = smul.addr %s223, 4
        %s225 = scalar_lea.vmem %s1, %s224
        %p226 = pneg %p64
        %p227 = pneg %p61
        %p228 = pneg %p85
        %p229 = pneg %p82
        %p230 = pneg %p106
        %p231 = pneg %p103
        %p232 = pneg %p132
        %p233 = pneg %p129
        %s234 = smul.u32 32, %s17
        %p235 = scmp.lt.s32.totalorder %s234, 63
        %s236 = scalar_select %p235, %s234, 63
        %s237 = smul.addr %s236, 8
        %s238 = scalar_lea.vmem %s4, %s237
        %s239 = smul.u32 32, %s17
        %p240 = scmp.lt.s32.totalorder %s239, 63
        %s241 = scalar_select %p240, %s239, 63
        %s242 = smul.addr %s241, 4
        %s243 = scalar_lea.vmem %s0, %s242
        %s244 = smul.u32 32, %s17
        %s245 = smul.u32 32, %s17
        %p246 = scmp.lt.s32.totalorder %s245, 63
        %s247 = scalar_select %p246, %s245, 63
        %s248 = smul.addr %s247, 4
        %s249 = scalar_lea.vmem %s1, %s248
        %s250 = smul.u32 32, %s17
        %s251 = smul.u32 32, %s17
        %p252 = scmp.lt.s32.totalorder %s251, 63
        %s253 = scalar_select %p252, %s251, 63
        %s254 = smul.addr %s253, 8
        %s255 = scalar_lea.vmem %s4, %s254
        %s256 = smul.u32 32, %s17
        %v257 = vld [vmem:[%s243] sm:$0xf]
        %v258 = vld [vmem:[%s243 + $0x4] sm:$0xf]
        %v259 = vld [vmem:[%s243 + $0x8] sm:$0xf]
        %v260 = vld [vmem:[%s243 + $0xc] sm:$0xf]
        %v261 = vld [vmem:[%s243 + $0x10] sm:$0xf]
        %v262 = vld [vmem:[%s243 + $0x14] sm:$0xf]
        %v263 = vld [vmem:[%s243 + $0x18] sm:$0xf]
        %v264 = vld [vmem:[%s243 + $0x1c] sm:$0xf]
        %v265 = vld [vmem:[%s243 + $0x20] sm:$0xf]
        %v266 = vld [vmem:[%s243 + $0x24] sm:$0xf]
        %v267 = vld [vmem:[%s243 + $0x28] sm:$0xf]
        %v268 = vld [vmem:[%s243 + $0x2c] sm:$0xf]
        %v269 = vld [vmem:[%s243 + $0x30] sm:$0xf]
        %v270 = vld [vmem:[%s243 + $0x34] sm:$0xf]
        %v271 = vld [vmem:[%s243 + $0x38] sm:$0xf]
        %v272 = vld [vmem:[%s243 + $0x3c] sm:$0xf]
        %v273 = vld [vmem:[%s243 + $0x40] sm:$0xf]
        %v274 = vld [vmem:[%s243 + $0x44] sm:$0xf]
        %v275 = vld [vmem:[%s243 + $0x48] sm:$0xf]
        %v276 = vld [vmem:[%s243 + $0x4c] sm:$0xf]
        %v277 = vld [vmem:[%s243 + $0x50] sm:$0xf]
        %v278 = vld [vmem:[%s243 + $0x54] sm:$0xf]
        %v279 = vld [vmem:[%s243 + $0x58] sm:$0xf]
        %v280 = vld [vmem:[%s243 + $0x5c] sm:$0xf]
        %v281 = vld [vmem:[%s243 + $0x60] sm:$0xf]
        %v282 = vld [vmem:[%s243 + $0x64] sm:$0xf]
        %v283 = vld [vmem:[%s243 + $0x68] sm:$0xf]
        %v284 = vld [vmem:[%s243 + $0x6c] sm:$0xf]
        %v285 = vld [vmem:[%s243 + $0x70] sm:$0xf]
        %v286 = vld [vmem:[%s243 + $0x74] sm:$0xf]
        %v287 = vld [vmem:[%s243 + $0x78] sm:$0xf]
        %v288 = vld [vmem:[%s243 + $0x7c] sm:$0xf]
        %v289 = vld [vmem:[%s249] sm:$0xf]
        %v290 = vld [vmem:[%s249 + $0x4] sm:$0xf]
        %v291 = vld [vmem:[%s249 + $0x8] sm:$0xf]
        %v292 = vld [vmem:[%s249 + $0xc] sm:$0xf]
        %v293 = vld [vmem:[%s249 + $0x10] sm:$0xf]
        %v294 = vld [vmem:[%s249 + $0x14] sm:$0xf]
        %v295 = vld [vmem:[%s249 + $0x18] sm:$0xf]
        %v296 = vld [vmem:[%s249 + $0x1c] sm:$0xf]
        %v297 = vld [vmem:[%s249 + $0x20] sm:$0xf]
        %v298 = vld [vmem:[%s249 + $0x24] sm:$0xf]
        %v299 = vld [vmem:[%s249 + $0x28] sm:$0xf]
        %v300 = vld [vmem:[%s249 + $0x2c] sm:$0xf]
        %v301 = vld [vmem:[%s249 + $0x30] sm:$0xf]
        %v302 = vld [vmem:[%s249 + $0x34] sm:$0xf]
        %v303 = vld [vmem:[%s249 + $0x38] sm:$0xf]
        %v304 = vld [vmem:[%s249 + $0x3c] sm:$0xf]
        %v305 = vld [vmem:[%s249 + $0x40] sm:$0xf]
        %v306 = vld [vmem:[%s249 + $0x44] sm:$0xf]
        %v307 = vld [vmem:[%s249 + $0x48] sm:$0xf]
        %v308 = vld [vmem:[%s249 + $0x4c] sm:$0xf]
        %v309 = vld [vmem:[%s249 + $0x50] sm:$0xf]
        %v310 = vld [vmem:[%s249 + $0x54] sm:$0xf]
        %v311 = vld [vmem:[%s249 + $0x58] sm:$0xf]
        %v312 = vld [vmem:[%s249 + $0x5c] sm:$0xf]
        %v313 = vld [vmem:[%s249 + $0x60] sm:$0xf]
        %v314 = vld [vmem:[%s249 + $0x64] sm:$0xf]
        %v315 = vld [vmem:[%s249 + $0x68] sm:$0xf]
        %v316 = vld [vmem:[%s249 + $0x6c] sm:$0xf]
        %v317 = vld [vmem:[%s249 + $0x70] sm:$0xf]
        %v318 = vld [vmem:[%s249 + $0x74] sm:$0xf]
        %v319 = vld [vmem:[%s249 + $0x78] sm:$0xf]
        %v320 = vld [vmem:[%s249 + $0x7c] sm:$0xf]
        %v321 = vunpack.c.l.bf16 %v289
        %v322 = vunpack.c.l.bf16 %v290
        %v323 = vunpack.c.l.bf16 %v291
        %v324 = vunpack.c.l.bf16 %v292
        %v325 = vunpack.c.l.bf16 %v293
        %v326 = vunpack.c.l.bf16 %v294
        %v327 = vunpack.c.l.bf16 %v295
        %v328 = vunpack.c.l.bf16 %v296
        %v329 = vunpack.c.l.bf16 %v297
        %v330 = vunpack.c.l.bf16 %v298
        %v331 = vunpack.c.l.bf16 %v299
        %v332 = vunpack.c.l.bf16 %v300
        %v333 = vunpack.c.l.bf16 %v301
        %v334 = vunpack.c.l.bf16 %v302
        %v335 = vunpack.c.l.bf16 %v303
        %v336 = vunpack.c.l.bf16 %v304
        %v337 = vunpack.c.l.bf16 %v305
        %v338 = vunpack.c.l.bf16 %v306
        %v339 = vunpack.c.l.bf16 %v307
        %v340 = vunpack.c.l.bf16 %v308
        %v341 = vunpack.c.l.bf16 %v309
        %v342 = vunpack.c.l.bf16 %v310
        %v343 = vunpack.c.l.bf16 %v311
        %v344 = vunpack.c.l.bf16 %v312
        %v345 = vunpack.c.l.bf16 %v313
        %v346 = vunpack.c.l.bf16 %v314
        %v347 = vunpack.c.l.bf16 %v315
        %v348 = vunpack.c.l.bf16 %v316
        %v349 = vunpack.c.l.bf16 %v317
        %v350 = vunpack.c.l.bf16 %v318
        %v351 = vunpack.c.l.bf16 %v319
        %v352 = vunpack.c.l.bf16 %v320
        %v353 = vmax.f32 %v321, 0.0
        %v354 = vmax.f32 %v322, 0.0
        %v355 = vmax.f32 %v323, 0.0
        %v356 = vmax.f32 %v324, 0.0
        %v357 = vmax.f32 %v325, 0.0
        %v358 = vmax.f32 %v326, 0.0
        %v359 = vmax.f32 %v327, 0.0
        %v360 = vmax.f32 %v328, 0.0
        %v361 = vmax.f32 %v329, 0.0
        %v362 = vmax.f32 %v330, 0.0
        %v363 = vmax.f32 %v331, 0.0
        %v364 = vmax.f32 %v332, 0.0
        %v365 = vmax.f32 %v333, 0.0
        %v366 = vmax.f32 %v334, 0.0
        %v367 = vmax.f32 %v335, 0.0
        %v368 = vmax.f32 %v336, 0.0
        %v369 = vmax.f32 %v337, 0.0
        %v370 = vmax.f32 %v338, 0.0
        %v371 = vmax.f32 %v339, 0.0
        %v372 = vmax.f32 %v340, 0.0
        %v373 = vmax.f32 %v341, 0.0
        %v374 = vmax.f32 %v342, 0.0
        %v375 = vmax.f32 %v343, 0.0
        %v376 = vmax.f32 %v344, 0.0
        %v377 = vmax.f32 %v345, 0.0
        %v378 = vmax.f32 %v346, 0.0
        %v379 = vmax.f32 %v347, 0.0
        %v380 = vmax.f32 %v348, 0.0
        %v381 = vmax.f32 %v349, 0.0
        %v382 = vmax.f32 %v350, 0.0
        %v383 = vmax.f32 %v351, 0.0
        %v384 = vmax.f32 %v352, 0.0
        %v385 = vpack.c.bf16 %v354, %v353
        %v386 = vpack.c.bf16 %v356, %v355
        %v387 = vpack.c.bf16 %v358, %v357
        %v388 = vpack.c.bf16 %v360, %v359
        %v389 = vpack.c.bf16 %v362, %v361
        %v390 = vpack.c.bf16 %v364, %v363
        %v391 = vpack.c.bf16 %v366, %v365
        %v392 = vpack.c.bf16 %v368, %v367
        %v393 = vpack.c.bf16 %v370, %v369
        %v394 = vpack.c.bf16 %v372, %v371
        %v395 = vpack.c.bf16 %v374, %v373
        %v396 = vpack.c.bf16 %v376, %v375
        %v397 = vpack.c.bf16 %v378, %v377
        %v398 = vpack.c.bf16 %v380, %v379
        %v399 = vpack.c.bf16 %v382, %v381
        %v400 = vpack.c.bf16 %v384, %v383
        %v401 = vld [vmem:[#allocation2] sm:$0xff]
        %v402 = vld [vmem:[#allocation2 + $0x8] sm:$0xff]
        %v403 = vld [vmem:[#allocation2 + $0x10] sm:$0xf]
        %v404 = vld [vmem:[#allocation2 + $0x14] sm:$0xff]
        %v405 = vld [vmem:[#allocation2 + $0x1c] sm:$0xff]
        %v406 = vld [vmem:[#allocation2 + $0x24] sm:$0xf]
        %v407 = vld [vmem:[#allocation2 + $0x28] sm:$0xff]
        %v408 = vld [vmem:[#allocation2 + $0x30] sm:$0xff]
        %v409 = vld [vmem:[#allocation2 + $0x38] sm:$0xf]
        %v410 = vld [vmem:[#allocation2 + $0x3c] sm:$0xff]
        %v411 = vld [vmem:[#allocation2 + $0x44] sm:$0xff]
        %v412 = vld [vmem:[#allocation2 + $0x4c] sm:$0xf]
        %v413 = vld [vmem:[#allocation2 + $0x50] sm:$0xff]
        %v414 = vld [vmem:[#allocation2 + $0x58] sm:$0xff]
        %v415 = vld [vmem:[#allocation2 + $0x60] sm:$0xf]
        %v416 = vld [vmem:[#allocation2 + $0x64] sm:$0xff]
        %v417 = vld [vmem:[#allocation2 + $0x6c] sm:$0xff]
        %v418 = vld [vmem:[#allocation2 + $0x74] sm:$0xf]
        %v419 = vld [vmem:[#allocation2 + $0x78] sm:$0xff]
        %v420 = vld [vmem:[#allocation2 + $0x80] sm:$0xff]
        %v421 = vld [vmem:[#allocation2 + $0x88] sm:$0xf]
        %v422 = vld [vmem:[#allocation2 + $0x8c] sm:$0xff]
        %v423 = vld [vmem:[#allocation2 + $0x94] sm:$0xff]
        %v424 = vld [vmem:[#allocation2 + $0x9c] sm:$0xf]
        %v425 = vld [vmem:[#allocation2 + $0xa0] sm:$0xff]
        %v426 = vld [vmem:[#allocation2 + $0xa8] sm:$0xff]
        %v427 = vld [vmem:[#allocation2 + $0xb0] sm:$0xf]
        %v428 = vld [vmem:[#allocation2 + $0xb4] sm:$0xff]
        %v429 = vld [vmem:[#allocation2 + $0xbc] sm:$0xff]
        %v430 = vld [vmem:[#allocation2 + $0xc4] sm:$0xf]
        %v431 = vld [vmem:[#allocation2 + $0xc8] sm:$0xff]
        %v432 = vld [vmem:[#allocation2 + $0xd0] sm:$0xff]
        %v433 = vld [vmem:[#allocation2 + $0xd8] sm:$0xf]
        %v434 = vld [vmem:[#allocation2 + $0xdc] sm:$0xff]
        %v435 = vld [vmem:[#allocation2 + $0xe4] sm:$0xff]
        %v436 = vld [vmem:[#allocation2 + $0xec] sm:$0xf]
        %v437 = vld [vmem:[#allocation2 + $0xf0] sm:$0xff]
        %v438 = vld [vmem:[#allocation2 + $0xf8] sm:$0xff]
        %v439 = vld [vmem:[#allocation2 + $0x100] sm:$0xf]
        %v440 = vld [vmem:[#allocation2 + $0x104] sm:$0xff]
        %v441 = vld [vmem:[#allocation2 + $0x10c] sm:$0xff]
        %v442 = vld [vmem:[#allocation2 + $0x114] sm:$0xf]
        %v443 = vld [vmem:[#allocation2 + $0x118] sm:$0xff]
        %v444 = vld [vmem:[#allocation2 + $0x120] sm:$0xff]
        %v445 = vld [vmem:[#allocation2 + $0x128] sm:$0xf]
        %v446 = vld [vmem:[#allocation2 + $0x12c] sm:$0xff]
        %v447 = vld [vmem:[#allocation2 + $0x134] sm:$0xff]
        %v448 = vld [vmem:[#allocation2 + $0x13c] sm:$0xf]
        %v449 = vld [vmem:[#allocation4] sm:$0xff]
        %v450 = vld [vmem:[#allocation4 + $0x8] sm:$0xff]
        %v451 = vld [vmem:[#allocation4 + $0x10] sm:$0xf]
        %v452 = vld [vmem:[#allocation4 + $0x14] sm:$0xff]
        %v453 = vld [vmem:[#allocation4 + $0x1c] sm:$0xff]
        %v454 = vld [vmem:[#allocation4 + $0x24] sm:$0xf]
        %v455 = vld [vmem:[#allocation4 + $0x28] sm:$0xff]
        %v456 = vld [vmem:[#allocation4 + $0x30] sm:$0xff]
        %v457 = vld [vmem:[#allocation4 + $0x38] sm:$0xf]
        %v458 = vld [vmem:[#allocation4 + $0x3c] sm:$0xff]
        %v459 = vld [vmem:[#allocation4 + $0x44] sm:$0xff]
        %v460 = vld [vmem:[#allocation4 + $0x4c] sm:$0xf]
        %v461 = vld [vmem:[#allocation4 + $0x50] sm:$0xff]
        %v462 = vld [vmem:[#allocation4 + $0x58] sm:$0xff]
        %v463 = vld [vmem:[#allocation4 + $0x60] sm:$0xf]
        %v464 = vld [vmem:[#allocation4 + $0x64] sm:$0xff]
        %v465 = vld [vmem:[#allocation4 + $0x6c] sm:$0xff]
        %v466 = vld [vmem:[#allocation4 + $0x74] sm:$0xf]
        %v467 = vld [vmem:[#allocation4 + $0x78] sm:$0xff]
        %v468 = vld [vmem:[#allocation4 + $0x80] sm:$0xff]
        %v469 = vld [vmem:[#allocation4 + $0x88] sm:$0xf]
        %v470 = vld [vmem:[#allocation4 + $0x8c] sm:$0xff]
        %v471 = vld [vmem:[#allocation4 + $0x94] sm:$0xff]
        %v472 = vld [vmem:[#allocation4 + $0x9c] sm:$0xf]
        %v473 = vld [vmem:[#allocation4 + $0xa0] sm:$0xff]
        %v474 = vld [vmem:[#allocation4 + $0xa8] sm:$0xff]
        %v475 = vld [vmem:[#allocation4 + $0xb0] sm:$0xf]
        %v476 = vld [vmem:[#allocation4 + $0xb4] sm:$0xff]
        %v477 = vld [vmem:[#allocation4 + $0xbc] sm:$0xff]
        %v478 = vld [vmem:[#allocation4 + $0xc4] sm:$0xf]
        %v479 = vld [vmem:[#allocation4 + $0xc8] sm:$0xff]
        %v480 = vld [vmem:[#allocation4 + $0xd0] sm:$0xff]
        %v481 = vld [vmem:[#allocation4 + $0xd8] sm:$0xf]
        %v482 = vld [vmem:[#allocation4 + $0xdc] sm:$0xff]
        %v483 = vld [vmem:[#allocation4 + $0xe4] sm:$0xff]
        %v484 = vld [vmem:[#allocation4 + $0xec] sm:$0xf]
        %v485 = vld [vmem:[#allocation4 + $0xf0] sm:$0xff]
        %v486 = vld [vmem:[#allocation4 + $0xf8] sm:$0xff]
        %v487 = vld [vmem:[#allocation4 + $0x100] sm:$0xf]
        %v488 = vld [vmem:[#allocation4 + $0x104] sm:$0xff]
        %v489 = vld [vmem:[#allocation4 + $0x10c] sm:$0xff]
        %v490 = vld [vmem:[#allocation4 + $0x114] sm:$0xf]
        %v491 = vld [vmem:[#allocation4 + $0x118] sm:$0xff]
        %v492 = vld [vmem:[#allocation4 + $0x120] sm:$0xff]
        %v493 = vld [vmem:[#allocation4 + $0x128] sm:$0xf]
        %v494 = vld [vmem:[#allocation4 + $0x12c] sm:$0xff]
        %v495 = vld [vmem:[#allocation4 + $0x134] sm:$0xff]
        %v496 = vld [vmem:[#allocation4 + $0x13c] sm:$0xf]
        %v545 = vunpack.c.l.b16 %v449
        %v546 = vunpack.c.h.b16 %v449
        %v547 = vunpack.c.l.b16 %v450
        %v548 = vunpack.c.h.b16 %v450
        %v549 = vunpack.c.l.b16 %v451
        %v550 = vunpack.c.l.b16 %v452
        %v551 = vunpack.c.h.b16 %v452
        %v552 = vunpack.c.l.b16 %v453
        %v553 = vunpack.c.h.b16 %v453
        %v554 = vunpack.c.l.b16 %v454
        %v555 = vunpack.c.l.b16 %v455
        %v556 = vunpack.c.h.b16 %v455
        %v557 = vunpack.c.l.b16 %v456
        %v558 = vunpack.c.h.b16 %v456
        %v559 = vunpack.c.l.b16 %v457
        %v560 = vunpack.c.l.b16 %v458
        %v561 = vunpack.c.h.b16 %v458
        %v562 = vunpack.c.l.b16 %v459
        %v563 = vunpack.c.h.b16 %v459
        %v564 = vunpack.c.l.b16 %v460
        %v565 = vunpack.c.l.b16 %v461
        %v566 = vunpack.c.h.b16 %v461
        %v567 = vunpack.c.l.b16 %v462
        %v568 = vunpack.c.h.b16 %v462
        %v569 = vunpack.c.l.b16 %v463
        %v570 = vunpack.c.l.b16 %v464
        %v571 = vunpack.c.h.b16 %v464
        %v572 = vunpack.c.l.b16 %v465
        %v573 = vunpack.c.h.b16 %v465
        %v574 = vunpack.c.l.b16 %v466
        %v575 = vunpack.c.l.b16 %v467
        %v576 = vunpack.c.h.b16 %v467
        %v577 = vunpack.c.l.b16 %v468
        %v578 = vunpack.c.h.b16 %v468
        %v579 = vunpack.c.l.b16 %v469
        %v580 = vunpack.c.l.b16 %v470
        %v581 = vunpack.c.h.b16 %v470
        %v582 = vunpack.c.l.b16 %v471
        %v583 = vunpack.c.h.b16 %v471
        %v584 = vunpack.c.l.b16 %v472
        %v585 = vunpack.c.l.b16 %v473
        %v586 = vunpack.c.h.b16 %v473
        %v587 = vunpack.c.l.b16 %v474
        %v588 = vunpack.c.h.b16 %v474
        %v589 = vunpack.c.l.b16 %v475
        %v590 = vunpack.c.l.b16 %v476
        %v591 = vunpack.c.h.b16 %v476
        %v592 = vunpack.c.l.b16 %v477
        %v593 = vunpack.c.h.b16 %v477
        %v594 = vunpack.c.l.b16 %v478
        %v595 = vunpack.c.l.b16 %v479
        %v596 = vunpack.c.h.b16 %v479
        %v597 = vunpack.c.l.b16 %v480
        %v598 = vunpack.c.h.b16 %v480
        %v599 = vunpack.c.l.b16 %v481
        %v600 = vunpack.c.l.b16 %v482
        %v601 = vunpack.c.h.b16 %v482
        %v602 = vunpack.c.l.b16 %v483
        %v603 = vunpack.c.h.b16 %v483
        %v604 = vunpack.c.l.b16 %v484
        %v605 = vunpack.c.l.b16 %v485
        %v606 = vunpack.c.h.b16 %v485
        %v607 = vunpack.c.l.b16 %v486
        %v608 = vunpack.c.h.b16 %v486
        %v609 = vunpack.c.l.b16 %v487
        %v610 = vunpack.c.l.b16 %v488
        %v611 = vunpack.c.h.b16 %v488
        %v612 = vunpack.c.l.b16 %v489
        %v613 = vunpack.c.h.b16 %v489
        %v614 = vunpack.c.l.b16 %v490
        %v615 = vunpack.c.l.b16 %v491
        %v616 = vunpack.c.h.b16 %v491
        %v617 = vunpack.c.l.b16 %v492
        %v618 = vunpack.c.h.b16 %v492
        %v619 = vunpack.c.l.b16 %v493
        %v620 = vunpack.c.l.b16 %v494
        %v621 = vunpack.c.h.b16 %v494
        %v622 = vunpack.c.l.b16 %v495
        %v623 = vunpack.c.h.b16 %v495
        %v624 = vunpack.c.l.b16 %v496
        %v625 = vpack.c.b16 %v550, %v545
        %v626 = vpack.c.b16 %v551, %v546
        %v627 = vpack.c.b16 %v552, %v547
        %v628 = vpack.c.b16 %v553, %v548
        %v629 = vpack.c.b16 %v554, %v549
        %v630 = vpack.c.b16 %v560, %v555
        %v631 = vpack.c.b16 %v561, %v556
        %v632 = vpack.c.b16 %v562, %v557
        %v633 = vpack.c.b16 %v563, %v558
        %v634 = vpack.c.b16 %v564, %v559
        %v635 = vpack.c.b16 %v570, %v565
        %v636 = vpack.c.b16 %v571, %v566
        %v637 = vpack.c.b16 %v572, %v567
        %v638 = vpack.c.b16 %v573, %v568
        %v639 = vpack.c.b16 %v574, %v569
        %v640 = vpack.c.b16 %v580, %v575
        %v641 = vpack.c.b16 %v581, %v576
        %v642 = vpack.c.b16 %v582, %v577
        %v643 = vpack.c.b16 %v583, %v578
        %v644 = vpack.c.b16 %v584, %v579
        %v645 = vpack.c.b16 %v590, %v585
        %v646 = vpack.c.b16 %v591, %v586
        %v647 = vpack.c.b16 %v592, %v587
        %v648 = vpack.c.b16 %v593, %v588
        %v649 = vpack.c.b16 %v594, %v589
        %v650 = vpack.c.b16 %v600, %v595
        %v651 = vpack.c.b16 %v601, %v596
        %v652 = vpack.c.b16 %v602, %v597
        %v653 = vpack.c.b16 %v603, %v598
        %v654 = vpack.c.b16 %v604, %v599
        %v655 = vpack.c.b16 %v610, %v605
        %v656 = vpack.c.b16 %v611, %v606
        %v657 = vpack.c.b16 %v612, %v607
        %v658 = vpack.c.b16 %v613, %v608
        %v659 = vpack.c.b16 %v614, %v609
        %v660 = vpack.c.b16 %v620, %v615
        %v661 = vpack.c.b16 %v621, %v616
        %v662 = vpack.c.b16 %v622, %v617
        %v663 = vpack.c.b16 %v623, %v618
        %v664 = vpack.c.b16 %v624, %v619
        %705 = vmatpush.bf16.msra.mxu0 %v660
        %706 = vmatpush.bf16.msra.mxu0 %v655
        %707 = vmatpush.bf16.msra.mxu0 %v650
        %708 = vmatpush.bf16.msra.mxu0 %v645
        %709 = vmatpush.bf16.msra.mxu0 %v640
        %710 = vmatpush.bf16.msra.mxu0 %v635
        %711 = vmatpush.bf16.msra.mxu0 %v630
        %712 = vmatpush.bf16.msra.mxu0 %v625
        %713 = vmatmul.bf16.gmra.mxu0 %v385
        %v714 = vpop.f32.mrf.mxu0
        %v715 = vadd.f32 0.0, %v714
        %v716 = vpop.f32.mrf.mxu0
        %v717 = vadd.f32 0.0, %v716
        %718 = vmatmul.bf16.gmra.mxu0 %v386
        %v719 = vpop.f32.mrf.mxu0
        %v720 = vadd.f32 0.0, %v719
        %v721 = vpop.f32.mrf.mxu0
        %v722 = vadd.f32 0.0, %v721
        %723 = vmatmul.bf16.gmra.mxu0 %v387
        %v724 = vpop.f32.mrf.mxu0
        %v725 = vadd.f32 0.0, %v724
        %v726 = vpop.f32.mrf.mxu0
        %v727 = vadd.f32 0.0, %v726
        %728 = vmatmul.bf16.gmra.mxu0 %v388
        %v729 = vpop.f32.mrf.mxu0
        %v730 = vadd.f32 0.0, %v729
        %v731 = vpop.f32.mrf.mxu0
        %v732 = vadd.f32 0.0, %v731
        %733 = vmatmul.bf16.gmra.mxu0 %v389
        %v734 = vpop.f32.mrf.mxu0
        %v735 = vadd.f32 0.0, %v734
        %v736 = vpop.f32.mrf.mxu0
        %v737 = vadd.f32 0.0, %v736
        %738 = vmatmul.bf16.gmra.mxu0 %v390
        %v739 = vpop.f32.mrf.mxu0
        %v740 = vadd.f32 0.0, %v739
        %v741 = vpop.f32.mrf.mxu0
        %v742 = vadd.f32 0.0, %v741
        %743 = vmatmul.bf16.gmra.mxu0 %v391
        %v744 = vpop.f32.mrf.mxu0
        %v745 = vadd.f32 0.0, %v744
        %v746 = vpop.f32.mrf.mxu0
        %v747 = vadd.f32 0.0, %v746
        %748 = vmatmul.bf16.gmra.mxu0 %v392
        %v749 = vpop.f32.mrf.mxu0
        %v750 = vadd.f32 0.0, %v749
        %v751 = vpop.f32.mrf.mxu0
        %v752 = vadd.f32 0.0, %v751
        %753 = vmatmul.bf16.gmra.mxu0 %v393
        %v754 = vpop.f32.mrf.mxu0
        %v755 = vadd.f32 0.0, %v754
        %v756 = vpop.f32.mrf.mxu0
        %v757 = vadd.f32 0.0, %v756
        %758 = vmatmul.bf16.gmra.mxu0 %v394
        %v759 = vpop.f32.mrf.mxu0
        %v760 = vadd.f32 0.0, %v759
        %v761 = vpop.f32.mrf.mxu0
        %v762 = vadd.f32 0.0, %v761
        %763 = vmatmul.bf16.gmra.mxu0 %v395
        %v764 = vpop.f32.mrf.mxu0
        %v765 = vadd.f32 0.0, %v764
        %v766 = vpop.f32.mrf.mxu0
        %v767 = vadd.f32 0.0, %v766
        %768 = vmatmul.bf16.gmra.mxu0 %v396
        %v769 = vpop.f32.mrf.mxu0
        %v770 = vadd.f32 0.0, %v769
        %v771 = vpop.f32.mrf.mxu0
        %v772 = vadd.f32 0.0, %v771
        %773 = vmatmul.bf16.gmra.mxu0 %v397
        %v774 = vpop.f32.mrf.mxu0
        %v775 = vadd.f32 0.0, %v774
        %v776 = vpop.f32.mrf.mxu0
        %v777 = vadd.f32 0.0, %v776
        %778 = vmatmul.bf16.gmra.mxu0 %v398
        %v779 = vpop.f32.mrf.mxu0
        %v780 = vadd.f32 0.0, %v779
        %v781 = vpop.f32.mrf.mxu0
        %v782 = vadd.f32 0.0, %v781
        %783 = vmatmul.bf16.gmra.mxu0 %v399
        %v784 = vpop.f32.mrf.mxu0
        %v785 = vadd.f32 0.0, %v784
        %v786 = vpop.f32.mrf.mxu0
        %v787 = vadd.f32 0.0, %v786
        %788 = vmatmul.bf16.gmra.mxu0 %v400
        %v789 = vpop.f32.mrf.mxu0
        %v790 = vadd.f32 0.0, %v789
        %v791 = vpop.f32.mrf.mxu0
        %v792 = vadd.f32 0.0, %v791
        %793 = vdwg.mxu0
        %794 = vmatpush.bf16.msra.mxu0 %v661
        %795 = vmatpush.bf16.msra.mxu0 %v656
        %796 = vmatpush.bf16.msra.mxu0 %v651
        %797 = vmatpush.bf16.msra.mxu0 %v646
        %798 = vmatpush.bf16.msra.mxu0 %v641
        %799 = vmatpush.bf16.msra.mxu0 %v636
        %800 = vmatpush.bf16.msra.mxu0 %v631
        %801 = vmatpush.bf16.msra.mxu0 %v626
        %802 = vmatmul.bf16.gmra.mxu0 %v385
        %v803 = vpop.f32.mrf.mxu0
        %v804 = vadd.f32 0.0, %v803
        %v805 = vpop.f32.mrf.mxu0
        %v806 = vadd.f32 0.0, %v805
        %807 = vmatmul.bf16.gmra.mxu0 %v386
        %v808 = vpop.f32.mrf.mxu0
        %v809 = vadd.f32 0.0, %v808
        %v810 = vpop.f32.mrf.mxu0
        %v811 = vadd.f32 0.0, %v810
        %812 = vmatmul.bf16.gmra.mxu0 %v387
        %v813 = vpop.f32.mrf.mxu0
        %v814 = vadd.f32 0.0, %v813
        %v815 = vpop.f32.mrf.mxu0
        %v816 = vadd.f32 0.0, %v815
        %817 = vmatmul.bf16.gmra.mxu0 %v388
        %v818 = vpop.f32.mrf.mxu0
        %v819 = vadd.f32 0.0, %v818
        %v820 = vpop.f32.mrf.mxu0
        %v821 = vadd.f32 0.0, %v820
        %822 = vmatmul.bf16.gmra.mxu0 %v389
        %v823 = vpop.f32.mrf.mxu0
        %v824 = vadd.f32 0.0, %v823
        %v825 = vpop.f32.mrf.mxu0
        %v826 = vadd.f32 0.0, %v825
        %827 = vmatmul.bf16.gmra.mxu0 %v390
        %v828 = vpop.f32.mrf.mxu0
        %v829 = vadd.f32 0.0, %v828
        %v830 = vpop.f32.mrf.mxu0
        %v831 = vadd.f32 0.0, %v830
        %832 = vmatmul.bf16.gmra.mxu0 %v391
        %v833 = vpop.f32.mrf.mxu0
        %v834 = vadd.f32 0.0, %v833
        %v835 = vpop.f32.mrf.mxu0
        %v836 = vadd.f32 0.0, %v835
        %837 = vmatmul.bf16.gmra.mxu0 %v392
        %v838 = vpop.f32.mrf.mxu0
        %v839 = vadd.f32 0.0, %v838
        %v840 = vpop.f32.mrf.mxu0
        %v841 = vadd.f32 0.0, %v840
        %842 = vmatmul.bf16.gmra.mxu0 %v393
        %v843 = vpop.f32.mrf.mxu0
        %v844 = vadd.f32 0.0, %v843
        %v845 = vpop.f32.mrf.mxu0
        %v846 = vadd.f32 0.0, %v845
        %847 = vmatmul.bf16.gmra.mxu0 %v394
        %v848 = vpop.f32.mrf.mxu0
        %v849 = vadd.f32 0.0, %v848
        %v850 = vpop.f32.mrf.mxu0
        %v851 = vadd.f32 0.0, %v850
        %852 = vmatmul.bf16.gmra.mxu0 %v395
        %v853 = vpop.f32.mrf.mxu0
        %v854 = vadd.f32 0.0, %v853
        %v855 = vpop.f32.mrf.mxu0
        %v856 = vadd.f32 0.0, %v855
        %857 = vmatmul.bf16.gmra.mxu0 %v396
        %v858 = vpop.f32.mrf.mxu0
        %v859 = vadd.f32 0.0, %v858
        %v860 = vpop.f32.mrf.mxu0
        %v861 = vadd.f32 0.0, %v860
        %862 = vmatmul.bf16.gmra.mxu0 %v397
        %v863 = vpop.f32.mrf.mxu0
        %v864 = vadd.f32 0.0, %v863
        %v865 = vpop.f32.mrf.mxu0
        %v866 = vadd.f32 0.0, %v865
        %867 = vmatmul.bf16.gmra.mxu0 %v398
        %v868 = vpop.f32.mrf.mxu0
        %v869 = vadd.f32 0.0, %v868
        %v870 = vpop.f32.mrf.mxu0
        %v871 = vadd.f32 0.0, %v870
        %872 = vmatmul.bf16.gmra.mxu0 %v399
        %v873 = vpop.f32.mrf.mxu0
        %v874 = vadd.f32 0.0, %v873
        %v875 = vpop.f32.mrf.mxu0
        %v876 = vadd.f32 0.0, %v875
        %877 = vmatmul.bf16.gmra.mxu0 %v400
        %v878 = vpop.f32.mrf.mxu0
        %v879 = vadd.f32 0.0, %v878
        %v880 = vpop.f32.mrf.mxu0
        %v881 = vadd.f32 0.0, %v880
        %882 = vdwg.mxu0
        %883 = vmatpush.bf16.msra.mxu0 %v662
        %884 = vmatpush.bf16.msra.mxu0 %v657
        %885 = vmatpush.bf16.msra.mxu0 %v652
        %886 = vmatpush.bf16.msra.mxu0 %v647
        %887 = vmatpush.bf16.msra.mxu0 %v642
        %888 = vmatpush.bf16.msra.mxu0 %v637
        %889 = vmatpush.bf16.msra.mxu0 %v632
        %890 = vmatpush.bf16.msra.mxu0 %v627
        %891 = vmatmul.bf16.gmra.mxu0 %v385
        %v892 = vpop.f32.mrf.mxu0
        %v893 = vadd.f32 0.0, %v892
        %v894 = vpop.f32.mrf.mxu0
        %v895 = vadd.f32 0.0, %v894
        %896 = vmatmul.bf16.gmra.mxu0 %v386
        %v897 = vpop.f32.mrf.mxu0
        %v898 = vadd.f32 0.0, %v897
        %v899 = vpop.f32.mrf.mxu0
        %v900 = vadd.f32 0.0, %v899
        %901 = vmatmul.bf16.gmra.mxu0 %v387
        %v902 = vpop.f32.mrf.mxu0
        %v903 = vadd.f32 0.0, %v902
        %v904 = vpop.f32.mrf.mxu0
        %v905 = vadd.f32 0.0, %v904
        %906 = vmatmul.bf16.gmra.mxu0 %v388
        %v907 = vpop.f32.mrf.mxu0
        %v908 = vadd.f32 0.0, %v907
        %v909 = vpop.f32.mrf.mxu0
        %v910 = vadd.f32 0.0, %v909
        %911 = vmatmul.bf16.gmra.mxu0 %v389
        %v912 = vpop.f32.mrf.mxu0
        %v913 = vadd.f32 0.0, %v912
        %v914 = vpop.f32.mrf.mxu0
        %v915 = vadd.f32 0.0, %v914
        %916 = vmatmul.bf16.gmra.mxu0 %v390
        %v917 = vpop.f32.mrf.mxu0
        %v918 = vadd.f32 0.0, %v917
        %v919 = vpop.f32.mrf.mxu0
        %v920 = vadd.f32 0.0, %v919
        %921 = vmatmul.bf16.gmra.mxu0 %v391
        %v922 = vpop.f32.mrf.mxu0
        %v923 = vadd.f32 0.0, %v922
        %v924 = vpop.f32.mrf.mxu0
        %v925 = vadd.f32 0.0, %v924
        %926 = vmatmul.bf16.gmra.mxu0 %v392
        %v927 = vpop.f32.mrf.mxu0
        %v928 = vadd.f32 0.0, %v927
        %v929 = vpop.f32.mrf.mxu0
        %v930 = vadd.f32 0.0, %v929
        %931 = vmatmul.bf16.gmra.mxu0 %v393
        %v932 = vpop.f32.mrf.mxu0
        %v933 = vadd.f32 0.0, %v932
        %v934 = vpop.f32.mrf.mxu0
        %v935 = vadd.f32 0.0, %v934
        %936 = vmatmul.bf16.gmra.mxu0 %v394
        %v937 = vpop.f32.mrf.mxu0
        %v938 = vadd.f32 0.0, %v937
        %v939 = vpop.f32.mrf.mxu0
        %v940 = vadd.f32 0.0, %v939
        %941 = vmatmul.bf16.gmra.mxu0 %v395
        %v942 = vpop.f32.mrf.mxu0
        %v943 = vadd.f32 0.0, %v942
        %v944 = vpop.f32.mrf.mxu0
        %v945 = vadd.f32 0.0, %v944
        %946 = vmatmul.bf16.gmra.mxu0 %v396
        %v947 = vpop.f32.mrf.mxu0
        %v948 = vadd.f32 0.0, %v947
        %v949 = vpop.f32.mrf.mxu0
        %v950 = vadd.f32 0.0, %v949
        %951 = vmatmul.bf16.gmra.mxu0 %v397
        %v952 = vpop.f32.mrf.mxu0
        %v953 = vadd.f32 0.0, %v952
        %v954 = vpop.f32.mrf.mxu0
        %v955 = vadd.f32 0.0, %v954
        %956 = vmatmul.bf16.gmra.mxu0 %v398
        %v957 = vpop.f32.mrf.mxu0
        %v958 = vadd.f32 0.0, %v957
        %v959 = vpop.f32.mrf.mxu0
        %v960 = vadd.f32 0.0, %v959
        %961 = vmatmul.bf16.gmra.mxu0 %v399
        %v962 = vpop.f32.mrf.mxu0
        %v963 = vadd.f32 0.0, %v962
        %v964 = vpop.f32.mrf.mxu0
        %v965 = vadd.f32 0.0, %v964
        %966 = vmatmul.bf16.gmra.mxu0 %v400
        %v967 = vpop.f32.mrf.mxu0
        %v968 = vadd.f32 0.0, %v967
        %v969 = vpop.f32.mrf.mxu0
        %v970 = vadd.f32 0.0, %v969
        %971 = vdwg.mxu0
        %972 = vmatpush.bf16.msra.mxu0 %v663
        %973 = vmatpush.bf16.msra.mxu0 %v658
        %974 = vmatpush.bf16.msra.mxu0 %v653
        %975 = vmatpush.bf16.msra.mxu0 %v648
        %976 = vmatpush.bf16.msra.mxu0 %v643
        %977 = vmatpush.bf16.msra.mxu0 %v638
        %978 = vmatpush.bf16.msra.mxu0 %v633
        %979 = vmatpush.bf16.msra.mxu0 %v628
        %980 = vmatmul.bf16.gmra.mxu0 %v385
        %v981 = vpop.f32.mrf.mxu0
        %v982 = vadd.f32 0.0, %v981
        %v983 = vpop.f32.mrf.mxu0
        %v984 = vadd.f32 0.0, %v983
        %985 = vmatmul.bf16.gmra.mxu0 %v386
        %v986 = vpop.f32.mrf.mxu0
        %v987 = vadd.f32 0.0, %v986
        %v988 = vpop.f32.mrf.mxu0
        %v989 = vadd.f32 0.0, %v988
        %990 = vmatmul.bf16.gmra.mxu0 %v387
        %v991 = vpop.f32.mrf.mxu0
        %v992 = vadd.f32 0.0, %v991
        %v993 = vpop.f32.mrf.mxu0
        %v994 = vadd.f32 0.0, %v993
        %995 = vmatmul.bf16.gmra.mxu0 %v388
        %v996 = vpop.f32.mrf.mxu0
        %v997 = vadd.f32 0.0, %v996
        %v998 = vpop.f32.mrf.mxu0
        %v999 = vadd.f32 0.0, %v998
        %1000 = vmatmul.bf16.gmra.mxu0 %v389
        %v1001 = vpop.f32.mrf.mxu0
        %v1002 = vadd.f32 0.0, %v1001
        %v1003 = vpop.f32.mrf.mxu0
        %v1004 = vadd.f32 0.0, %v1003
        %1005 = vmatmul.bf16.gmra.mxu0 %v390
        %v1006 = vpop.f32.mrf.mxu0
        %v1007 = vadd.f32 0.0, %v1006
        %v1008 = vpop.f32.mrf.mxu0
        %v1009 = vadd.f32 0.0, %v1008
        %1010 = vmatmul.bf16.gmra.mxu0 %v391
        %v1011 = vpop.f32.mrf.mxu0
        %v1012 = vadd.f32 0.0, %v1011
        %v1013 = vpop.f32.mrf.mxu0
        %v1014 = vadd.f32 0.0, %v1013
        %1015 = vmatmul.bf16.gmra.mxu0 %v392
        %v1016 = vpop.f32.mrf.mxu0
        %v1017 = vadd.f32 0.0, %v1016
        %v1018 = vpop.f32.mrf.mxu0
        %v1019 = vadd.f32 0.0, %v1018
        %1020 = vmatmul.bf16.gmra.mxu0 %v393
        %v1021 = vpop.f32.mrf.mxu0
        %v1022 = vadd.f32 0.0, %v1021
        %v1023 = vpop.f32.mrf.mxu0
        %v1024 = vadd.f32 0.0, %v1023
        %1025 = vmatmul.bf16.gmra.mxu0 %v394
        %v1026 = vpop.f32.mrf.mxu0
        %v1027 = vadd.f32 0.0, %v1026
        %v1028 = vpop.f32.mrf.mxu0
        %v1029 = vadd.f32 0.0, %v1028
        %1030 = vmatmul.bf16.gmra.mxu0 %v395
        %v1031 = vpop.f32.mrf.mxu0
        %v1032 = vadd.f32 0.0, %v1031
        %v1033 = vpop.f32.mrf.mxu0
        %v1034 = vadd.f32 0.0, %v1033
        %1035 = vmatmul.bf16.gmra.mxu0 %v396
        %v1036 = vpop.f32.mrf.mxu0
        %v1037 = vadd.f32 0.0, %v1036
        %v1038 = vpop.f32.mrf.mxu0
        %v1039 = vadd.f32 0.0, %v1038
        %1040 = vmatmul.bf16.gmra.mxu0 %v397
        %v1041 = vpop.f32.mrf.mxu0
        %v1042 = vadd.f32 0.0, %v1041
        %v1043 = vpop.f32.mrf.mxu0
        %v1044 = vadd.f32 0.0, %v1043
        %1045 = vmatmul.bf16.gmra.mxu0 %v398
        %v1046 = vpop.f32.mrf.mxu0
        %v1047 = vadd.f32 0.0, %v1046
        %v1048 = vpop.f32.mrf.mxu0
        %v1049 = vadd.f32 0.0, %v1048
        %1050 = vmatmul.bf16.gmra.mxu0 %v399
        %v1051 = vpop.f32.mrf.mxu0
        %v1052 = vadd.f32 0.0, %v1051
        %v1053 = vpop.f32.mrf.mxu0
        %v1054 = vadd.f32 0.0, %v1053
        %1055 = vmatmul.bf16.gmra.mxu0 %v400
        %v1056 = vpop.f32.mrf.mxu0
        %v1057 = vadd.f32 0.0, %v1056
        %v1058 = vpop.f32.mrf.mxu0
        %v1059 = vadd.f32 0.0, %v1058
        %1060 = vdwg.mxu0
        %1061 = vmatpush.bf16.msra.mxu0 %v664
        %1062 = vmatpush.bf16.msra.mxu0 %v659
        %1063 = vmatpush.bf16.msra.mxu0 %v654
        %1064 = vmatpush.bf16.msra.mxu0 %v649
        %1065 = vmatpush.bf16.msra.mxu0 %v644
        %1066 = vmatpush.bf16.msra.mxu0 %v639
        %1067 = vmatpush.bf16.msra.mxu0 %v634
        %1068 = vmatpush.bf16.msra.mxu0 %v629
        %1069 = vmatmul.bf16.gmra.mxu0 %v385
        %v1070 = vpop.f32.mrf.mxu0
        %v1071 = vadd.f32 0.0, %v1070
        %v1072 = vpop.f32.mrf.mxu0
        %v1073 = vadd.f32 0.0, %v1072
        %1074 = vmatmul.bf16.gmra.mxu0 %v386
        %v1075 = vpop.f32.mrf.mxu0
        %v1076 = vadd.f32 0.0, %v1075
        %v1077 = vpop.f32.mrf.mxu0
        %v1078 = vadd.f32 0.0, %v1077
        %1079 = vmatmul.bf16.gmra.mxu0 %v387
        %v1080 = vpop.f32.mrf.mxu0
        %v1081 = vadd.f32 0.0, %v1080
        %v1082 = vpop.f32.mrf.mxu0
        %v1083 = vadd.f32 0.0, %v1082
        %1084 = vmatmul.bf16.gmra.mxu0 %v388
        %v1085 = vpop.f32.mrf.mxu0
        %v1086 = vadd.f32 0.0, %v1085
        %v1087 = vpop.f32.mrf.mxu0
        %v1088 = vadd.f32 0.0, %v1087
        %1089 = vmatmul.bf16.gmra.mxu0 %v389
        %v1090 = vpop.f32.mrf.mxu0
        %v1091 = vadd.f32 0.0, %v1090
        %v1092 = vpop.f32.mrf.mxu0
        %v1093 = vadd.f32 0.0, %v1092
        %1094 = vmatmul.bf16.gmra.mxu0 %v390
        %v1095 = vpop.f32.mrf.mxu0
        %v1096 = vadd.f32 0.0, %v1095
        %v1097 = vpop.f32.mrf.mxu0
        %v1098 = vadd.f32 0.0, %v1097
        %1099 = vmatmul.bf16.gmra.mxu0 %v391
        %v1100 = vpop.f32.mrf.mxu0
        %v1101 = vadd.f32 0.0, %v1100
        %v1102 = vpop.f32.mrf.mxu0
        %v1103 = vadd.f32 0.0, %v1102
        %1104 = vmatmul.bf16.gmra.mxu0 %v392
        %v1105 = vpop.f32.mrf.mxu0
        %v1106 = vadd.f32 0.0, %v1105
        %v1107 = vpop.f32.mrf.mxu0
        %v1108 = vadd.f32 0.0, %v1107
        %1109 = vmatmul.bf16.gmra.mxu0 %v393
        %v1110 = vpop.f32.mrf.mxu0
        %v1111 = vadd.f32 0.0, %v1110
        %v1112 = vpop.f32.mrf.mxu0
        %v1113 = vadd.f32 0.0, %v1112
        %1114 = vmatmul.bf16.gmra.mxu0 %v394
        %v1115 = vpop.f32.mrf.mxu0
        %v1116 = vadd.f32 0.0, %v1115
        %v1117 = vpop.f32.mrf.mxu0
        %v1118 = vadd.f32 0.0, %v1117
        %1119 = vmatmul.bf16.gmra.mxu0 %v395
        %v1120 = vpop.f32.mrf.mxu0
        %v1121 = vadd.f32 0.0, %v1120
        %v1122 = vpop.f32.mrf.mxu0
        %v1123 = vadd.f32 0.0, %v1122
        %1124 = vmatmul.bf16.gmra.mxu0 %v396
        %v1125 = vpop.f32.mrf.mxu0
        %v1126 = vadd.f32 0.0, %v1125
        %v1127 = vpop.f32.mrf.mxu0
        %v1128 = vadd.f32 0.0, %v1127
        %1129 = vmatmul.bf16.gmra.mxu0 %v397
        %v1130 = vpop.f32.mrf.mxu0
        %v1131 = vadd.f32 0.0, %v1130
        %v1132 = vpop.f32.mrf.mxu0
        %v1133 = vadd.f32 0.0, %v1132
        %1134 = vmatmul.bf16.gmra.mxu0 %v398
        %v1135 = vpop.f32.mrf.mxu0
        %v1136 = vadd.f32 0.0, %v1135
        %v1137 = vpop.f32.mrf.mxu0
        %v1138 = vadd.f32 0.0, %v1137
        %1139 = vmatmul.bf16.gmra.mxu0 %v399
        %v1140 = vpop.f32.mrf.mxu0
        %v1141 = vadd.f32 0.0, %v1140
        %v1142 = vpop.f32.mrf.mxu0
        %v1143 = vadd.f32 0.0, %v1142
        %1144 = vmatmul.bf16.gmra.mxu0 %v400
        %v1145 = vpop.f32.mrf.mxu0
        %v1146 = vadd.f32 0.0, %v1145
        %v1147 = vpop.f32.mrf.mxu0
        %v1148 = vadd.f32 0.0, %v1147
        %1149 = vdwg.mxu0
        %v1182 = vunpack.c.l.b16 %v257
        %v1183 = vunpack.c.l.b16 %v258
        %v1184 = vunpack.c.l.b16 %v259
        %v1185 = vunpack.c.l.b16 %v260
        %v1186 = vunpack.c.l.b16 %v261
        %v1187 = vunpack.c.l.b16 %v262
        %v1188 = vunpack.c.l.b16 %v263
        %v1189 = vunpack.c.l.b16 %v264
        %v1190 = vunpack.c.l.b16 %v265
        %v1191 = vunpack.c.l.b16 %v266
        %v1192 = vunpack.c.l.b16 %v267
        %v1193 = vunpack.c.l.b16 %v268
        %v1194 = vunpack.c.l.b16 %v269
        %v1195 = vunpack.c.l.b16 %v270
        %v1196 = vunpack.c.l.b16 %v271
        %v1197 = vunpack.c.l.b16 %v272
        %v1198 = vunpack.c.l.b16 %v273
        %v1199 = vunpack.c.l.b16 %v274
        %v1200 = vunpack.c.l.b16 %v275
        %v1201 = vunpack.c.l.b16 %v276
        %v1202 = vunpack.c.l.b16 %v277
        %v1203 = vunpack.c.l.b16 %v278
        %v1204 = vunpack.c.l.b16 %v279
        %v1205 = vunpack.c.l.b16 %v280
        %v1206 = vunpack.c.l.b16 %v281
        %v1207 = vunpack.c.l.b16 %v282
        %v1208 = vunpack.c.l.b16 %v283
        %v1209 = vunpack.c.l.b16 %v284
        %v1210 = vunpack.c.l.b16 %v285
        %v1211 = vunpack.c.l.b16 %v286
        %v1212 = vunpack.c.l.b16 %v287
        %v1213 = vunpack.c.l.b16 %v288
        %v1214 = vpack.c.b16 %v1183, %v1182
        %v1215 = vpack.c.b16 %v1185, %v1184
        %v1216 = vpack.c.b16 %v1187, %v1186
        %v1217 = vpack.c.b16 %v1189, %v1188
        %v1218 = vpack.c.b16 %v1191, %v1190
        %v1219 = vpack.c.b16 %v1193, %v1192
        %v1220 = vpack.c.b16 %v1195, %v1194
        %v1221 = vpack.c.b16 %v1197, %v1196
        %v1222 = vpack.c.b16 %v1199, %v1198
        %v1223 = vpack.c.b16 %v1201, %v1200
        %v1224 = vpack.c.b16 %v1203, %v1202
        %v1225 = vpack.c.b16 %v1205, %v1204
        %v1226 = vpack.c.b16 %v1207, %v1206
        %v1227 = vpack.c.b16 %v1209, %v1208
        %v1228 = vpack.c.b16 %v1211, %v1210
        %v1229 = vpack.c.b16 %v1213, %v1212
        %v1294 = vunpack.c.l.b16 %v401
        %v1295 = vunpack.c.h.b16 %v401
        %v1296 = vunpack.c.l.b16 %v402
        %v1297 = vunpack.c.h.b16 %v402
        %v1298 = vunpack.c.l.b16 %v403
        %v1299 = vunpack.c.l.b16 %v404
        %v1300 = vunpack.c.h.b16 %v404
        %v1301 = vunpack.c.l.b16 %v405
        %v1302 = vunpack.c.h.b16 %v405
        %v1303 = vunpack.c.l.b16 %v406
        %v1304 = vunpack.c.l.b16 %v407
        %v1305 = vunpack.c.h.b16 %v407
        %v1306 = vunpack.c.l.b16 %v408
        %v1307 = vunpack.c.h.b16 %v408
        %v1308 = vunpack.c.l.b16 %v409
        %v1309 = vunpack.c.l.b16 %v410
        %v1310 = vunpack.c.h.b16 %v410
        %v1311 = vunpack.c.l.b16 %v411
        %v1312 = vunpack.c.h.b16 %v411
        %v1313 = vunpack.c.l.b16 %v412
        %v1314 = vunpack.c.l.b16 %v413
        %v1315 = vunpack.c.h.b16 %v413
        %v1316 = vunpack.c.l.b16 %v414
        %v1317 = vunpack.c.h.b16 %v414
        %v1318 = vunpack.c.l.b16 %v415
        %v1319 = vunpack.c.l.b16 %v416
        %v1320 = vunpack.c.h.b16 %v416
        %v1321 = vunpack.c.l.b16 %v417
        %v1322 = vunpack.c.h.b16 %v417
        %v1323 = vunpack.c.l.b16 %v418
        %v1324 = vunpack.c.l.b16 %v419
        %v1325 = vunpack.c.h.b16 %v419
        %v1326 = vunpack.c.l.b16 %v420
        %v1327 = vunpack.c.h.b16 %v420
        %v1328 = vunpack.c.l.b16 %v421
        %v1329 = vunpack.c.l.b16 %v422
        %v1330 = vunpack.c.h.b16 %v422
        %v1331 = vunpack.c.l.b16 %v423
        %v1332 = vunpack.c.h.b16 %v423
        %v1333 = vunpack.c.l.b16 %v424
        %v1334 = vunpack.c.l.b16 %v425
        %v1335 = vunpack.c.h.b16 %v425
        %v1336 = vunpack.c.l.b16 %v426
        %v1337 = vunpack.c.h.b16 %v426
        %v1338 = vunpack.c.l.b16 %v427
        %v1339 = vunpack.c.l.b16 %v428
        %v1340 = vunpack.c.h.b16 %v428
        %v1341 = vunpack.c.l.b16 %v429
        %v1342 = vunpack.c.h.b16 %v429
        %v1343 = vunpack.c.l.b16 %v430
        %v1344 = vunpack.c.l.b16 %v431
        %v1345 = vunpack.c.h.b16 %v431
        %v1346 = vunpack.c.l.b16 %v432
        %v1347 = vunpack.c.h.b16 %v432
        %v1348 = vunpack.c.l.b16 %v433
        %v1349 = vunpack.c.l.b16 %v434
        %v1350 = vunpack.c.h.b16 %v434
        %v1351 = vunpack.c.l.b16 %v435
        %v1352 = vunpack.c.h.b16 %v435
        %v1353 = vunpack.c.l.b16 %v436
        %v1354 = vunpack.c.l.b16 %v437
        %v1355 = vunpack.c.h.b16 %v437
        %v1356 = vunpack.c.l.b16 %v438
        %v1357 = vunpack.c.h.b16 %v438
        %v1358 = vunpack.c.l.b16 %v439
        %v1359 = vunpack.c.l.b16 %v440
        %v1360 = vunpack.c.h.b16 %v440
        %v1361 = vunpack.c.l.b16 %v441
        %v1362 = vunpack.c.h.b16 %v441
        %v1363 = vunpack.c.l.b16 %v442
        %v1364 = vunpack.c.l.b16 %v443
        %v1365 = vunpack.c.h.b16 %v443
        %v1366 = vunpack.c.l.b16 %v444
        %v1367 = vunpack.c.h.b16 %v444
        %v1368 = vunpack.c.l.b16 %v445
        %v1369 = vunpack.c.l.b16 %v446
        %v1370 = vunpack.c.h.b16 %v446
        %v1371 = vunpack.c.l.b16 %v447
        %v1372 = vunpack.c.h.b16 %v447
        %v1373 = vunpack.c.l.b16 %v448
        %v1374 = vpack.c.b16 %v1299, %v1294
        %v1375 = vpack.c.b16 %v1300, %v1295
        %v1376 = vpack.c.b16 %v1301, %v1296
        %v1377 = vpack.c.b16 %v1302, %v1297
        %v1378 = vpack.c.b16 %v1303, %v1298
        %v1379 = vpack.c.b16 %v1309, %v1304
        %v1380 = vpack.c.b16 %v1310, %v1305
        %v1381 = vpack.c.b16 %v1311, %v1306
        %v1382 = vpack.c.b16 %v1312, %v1307
        %v1383 = vpack.c.b16 %v1313, %v1308
        %v1384 = vpack.c.b16 %v1319, %v1314
        %v1385 = vpack.c.b16 %v1320, %v1315
        %v1386 = vpack.c.b16 %v1321, %v1316
        %v1387 = vpack.c.b16 %v1322, %v1317
        %v1388 = vpack.c.b16 %v1323, %v1318
        %v1389 = vpack.c.b16 %v1329, %v1324
        %v1390 = vpack.c.b16 %v1330, %v1325
        %v1391 = vpack.c.b16 %v1331, %v1326
        %v1392 = vpack.c.b16 %v1332, %v1327
        %v1393 = vpack.c.b16 %v1333, %v1328
        %v1394 = vpack.c.b16 %v1339, %v1334
        %v1395 = vpack.c.b16 %v1340, %v1335
        %v1396 = vpack.c.b16 %v1341, %v1336
        %v1397 = vpack.c.b16 %v1342, %v1337
        %v1398 = vpack.c.b16 %v1343, %v1338
        %v1399 = vpack.c.b16 %v1349, %v1344
        %v1400 = vpack.c.b16 %v1350, %v1345
        %v1401 = vpack.c.b16 %v1351, %v1346
        %v1402 = vpack.c.b16 %v1352, %v1347
        %v1403 = vpack.c.b16 %v1353, %v1348
        %v1404 = vpack.c.b16 %v1359, %v1354
        %v1405 = vpack.c.b16 %v1360, %v1355
        %v1406 = vpack.c.b16 %v1361, %v1356
        %v1407 = vpack.c.b16 %v1362, %v1357
        %v1408 = vpack.c.b16 %v1363, %v1358
        %v1409 = vpack.c.b16 %v1369, %v1364
        %v1410 = vpack.c.b16 %v1370, %v1365
        %v1411 = vpack.c.b16 %v1371, %v1366
        %v1412 = vpack.c.b16 %v1372, %v1367
        %v1413 = vpack.c.b16 %v1373, %v1368
        %1454 = vmatpush.bf16.msra.mxu0 %v1409
        %1455 = vmatpush.bf16.msra.mxu0 %v1404
        %1456 = vmatpush.bf16.msra.mxu0 %v1399
        %1457 = vmatpush.bf16.msra.mxu0 %v1394
        %1458 = vmatpush.bf16.msra.mxu0 %v1389
        %1459 = vmatpush.bf16.msra.mxu0 %v1384
        %1460 = vmatpush.bf16.msra.mxu0 %v1379
        %1461 = vmatpush.bf16.msra.mxu0 %v1374
        %1462 = vmatmul.bf16.gmra.mxu0 %v1214
        %v1463 = vpop.f32.mrf.mxu0
        %v1464 = vadd.f32 %v715, %v1463
        %v1465 = vpop.f32.mrf.mxu0
        %v1466 = vadd.f32 %v717, %v1465
        %1467 = vmatmul.bf16.gmra.mxu0 %v1215
        %v1468 = vpop.f32.mrf.mxu0
        %v1469 = vadd.f32 %v720, %v1468
        %v1470 = vpop.f32.mrf.mxu0
        %v1471 = vadd.f32 %v722, %v1470
        %1472 = vmatmul.bf16.gmra.mxu0 %v1216
        %v1473 = vpop.f32.mrf.mxu0
        %v1474 = vadd.f32 %v725, %v1473
        %v1475 = vpop.f32.mrf.mxu0
        %v1476 = vadd.f32 %v727, %v1475
        %1477 = vmatmul.bf16.gmra.mxu0 %v1217
        %v1478 = vpop.f32.mrf.mxu0
        %v1479 = vadd.f32 %v730, %v1478
        %v1480 = vpop.f32.mrf.mxu0
        %v1481 = vadd.f32 %v732, %v1480
        %1482 = vmatmul.bf16.gmra.mxu0 %v1218
        %v1483 = vpop.f32.mrf.mxu0
        %v1484 = vadd.f32 %v735, %v1483
        %v1485 = vpop.f32.mrf.mxu0
        %v1486 = vadd.f32 %v737, %v1485
        %1487 = vmatmul.bf16.gmra.mxu0 %v1219
        %v1488 = vpop.f32.mrf.mxu0
        %v1489 = vadd.f32 %v740, %v1488
        %v1490 = vpop.f32.mrf.mxu0
        %v1491 = vadd.f32 %v742, %v1490
        %1492 = vmatmul.bf16.gmra.mxu0 %v1220
        %v1493 = vpop.f32.mrf.mxu0
        %v1494 = vadd.f32 %v745, %v1493
        %v1495 = vpop.f32.mrf.mxu0
        %v1496 = vadd.f32 %v747, %v1495
        %1497 = vmatmul.bf16.gmra.mxu0 %v1221
        %v1498 = vpop.f32.mrf.mxu0
        %v1499 = vadd.f32 %v750, %v1498
        %v1500 = vpop.f32.mrf.mxu0
        %v1501 = vadd.f32 %v752, %v1500
        %1502 = vmatmul.bf16.gmra.mxu0 %v1222
        %v1503 = vpop.f32.mrf.mxu0
        %v1504 = vadd.f32 %v755, %v1503
        %v1505 = vpop.f32.mrf.mxu0
        %v1506 = vadd.f32 %v757, %v1505
        %1507 = vmatmul.bf16.gmra.mxu0 %v1223
        %v1508 = vpop.f32.mrf.mxu0
        %v1509 = vadd.f32 %v760, %v1508
        %v1510 = vpop.f32.mrf.mxu0
        %v1511 = vadd.f32 %v762, %v1510
        %1512 = vmatmul.bf16.gmra.mxu0 %v1224
        %v1513 = vpop.f32.mrf.mxu0
        %v1514 = vadd.f32 %v765, %v1513
        %v1515 = vpop.f32.mrf.mxu0
        %v1516 = vadd.f32 %v767, %v1515
        %1517 = vmatmul.bf16.gmra.mxu0 %v1225
        %v1518 = vpop.f32.mrf.mxu0
        %v1519 = vadd.f32 %v770, %v1518
        %v1520 = vpop.f32.mrf.mxu0
        %v1521 = vadd.f32 %v772, %v1520
        %1522 = vmatmul.bf16.gmra.mxu0 %v1226
        %v1523 = vpop.f32.mrf.mxu0
        %v1524 = vadd.f32 %v775, %v1523
        %v1525 = vpop.f32.mrf.mxu0
        %v1526 = vadd.f32 %v777, %v1525
        %1527 = vmatmul.bf16.gmra.mxu0 %v1227
        %v1528 = vpop.f32.mrf.mxu0
        %v1529 = vadd.f32 %v780, %v1528
        %v1530 = vpop.f32.mrf.mxu0
        %v1531 = vadd.f32 %v782, %v1530
        %1532 = vmatmul.bf16.gmra.mxu0 %v1228
        %v1533 = vpop.f32.mrf.mxu0
        %v1534 = vadd.f32 %v785, %v1533
        %v1535 = vpop.f32.mrf.mxu0
        %v1536 = vadd.f32 %v787, %v1535
        %1537 = vmatmul.bf16.gmra.mxu0 %v1229
        %v1538 = vpop.f32.mrf.mxu0
        %v1539 = vadd.f32 %v790, %v1538
        %v1540 = vpop.f32.mrf.mxu0
        %v1541 = vadd.f32 %v792, %v1540
        %1542 = vdwg.mxu0
        %1543 = vmatpush.bf16.msra.mxu0 %v1410
        %1544 = vmatpush.bf16.msra.mxu0 %v1405
        %1545 = vmatpush.bf16.msra.mxu0 %v1400
        %1546 = vmatpush.bf16.msra.mxu0 %v1395
        %1547 = vmatpush.bf16.msra.mxu0 %v1390
        %1548 = vmatpush.bf16.msra.mxu0 %v1385
        %1549 = vmatpush.bf16.msra.mxu0 %v1380
        %1550 = vmatpush.bf16.msra.mxu0 %v1375
        %1551 = vmatmul.bf16.gmra.mxu0 %v1214
        %v1552 = vpop.f32.mrf.mxu0
        %v1553 = vadd.f32 %v804, %v1552
        %v1554 = vpop.f32.mrf.mxu0
        %v1555 = vadd.f32 %v806, %v1554
        %1556 = vmatmul.bf16.gmra.mxu0 %v1215
        %v1557 = vpop.f32.mrf.mxu0
        %v1558 = vadd.f32 %v809, %v1557
        %v1559 = vpop.f32.mrf.mxu0
        %v1560 = vadd.f32 %v811, %v1559
        %1561 = vmatmul.bf16.gmra.mxu0 %v1216
        %v1562 = vpop.f32.mrf.mxu0
        %v1563 = vadd.f32 %v814, %v1562
        %v1564 = vpop.f32.mrf.mxu0
        %v1565 = vadd.f32 %v816, %v1564
        %1566 = vmatmul.bf16.gmra.mxu0 %v1217
        %v1567 = vpop.f32.mrf.mxu0
        %v1568 = vadd.f32 %v819, %v1567
        %v1569 = vpop.f32.mrf.mxu0
        %v1570 = vadd.f32 %v821, %v1569
        %1571 = vmatmul.bf16.gmra.mxu0 %v1218
        %v1572 = vpop.f32.mrf.mxu0
        %v1573 = vadd.f32 %v824, %v1572
        %v1574 = vpop.f32.mrf.mxu0
        %v1575 = vadd.f32 %v826, %v1574
        %1576 = vmatmul.bf16.gmra.mxu0 %v1219
        %v1577 = vpop.f32.mrf.mxu0
        %v1578 = vadd.f32 %v829, %v1577
        %v1579 = vpop.f32.mrf.mxu0
        %v1580 = vadd.f32 %v831, %v1579
        %1581 = vmatmul.bf16.gmra.mxu0 %v1220
        %v1582 = vpop.f32.mrf.mxu0
        %v1583 = vadd.f32 %v834, %v1582
        %v1584 = vpop.f32.mrf.mxu0
        %v1585 = vadd.f32 %v836, %v1584
        %1586 = vmatmul.bf16.gmra.mxu0 %v1221
        %v1587 = vpop.f32.mrf.mxu0
        %v1588 = vadd.f32 %v839, %v1587
        %v1589 = vpop.f32.mrf.mxu0
        %v1590 = vadd.f32 %v841, %v1589
        %1591 = vmatmul.bf16.gmra.mxu0 %v1222
        %v1592 = vpop.f32.mrf.mxu0
        %v1593 = vadd.f32 %v844, %v1592
        %v1594 = vpop.f32.mrf.mxu0
        %v1595 = vadd.f32 %v846, %v1594
        %1596 = vmatmul.bf16.gmra.mxu0 %v1223
        %v1597 = vpop.f32.mrf.mxu0
        %v1598 = vadd.f32 %v849, %v1597
        %v1599 = vpop.f32.mrf.mxu0
        %v1600 = vadd.f32 %v851, %v1599
        %1601 = vmatmul.bf16.gmra.mxu0 %v1224
        %v1602 = vpop.f32.mrf.mxu0
        %v1603 = vadd.f32 %v854, %v1602
        %v1604 = vpop.f32.mrf.mxu0
        %v1605 = vadd.f32 %v856, %v1604
        %1606 = vmatmul.bf16.gmra.mxu0 %v1225
        %v1607 = vpop.f32.mrf.mxu0
        %v1608 = vadd.f32 %v859, %v1607
        %v1609 = vpop.f32.mrf.mxu0
        %v1610 = vadd.f32 %v861, %v1609
        %1611 = vmatmul.bf16.gmra.mxu0 %v1226
        %v1612 = vpop.f32.mrf.mxu0
        %v1613 = vadd.f32 %v864, %v1612
        %v1614 = vpop.f32.mrf.mxu0
        %v1615 = vadd.f32 %v866, %v1614
        %1616 = vmatmul.bf16.gmra.mxu0 %v1227
        %v1617 = vpop.f32.mrf.mxu0
        %v1618 = vadd.f32 %v869, %v1617
        %v1619 = vpop.f32.mrf.mxu0
        %v1620 = vadd.f32 %v871, %v1619
        %1621 = vmatmul.bf16.gmra.mxu0 %v1228
        %v1622 = vpop.f32.mrf.mxu0
        %v1623 = vadd.f32 %v874, %v1622
        %v1624 = vpop.f32.mrf.mxu0
        %v1625 = vadd.f32 %v876, %v1624
        %1626 = vmatmul.bf16.gmra.mxu0 %v1229
        %v1627 = vpop.f32.mrf.mxu0
        %v1628 = vadd.f32 %v879, %v1627
        %v1629 = vpop.f32.mrf.mxu0
        %v1630 = vadd.f32 %v881, %v1629
        %1631 = vdwg.mxu0
        %1632 = vmatpush.bf16.msra.mxu0 %v1411
        %1633 = vmatpush.bf16.msra.mxu0 %v1406
        %1634 = vmatpush.bf16.msra.mxu0 %v1401
        %1635 = vmatpush.bf16.msra.mxu0 %v1396
        %1636 = vmatpush.bf16.msra.mxu0 %v1391
        %1637 = vmatpush.bf16.msra.mxu0 %v1386
        %1638 = vmatpush.bf16.msra.mxu0 %v1381
        %1639 = vmatpush.bf16.msra.mxu0 %v1376
        %1640 = vmatmul.bf16.gmra.mxu0 %v1214
        %v1641 = vpop.f32.mrf.mxu0
        %v1642 = vadd.f32 %v893, %v1641
        %v1643 = vpop.f32.mrf.mxu0
        %v1644 = vadd.f32 %v895, %v1643
        %1645 = vmatmul.bf16.gmra.mxu0 %v1215
        %v1646 = vpop.f32.mrf.mxu0
        %v1647 = vadd.f32 %v898, %v1646
        %v1648 = vpop.f32.mrf.mxu0
        %v1649 = vadd.f32 %v900, %v1648
        %1650 = vmatmul.bf16.gmra.mxu0 %v1216
        %v1651 = vpop.f32.mrf.mxu0
        %v1652 = vadd.f32 %v903, %v1651
        %v1653 = vpop.f32.mrf.mxu0
        %v1654 = vadd.f32 %v905, %v1653
        %1655 = vmatmul.bf16.gmra.mxu0 %v1217
        %v1656 = vpop.f32.mrf.mxu0
        %v1657 = vadd.f32 %v908, %v1656
        %v1658 = vpop.f32.mrf.mxu0
        %v1659 = vadd.f32 %v910, %v1658
        %1660 = vmatmul.bf16.gmra.mxu0 %v1218
        %v1661 = vpop.f32.mrf.mxu0
        %v1662 = vadd.f32 %v913, %v1661
        %v1663 = vpop.f32.mrf.mxu0
        %v1664 = vadd.f32 %v915, %v1663
        %1665 = vmatmul.bf16.gmra.mxu0 %v1219
        %v1666 = vpop.f32.mrf.mxu0
        %v1667 = vadd.f32 %v918, %v1666
        %v1668 = vpop.f32.mrf.mxu0
        %v1669 = vadd.f32 %v920, %v1668
        %1670 = vmatmul.bf16.gmra.mxu0 %v1220
        %v1671 = vpop.f32.mrf.mxu0
        %v1672 = vadd.f32 %v923, %v1671
        %v1673 = vpop.f32.mrf.mxu0
        %v1674 = vadd.f32 %v925, %v1673
        %1675 = vmatmul.bf16.gmra.mxu0 %v1221
        %v1676 = vpop.f32.mrf.mxu0
        %v1677 = vadd.f32 %v928, %v1676
        %v1678 = vpop.f32.mrf.mxu0
        %v1679 = vadd.f32 %v930, %v1678
        %1680 = vmatmul.bf16.gmra.mxu0 %v1222
        %v1681 = vpop.f32.mrf.mxu0
        %v1682 = vadd.f32 %v933, %v1681
        %v1683 = vpop.f32.mrf.mxu0
        %v1684 = vadd.f32 %v935, %v1683
        %1685 = vmatmul.bf16.gmra.mxu0 %v1223
        %v1686 = vpop.f32.mrf.mxu0
        %v1687 = vadd.f32 %v938, %v1686
        %v1688 = vpop.f32.mrf.mxu0
        %v1689 = vadd.f32 %v940, %v1688
        %1690 = vmatmul.bf16.gmra.mxu0 %v1224
        %v1691 = vpop.f32.mrf.mxu0
        %v1692 = vadd.f32 %v943, %v1691
        %v1693 = vpop.f32.mrf.mxu0
        %v1694 = vadd.f32 %v945, %v1693
        %1695 = vmatmul.bf16.gmra.mxu0 %v1225
        %v1696 = vpop.f32.mrf.mxu0
        %v1697 = vadd.f32 %v948, %v1696
        %v1698 = vpop.f32.mrf.mxu0
        %v1699 = vadd.f32 %v950, %v1698
        %1700 = vmatmul.bf16.gmra.mxu0 %v1226
        %v1701 = vpop.f32.mrf.mxu0
        %v1702 = vadd.f32 %v953, %v1701
        %v1703 = vpop.f32.mrf.mxu0
        %v1704 = vadd.f32 %v955, %v1703
        %1705 = vmatmul.bf16.gmra.mxu0 %v1227
        %v1706 = vpop.f32.mrf.mxu0
        %v1707 = vadd.f32 %v958, %v1706
        %v1708 = vpop.f32.mrf.mxu0
        %v1709 = vadd.f32 %v960, %v1708
        %1710 = vmatmul.bf16.gmra.mxu0 %v1228
        %v1711 = vpop.f32.mrf.mxu0
        %v1712 = vadd.f32 %v963, %v1711
        %v1713 = vpop.f32.mrf.mxu0
        %v1714 = vadd.f32 %v965, %v1713
        %1715 = vmatmul.bf16.gmra.mxu0 %v1229
        %v1716 = vpop.f32.mrf.mxu0
        %v1717 = vadd.f32 %v968, %v1716
        %v1718 = vpop.f32.mrf.mxu0
        %v1719 = vadd.f32 %v970, %v1718
        %1720 = vdwg.mxu0
        %1721 = vmatpush.bf16.msra.mxu0 %v1412
        %1722 = vmatpush.bf16.msra.mxu0 %v1407
        %1723 = vmatpush.bf16.msra.mxu0 %v1402
        %1724 = vmatpush.bf16.msra.mxu0 %v1397
        %1725 = vmatpush.bf16.msra.mxu0 %v1392
        %1726 = vmatpush.bf16.msra.mxu0 %v1387
        %1727 = vmatpush.bf16.msra.mxu0 %v1382
        %1728 = vmatpush.bf16.msra.mxu0 %v1377
        %1729 = vmatmul.bf16.gmra.mxu0 %v1214
        %v1730 = vpop.f32.mrf.mxu0
        %v1731 = vadd.f32 %v982, %v1730
        %v1732 = vpop.f32.mrf.mxu0
        %v1733 = vadd.f32 %v984, %v1732
        %1734 = vmatmul.bf16.gmra.mxu0 %v1215
        %v1735 = vpop.f32.mrf.mxu0
        %v1736 = vadd.f32 %v987, %v1735
        %v1737 = vpop.f32.mrf.mxu0
        %v1738 = vadd.f32 %v989, %v1737
        %1739 = vmatmul.bf16.gmra.mxu0 %v1216
        %v1740 = vpop.f32.mrf.mxu0
        %v1741 = vadd.f32 %v992, %v1740
        %v1742 = vpop.f32.mrf.mxu0
        %v1743 = vadd.f32 %v994, %v1742
        %1744 = vmatmul.bf16.gmra.mxu0 %v1217
        %v1745 = vpop.f32.mrf.mxu0
        %v1746 = vadd.f32 %v997, %v1745
        %v1747 = vpop.f32.mrf.mxu0
        %v1748 = vadd.f32 %v999, %v1747
        %1749 = vmatmul.bf16.gmra.mxu0 %v1218
        %v1750 = vpop.f32.mrf.mxu0
        %v1751 = vadd.f32 %v1002, %v1750
        %v1752 = vpop.f32.mrf.mxu0
        %v1753 = vadd.f32 %v1004, %v1752
        %1754 = vmatmul.bf16.gmra.mxu0 %v1219
        %v1755 = vpop.f32.mrf.mxu0
        %v1756 = vadd.f32 %v1007, %v1755
        %v1757 = vpop.f32.mrf.mxu0
        %v1758 = vadd.f32 %v1009, %v1757
        %1759 = vmatmul.bf16.gmra.mxu0 %v1220
        %v1760 = vpop.f32.mrf.mxu0
        %v1761 = vadd.f32 %v1012, %v1760
        %v1762 = vpop.f32.mrf.mxu0
        %v1763 = vadd.f32 %v1014, %v1762
        %1764 = vmatmul.bf16.gmra.mxu0 %v1221
        %v1765 = vpop.f32.mrf.mxu0
        %v1766 = vadd.f32 %v1017, %v1765
        %v1767 = vpop.f32.mrf.mxu0
        %v1768 = vadd.f32 %v1019, %v1767
        %1769 = vmatmul.bf16.gmra.mxu0 %v1222
        %v1770 = vpop.f32.mrf.mxu0
        %v1771 = vadd.f32 %v1022, %v1770
        %v1772 = vpop.f32.mrf.mxu0
        %v1773 = vadd.f32 %v1024, %v1772
        %1774 = vmatmul.bf16.gmra.mxu0 %v1223
        %v1775 = vpop.f32.mrf.mxu0
        %v1776 = vadd.f32 %v1027, %v1775
        %v1777 = vpop.f32.mrf.mxu0
        %v1778 = vadd.f32 %v1029, %v1777
        %1779 = vmatmul.bf16.gmra.mxu0 %v1224
        %v1780 = vpop.f32.mrf.mxu0
        %v1781 = vadd.f32 %v1032, %v1780
        %v1782 = vpop.f32.mrf.mxu0
        %v1783 = vadd.f32 %v1034, %v1782
        %1784 = vmatmul.bf16.gmra.mxu0 %v1225
        %v1785 = vpop.f32.mrf.mxu0
        %v1786 = vadd.f32 %v1037, %v1785
        %v1787 = vpop.f32.mrf.mxu0
        %v1788 = vadd.f32 %v1039, %v1787
        %1789 = vmatmul.bf16.gmra.mxu0 %v1226
        %v1790 = vpop.f32.mrf.mxu0
        %v1791 = vadd.f32 %v1042, %v1790
        %v1792 = vpop.f32.mrf.mxu0
        %v1793 = vadd.f32 %v1044, %v1792
        %1794 = vmatmul.bf16.gmra.mxu0 %v1227
        %v1795 = vpop.f32.mrf.mxu0
        %v1796 = vadd.f32 %v1047, %v1795
        %v1797 = vpop.f32.mrf.mxu0
        %v1798 = vadd.f32 %v1049, %v1797
        %1799 = vmatmul.bf16.gmra.mxu0 %v1228
        %v1800 = vpop.f32.mrf.mxu0
        %v1801 = vadd.f32 %v1052, %v1800
        %v1802 = vpop.f32.mrf.mxu0
        %v1803 = vadd.f32 %v1054, %v1802
        %1804 = vmatmul.bf16.gmra.mxu0 %v1229
        %v1805 = vpop.f32.mrf.mxu0
        %v1806 = vadd.f32 %v1057, %v1805
        %v1807 = vpop.f32.mrf.mxu0
        %v1808 = vadd.f32 %v1059, %v1807
        %1809 = vdwg.mxu0
        %1810 = vmatpush.bf16.msra.mxu0 %v1413
        %1811 = vmatpush.bf16.msra.mxu0 %v1408
        %1812 = vmatpush.bf16.msra.mxu0 %v1403
        %1813 = vmatpush.bf16.msra.mxu0 %v1398
        %1814 = vmatpush.bf16.msra.mxu0 %v1393
        %1815 = vmatpush.bf16.msra.mxu0 %v1388
        %1816 = vmatpush.bf16.msra.mxu0 %v1383
        %1817 = vmatpush.bf16.msra.mxu0 %v1378
        %1818 = vmatmul.bf16.gmra.mxu0 %v1214
        %v1819 = vpop.f32.mrf.mxu0
        %v1820 = vadd.f32 %v1071, %v1819
        %v1821 = vpop.f32.mrf.mxu0
        %v1822 = vadd.f32 %v1073, %v1821
        %1823 = vmatmul.bf16.gmra.mxu0 %v1215
        %v1824 = vpop.f32.mrf.mxu0
        %v1825 = vadd.f32 %v1076, %v1824
        %v1826 = vpop.f32.mrf.mxu0
        %v1827 = vadd.f32 %v1078, %v1826
        %1828 = vmatmul.bf16.gmra.mxu0 %v1216
        %v1829 = vpop.f32.mrf.mxu0
        %v1830 = vadd.f32 %v1081, %v1829
        %v1831 = vpop.f32.mrf.mxu0
        %v1832 = vadd.f32 %v1083, %v1831
        %1833 = vmatmul.bf16.gmra.mxu0 %v1217
        %v1834 = vpop.f32.mrf.mxu0
        %v1835 = vadd.f32 %v1086, %v1834
        %v1836 = vpop.f32.mrf.mxu0
        %v1837 = vadd.f32 %v1088, %v1836
        %1838 = vmatmul.bf16.gmra.mxu0 %v1218
        %v1839 = vpop.f32.mrf.mxu0
        %v1840 = vadd.f32 %v1091, %v1839
        %v1841 = vpop.f32.mrf.mxu0
        %v1842 = vadd.f32 %v1093, %v1841
        %1843 = vmatmul.bf16.gmra.mxu0 %v1219
        %v1844 = vpop.f32.mrf.mxu0
        %v1845 = vadd.f32 %v1096, %v1844
        %v1846 = vpop.f32.mrf.mxu0
        %v1847 = vadd.f32 %v1098, %v1846
        %1848 = vmatmul.bf16.gmra.mxu0 %v1220
        %v1849 = vpop.f32.mrf.mxu0
        %v1850 = vadd.f32 %v1101, %v1849
        %v1851 = vpop.f32.mrf.mxu0
        %v1852 = vadd.f32 %v1103, %v1851
        %1853 = vmatmul.bf16.gmra.mxu0 %v1221
        %v1854 = vpop.f32.mrf.mxu0
        %v1855 = vadd.f32 %v1106, %v1854
        %v1856 = vpop.f32.mrf.mxu0
        %v1857 = vadd.f32 %v1108, %v1856
        %1858 = vmatmul.bf16.gmra.mxu0 %v1222
        %v1859 = vpop.f32.mrf.mxu0
        %v1860 = vadd.f32 %v1111, %v1859
        %v1861 = vpop.f32.mrf.mxu0
        %v1862 = vadd.f32 %v1113, %v1861
        %1863 = vmatmul.bf16.gmra.mxu0 %v1223
        %v1864 = vpop.f32.mrf.mxu0
        %v1865 = vadd.f32 %v1116, %v1864
        %v1866 = vpop.f32.mrf.mxu0
        %v1867 = vadd.f32 %v1118, %v1866
        %1868 = vmatmul.bf16.gmra.mxu0 %v1224
        %v1869 = vpop.f32.mrf.mxu0
        %v1870 = vadd.f32 %v1121, %v1869
        %v1871 = vpop.f32.mrf.mxu0
        %v1872 = vadd.f32 %v1123, %v1871
        %1873 = vmatmul.bf16.gmra.mxu0 %v1225
        %v1874 = vpop.f32.mrf.mxu0
        %v1875 = vadd.f32 %v1126, %v1874
        %v1876 = vpop.f32.mrf.mxu0
        %v1877 = vadd.f32 %v1128, %v1876
        %1878 = vmatmul.bf16.gmra.mxu0 %v1226
        %v1879 = vpop.f32.mrf.mxu0
        %v1880 = vadd.f32 %v1131, %v1879
        %v1881 = vpop.f32.mrf.mxu0
        %v1882 = vadd.f32 %v1133, %v1881
        %1883 = vmatmul.bf16.gmra.mxu0 %v1227
        %v1884 = vpop.f32.mrf.mxu0
        %v1885 = vadd.f32 %v1136, %v1884
        %v1886 = vpop.f32.mrf.mxu0
        %v1887 = vadd.f32 %v1138, %v1886
        %1888 = vmatmul.bf16.gmra.mxu0 %v1228
        %v1889 = vpop.f32.mrf.mxu0
        %v1890 = vadd.f32 %v1141, %v1889
        %v1891 = vpop.f32.mrf.mxu0
        %v1892 = vadd.f32 %v1143, %v1891
        %1893 = vmatmul.bf16.gmra.mxu0 %v1229
        %v1894 = vpop.f32.mrf.mxu0
        %v1895 = vadd.f32 %v1146, %v1894
        %v1896 = vpop.f32.mrf.mxu0
        %v1897 = vadd.f32 %v1148, %v1896
        %1898 = vdwg.mxu0
        %v1899 = vlaneseq
        %v1900 = vand.u32 %v1899, 127
        %vm1901 = vcmp.lt.s32.totalorder %v1900, 4
        %v1902 = vsel %vm1901, %v1464, -inf
        %v1903 = vsel %vm1901, %v1466, -inf
        %v1904 = vsel %vm1901, %v1469, -inf
        %v1905 = vsel %vm1901, %v1471, -inf
        %v1906 = vsel %vm1901, %v1474, -inf
        %v1907 = vsel %vm1901, %v1476, -inf
        %v1908 = vsel %vm1901, %v1479, -inf
        %v1909 = vsel %vm1901, %v1481, -inf
        %v1910 = vsel %vm1901, %v1484, -inf
        %v1911 = vsel %vm1901, %v1486, -inf
        %v1912 = vsel %vm1901, %v1489, -inf
        %v1913 = vsel %vm1901, %v1491, -inf
        %v1914 = vsel %vm1901, %v1494, -inf
        %v1915 = vsel %vm1901, %v1496, -inf
        %v1916 = vsel %vm1901, %v1499, -inf
        %v1917 = vsel %vm1901, %v1501, -inf
        %v1918 = vsel %vm1901, %v1504, -inf
        %v1919 = vsel %vm1901, %v1506, -inf
        %v1920 = vsel %vm1901, %v1509, -inf
        %v1921 = vsel %vm1901, %v1511, -inf
        %v1922 = vsel %vm1901, %v1514, -inf
        %v1923 = vsel %vm1901, %v1516, -inf
        %v1924 = vsel %vm1901, %v1519, -inf
        %v1925 = vsel %vm1901, %v1521, -inf
        %v1926 = vsel %vm1901, %v1524, -inf
        %v1927 = vsel %vm1901, %v1526, -inf
        %v1928 = vsel %vm1901, %v1529, -inf
        %v1929 = vsel %vm1901, %v1531, -inf
        %v1930 = vsel %vm1901, %v1534, -inf
        %v1931 = vsel %vm1901, %v1536, -inf
        %v1932 = vsel %vm1901, %v1539, -inf
        %v1933 = vsel %vm1901, %v1541, -inf
        %1934 = vmax.xlane.f32.xlu0 %v1902
        %v1935 = vpop.xlane.xlu0 %1934
        %1936 = vmax.xlane.f32.xlu0 %v1903
        %v1937 = vpop.xlane.xlu0 %1936
        %1938 = vmax.xlane.f32.xlu0 %v1904
        %v1939 = vpop.xlane.xlu0 %1938
        %1940 = vmax.xlane.f32.xlu0 %v1905
        %v1941 = vpop.xlane.xlu0 %1940
        %1942 = vmax.xlane.f32.xlu0 %v1906
        %v1943 = vpop.xlane.xlu0 %1942
        %1944 = vmax.xlane.f32.xlu0 %v1907
        %v1945 = vpop.xlane.xlu0 %1944
        %1946 = vmax.xlane.f32.xlu0 %v1908
        %v1947 = vpop.xlane.xlu0 %1946
        %1948 = vmax.xlane.f32.xlu0 %v1909
        %v1949 = vpop.xlane.xlu0 %1948
        %1950 = vmax.xlane.f32.xlu0 %v1910
        %v1951 = vpop.xlane.xlu0 %1950
        %1952 = vmax.xlane.f32.xlu0 %v1911
        %v1953 = vpop.xlane.xlu0 %1952
        %1954 = vmax.xlane.f32.xlu0 %v1912
        %v1955 = vpop.xlane.xlu0 %1954
        %1956 = vmax.xlane.f32.xlu0 %v1913
        %v1957 = vpop.xlane.xlu0 %1956
        %1958 = vmax.xlane.f32.xlu0 %v1914
        %v1959 = vpop.xlane.xlu0 %1958
        %1960 = vmax.xlane.f32.xlu0 %v1915
        %v1961 = vpop.xlane.xlu0 %1960
        %1962 = vmax.xlane.f32.xlu0 %v1916
        %v1963 = vpop.xlane.xlu0 %1962
        %1964 = vmax.xlane.f32.xlu0 %v1917
        %v1965 = vpop.xlane.xlu0 %1964
        %1966 = vmax.xlane.f32.xlu0 %v1918
        %v1967 = vpop.xlane.xlu0 %1966
        %1968 = vmax.xlane.f32.xlu0 %v1919
        %v1969 = vpop.xlane.xlu0 %1968
        %1970 = vmax.xlane.f32.xlu0 %v1920
        %v1971 = vpop.xlane.xlu0 %1970
        %1972 = vmax.xlane.f32.xlu0 %v1921
        %v1973 = vpop.xlane.xlu0 %1972
        %1974 = vmax.xlane.f32.xlu0 %v1922
        %v1975 = vpop.xlane.xlu0 %1974
        %1976 = vmax.xlane.f32.xlu0 %v1923
        %v1977 = vpop.xlane.xlu0 %1976
        %1978 = vmax.xlane.f32.xlu0 %v1924
        %v1979 = vpop.xlane.xlu0 %1978
        %1980 = vmax.xlane.f32.xlu0 %v1925
        %v1981 = vpop.xlane.xlu0 %1980
        %1982 = vmax.xlane.f32.xlu0 %v1926
        %v1983 = vpop.xlane.xlu0 %1982
        %1984 = vmax.xlane.f32.xlu0 %v1927
        %v1985 = vpop.xlane.xlu0 %1984
        %1986 = vmax.xlane.f32.xlu0 %v1928
        %v1987 = vpop.xlane.xlu0 %1986
        %1988 = vmax.xlane.f32.xlu0 %v1929
        %v1989 = vpop.xlane.xlu0 %1988
        %1990 = vmax.xlane.f32.xlu0 %v1930
        %v1991 = vpop.xlane.xlu0 %1990
        %1992 = vmax.xlane.f32.xlu0 %v1931
        %v1993 = vpop.xlane.xlu0 %1992
        %1994 = vmax.xlane.f32.xlu0 %v1932
        %v1995 = vpop.xlane.xlu0 %1994
        %1996 = vmax.xlane.f32.xlu0 %v1933
        %v1997 = vpop.xlane.xlu0 %1996
        %vm1998 = vcmp.eq.f32.partialorder %v1902, %v1935
        %vm1999 = vcmp.eq.f32.partialorder %v1903, %v1937
        %vm2000 = vcmp.eq.f32.partialorder %v1904, %v1939
        %vm2001 = vcmp.eq.f32.partialorder %v1905, %v1941
        %vm2002 = vcmp.eq.f32.partialorder %v1906, %v1943
        %vm2003 = vcmp.eq.f32.partialorder %v1907, %v1945
        %vm2004 = vcmp.eq.f32.partialorder %v1908, %v1947
        %vm2005 = vcmp.eq.f32.partialorder %v1909, %v1949
        %vm2006 = vcmp.eq.f32.partialorder %v1910, %v1951
        %vm2007 = vcmp.eq.f32.partialorder %v1911, %v1953
        %vm2008 = vcmp.eq.f32.partialorder %v1912, %v1955
        %vm2009 = vcmp.eq.f32.partialorder %v1913, %v1957
        %vm2010 = vcmp.eq.f32.partialorder %v1914, %v1959
        %vm2011 = vcmp.eq.f32.partialorder %v1915, %v1961
        %vm2012 = vcmp.eq.f32.partialorder %v1916, %v1963
        %vm2013 = vcmp.eq.f32.partialorder %v1917, %v1965
        %vm2014 = vcmp.eq.f32.partialorder %v1918, %v1967
        %vm2015 = vcmp.eq.f32.partialorder %v1919, %v1969
        %vm2016 = vcmp.eq.f32.partialorder %v1920, %v1971
        %vm2017 = vcmp.eq.f32.partialorder %v1921, %v1973
        %vm2018 = vcmp.eq.f32.partialorder %v1922, %v1975
        %vm2019 = vcmp.eq.f32.partialorder %v1923, %v1977
        %vm2020 = vcmp.eq.f32.partialorder %v1924, %v1979
        %vm2021 = vcmp.eq.f32.partialorder %v1925, %v1981
        %vm2022 = vcmp.eq.f32.partialorder %v1926, %v1983
        %vm2023 = vcmp.eq.f32.partialorder %v1927, %v1985
        %vm2024 = vcmp.eq.f32.partialorder %v1928, %v1987
        %vm2025 = vcmp.eq.f32.partialorder %v1929, %v1989
        %vm2026 = vcmp.eq.f32.partialorder %v1930, %v1991
        %vm2027 = vcmp.eq.f32.partialorder %v1931, %v1993
        %vm2028 = vcmp.eq.f32.partialorder %v1932, %v1995
        %vm2029 = vcmp.eq.f32.partialorder %v1933, %v1997
        %v2030 = vsel %vm1998, %v1900, 128
        %v2031 = vsel %vm1999, %v1900, 128
        %v2032 = vsel %vm2000, %v1900, 128
        %v2033 = vsel %vm2001, %v1900, 128
        %v2034 = vsel %vm2002, %v1900, 128
        %v2035 = vsel %vm2003, %v1900, 128
        %v2036 = vsel %vm2004, %v1900, 128
        %v2037 = vsel %vm2005, %v1900, 128
        %v2038 = vsel %vm2006, %v1900, 128
        %v2039 = vsel %vm2007, %v1900, 128
        %v2040 = vsel %vm2008, %v1900, 128
        %v2041 = vsel %vm2009, %v1900, 128
        %v2042 = vsel %vm2010, %v1900, 128
        %v2043 = vsel %vm2011, %v1900, 128
        %v2044 = vsel %vm2012, %v1900, 128
        %v2045 = vsel %vm2013, %v1900, 128
        %v2046 = vsel %vm2014, %v1900, 128
        %v2047 = vsel %vm2015, %v1900, 128
        %v2048 = vsel %vm2016, %v1900, 128
        %v2049 = vsel %vm2017, %v1900, 128
        %v2050 = vsel %vm2018, %v1900, 128
        %v2051 = vsel %vm2019, %v1900, 128
        %v2052 = vsel %vm2020, %v1900, 128
        %v2053 = vsel %vm2021, %v1900, 128
        %v2054 = vsel %vm2022, %v1900, 128
        %v2055 = vsel %vm2023, %v1900, 128
        %v2056 = vsel %vm2024, %v1900, 128
        %v2057 = vsel %vm2025, %v1900, 128
        %v2058 = vsel %vm2026, %v1900, 128
        %v2059 = vsel %vm2027, %v1900, 128
        %v2060 = vsel %vm2028, %v1900, 128
        %v2061 = vsel %vm2029, %v1900, 128
        %v2062 = vand.u32 %v2030, 65535
        %v2063 = vshra.s32 %v2030, 16
        %v2064 = vcvt.s32.f32 %v2062
        %v2065 = vcvt.s32.f32 %v2063
        %2066 = vmin.xlane.f32.xlu0 %v2065
        %v2067 = vpop.xlane.xlu0 %2066
        %vm2068 = vcmp.eq.f32.partialorder %v2065, %v2067
        %v2069 = vsel %vm2068, %v2064, inf
        %2070 = vmin.xlane.f32.xlu0 %v2069
        %v2071 = vpop.xlane.xlu0 %2070
        %v2072 = vcvt.f32.s32 %v2071
        %v2073 = vcvt.f32.s32 %v2067
        %v2074 = vshll.u32 %v2073, 16
        %v2075 = vadd.s32 %v2074, %v2072
        %v2076 = vand.u32 %v2031, 65535
        %v2077 = vshra.s32 %v2031, 16
        %v2078 = vcvt.s32.f32 %v2076
        %v2079 = vcvt.s32.f32 %v2077
        %2080 = vmin.xlane.f32.xlu0 %v2079
        %v2081 = vpop.xlane.xlu0 %2080
        %vm2082 = vcmp.eq.f32.partialorder %v2079, %v2081
        %v2083 = vsel %vm2082, %v2078, inf
        %2084 = vmin.xlane.f32.xlu0 %v2083
        %v2085 = vpop.xlane.xlu0 %2084
        %v2086 = vcvt.f32.s32 %v2085
        %v2087 = vcvt.f32.s32 %v2081
        %v2088 = vshll.u32 %v2087, 16
        %v2089 = vadd.s32 %v2088, %v2086
        %v2090 = vand.u32 %v2032, 65535
        %v2091 = vshra.s32 %v2032, 16
        %v2092 = vcvt.s32.f32 %v2090
        %v2093 = vcvt.s32.f32 %v2091
        %2094 = vmin.xlane.f32.xlu0 %v2093
        %v2095 = vpop.xlane.xlu0 %2094
        %vm2096 = vcmp.eq.f32.partialorder %v2093, %v2095
        %v2097 = vsel %vm2096, %v2092, inf
        %2098 = vmin.xlane.f32.xlu0 %v2097
        %v2099 = vpop.xlane.xlu0 %2098
        %v2100 = vcvt.f32.s32 %v2099
        %v2101 = vcvt.f32.s32 %v2095
        %v2102 = vshll.u32 %v2101, 16
        %v2103 = vadd.s32 %v2102, %v2100
        %v2104 = vand.u32 %v2033, 65535
        %v2105 = vshra.s32 %v2033, 16
        %v2106 = vcvt.s32.f32 %v2104
        %v2107 = vcvt.s32.f32 %v2105
        %2108 = vmin.xlane.f32.xlu0 %v2107
        %v2109 = vpop.xlane.xlu0 %2108
        %vm2110 = vcmp.eq.f32.partialorder %v2107, %v2109
        %v2111 = vsel %vm2110, %v2106, inf
        %2112 = vmin.xlane.f32.xlu0 %v2111
        %v2113 = vpop.xlane.xlu0 %2112
        %v2114 = vcvt.f32.s32 %v2113
        %v2115 = vcvt.f32.s32 %v2109
        %v2116 = vshll.u32 %v2115, 16
        %v2117 = vadd.s32 %v2116, %v2114
        %v2118 = vand.u32 %v2034, 65535
        %v2119 = vshra.s32 %v2034, 16
        %v2120 = vcvt.s32.f32 %v2118
        %v2121 = vcvt.s32.f32 %v2119
        %2122 = vmin.xlane.f32.xlu0 %v2121
        %v2123 = vpop.xlane.xlu0 %2122
        %vm2124 = vcmp.eq.f32.partialorder %v2121, %v2123
        %v2125 = vsel %vm2124, %v2120, inf
        %2126 = vmin.xlane.f32.xlu0 %v2125
        %v2127 = vpop.xlane.xlu0 %2126
        %v2128 = vcvt.f32.s32 %v2127
        %v2129 = vcvt.f32.s32 %v2123
        %v2130 = vshll.u32 %v2129, 16
        %v2131 = vadd.s32 %v2130, %v2128
        %v2132 = vand.u32 %v2035, 65535
        %v2133 = vshra.s32 %v2035, 16
        %v2134 = vcvt.s32.f32 %v2132
        %v2135 = vcvt.s32.f32 %v2133
        %2136 = vmin.xlane.f32.xlu0 %v2135
        %v2137 = vpop.xlane.xlu0 %2136
        %vm2138 = vcmp.eq.f32.partialorder %v2135, %v2137
        %v2139 = vsel %vm2138, %v2134, inf
        %2140 = vmin.xlane.f32.xlu0 %v2139
        %v2141 = vpop.xlane.xlu0 %2140
        %v2142 = vcvt.f32.s32 %v2141
        %v2143 = vcvt.f32.s32 %v2137
        %v2144 = vshll.u32 %v2143, 16
        %v2145 = vadd.s32 %v2144, %v2142
        %v2146 = vand.u32 %v2036, 65535
        %v2147 = vshra.s32 %v2036, 16
        %v2148 = vcvt.s32.f32 %v2146
        %v2149 = vcvt.s32.f32 %v2147
        %2150 = vmin.xlane.f32.xlu0 %v2149
        %v2151 = vpop.xlane.xlu0 %2150
        %vm2152 = vcmp.eq.f32.partialorder %v2149, %v2151
        %v2153 = vsel %vm2152, %v2148, inf
        %2154 = vmin.xlane.f32.xlu0 %v2153
        %v2155 = vpop.xlane.xlu0 %2154
        %v2156 = vcvt.f32.s32 %v2155
        %v2157 = vcvt.f32.s32 %v2151
        %v2158 = vshll.u32 %v2157, 16
        %v2159 = vadd.s32 %v2158, %v2156
        %v2160 = vand.u32 %v2037, 65535
        %v2161 = vshra.s32 %v2037, 16
        %v2162 = vcvt.s32.f32 %v2160
        %v2163 = vcvt.s32.f32 %v2161
        %2164 = vmin.xlane.f32.xlu0 %v2163
        %v2165 = vpop.xlane.xlu0 %2164
        %vm2166 = vcmp.eq.f32.partialorder %v2163, %v2165
        %v2167 = vsel %vm2166, %v2162, inf
        %2168 = vmin.xlane.f32.xlu0 %v2167
        %v2169 = vpop.xlane.xlu0 %2168
        %v2170 = vcvt.f32.s32 %v2169
        %v2171 = vcvt.f32.s32 %v2165
        %v2172 = vshll.u32 %v2171, 16
        %v2173 = vadd.s32 %v2172, %v2170
        %v2174 = vand.u32 %v2038, 65535
        %v2175 = vshra.s32 %v2038, 16
        %v2176 = vcvt.s32.f32 %v2174
        %v2177 = vcvt.s32.f32 %v2175
        %2178 = vmin.xlane.f32.xlu0 %v2177
        %v2179 = vpop.xlane.xlu0 %2178
        %vm2180 = vcmp.eq.f32.partialorder %v2177, %v2179
        %v2181 = vsel %vm2180, %v2176, inf
        %2182 = vmin.xlane.f32.xlu0 %v2181
        %v2183 = vpop.xlane.xlu0 %2182
        %v2184 = vcvt.f32.s32 %v2183
        %v2185 = vcvt.f32.s32 %v2179
        %v2186 = vshll.u32 %v2185, 16
        %v2187 = vadd.s32 %v2186, %v2184
        %v2188 = vand.u32 %v2039, 65535
        %v2189 = vshra.s32 %v2039, 16
        %v2190 = vcvt.s32.f32 %v2188
        %v2191 = vcvt.s32.f32 %v2189
        %2192 = vmin.xlane.f32.xlu0 %v2191
        %v2193 = vpop.xlane.xlu0 %2192
        %vm2194 = vcmp.eq.f32.partialorder %v2191, %v2193
        %v2195 = vsel %vm2194, %v2190, inf
        %2196 = vmin.xlane.f32.xlu0 %v2195
        %v2197 = vpop.xlane.xlu0 %2196
        %v2198 = vcvt.f32.s32 %v2197
        %v2199 = vcvt.f32.s32 %v2193
        %v2200 = vshll.u32 %v2199, 16
        %v2201 = vadd.s32 %v2200, %v2198
        %v2202 = vand.u32 %v2040, 65535
        %v2203 = vshra.s32 %v2040, 16
        %v2204 = vcvt.s32.f32 %v2202
        %v2205 = vcvt.s32.f32 %v2203
        %2206 = vmin.xlane.f32.xlu0 %v2205
        %v2207 = vpop.xlane.xlu0 %2206
        %vm2208 = vcmp.eq.f32.partialorder %v2205, %v2207
        %v2209 = vsel %vm2208, %v2204, inf
        %2210 = vmin.xlane.f32.xlu0 %v2209
        %v2211 = vpop.xlane.xlu0 %2210
        %v2212 = vcvt.f32.s32 %v2211
        %v2213 = vcvt.f32.s32 %v2207
        %v2214 = vshll.u32 %v2213, 16
        %v2215 = vadd.s32 %v2214, %v2212
        %v2216 = vand.u32 %v2041, 65535
        %v2217 = vshra.s32 %v2041, 16
        %v2218 = vcvt.s32.f32 %v2216
        %v2219 = vcvt.s32.f32 %v2217
        %2220 = vmin.xlane.f32.xlu0 %v2219
        %v2221 = vpop.xlane.xlu0 %2220
        %vm2222 = vcmp.eq.f32.partialorder %v2219, %v2221
        %v2223 = vsel %vm2222, %v2218, inf
        %2224 = vmin.xlane.f32.xlu0 %v2223
        %v2225 = vpop.xlane.xlu0 %2224
        %v2226 = vcvt.f32.s32 %v2225
        %v2227 = vcvt.f32.s32 %v2221
        %v2228 = vshll.u32 %v2227, 16
        %v2229 = vadd.s32 %v2228, %v2226
        %v2230 = vand.u32 %v2042, 65535
        %v2231 = vshra.s32 %v2042, 16
        %v2232 = vcvt.s32.f32 %v2230
        %v2233 = vcvt.s32.f32 %v2231
        %2234 = vmin.xlane.f32.xlu0 %v2233
        %v2235 = vpop.xlane.xlu0 %2234
        %vm2236 = vcmp.eq.f32.partialorder %v2233, %v2235
        %v2237 = vsel %vm2236, %v2232, inf
        %2238 = vmin.xlane.f32.xlu0 %v2237
        %v2239 = vpop.xlane.xlu0 %2238
        %v2240 = vcvt.f32.s32 %v2239
        %v2241 = vcvt.f32.s32 %v2235
        %v2242 = vshll.u32 %v2241, 16
        %v2243 = vadd.s32 %v2242, %v2240
        %v2244 = vand.u32 %v2043, 65535
        %v2245 = vshra.s32 %v2043, 16
        %v2246 = vcvt.s32.f32 %v2244
        %v2247 = vcvt.s32.f32 %v2245
        %2248 = vmin.xlane.f32.xlu0 %v2247
        %v2249 = vpop.xlane.xlu0 %2248
        %vm2250 = vcmp.eq.f32.partialorder %v2247, %v2249
        %v2251 = vsel %vm2250, %v2246, inf
        %2252 = vmin.xlane.f32.xlu0 %v2251
        %v2253 = vpop.xlane.xlu0 %2252
        %v2254 = vcvt.f32.s32 %v2253
        %v2255 = vcvt.f32.s32 %v2249
        %v2256 = vshll.u32 %v2255, 16
        %v2257 = vadd.s32 %v2256, %v2254
        %v2258 = vand.u32 %v2044, 65535
        %v2259 = vshra.s32 %v2044, 16
        %v2260 = vcvt.s32.f32 %v2258
        %v2261 = vcvt.s32.f32 %v2259
        %2262 = vmin.xlane.f32.xlu0 %v2261
        %v2263 = vpop.xlane.xlu0 %2262
        %vm2264 = vcmp.eq.f32.partialorder %v2261, %v2263
        %v2265 = vsel %vm2264, %v2260, inf
        %2266 = vmin.xlane.f32.xlu0 %v2265
        %v2267 = vpop.xlane.xlu0 %2266
        %v2268 = vcvt.f32.s32 %v2267
        %v2269 = vcvt.f32.s32 %v2263
        %v2270 = vshll.u32 %v2269, 16
        %v2271 = vadd.s32 %v2270, %v2268
        %v2272 = vand.u32 %v2045, 65535
        %v2273 = vshra.s32 %v2045, 16
        %v2274 = vcvt.s32.f32 %v2272
        %v2275 = vcvt.s32.f32 %v2273
        %2276 = vmin.xlane.f32.xlu0 %v2275
        %v2277 = vpop.xlane.xlu0 %2276
        %vm2278 = vcmp.eq.f32.partialorder %v2275, %v2277
        %v2279 = vsel %vm2278, %v2274, inf
        %2280 = vmin.xlane.f32.xlu0 %v2279
        %v2281 = vpop.xlane.xlu0 %2280
        %v2282 = vcvt.f32.s32 %v2281
        %v2283 = vcvt.f32.s32 %v2277
        %v2284 = vshll.u32 %v2283, 16
        %v2285 = vadd.s32 %v2284, %v2282
        %v2286 = vand.u32 %v2046, 65535
        %v2287 = vshra.s32 %v2046, 16
        %v2288 = vcvt.s32.f32 %v2286
        %v2289 = vcvt.s32.f32 %v2287
        %2290 = vmin.xlane.f32.xlu0 %v2289
        %v2291 = vpop.xlane.xlu0 %2290
        %vm2292 = vcmp.eq.f32.partialorder %v2289, %v2291
        %v2293 = vsel %vm2292, %v2288, inf
        %2294 = vmin.xlane.f32.xlu0 %v2293
        %v2295 = vpop.xlane.xlu0 %2294
        %v2296 = vcvt.f32.s32 %v2295
        %v2297 = vcvt.f32.s32 %v2291
        %v2298 = vshll.u32 %v2297, 16
        %v2299 = vadd.s32 %v2298, %v2296
        %v2300 = vand.u32 %v2047, 65535
        %v2301 = vshra.s32 %v2047, 16
        %v2302 = vcvt.s32.f32 %v2300
        %v2303 = vcvt.s32.f32 %v2301
        %2304 = vmin.xlane.f32.xlu0 %v2303
        %v2305 = vpop.xlane.xlu0 %2304
        %vm2306 = vcmp.eq.f32.partialorder %v2303, %v2305
        %v2307 = vsel %vm2306, %v2302, inf
        %2308 = vmin.xlane.f32.xlu0 %v2307
        %v2309 = vpop.xlane.xlu0 %2308
        %v2310 = vcvt.f32.s32 %v2309
        %v2311 = vcvt.f32.s32 %v2305
        %v2312 = vshll.u32 %v2311, 16
        %v2313 = vadd.s32 %v2312, %v2310
        %v2314 = vand.u32 %v2048, 65535
        %v2315 = vshra.s32 %v2048, 16
        %v2316 = vcvt.s32.f32 %v2314
        %v2317 = vcvt.s32.f32 %v2315
        %2318 = vmin.xlane.f32.xlu0 %v2317
        %v2319 = vpop.xlane.xlu0 %2318
        %vm2320 = vcmp.eq.f32.partialorder %v2317, %v2319
        %v2321 = vsel %vm2320, %v2316, inf
        %2322 = vmin.xlane.f32.xlu0 %v2321
        %v2323 = vpop.xlane.xlu0 %2322
        %v2324 = vcvt.f32.s32 %v2323
        %v2325 = vcvt.f32.s32 %v2319
        %v2326 = vshll.u32 %v2325, 16
        %v2327 = vadd.s32 %v2326, %v2324
        %v2328 = vand.u32 %v2049, 65535
        %v2329 = vshra.s32 %v2049, 16
        %v2330 = vcvt.s32.f32 %v2328
        %v2331 = vcvt.s32.f32 %v2329
        %2332 = vmin.xlane.f32.xlu0 %v2331
        %v2333 = vpop.xlane.xlu0 %2332
        %vm2334 = vcmp.eq.f32.partialorder %v2331, %v2333
        %v2335 = vsel %vm2334, %v2330, inf
        %2336 = vmin.xlane.f32.xlu0 %v2335
        %v2337 = vpop.xlane.xlu0 %2336
        %v2338 = vcvt.f32.s32 %v2337
        %v2339 = vcvt.f32.s32 %v2333
        %v2340 = vshll.u32 %v2339, 16
        %v2341 = vadd.s32 %v2340, %v2338
        %v2342 = vand.u32 %v2050, 65535
        %v2343 = vshra.s32 %v2050, 16
        %v2344 = vcvt.s32.f32 %v2342
        %v2345 = vcvt.s32.f32 %v2343
        %2346 = vmin.xlane.f32.xlu0 %v2345
        %v2347 = vpop.xlane.xlu0 %2346
        %vm2348 = vcmp.eq.f32.partialorder %v2345, %v2347
        %v2349 = vsel %vm2348, %v2344, inf
        %2350 = vmin.xlane.f32.xlu0 %v2349
        %v2351 = vpop.xlane.xlu0 %2350
        %v2352 = vcvt.f32.s32 %v2351
        %v2353 = vcvt.f32.s32 %v2347
        %v2354 = vshll.u32 %v2353, 16
        %v2355 = vadd.s32 %v2354, %v2352
        %v2356 = vand.u32 %v2051, 65535
        %v2357 = vshra.s32 %v2051, 16
        %v2358 = vcvt.s32.f32 %v2356
        %v2359 = vcvt.s32.f32 %v2357
        %2360 = vmin.xlane.f32.xlu0 %v2359
        %v2361 = vpop.xlane.xlu0 %2360
        %vm2362 = vcmp.eq.f32.partialorder %v2359, %v2361
        %v2363 = vsel %vm2362, %v2358, inf
        %2364 = vmin.xlane.f32.xlu0 %v2363
        %v2365 = vpop.xlane.xlu0 %2364
        %v2366 = vcvt.f32.s32 %v2365
        %v2367 = vcvt.f32.s32 %v2361
        %v2368 = vshll.u32 %v2367, 16
        %v2369 = vadd.s32 %v2368, %v2366
        %v2370 = vand.u32 %v2052, 65535
        %v2371 = vshra.s32 %v2052, 16
        %v2372 = vcvt.s32.f32 %v2370
        %v2373 = vcvt.s32.f32 %v2371
        %2374 = vmin.xlane.f32.xlu0 %v2373
        %v2375 = vpop.xlane.xlu0 %2374
        %vm2376 = vcmp.eq.f32.partialorder %v2373, %v2375
        %v2377 = vsel %vm2376, %v2372, inf
        %2378 = vmin.xlane.f32.xlu0 %v2377
        %v2379 = vpop.xlane.xlu0 %2378
        %v2380 = vcvt.f32.s32 %v2379
        %v2381 = vcvt.f32.s32 %v2375
        %v2382 = vshll.u32 %v2381, 16
        %v2383 = vadd.s32 %v2382, %v2380
        %v2384 = vand.u32 %v2053, 65535
        %v2385 = vshra.s32 %v2053, 16
        %v2386 = vcvt.s32.f32 %v2384
        %v2387 = vcvt.s32.f32 %v2385
        %2388 = vmin.xlane.f32.xlu0 %v2387
        %v2389 = vpop.xlane.xlu0 %2388
        %vm2390 = vcmp.eq.f32.partialorder %v2387, %v2389
        %v2391 = vsel %vm2390, %v2386, inf
        %2392 = vmin.xlane.f32.xlu0 %v2391
        %v2393 = vpop.xlane.xlu0 %2392
        %v2394 = vcvt.f32.s32 %v2393
        %v2395 = vcvt.f32.s32 %v2389
        %v2396 = vshll.u32 %v2395, 16
        %v2397 = vadd.s32 %v2396, %v2394
        %v2398 = vand.u32 %v2054, 65535
        %v2399 = vshra.s32 %v2054, 16
        %v2400 = vcvt.s32.f32 %v2398
        %v2401 = vcvt.s32.f32 %v2399
        %2402 = vmin.xlane.f32.xlu0 %v2401
        %v2403 = vpop.xlane.xlu0 %2402
        %vm2404 = vcmp.eq.f32.partialorder %v2401, %v2403
        %v2405 = vsel %vm2404, %v2400, inf
        %2406 = vmin.xlane.f32.xlu0 %v2405
        %v2407 = vpop.xlane.xlu0 %2406
        %v2408 = vcvt.f32.s32 %v2407
        %v2409 = vcvt.f32.s32 %v2403
        %v2410 = vshll.u32 %v2409, 16
        %v2411 = vadd.s32 %v2410, %v2408
        %v2412 = vand.u32 %v2055, 65535
        %v2413 = vshra.s32 %v2055, 16
        %v2414 = vcvt.s32.f32 %v2412
        %v2415 = vcvt.s32.f32 %v2413
        %2416 = vmin.xlane.f32.xlu0 %v2415
        %v2417 = vpop.xlane.xlu0 %2416
        %vm2418 = vcmp.eq.f32.partialorder %v2415, %v2417
        %v2419 = vsel %vm2418, %v2414, inf
        %2420 = vmin.xlane.f32.xlu0 %v2419
        %v2421 = vpop.xlane.xlu0 %2420
        %v2422 = vcvt.f32.s32 %v2421
        %v2423 = vcvt.f32.s32 %v2417
        %v2424 = vshll.u32 %v2423, 16
        %v2425 = vadd.s32 %v2424, %v2422
        %v2426 = vand.u32 %v2056, 65535
        %v2427 = vshra.s32 %v2056, 16
        %v2428 = vcvt.s32.f32 %v2426
        %v2429 = vcvt.s32.f32 %v2427
        %2430 = vmin.xlane.f32.xlu0 %v2429
        %v2431 = vpop.xlane.xlu0 %2430
        %vm2432 = vcmp.eq.f32.partialorder %v2429, %v2431
        %v2433 = vsel %vm2432, %v2428, inf
        %2434 = vmin.xlane.f32.xlu0 %v2433
        %v2435 = vpop.xlane.xlu0 %2434
        %v2436 = vcvt.f32.s32 %v2435
        %v2437 = vcvt.f32.s32 %v2431
        %v2438 = vshll.u32 %v2437, 16
        %v2439 = vadd.s32 %v2438, %v2436
        %v2440 = vand.u32 %v2057, 65535
        %v2441 = vshra.s32 %v2057, 16
        %v2442 = vcvt.s32.f32 %v2440
        %v2443 = vcvt.s32.f32 %v2441
        %2444 = vmin.xlane.f32.xlu0 %v2443
        %v2445 = vpop.xlane.xlu0 %2444
        %vm2446 = vcmp.eq.f32.partialorder %v2443, %v2445
        %v2447 = vsel %vm2446, %v2442, inf
        %2448 = vmin.xlane.f32.xlu0 %v2447
        %v2449 = vpop.xlane.xlu0 %2448
        %v2450 = vcvt.f32.s32 %v2449
        %v2451 = vcvt.f32.s32 %v2445
        %v2452 = vshll.u32 %v2451, 16
        %v2453 = vadd.s32 %v2452, %v2450
        %v2454 = vand.u32 %v2058, 65535
        %v2455 = vshra.s32 %v2058, 16
        %v2456 = vcvt.s32.f32 %v2454
        %v2457 = vcvt.s32.f32 %v2455
        %2458 = vmin.xlane.f32.xlu0 %v2457
        %v2459 = vpop.xlane.xlu0 %2458
        %vm2460 = vcmp.eq.f32.partialorder %v2457, %v2459
        %v2461 = vsel %vm2460, %v2456, inf
        %2462 = vmin.xlane.f32.xlu0 %v2461
        %v2463 = vpop.xlane.xlu0 %2462
        %v2464 = vcvt.f32.s32 %v2463
        %v2465 = vcvt.f32.s32 %v2459
        %v2466 = vshll.u32 %v2465, 16
        %v2467 = vadd.s32 %v2466, %v2464
        %v2468 = vand.u32 %v2059, 65535
        %v2469 = vshra.s32 %v2059, 16
        %v2470 = vcvt.s32.f32 %v2468
        %v2471 = vcvt.s32.f32 %v2469
        %2472 = vmin.xlane.f32.xlu0 %v2471
        %v2473 = vpop.xlane.xlu0 %2472
        %vm2474 = vcmp.eq.f32.partialorder %v2471, %v2473
        %v2475 = vsel %vm2474, %v2470, inf
        %2476 = vmin.xlane.f32.xlu0 %v2475
        %v2477 = vpop.xlane.xlu0 %2476
        %v2478 = vcvt.f32.s32 %v2477
        %v2479 = vcvt.f32.s32 %v2473
        %v2480 = vshll.u32 %v2479, 16
        %v2481 = vadd.s32 %v2480, %v2478
        %v2482 = vand.u32 %v2060, 65535
        %v2483 = vshra.s32 %v2060, 16
        %v2484 = vcvt.s32.f32 %v2482
        %v2485 = vcvt.s32.f32 %v2483
        %2486 = vmin.xlane.f32.xlu0 %v2485
        %v2487 = vpop.xlane.xlu0 %2486
        %vm2488 = vcmp.eq.f32.partialorder %v2485, %v2487
        %v2489 = vsel %vm2488, %v2484, inf
        %2490 = vmin.xlane.f32.xlu0 %v2489
        %v2491 = vpop.xlane.xlu0 %2490
        %v2492 = vcvt.f32.s32 %v2491
        %v2493 = vcvt.f32.s32 %v2487
        %v2494 = vshll.u32 %v2493, 16
        %v2495 = vadd.s32 %v2494, %v2492
        %v2496 = vand.u32 %v2061, 65535
        %v2497 = vshra.s32 %v2061, 16
        %v2498 = vcvt.s32.f32 %v2496
        %v2499 = vcvt.s32.f32 %v2497
        %2500 = vmin.xlane.f32.xlu0 %v2499
        %v2501 = vpop.xlane.xlu0 %2500
        %vm2502 = vcmp.eq.f32.partialorder %v2499, %v2501
        %v2503 = vsel %vm2502, %v2498, inf
        %2504 = vmin.xlane.f32.xlu0 %v2503
        %v2505 = vpop.xlane.xlu0 %2504
        %v2506 = vcvt.f32.s32 %v2505
        %v2507 = vcvt.f32.s32 %v2501
        %v2508 = vshll.u32 %v2507, 16
        %v2509 = vadd.s32 %v2508, %v2506
        %vm2510 = vcmp.eq.s32.totalorder %v2075, 0
        %vm2511 = vcmp.eq.s32.totalorder %v2089, 0
        %vm2512 = vcmp.eq.s32.totalorder %v2103, 0
        %vm2513 = vcmp.eq.s32.totalorder %v2117, 0
        %vm2514 = vcmp.eq.s32.totalorder %v2131, 0
        %vm2515 = vcmp.eq.s32.totalorder %v2145, 0
        %vm2516 = vcmp.eq.s32.totalorder %v2159, 0
        %vm2517 = vcmp.eq.s32.totalorder %v2173, 0
        %vm2518 = vcmp.eq.s32.totalorder %v2187, 0
        %vm2519 = vcmp.eq.s32.totalorder %v2201, 0
        %vm2520 = vcmp.eq.s32.totalorder %v2215, 0
        %vm2521 = vcmp.eq.s32.totalorder %v2229, 0
        %vm2522 = vcmp.eq.s32.totalorder %v2243, 0
        %vm2523 = vcmp.eq.s32.totalorder %v2257, 0
        %vm2524 = vcmp.eq.s32.totalorder %v2271, 0
        %vm2525 = vcmp.eq.s32.totalorder %v2285, 0
        %vm2526 = vcmp.eq.s32.totalorder %v2299, 0
        %vm2527 = vcmp.eq.s32.totalorder %v2313, 0
        %vm2528 = vcmp.eq.s32.totalorder %v2327, 0
        %vm2529 = vcmp.eq.s32.totalorder %v2341, 0
        %vm2530 = vcmp.eq.s32.totalorder %v2355, 0
        %vm2531 = vcmp.eq.s32.totalorder %v2369, 0
        %vm2532 = vcmp.eq.s32.totalorder %v2383, 0
        %vm2533 = vcmp.eq.s32.totalorder %v2397, 0
        %vm2534 = vcmp.eq.s32.totalorder %v2411, 0
        %vm2535 = vcmp.eq.s32.totalorder %v2425, 0
        %vm2536 = vcmp.eq.s32.totalorder %v2439, 0
        %vm2537 = vcmp.eq.s32.totalorder %v2453, 0
        %vm2538 = vcmp.eq.s32.totalorder %v2467, 0
        %vm2539 = vcmp.eq.s32.totalorder %v2481, 0
        %vm2540 = vcmp.eq.s32.totalorder %v2495, 0
        %vm2541 = vcmp.eq.s32.totalorder %v2509, 0
        %v2542 = vsel %vm2510, 1, 0
        %v2543 = vsel %vm2511, 1, 0
        %v2544 = vsel %vm2512, 1, 0
        %v2545 = vsel %vm2513, 1, 0
        %v2546 = vsel %vm2514, 1, 0
        %v2547 = vsel %vm2515, 1, 0
        %v2548 = vsel %vm2516, 1, 0
        %v2549 = vsel %vm2517, 1, 0
        %v2550 = vsel %vm2518, 1, 0
        %v2551 = vsel %vm2519, 1, 0
        %v2552 = vsel %vm2520, 1, 0
        %v2553 = vsel %vm2521, 1, 0
        %v2554 = vsel %vm2522, 1, 0
        %v2555 = vsel %vm2523, 1, 0
        %v2556 = vsel %vm2524, 1, 0
        %v2557 = vsel %vm2525, 1, 0
        %v2558 = vsel %vm2526, 1, 0
        %v2559 = vsel %vm2527, 1, 0
        %v2560 = vsel %vm2528, 1, 0
        %v2561 = vsel %vm2529, 1, 0
        %v2562 = vsel %vm2530, 1, 0
        %v2563 = vsel %vm2531, 1, 0
        %v2564 = vsel %vm2532, 1, 0
        %v2565 = vsel %vm2533, 1, 0
        %v2566 = vsel %vm2534, 1, 0
        %v2567 = vsel %vm2535, 1, 0
        %v2568 = vsel %vm2536, 1, 0
        %v2569 = vsel %vm2537, 1, 0
        %v2570 = vsel %vm2538, 1, 0
        %v2571 = vsel %vm2539, 1, 0
        %v2572 = vsel %vm2540, 1, 0
        %v2573 = vsel %vm2541, 1, 0
        %vm2574 = vcmp.eq.s32.totalorder %v2542, 1
        %vm2575 = vcmp.eq.s32.totalorder %v2543, 1
        %vm2576 = vcmp.eq.s32.totalorder %v2544, 1
        %vm2577 = vcmp.eq.s32.totalorder %v2545, 1
        %vm2578 = vcmp.eq.s32.totalorder %v2546, 1
        %vm2579 = vcmp.eq.s32.totalorder %v2547, 1
        %vm2580 = vcmp.eq.s32.totalorder %v2548, 1
        %vm2581 = vcmp.eq.s32.totalorder %v2549, 1
        %vm2582 = vcmp.eq.s32.totalorder %v2550, 1
        %vm2583 = vcmp.eq.s32.totalorder %v2551, 1
        %vm2584 = vcmp.eq.s32.totalorder %v2552, 1
        %vm2585 = vcmp.eq.s32.totalorder %v2553, 1
        %vm2586 = vcmp.eq.s32.totalorder %v2554, 1
        %vm2587 = vcmp.eq.s32.totalorder %v2555, 1
        %vm2588 = vcmp.eq.s32.totalorder %v2556, 1
        %vm2589 = vcmp.eq.s32.totalorder %v2557, 1
        %vm2590 = vcmp.eq.s32.totalorder %v2558, 1
        %vm2591 = vcmp.eq.s32.totalorder %v2559, 1
        %vm2592 = vcmp.eq.s32.totalorder %v2560, 1
        %vm2593 = vcmp.eq.s32.totalorder %v2561, 1
        %vm2594 = vcmp.eq.s32.totalorder %v2562, 1
        %vm2595 = vcmp.eq.s32.totalorder %v2563, 1
        %vm2596 = vcmp.eq.s32.totalorder %v2564, 1
        %vm2597 = vcmp.eq.s32.totalorder %v2565, 1
        %vm2598 = vcmp.eq.s32.totalorder %v2566, 1
        %vm2599 = vcmp.eq.s32.totalorder %v2567, 1
        %vm2600 = vcmp.eq.s32.totalorder %v2568, 1
        %vm2601 = vcmp.eq.s32.totalorder %v2569, 1
        %vm2602 = vcmp.eq.s32.totalorder %v2570, 1
        %vm2603 = vcmp.eq.s32.totalorder %v2571, 1
        %vm2604 = vcmp.eq.s32.totalorder %v2572, 1
        %vm2605 = vcmp.eq.s32.totalorder %v2573, 1
        %v2606 = vsel %vm2574, %v1553, 0.0
        %v2607 = vsel %vm2575, %v1555, 0.0
        %v2608 = vsel %vm2576, %v1558, 0.0
        %v2609 = vsel %vm2577, %v1560, 0.0
        %v2610 = vsel %vm2578, %v1563, 0.0
        %v2611 = vsel %vm2579, %v1565, 0.0
        %v2612 = vsel %vm2580, %v1568, 0.0
        %v2613 = vsel %vm2581, %v1570, 0.0
        %v2614 = vsel %vm2582, %v1573, 0.0
        %v2615 = vsel %vm2583, %v1575, 0.0
        %v2616 = vsel %vm2584, %v1578, 0.0
        %v2617 = vsel %vm2585, %v1580, 0.0
        %v2618 = vsel %vm2586, %v1583, 0.0
        %v2619 = vsel %vm2587, %v1585, 0.0
        %v2620 = vsel %vm2588, %v1588, 0.0
        %v2621 = vsel %vm2589, %v1590, 0.0
        %v2622 = vsel %vm2590, %v1593, 0.0
        %v2623 = vsel %vm2591, %v1595, 0.0
        %v2624 = vsel %vm2592, %v1598, 0.0
        %v2625 = vsel %vm2593, %v1600, 0.0
        %v2626 = vsel %vm2594, %v1603, 0.0
        %v2627 = vsel %vm2595, %v1605, 0.0
        %v2628 = vsel %vm2596, %v1608, 0.0
        %v2629 = vsel %vm2597, %v1610, 0.0
        %v2630 = vsel %vm2598, %v1613, 0.0
        %v2631 = vsel %vm2599, %v1615, 0.0
        %v2632 = vsel %vm2600, %v1618, 0.0
        %v2633 = vsel %vm2601, %v1620, 0.0
        %v2634 = vsel %vm2602, %v1623, 0.0
        %v2635 = vsel %vm2603, %v1625, 0.0
        %v2636 = vsel %vm2604, %v1628, 0.0
        %v2637 = vsel %vm2605, %v1630, 0.0
        %vm2638 = vcmp.eq.s32.totalorder %v2075, 1
        %vm2639 = vcmp.eq.s32.totalorder %v2089, 1
        %vm2640 = vcmp.eq.s32.totalorder %v2103, 1
        %vm2641 = vcmp.eq.s32.totalorder %v2117, 1
        %vm2642 = vcmp.eq.s32.totalorder %v2131, 1
        %vm2643 = vcmp.eq.s32.totalorder %v2145, 1
        %vm2644 = vcmp.eq.s32.totalorder %v2159, 1
        %vm2645 = vcmp.eq.s32.totalorder %v2173, 1
        %vm2646 = vcmp.eq.s32.totalorder %v2187, 1
        %vm2647 = vcmp.eq.s32.totalorder %v2201, 1
        %vm2648 = vcmp.eq.s32.totalorder %v2215, 1
        %vm2649 = vcmp.eq.s32.totalorder %v2229, 1
        %vm2650 = vcmp.eq.s32.totalorder %v2243, 1
        %vm2651 = vcmp.eq.s32.totalorder %v2257, 1
        %vm2652 = vcmp.eq.s32.totalorder %v2271, 1
        %vm2653 = vcmp.eq.s32.totalorder %v2285, 1
        %vm2654 = vcmp.eq.s32.totalorder %v2299, 1
        %vm2655 = vcmp.eq.s32.totalorder %v2313, 1
        %vm2656 = vcmp.eq.s32.totalorder %v2327, 1
        %vm2657 = vcmp.eq.s32.totalorder %v2341, 1
        %vm2658 = vcmp.eq.s32.totalorder %v2355, 1
        %vm2659 = vcmp.eq.s32.totalorder %v2369, 1
        %vm2660 = vcmp.eq.s32.totalorder %v2383, 1
        %vm2661 = vcmp.eq.s32.totalorder %v2397, 1
        %vm2662 = vcmp.eq.s32.totalorder %v2411, 1
        %vm2663 = vcmp.eq.s32.totalorder %v2425, 1
        %vm2664 = vcmp.eq.s32.totalorder %v2439, 1
        %vm2665 = vcmp.eq.s32.totalorder %v2453, 1
        %vm2666 = vcmp.eq.s32.totalorder %v2467, 1
        %vm2667 = vcmp.eq.s32.totalorder %v2481, 1
        %vm2668 = vcmp.eq.s32.totalorder %v2495, 1
        %vm2669 = vcmp.eq.s32.totalorder %v2509, 1
        %v2670 = vsel %vm2638, 1, 0
        %v2671 = vsel %vm2639, 1, 0
        %v2672 = vsel %vm2640, 1, 0
        %v2673 = vsel %vm2641, 1, 0
        %v2674 = vsel %vm2642, 1, 0
        %v2675 = vsel %vm2643, 1, 0
        %v2676 = vsel %vm2644, 1, 0
        %v2677 = vsel %vm2645, 1, 0
        %v2678 = vsel %vm2646, 1, 0
        %v2679 = vsel %vm2647, 1, 0
        %v2680 = vsel %vm2648, 1, 0
        %v2681 = vsel %vm2649, 1, 0
        %v2682 = vsel %vm2650, 1, 0
        %v2683 = vsel %vm2651, 1, 0
        %v2684 = vsel %vm2652, 1, 0
        %v2685 = vsel %vm2653, 1, 0
        %v2686 = vsel %vm2654, 1, 0
        %v2687 = vsel %vm2655, 1, 0
        %v2688 = vsel %vm2656, 1, 0
        %v2689 = vsel %vm2657, 1, 0
        %v2690 = vsel %vm2658, 1, 0
        %v2691 = vsel %vm2659, 1, 0
        %v2692 = vsel %vm2660, 1, 0
        %v2693 = vsel %vm2661, 1, 0
        %v2694 = vsel %vm2662, 1, 0
        %v2695 = vsel %vm2663, 1, 0
        %v2696 = vsel %vm2664, 1, 0
        %v2697 = vsel %vm2665, 1, 0
        %v2698 = vsel %vm2666, 1, 0
        %v2699 = vsel %vm2667, 1, 0
        %v2700 = vsel %vm2668, 1, 0
        %v2701 = vsel %vm2669, 1, 0
        %vm2702 = vcmp.eq.s32.totalorder %v2670, 1
        %vm2703 = vcmp.eq.s32.totalorder %v2671, 1
        %vm2704 = vcmp.eq.s32.totalorder %v2672, 1
        %vm2705 = vcmp.eq.s32.totalorder %v2673, 1
        %vm2706 = vcmp.eq.s32.totalorder %v2674, 1
        %vm2707 = vcmp.eq.s32.totalorder %v2675, 1
        %vm2708 = vcmp.eq.s32.totalorder %v2676, 1
        %vm2709 = vcmp.eq.s32.totalorder %v2677, 1
        %vm2710 = vcmp.eq.s32.totalorder %v2678, 1
        %vm2711 = vcmp.eq.s32.totalorder %v2679, 1
        %vm2712 = vcmp.eq.s32.totalorder %v2680, 1
        %vm2713 = vcmp.eq.s32.totalorder %v2681, 1
        %vm2714 = vcmp.eq.s32.totalorder %v2682, 1
        %vm2715 = vcmp.eq.s32.totalorder %v2683, 1
        %vm2716 = vcmp.eq.s32.totalorder %v2684, 1
        %vm2717 = vcmp.eq.s32.totalorder %v2685, 1
        %vm2718 = vcmp.eq.s32.totalorder %v2686, 1
        %vm2719 = vcmp.eq.s32.totalorder %v2687, 1
        %vm2720 = vcmp.eq.s32.totalorder %v2688, 1
        %vm2721 = vcmp.eq.s32.totalorder %v2689, 1
        %vm2722 = vcmp.eq.s32.totalorder %v2690, 1
        %vm2723 = vcmp.eq.s32.totalorder %v2691, 1
        %vm2724 = vcmp.eq.s32.totalorder %v2692, 1
        %vm2725 = vcmp.eq.s32.totalorder %v2693, 1
        %vm2726 = vcmp.eq.s32.totalorder %v2694, 1
        %vm2727 = vcmp.eq.s32.totalorder %v2695, 1
        %vm2728 = vcmp.eq.s32.totalorder %v2696, 1
        %vm2729 = vcmp.eq.s32.totalorder %v2697, 1
        %vm2730 = vcmp.eq.s32.totalorder %v2698, 1
        %vm2731 = vcmp.eq.s32.totalorder %v2699, 1
        %vm2732 = vcmp.eq.s32.totalorder %v2700, 1
        %vm2733 = vcmp.eq.s32.totalorder %v2701, 1
        %v2734 = vsel %vm2702, %v1642, %v2606
        %v2735 = vsel %vm2703, %v1644, %v2607
        %v2736 = vsel %vm2704, %v1647, %v2608
        %v2737 = vsel %vm2705, %v1649, %v2609
        %v2738 = vsel %vm2706, %v1652, %v2610
        %v2739 = vsel %vm2707, %v1654, %v2611
        %v2740 = vsel %vm2708, %v1657, %v2612
        %v2741 = vsel %vm2709, %v1659, %v2613
        %v2742 = vsel %vm2710, %v1662, %v2614
        %v2743 = vsel %vm2711, %v1664, %v2615
        %v2744 = vsel %vm2712, %v1667, %v2616
        %v2745 = vsel %vm2713, %v1669, %v2617
        %v2746 = vsel %vm2714, %v1672, %v2618
        %v2747 = vsel %vm2715, %v1674, %v2619
        %v2748 = vsel %vm2716, %v1677, %v2620
        %v2749 = vsel %vm2717, %v1679, %v2621
        %v2750 = vsel %vm2718, %v1682, %v2622
        %v2751 = vsel %vm2719, %v1684, %v2623
        %v2752 = vsel %vm2720, %v1687, %v2624
        %v2753 = vsel %vm2721, %v1689, %v2625
        %v2754 = vsel %vm2722, %v1692, %v2626
        %v2755 = vsel %vm2723, %v1694, %v2627
        %v2756 = vsel %vm2724, %v1697, %v2628
        %v2757 = vsel %vm2725, %v1699, %v2629
        %v2758 = vsel %vm2726, %v1702, %v2630
        %v2759 = vsel %vm2727, %v1704, %v2631
        %v2760 = vsel %vm2728, %v1707, %v2632
        %v2761 = vsel %vm2729, %v1709, %v2633
        %v2762 = vsel %vm2730, %v1712, %v2634
        %v2763 = vsel %vm2731, %v1714, %v2635
        %v2764 = vsel %vm2732, %v1717, %v2636
        %v2765 = vsel %vm2733, %v1719, %v2637
        %vm2766 = vcmp.eq.s32.totalorder %v2075, 2
        %vm2767 = vcmp.eq.s32.totalorder %v2089, 2
        %vm2768 = vcmp.eq.s32.totalorder %v2103, 2
        %vm2769 = vcmp.eq.s32.totalorder %v2117, 2
        %vm2770 = vcmp.eq.s32.totalorder %v2131, 2
        %vm2771 = vcmp.eq.s32.totalorder %v2145, 2
        %vm2772 = vcmp.eq.s32.totalorder %v2159, 2
        %vm2773 = vcmp.eq.s32.totalorder %v2173, 2
        %vm2774 = vcmp.eq.s32.totalorder %v2187, 2
        %vm2775 = vcmp.eq.s32.totalorder %v2201, 2
        %vm2776 = vcmp.eq.s32.totalorder %v2215, 2
        %vm2777 = vcmp.eq.s32.totalorder %v2229, 2
        %vm2778 = vcmp.eq.s32.totalorder %v2243, 2
        %vm2779 = vcmp.eq.s32.totalorder %v2257, 2
        %vm2780 = vcmp.eq.s32.totalorder %v2271, 2
        %vm2781 = vcmp.eq.s32.totalorder %v2285, 2
        %vm2782 = vcmp.eq.s32.totalorder %v2299, 2
        %vm2783 = vcmp.eq.s32.totalorder %v2313, 2
        %vm2784 = vcmp.eq.s32.totalorder %v2327, 2
        %vm2785 = vcmp.eq.s32.totalorder %v2341, 2
        %vm2786 = vcmp.eq.s32.totalorder %v2355, 2
        %vm2787 = vcmp.eq.s32.totalorder %v2369, 2
        %vm2788 = vcmp.eq.s32.totalorder %v2383, 2
        %vm2789 = vcmp.eq.s32.totalorder %v2397, 2
        %vm2790 = vcmp.eq.s32.totalorder %v2411, 2
        %vm2791 = vcmp.eq.s32.totalorder %v2425, 2
        %vm2792 = vcmp.eq.s32.totalorder %v2439, 2
        %vm2793 = vcmp.eq.s32.totalorder %v2453, 2
        %vm2794 = vcmp.eq.s32.totalorder %v2467, 2
        %vm2795 = vcmp.eq.s32.totalorder %v2481, 2
        %vm2796 = vcmp.eq.s32.totalorder %v2495, 2
        %vm2797 = vcmp.eq.s32.totalorder %v2509, 2
        %v2798 = vsel %vm2766, 1, 0
        %v2799 = vsel %vm2767, 1, 0
        %v2800 = vsel %vm2768, 1, 0
        %v2801 = vsel %vm2769, 1, 0
        %v2802 = vsel %vm2770, 1, 0
        %v2803 = vsel %vm2771, 1, 0
        %v2804 = vsel %vm2772, 1, 0
        %v2805 = vsel %vm2773, 1, 0
        %v2806 = vsel %vm2774, 1, 0
        %v2807 = vsel %vm2775, 1, 0
        %v2808 = vsel %vm2776, 1, 0
        %v2809 = vsel %vm2777, 1, 0
        %v2810 = vsel %vm2778, 1, 0
        %v2811 = vsel %vm2779, 1, 0
        %v2812 = vsel %vm2780, 1, 0
        %v2813 = vsel %vm2781, 1, 0
        %v2814 = vsel %vm2782, 1, 0
        %v2815 = vsel %vm2783, 1, 0
        %v2816 = vsel %vm2784, 1, 0
        %v2817 = vsel %vm2785, 1, 0
        %v2818 = vsel %vm2786, 1, 0
        %v2819 = vsel %vm2787, 1, 0
        %v2820 = vsel %vm2788, 1, 0
        %v2821 = vsel %vm2789, 1, 0
        %v2822 = vsel %vm2790, 1, 0
        %v2823 = vsel %vm2791, 1, 0
        %v2824 = vsel %vm2792, 1, 0
        %v2825 = vsel %vm2793, 1, 0
        %v2826 = vsel %vm2794, 1, 0
        %v2827 = vsel %vm2795, 1, 0
        %v2828 = vsel %vm2796, 1, 0
        %v2829 = vsel %vm2797, 1, 0
        %vm2830 = vcmp.eq.s32.totalorder %v2798, 1
        %vm2831 = vcmp.eq.s32.totalorder %v2799, 1
        %vm2832 = vcmp.eq.s32.totalorder %v2800, 1
        %vm2833 = vcmp.eq.s32.totalorder %v2801, 1
        %vm2834 = vcmp.eq.s32.totalorder %v2802, 1
        %vm2835 = vcmp.eq.s32.totalorder %v2803, 1
        %vm2836 = vcmp.eq.s32.totalorder %v2804, 1
        %vm2837 = vcmp.eq.s32.totalorder %v2805, 1
        %vm2838 = vcmp.eq.s32.totalorder %v2806, 1
        %vm2839 = vcmp.eq.s32.totalorder %v2807, 1
        %vm2840 = vcmp.eq.s32.totalorder %v2808, 1
        %vm2841 = vcmp.eq.s32.totalorder %v2809, 1
        %vm2842 = vcmp.eq.s32.totalorder %v2810, 1
        %vm2843 = vcmp.eq.s32.totalorder %v2811, 1
        %vm2844 = vcmp.eq.s32.totalorder %v2812, 1
        %vm2845 = vcmp.eq.s32.totalorder %v2813, 1
        %vm2846 = vcmp.eq.s32.totalorder %v2814, 1
        %vm2847 = vcmp.eq.s32.totalorder %v2815, 1
        %vm2848 = vcmp.eq.s32.totalorder %v2816, 1
        %vm2849 = vcmp.eq.s32.totalorder %v2817, 1
        %vm2850 = vcmp.eq.s32.totalorder %v2818, 1
        %vm2851 = vcmp.eq.s32.totalorder %v2819, 1
        %vm2852 = vcmp.eq.s32.totalorder %v2820, 1
        %vm2853 = vcmp.eq.s32.totalorder %v2821, 1
        %vm2854 = vcmp.eq.s32.totalorder %v2822, 1
        %vm2855 = vcmp.eq.s32.totalorder %v2823, 1
        %vm2856 = vcmp.eq.s32.totalorder %v2824, 1
        %vm2857 = vcmp.eq.s32.totalorder %v2825, 1
        %vm2858 = vcmp.eq.s32.totalorder %v2826, 1
        %vm2859 = vcmp.eq.s32.totalorder %v2827, 1
        %vm2860 = vcmp.eq.s32.totalorder %v2828, 1
        %vm2861 = vcmp.eq.s32.totalorder %v2829, 1
        %v2862 = vsel %vm2830, %v1731, %v2734
        %v2863 = vsel %vm2831, %v1733, %v2735
        %v2864 = vsel %vm2832, %v1736, %v2736
        %v2865 = vsel %vm2833, %v1738, %v2737
        %v2866 = vsel %vm2834, %v1741, %v2738
        %v2867 = vsel %vm2835, %v1743, %v2739
        %v2868 = vsel %vm2836, %v1746, %v2740
        %v2869 = vsel %vm2837, %v1748, %v2741
        %v2870 = vsel %vm2838, %v1751, %v2742
        %v2871 = vsel %vm2839, %v1753, %v2743
        %v2872 = vsel %vm2840, %v1756, %v2744
        %v2873 = vsel %vm2841, %v1758, %v2745
        %v2874 = vsel %vm2842, %v1761, %v2746
        %v2875 = vsel %vm2843, %v1763, %v2747
        %v2876 = vsel %vm2844, %v1766, %v2748
        %v2877 = vsel %vm2845, %v1768, %v2749
        %v2878 = vsel %vm2846, %v1771, %v2750
        %v2879 = vsel %vm2847, %v1773, %v2751
        %v2880 = vsel %vm2848, %v1776, %v2752
        %v2881 = vsel %vm2849, %v1778, %v2753
        %v2882 = vsel %vm2850, %v1781, %v2754
        %v2883 = vsel %vm2851, %v1783, %v2755
        %v2884 = vsel %vm2852, %v1786, %v2756
        %v2885 = vsel %vm2853, %v1788, %v2757
        %v2886 = vsel %vm2854, %v1791, %v2758
        %v2887 = vsel %vm2855, %v1793, %v2759
        %v2888 = vsel %vm2856, %v1796, %v2760
        %v2889 = vsel %vm2857, %v1798, %v2761
        %v2890 = vsel %vm2858, %v1801, %v2762
        %v2891 = vsel %vm2859, %v1803, %v2763
        %v2892 = vsel %vm2860, %v1806, %v2764
        %v2893 = vsel %vm2861, %v1808, %v2765
        %vm2894 = vcmp.eq.s32.totalorder %v2075, 3
        %vm2895 = vcmp.eq.s32.totalorder %v2089, 3
        %vm2896 = vcmp.eq.s32.totalorder %v2103, 3
        %vm2897 = vcmp.eq.s32.totalorder %v2117, 3
        %vm2898 = vcmp.eq.s32.totalorder %v2131, 3
        %vm2899 = vcmp.eq.s32.totalorder %v2145, 3
        %vm2900 = vcmp.eq.s32.totalorder %v2159, 3
        %vm2901 = vcmp.eq.s32.totalorder %v2173, 3
        %vm2902 = vcmp.eq.s32.totalorder %v2187, 3
        %vm2903 = vcmp.eq.s32.totalorder %v2201, 3
        %vm2904 = vcmp.eq.s32.totalorder %v2215, 3
        %vm2905 = vcmp.eq.s32.totalorder %v2229, 3
        %vm2906 = vcmp.eq.s32.totalorder %v2243, 3
        %vm2907 = vcmp.eq.s32.totalorder %v2257, 3
        %vm2908 = vcmp.eq.s32.totalorder %v2271, 3
        %vm2909 = vcmp.eq.s32.totalorder %v2285, 3
        %vm2910 = vcmp.eq.s32.totalorder %v2299, 3
        %vm2911 = vcmp.eq.s32.totalorder %v2313, 3
        %vm2912 = vcmp.eq.s32.totalorder %v2327, 3
        %vm2913 = vcmp.eq.s32.totalorder %v2341, 3
        %vm2914 = vcmp.eq.s32.totalorder %v2355, 3
        %vm2915 = vcmp.eq.s32.totalorder %v2369, 3
        %vm2916 = vcmp.eq.s32.totalorder %v2383, 3
        %vm2917 = vcmp.eq.s32.totalorder %v2397, 3
        %vm2918 = vcmp.eq.s32.totalorder %v2411, 3
        %vm2919 = vcmp.eq.s32.totalorder %v2425, 3
        %vm2920 = vcmp.eq.s32.totalorder %v2439, 3
        %vm2921 = vcmp.eq.s32.totalorder %v2453, 3
        %vm2922 = vcmp.eq.s32.totalorder %v2467, 3
        %vm2923 = vcmp.eq.s32.totalorder %v2481, 3
        %vm2924 = vcmp.eq.s32.totalorder %v2495, 3
        %vm2925 = vcmp.eq.s32.totalorder %v2509, 3
        %v2926 = vsel %vm2894, 1, 0
        %v2927 = vsel %vm2895, 1, 0
        %v2928 = vsel %vm2896, 1, 0
        %v2929 = vsel %vm2897, 1, 0
        %v2930 = vsel %vm2898, 1, 0
        %v2931 = vsel %vm2899, 1, 0
        %v2932 = vsel %vm2900, 1, 0
        %v2933 = vsel %vm2901, 1, 0
        %v2934 = vsel %vm2902, 1, 0
        %v2935 = vsel %vm2903, 1, 0
        %v2936 = vsel %vm2904, 1, 0
        %v2937 = vsel %vm2905, 1, 0
        %v2938 = vsel %vm2906, 1, 0
        %v2939 = vsel %vm2907, 1, 0
        %v2940 = vsel %vm2908, 1, 0
        %v2941 = vsel %vm2909, 1, 0
        %v2942 = vsel %vm2910, 1, 0
        %v2943 = vsel %vm2911, 1, 0
        %v2944 = vsel %vm2912, 1, 0
        %v2945 = vsel %vm2913, 1, 0
        %v2946 = vsel %vm2914, 1, 0
        %v2947 = vsel %vm2915, 1, 0
        %v2948 = vsel %vm2916, 1, 0
        %v2949 = vsel %vm2917, 1, 0
        %v2950 = vsel %vm2918, 1, 0
        %v2951 = vsel %vm2919, 1, 0
        %v2952 = vsel %vm2920, 1, 0
        %v2953 = vsel %vm2921, 1, 0
        %v2954 = vsel %vm2922, 1, 0
        %v2955 = vsel %vm2923, 1, 0
        %v2956 = vsel %vm2924, 1, 0
        %v2957 = vsel %vm2925, 1, 0
        %vm2958 = vcmp.eq.s32.totalorder %v2926, 1
        %vm2959 = vcmp.eq.s32.totalorder %v2927, 1
        %vm2960 = vcmp.eq.s32.totalorder %v2928, 1
        %vm2961 = vcmp.eq.s32.totalorder %v2929, 1
        %vm2962 = vcmp.eq.s32.totalorder %v2930, 1
        %vm2963 = vcmp.eq.s32.totalorder %v2931, 1
        %vm2964 = vcmp.eq.s32.totalorder %v2932, 1
        %vm2965 = vcmp.eq.s32.totalorder %v2933, 1
        %vm2966 = vcmp.eq.s32.totalorder %v2934, 1
        %vm2967 = vcmp.eq.s32.totalorder %v2935, 1
        %vm2968 = vcmp.eq.s32.totalorder %v2936, 1
        %vm2969 = vcmp.eq.s32.totalorder %v2937, 1
        %vm2970 = vcmp.eq.s32.totalorder %v2938, 1
        %vm2971 = vcmp.eq.s32.totalorder %v2939, 1
        %vm2972 = vcmp.eq.s32.totalorder %v2940, 1
        %vm2973 = vcmp.eq.s32.totalorder %v2941, 1
        %vm2974 = vcmp.eq.s32.totalorder %v2942, 1
        %vm2975 = vcmp.eq.s32.totalorder %v2943, 1
        %vm2976 = vcmp.eq.s32.totalorder %v2944, 1
        %vm2977 = vcmp.eq.s32.totalorder %v2945, 1
        %vm2978 = vcmp.eq.s32.totalorder %v2946, 1
        %vm2979 = vcmp.eq.s32.totalorder %v2947, 1
        %vm2980 = vcmp.eq.s32.totalorder %v2948, 1
        %vm2981 = vcmp.eq.s32.totalorder %v2949, 1
        %vm2982 = vcmp.eq.s32.totalorder %v2950, 1
        %vm2983 = vcmp.eq.s32.totalorder %v2951, 1
        %vm2984 = vcmp.eq.s32.totalorder %v2952, 1
        %vm2985 = vcmp.eq.s32.totalorder %v2953, 1
        %vm2986 = vcmp.eq.s32.totalorder %v2954, 1
        %vm2987 = vcmp.eq.s32.totalorder %v2955, 1
        %vm2988 = vcmp.eq.s32.totalorder %v2956, 1
        %vm2989 = vcmp.eq.s32.totalorder %v2957, 1
        %v2990 = vsel %vm2958, %v1820, %v2862
        %v2991 = vsel %vm2959, %v1822, %v2863
        %v2992 = vsel %vm2960, %v1825, %v2864
        %v2993 = vsel %vm2961, %v1827, %v2865
        %v2994 = vsel %vm2962, %v1830, %v2866
        %v2995 = vsel %vm2963, %v1832, %v2867
        %v2996 = vsel %vm2964, %v1835, %v2868
        %v2997 = vsel %vm2965, %v1837, %v2869
        %v2998 = vsel %vm2966, %v1840, %v2870
        %v2999 = vsel %vm2967, %v1842, %v2871
        %v3000 = vsel %vm2968, %v1845, %v2872
        %v3001 = vsel %vm2969, %v1847, %v2873
        %v3002 = vsel %vm2970, %v1850, %v2874
        %v3003 = vsel %vm2971, %v1852, %v2875
        %v3004 = vsel %vm2972, %v1855, %v2876
        %v3005 = vsel %vm2973, %v1857, %v2877
        %v3006 = vsel %vm2974, %v1860, %v2878
        %v3007 = vsel %vm2975, %v1862, %v2879
        %v3008 = vsel %vm2976, %v1865, %v2880
        %v3009 = vsel %vm2977, %v1867, %v2881
        %v3010 = vsel %vm2978, %v1870, %v2882
        %v3011 = vsel %vm2979, %v1872, %v2883
        %v3012 = vsel %vm2980, %v1875, %v2884
        %v3013 = vsel %vm2981, %v1877, %v2885
        %v3014 = vsel %vm2982, %v1880, %v2886
        %v3015 = vsel %vm2983, %v1882, %v2887
        %v3016 = vsel %vm2984, %v1885, %v2888
        %v3017 = vsel %vm2985, %v1887, %v2889
        %v3018 = vsel %vm2986, %v1890, %v2890
        %v3019 = vsel %vm2987, %v1892, %v2891
        %v3020 = vsel %vm2988, %v1895, %v2892
        %v3021 = vsel %vm2989, %v1897, %v2893
        %3022 = vst [vmem:[%s255] sm:$0xff] %v2990
        %3023 = vst [vmem:[%s255 + $0x8] sm:$0xff] %v2991
        %3024 = vst [vmem:[%s255 + $0x10] sm:$0xff] %v2992
        %3025 = vst [vmem:[%s255 + $0x18] sm:$0xff] %v2993
        %3026 = vst [vmem:[%s255 + $0x20] sm:$0xff] %v2994
        %3027 = vst [vmem:[%s255 + $0x28] sm:$0xff] %v2995
        %3028 = vst [vmem:[%s255 + $0x30] sm:$0xff] %v2996
        %3029 = vst [vmem:[%s255 + $0x38] sm:$0xff] %v2997
        %3030 = vst [vmem:[%s255 + $0x40] sm:$0xff] %v2998
        %3031 = vst [vmem:[%s255 + $0x48] sm:$0xff] %v2999
        %3032 = vst [vmem:[%s255 + $0x50] sm:$0xff] %v3000
        %3033 = vst [vmem:[%s255 + $0x58] sm:$0xff] %v3001
        %3034 = vst [vmem:[%s255 + $0x60] sm:$0xff] %v3002
        %3035 = vst [vmem:[%s255 + $0x68] sm:$0xff] %v3003
        %3036 = vst [vmem:[%s255 + $0x70] sm:$0xff] %v3004
        %3037 = vst [vmem:[%s255 + $0x78] sm:$0xff] %v3005
        %3038 = vst [vmem:[%s255 + $0x80] sm:$0xff] %v3006
        %3039 = vst [vmem:[%s255 + $0x88] sm:$0xff] %v3007
        %3040 = vst [vmem:[%s255 + $0x90] sm:$0xff] %v3008
        %3041 = vst [vmem:[%s255 + $0x98] sm:$0xff] %v3009
        %3042 = vst [vmem:[%s255 + $0xa0] sm:$0xff] %v3010
        %3043 = vst [vmem:[%s255 + $0xa8] sm:$0xff] %v3011
        %3044 = vst [vmem:[%s255 + $0xb0] sm:$0xff] %v3012
        %3045 = vst [vmem:[%s255 + $0xb8] sm:$0xff] %v3013
        %3046 = vst [vmem:[%s255 + $0xc0] sm:$0xff] %v3014
        %3047 = vst [vmem:[%s255 + $0xc8] sm:$0xff] %v3015
        %3048 = vst [vmem:[%s255 + $0xd0] sm:$0xff] %v3016
        %3049 = vst [vmem:[%s255 + $0xd8] sm:$0xff] %v3017
        %3050 = vst [vmem:[%s255 + $0xe0] sm:$0xff] %v3018
        %3051 = vst [vmem:[%s255 + $0xe8] sm:$0xff] %v3019
        %3052 = vst [vmem:[%s255 + $0xf0] sm:$0xff] %v3020
        %3053 = vst [vmem:[%s255 + $0xf8] sm:$0xff] %v3021
        %s3054 = smul.u32 32, %s17
        %p3055 = scmp.lt.s32.totalorder %s3054, 63
        %s3056 = scalar_select %p3055, %s3054, 63
        %s3057 = smul.addr %s3056, 8
        %s3058 = scalar_lea.vmem %s4, %s3057
        // Predicated region
        $region45: #{graphsage_forward.9} parent=35 // pred_check
          %p3059 = pneg %p129
        $region46: #{graphsage_forward.9} parent=35 // pred_check_branch
          %3061 = sbr.rel (%p3059) target = $region48
        $region47: #{graphsage_forward.9} parent=35 // pred_region
          %s3062 = smul.u32 32, %s17
        $region48: #{graphsage_forward.9} parent=35 // pred_fallthru
          _
      $region36: #{graphsage_forward.9} parent=5 // pred_fallthru
        _
      %p3063 = scmp.le.s32.totalorder 2, %s12
      // Predicated region
      $region49: #{graphsage_forward.9} parent=5 // pred_check
        %p3064 = pneg %p3063
      $region50: #{graphsage_forward.9} parent=5 // pred_check_branch
        %3066 = sbr.rel (%p3064) target = $region52
      $region51: #{graphsage_forward.9} parent=5 // pred_region
        %s3067 = ssub.s32 %s12, 2
        // Predicated region
        $region53: #{graphsage_forward.9} parent=51 // pred_check
          %p3068 = pneg %p135
        $region54: #{graphsage_forward.9} parent=51 // pred_check_branch
          %3070 = sbr.rel (%p3068) target = $region56
        $region55: #{graphsage_forward.9} parent=51 // pred_region
          %s3071 = smul.u32 32, %s18
          %p3072 = scmp.lt.s32.totalorder %s3071, 63
          %s3073 = scalar_select %p3072, %s3071, 63
          %s3074 = smul.addr %s3073, 8
          %s3075 = scalar_lea.vmem %s4, %s3074
        $region56: #{graphsage_forward.9} parent=51 // pred_fallthru
          _
      $region52: #{graphsage_forward.9} parent=5 // pred_fallthru
        _
    $region6: #{graphsage_forward.9} parent=1 // loop_footer
      %s16 = sadd.s32 1, %s12
    $region7: #{graphsage_forward.9} parent=1 // loop_footer_branch
      %11 = sbr.rel target = $region3
    $region8: #{graphsage_forward.9} parent=1 // loop_exit
      _
    %3076 = vsyncpa [#allocation3], 1
    %s3077 = scalar_lea.sflag [#allocation3], 1
    %3078 = vsyncpa %s3077, 1
    %3079 = vsyncpa [#allocation5], 1

// kernel: graphsage_forward.6
$region0: #{graphsage_forward.6}
  #allocation0 [shape = 'u32[]', space=smem, size = 0x4, offset = 0x4, fixed_abs, tag = 'smem constant byte address 0x4 - core index']
  #allocation1 [shape = 'u32[72,128]{1,0:T(1,128)}', space=vmem, size = 0x9000, scoped, tag = 'internal scratch']
  #allocation2 [shape = 'f32[512,128]{1,0:T(8,128)}', space=vmem, size = 0x40000, scoped, tag = 'scratch operand']
  %s0 = inlined_call_operand.vmem [shape: s8[512,512], index: 0, kind: input, shape index: {}]
  %s1 = inlined_call_operand.vmem [shape: bf16[512,128], index: 1, kind: input, shape index: {}]
  %s2 = inlined_call_operand.vmem [shape: bf16[512,128], index: 2, kind: input, shape index: {}]
  %s3 = inlined_call_operand.vmem [shape: f32[512,1], index: 3, kind: input, shape index: {}]
  %s4 = inlined_call_operand.vmem [shape: bf16[512,128], index: 4, kind: output, shape index: {}]
  %s5 = sld [smem:[#allocation0]]
  $region34: #{graphsage_forward.6} parent=0
    _
  %s7 = ssub.s32 1, %s5
  %s8 = scalar_select 0, %s7, %s5
  // Predicated region
  $region2: #{graphsage_forward.6} parent=0 // pred_check
    _
  $region3: #{graphsage_forward.6} parent=0 // pred_check_branch
    %10 = sbr.rel (0) target = $region5
  $region4: #{graphsage_forward.6} parent=0 // pred_region
    _
  $region5: #{graphsage_forward.6} parent=0 // pred_fallthru
    _
  // Predicated region
  $region6: #{graphsage_forward.6} parent=0 // pred_check
    _
  $region7: #{graphsage_forward.6} parent=0 // pred_check_branch
    %12 = sbr.rel (0) target = $region9
  $region8: #{graphsage_forward.6} parent=0 // pred_region
    _
  $region9: #{graphsage_forward.6} parent=0 // pred_fallthru
    _
  // Predicated region
  $region10: #{graphsage_forward.6} parent=0 // pred_check
    _
  $region11: #{graphsage_forward.6} parent=0 // pred_check_branch
    %14 = sbr.rel (0) target = $region13
  $region12: #{graphsage_forward.6} parent=0 // pred_region
    _
  $region13: #{graphsage_forward.6} parent=0 // pred_fallthru
    _
  // Predicated region
  $region14: #{graphsage_forward.6} parent=0 // pred_check
    _
  $region15: #{graphsage_forward.6} parent=0 // pred_check_branch
    %16 = sbr.rel (0) target = $region17
  $region16: #{graphsage_forward.6} parent=0 // pred_region
    _
  $region17: #{graphsage_forward.6} parent=0 // pred_fallthru
    _
  %p17 = scmp.eq.s32.totalorder 0, 0
  // Predicated region
  $region18: #{graphsage_forward.6} parent=0 // pred_check
    %p18 = pneg %p17
  $region19: #{graphsage_forward.6} parent=0 // pred_check_branch
    %20 = sbr.rel (%p18) target = $region21
  $region20: #{graphsage_forward.6} parent=0 // pred_region
    %21 = vst [vmem:[#allocation2] sm:$0xff] 0.0
    %22 = vst [vmem:[#allocation2 + $0x8] sm:$0xff] 0.0
    %23 = vst [vmem:[#allocation2 + $0x10] sm:$0xff] 0.0
    %24 = vst [vmem:[#allocation2 + $0x18] sm:$0xff] 0.0
    %25 = vst [vmem:[#allocation2 + $0x20] sm:$0xff] 0.0
    %26 = vst [vmem:[#allocation2 + $0x28] sm:$0xff] 0.0
    %27 = vst [vmem:[#allocation2 + $0x30] sm:$0xff] 0.0
    %28 = vst [vmem:[#allocation2 + $0x38] sm:$0xff] 0.0
    %29 = vst [vmem:[#allocation2 + $0x40] sm:$0xff] 0.0
    %30 = vst [vmem:[#allocation2 + $0x48] sm:$0xff] 0.0
    %31 = vst [vmem:[#allocation2 + $0x50] sm:$0xff] 0.0
    %32 = vst [vmem:[#allocation2 + $0x58] sm:$0xff] 0.0
    %33 = vst [vmem:[#allocation2 + $0x60] sm:$0xff] 0.0
    %34 = vst [vmem:[#allocation2 + $0x68] sm:$0xff] 0.0
    %35 = vst [vmem:[#allocation2 + $0x70] sm:$0xff] 0.0
    %36 = vst [vmem:[#allocation2 + $0x78] sm:$0xff] 0.0
    %37 = vst [vmem:[#allocation2 + $0x80] sm:$0xff] 0.0
    %38 = vst [vmem:[#allocation2 + $0x88] sm:$0xff] 0.0
    %39 = vst [vmem:[#allocation2 + $0x90] sm:$0xff] 0.0
    %40 = vst [vmem:[#allocation2 + $0x98] sm:$0xff] 0.0
    %41 = vst [vmem:[#allocation2 + $0xa0] sm:$0xff] 0.0
    %42 = vst [vmem:[#allocation2 + $0xa8] sm:$0xff] 0.0
    %43 = vst [vmem:[#allocation2 + $0xb0] sm:$0xff] 0.0
    %44 = vst [vmem:[#allocation2 + $0xb8] sm:$0xff] 0.0
    %45 = vst [vmem:[#allocation2 + $0xc0] sm:$0xff] 0.0
    %46 = vst [vmem:[#allocation2 + $0xc8] sm:$0xff] 0.0
    %47 = vst [vmem:[#allocation2 + $0xd0] sm:$0xff] 0.0
    %48 = vst [vmem:[#allocation2 + $0xd8] sm:$0xff] 0.0
    %49 = vst [vmem:[#allocation2 + $0xe0] sm:$0xff] 0.0
    %50 = vst [vmem:[#allocation2 + $0xe8] sm:$0xff] 0.0
    %51 = vst [vmem:[#allocation2 + $0xf0] sm:$0xff] 0.0
    %52 = vst [vmem:[#allocation2 + $0xf8] sm:$0xff] 0.0
    %53 = vst [vmem:[#allocation2 + $0x100] sm:$0xff] 0.0
    %54 = vst [vmem:[#allocation2 + $0x108] sm:$0xff] 0.0
    %55 = vst [vmem:[#allocation2 + $0x110] sm:$0xff] 0.0
    %56 = vst [vmem:[#allocation2 + $0x118] sm:$0xff] 0.0
    %57 = vst [vmem:[#allocation2 + $0x120] sm:$0xff] 0.0
    %58 = vst [vmem:[#allocation2 + $0x128] sm:$0xff] 0.0
    %59 = vst [vmem:[#allocation2 + $0x130] sm:$0xff] 0.0
    %60 = vst [vmem:[#allocation2 + $0x138] sm:$0xff] 0.0
    %61 = vst [vmem:[#allocation2 + $0x140] sm:$0xff] 0.0
    %62 = vst [vmem:[#allocation2 + $0x148] sm:$0xff] 0.0
    %63 = vst [vmem:[#allocation2 + $0x150] sm:$0xff] 0.0
    %64 = vst [vmem:[#allocation2 + $0x158] sm:$0xff] 0.0
    %65 = vst [vmem:[#allocation2 + $0x160] sm:$0xff] 0.0
    %66 = vst [vmem:[#allocation2 + $0x168] sm:$0xff] 0.0
    %67 = vst [vmem:[#allocation2 + $0x170] sm:$0xff] 0.0
    %68 = vst [vmem:[#allocation2 + $0x178] sm:$0xff] 0.0
    %69 = vst [vmem:[#allocation2 + $0x180] sm:$0xff] 0.0
    %70 = vst [vmem:[#allocation2 + $0x188] sm:$0xff] 0.0
    %71 = vst [vmem:[#allocation2 + $0x190] sm:$0xff] 0.0
    %72 = vst [vmem:[#allocation2 + $0x198] sm:$0xff] 0.0
    %73 = vst [vmem:[#allocation2 + $0x1a0] sm:$0xff] 0.0
    %74 = vst [vmem:[#allocation2 + $0x1a8] sm:$0xff] 0.0
    %75 = vst [vmem:[#allocation2 + $0x1b0] sm:$0xff] 0.0
    %76 = vst [vmem:[#allocation2 + $0x1b8] sm:$0xff] 0.0
    %77 = vst [vmem:[#allocation2 + $0x1c0] sm:$0xff] 0.0
    %78 = vst [vmem:[#allocation2 + $0x1c8] sm:$0xff] 0.0
    %79 = vst [vmem:[#allocation2 + $0x1d0] sm:$0xff] 0.0
    %80 = vst [vmem:[#allocation2 + $0x1d8] sm:$0xff] 0.0
    %81 = vst [vmem:[#allocation2 + $0x1e0] sm:$0xff] 0.0
    %82 = vst [vmem:[#allocation2 + $0x1e8] sm:$0xff] 0.0
    %83 = vst [vmem:[#allocation2 + $0x1f0] sm:$0xff] 0.0
    %84 = vst [vmem:[#allocation2 + $0x1f8] sm:$0xff] 0.0
  $region21: #{graphsage_forward.6} parent=0 // pred_fallthru
    _
  %v85 = vld [vmem:[%s0] sm:$0xff]
  %v86 = vld [vmem:[%s0 + $0x8] sm:$0xff]
  %v87 = vld [vmem:[%s0 + $0x10] sm:$0xff]
  %v88 = vld [vmem:[%s0 + $0x18] sm:$0xff]
  %v89 = vld [vmem:[%s0 + $0x20] sm:$0xff]
  %v90 = vld [vmem:[%s0 + $0x28] sm:$0xff]
  %v91 = vld [vmem:[%s0 + $0x30] sm:$0xff]
  %v92 = vld [vmem:[%s0 + $0x38] sm:$0xff]
  %v93 = vld [vmem:[%s0 + $0x40] sm:$0xff]
  %v94 = vld [vmem:[%s0 + $0x48] sm:$0xff]
  %v95 = vld [vmem:[%s0 + $0x50] sm:$0xff]
  %v96 = vld [vmem:[%s0 + $0x58] sm:$0xff]
  %v97 = vld [vmem:[%s0 + $0x60] sm:$0xff]
  %v98 = vld [vmem:[%s0 + $0x68] sm:$0xff]
  %v99 = vld [vmem:[%s0 + $0x70] sm:$0xff]
  %v100 = vld [vmem:[%s0 + $0x78] sm:$0xff]
  %v101 = vld [vmem:[%s0 + $0x80] sm:$0xff]
  %v102 = vld [vmem:[%s0 + $0x88] sm:$0xff]
  %v103 = vld [vmem:[%s0 + $0x90] sm:$0xff]
  %v104 = vld [vmem:[%s0 + $0x98] sm:$0xff]
  %v105 = vld [vmem:[%s0 + $0xa0] sm:$0xff]
  %v106 = vld [vmem:[%s0 + $0xa8] sm:$0xff]
  %v107 = vld [vmem:[%s0 + $0xb0] sm:$0xff]
  %v108 = vld [vmem:[%s0 + $0xb8] sm:$0xff]
  %v109 = vld [vmem:[%s0 + $0xc0] sm:$0xff]
  %v110 = vld [vmem:[%s0 + $0xc8] sm:$0xff]
  %v111 = vld [vmem:[%s0 + $0xd0] sm:$0xff]
  %v112 = vld [vmem:[%s0 + $0xd8] sm:$0xff]
  %v113 = vld [vmem:[%s0 + $0xe0] sm:$0xff]
  %v114 = vld [vmem:[%s0 + $0xe8] sm:$0xff]
  %v115 = vld [vmem:[%s0 + $0xf0] sm:$0xff]
  %v116 = vld [vmem:[%s0 + $0xf8] sm:$0xff]
  %v117 = vld [vmem:[%s0 + $0x100] sm:$0xff]
  %v118 = vld [vmem:[%s0 + $0x108] sm:$0xff]
  %v119 = vld [vmem:[%s0 + $0x110] sm:$0xff]
  %v120 = vld [vmem:[%s0 + $0x118] sm:$0xff]
  %v121 = vld [vmem:[%s0 + $0x120] sm:$0xff]
  %v122 = vld [vmem:[%s0 + $0x128] sm:$0xff]
  %v123 = vld [vmem:[%s0 + $0x130] sm:$0xff]
  %v124 = vld [vmem:[%s0 + $0x138] sm:$0xff]
  %v125 = vld [vmem:[%s0 + $0x140] sm:$0xff]
  %v126 = vld [vmem:[%s0 + $0x148] sm:$0xff]
  %v127 = vld [vmem:[%s0 + $0x150] sm:$0xff]
  %v128 = vld [vmem:[%s0 + $0x158] sm:$0xff]
  %v129 = vld [vmem:[%s0 + $0x160] sm:$0xff]
  %v130 = vld [vmem:[%s0 + $0x168] sm:$0xff]
  %v131 = vld [vmem:[%s0 + $0x170] sm:$0xff]
  %v132 = vld [vmem:[%s0 + $0x178] sm:$0xff]
  %v133 = vld [vmem:[%s0 + $0x180] sm:$0xff]
  %v134 = vld [vmem:[%s0 + $0x188] sm:$0xff]
  %v135 = vld [vmem:[%s0 + $0x190] sm:$0xff]
  %v136 = vld [vmem:[%s0 + $0x198] sm:$0xff]
  %v137 = vld [vmem:[%s0 + $0x1a0] sm:$0xff]
  %v138 = vld [vmem:[%s0 + $0x1a8] sm:$0xff]
  %v139 = vld [vmem:[%s0 + $0x1b0] sm:$0xff]
  %v140 = vld [vmem:[%s0 + $0x1b8] sm:$0xff]
  %v141 = vld [vmem:[%s0 + $0x1c0] sm:$0xff]
  %v142 = vld [vmem:[%s0 + $0x1c8] sm:$0xff]
  %v143 = vld [vmem:[%s0 + $0x1d0] sm:$0xff]
  %v144 = vld [vmem:[%s0 + $0x1d8] sm:$0xff]
  %v145 = vld [vmem:[%s0 + $0x1e0] sm:$0xff]
  %v146 = vld [vmem:[%s0 + $0x1e8] sm:$0xff]
  %v147 = vld [vmem:[%s0 + $0x1f0] sm:$0xff]
  %v148 = vld [vmem:[%s0 + $0x1f8] sm:$0xff]
  %v149 = vunpack.c.0.s8 %v85
  %v150 = vunpack.c.0.s8 %v86
  %v151 = vunpack.c.0.s8 %v87
  %v152 = vunpack.c.0.s8 %v88
  %v153 = vunpack.c.1.s8 %v85
  %v154 = vunpack.c.1.s8 %v86
  %v155 = vunpack.c.1.s8 %v87
  %v156 = vunpack.c.1.s8 %v88
  %v157 = vunpack.c.2.s8 %v85
  %v158 = vunpack.c.2.s8 %v86
  %v159 = vunpack.c.2.s8 %v87
  %v160 = vunpack.c.2.s8 %v88
  %v161 = vunpack.c.3.s8 %v85
  %v162 = vunpack.c.3.s8 %v86
  %v163 = vunpack.c.3.s8 %v87
  %v164 = vunpack.c.3.s8 %v88
  %v165 = vunpack.c.0.s8 %v89
  %v166 = vunpack.c.0.s8 %v90
  %v167 = vunpack.c.0.s8 %v91
  %v168 = vunpack.c.0.s8 %v92
  %v169 = vunpack.c.1.s8 %v89
  %v170 = vunpack.c.1.s8 %v90
  %v171 = vunpack.c.1.s8 %v91
  %v172 = vunpack.c.1.s8 %v92
  %v173 = vunpack.c.2.s8 %v89
  %v174 = vunpack.c.2.s8 %v90
  %v175 = vunpack.c.2.s8 %v91
  %v176 = vunpack.c.2.s8 %v92
  %v177 = vunpack.c.3.s8 %v89
  %v178 = vunpack.c.3.s8 %v90
  %v179 = vunpack.c.3.s8 %v91
  %v180 = vunpack.c.3.s8 %v92
  %v181 = vunpack.c.0.s8 %v93
  %v182 = vunpack.c.0.s8 %v94
  %v183 = vunpack.c.0.s8 %v95
  %v184 = vunpack.c.0.s8 %v96
  %v185 = vunpack.c.1.s8 %v93
  %v186 = vunpack.c.1.s8 %v94
  %v187 = vunpack.c.1.s8 %v95
  %v188 = vunpack.c.1.s8 %v96
  %v189 = vunpack.c.2.s8 %v93
  %v190 = vunpack.c.2.s8 %v94
  %v191 = vunpack.c.2.s8 %v95
  %v192 = vunpack.c.2.s8 %v96
  %v193 = vunpack.c.3.s8 %v93
  %v194 = vunpack.c.3.s8 %v94
  %v195 = vunpack.c.3.s8 %v95
  %v196 = vunpack.c.3.s8 %v96
  %v197 = vunpack.c.0.s8 %v97
  %v198 = vunpack.c.0.s8 %v98
  %v199 = vunpack.c.0.s8 %v99
  %v200 = vunpack.c.0.s8 %v100
  %v201 = vunpack.c.1.s8 %v97
  %v202 = vunpack.c.1.s8 %v98
  %v203 = vunpack.c.1.s8 %v99
  %v204 = vunpack.c.1.s8 %v100
  %v205 = vunpack.c.2.s8 %v97
  %v206 = vunpack.c.2.s8 %v98
  %v207 = vunpack.c.2.s8 %v99
  %v208 = vunpack.c.2.s8 %v100
  %v209 = vunpack.c.3.s8 %v97
  %v210 = vunpack.c.3.s8 %v98
  %v211 = vunpack.c.3.s8 %v99
  %v212 = vunpack.c.3.s8 %v100
  %v213 = vunpack.c.0.s8 %v101
  %v214 = vunpack.c.0.s8 %v102
  %v215 = vunpack.c.0.s8 %v103
  %v216 = vunpack.c.0.s8 %v104
  %v217 = vunpack.c.1.s8 %v101
  %v218 = vunpack.c.1.s8 %v102
  %v219 = vunpack.c.1.s8 %v103
  %v220 = vunpack.c.1.s8 %v104
  %v221 = vunpack.c.2.s8 %v101
  %v222 = vunpack.c.2.s8 %v102
  %v223 = vunpack.c.2.s8 %v103
  %v224 = vunpack.c.2.s8 %v104
  %v225 = vunpack.c.3.s8 %v101
  %v226 = vunpack.c.3.s8 %v102
  %v227 = vunpack.c.3.s8 %v103
  %v228 = vunpack.c.3.s8 %v104
  %v229 = vunpack.c.0.s8 %v105
  %v230 = vunpack.c.0.s8 %v106
  %v231 = vunpack.c.0.s8 %v107
  %v232 = vunpack.c.0.s8 %v108
  %v233 = vunpack.c.1.s8 %v105
  %v234 = vunpack.c.1.s8 %v106
  %v235 = vunpack.c.1.s8 %v107
  %v236 = vunpack.c.1.s8 %v108
  %v237 = vunpack.c.2.s8 %v105
  %v238 = vunpack.c.2.s8 %v106
  %v239 = vunpack.c.2.s8 %v107
  %v240 = vunpack.c.2.s8 %v108
  %v241 = vunpack.c.3.s8 %v105
  %v242 = vunpack.c.3.s8 %v106
  %v243 = vunpack.c.3.s8 %v107
  %v244 = vunpack.c.3.s8 %v108
  %v245 = vunpack.c.0.s8 %v109
  %v246 = vunpack.c.0.s8 %v110
  %v247 = vunpack.c.0.s8 %v111
  %v248 = vunpack.c.0.s8 %v112
  %v249 = vunpack.c.1.s8 %v109
  %v250 = vunpack.c.1.s8 %v110
  %v251 = vunpack.c.1.s8 %v111
  %v252 = vunpack.c.1.s8 %v112
  %v253 = vunpack.c.2.s8 %v109
  %v254 = vunpack.c.2.s8 %v110
  %v255 = vunpack.c.2.s8 %v111
  %v256 = vunpack.c.2.s8 %v112
  %v257 = vunpack.c.3.s8 %v109
  %v258 = vunpack.c.3.s8 %v110
  %v259 = vunpack.c.3.s8 %v111
  %v260 = vunpack.c.3.s8 %v112
  %v261 = vunpack.c.0.s8 %v113
  %v262 = vunpack.c.0.s8 %v114
  %v263 = vunpack.c.0.s8 %v115
  %v264 = vunpack.c.0.s8 %v116
  %v265 = vunpack.c.1.s8 %v113
  %v266 = vunpack.c.1.s8 %v114
  %v267 = vunpack.c.1.s8 %v115
  %v268 = vunpack.c.1.s8 %v116
  %v269 = vunpack.c.2.s8 %v113
  %v270 = vunpack.c.2.s8 %v114
  %v271 = vunpack.c.2.s8 %v115
  %v272 = vunpack.c.2.s8 %v116
  %v273 = vunpack.c.3.s8 %v113
  %v274 = vunpack.c.3.s8 %v114
  %v275 = vunpack.c.3.s8 %v115
  %v276 = vunpack.c.3.s8 %v116
  %v277 = vunpack.c.0.s8 %v117
  %v278 = vunpack.c.0.s8 %v118
  %v279 = vunpack.c.0.s8 %v119
  %v280 = vunpack.c.0.s8 %v120
  %v281 = vunpack.c.1.s8 %v117
  %v282 = vunpack.c.1.s8 %v118
  %v283 = vunpack.c.1.s8 %v119
  %v284 = vunpack.c.1.s8 %v120
  %v285 = vunpack.c.2.s8 %v117
  %v286 = vunpack.c.2.s8 %v118
  %v287 = vunpack.c.2.s8 %v119
  %v288 = vunpack.c.2.s8 %v120
  %v289 = vunpack.c.3.s8 %v117
  %v290 = vunpack.c.3.s8 %v118
  %v291 = vunpack.c.3.s8 %v119
  %v292 = vunpack.c.3.s8 %v120
  %v293 = vunpack.c.0.s8 %v121
  %v294 = vunpack.c.0.s8 %v122
  %v295 = vunpack.c.0.s8 %v123
  %v296 = vunpack.c.0.s8 %v124
  %v297 = vunpack.c.1.s8 %v121
  %v298 = vunpack.c.1.s8 %v122
  %v299 = vunpack.c.1.s8 %v123
  %v300 = vunpack.c.1.s8 %v124
  %v301 = vunpack.c.2.s8 %v121
  %v302 = vunpack.c.2.s8 %v122
  %v303 = vunpack.c.2.s8 %v123
  %v304 = vunpack.c.2.s8 %v124
  %v305 = vunpack.c.3.s8 %v121
  %v306 = vunpack.c.3.s8 %v122
  %v307 = vunpack.c.3.s8 %v123
  %v308 = vunpack.c.3.s8 %v124
  %v309 = vunpack.c.0.s8 %v125
  %v310 = vunpack.c.0.s8 %v126
  %v311 = vunpack.c.0.s8 %v127
  %v312 = vunpack.c.0.s8 %v128
  %v313 = vunpack.c.1.s8 %v125
  %v314 = vunpack.c.1.s8 %v126
  %v315 = vunpack.c.1.s8 %v127
  %v316 = vunpack.c.1.s8 %v128
  %v317 = vunpack.c.2.s8 %v125
  %v318 = vunpack.c.2.s8 %v126
  %v319 = vunpack.c.2.s8 %v127
  %v320 = vunpack.c.2.s8 %v128
  %v321 = vunpack.c.3.s8 %v125
  %v322 = vunpack.c.3.s8 %v126
  %v323 = vunpack.c.3.s8 %v127
  %v324 = vunpack.c.3.s8 %v128
  %v325 = vunpack.c.0.s8 %v129
  %v326 = vunpack.c.0.s8 %v130
  %v327 = vunpack.c.0.s8 %v131
  %v328 = vunpack.c.0.s8 %v132
  %v329 = vunpack.c.1.s8 %v129
  %v330 = vunpack.c.1.s8 %v130
  %v331 = vunpack.c.1.s8 %v131
  %v332 = vunpack.c.1.s8 %v132
  %v333 = vunpack.c.2.s8 %v129
  %v334 = vunpack.c.2.s8 %v130
  %v335 = vunpack.c.2.s8 %v131
  %v336 = vunpack.c.2.s8 %v132
  %v337 = vunpack.c.3.s8 %v129
  %v338 = vunpack.c.3.s8 %v130
  %v339 = vunpack.c.3.s8 %v131
  %v340 = vunpack.c.3.s8 %v132
  %v341 = vunpack.c.0.s8 %v133
  %v342 = vunpack.c.0.s8 %v134
  %v343 = vunpack.c.0.s8 %v135
  %v344 = vunpack.c.0.s8 %v136
  %v345 = vunpack.c.1.s8 %v133
  %v346 = vunpack.c.1.s8 %v134
  %v347 = vunpack.c.1.s8 %v135
  %v348 = vunpack.c.1.s8 %v136
  %v349 = vunpack.c.2.s8 %v133
  %v350 = vunpack.c.2.s8 %v134
  %v351 = vunpack.c.2.s8 %v135
  %v352 = vunpack.c.2.s8 %v136
  %v353 = vunpack.c.3.s8 %v133
  %v354 = vunpack.c.3.s8 %v134
  %v355 = vunpack.c.3.s8 %v135
  %v356 = vunpack.c.3.s8 %v136
  %v357 = vunpack.c.0.s8 %v137
  %v358 = vunpack.c.0.s8 %v138
  %v359 = vunpack.c.0.s8 %v139
  %v360 = vunpack.c.0.s8 %v140
  %v361 = vunpack.c.1.s8 %v137
  %v362 = vunpack.c.1.s8 %v138
  %v363 = vunpack.c.1.s8 %v139
  %v364 = vunpack.c.1.s8 %v140
  %v365 = vunpack.c.2.s8 %v137
  %v366 = vunpack.c.2.s8 %v138
  %v367 = vunpack.c.2.s8 %v139
  %v368 = vunpack.c.2.s8 %v140
  %v369 = vunpack.c.3.s8 %v137
  %v370 = vunpack.c.3.s8 %v138
  %v371 = vunpack.c.3.s8 %v139
  %v372 = vunpack.c.3.s8 %v140
  %v373 = vunpack.c.0.s8 %v141
  %v374 = vunpack.c.0.s8 %v142
  %v375 = vunpack.c.0.s8 %v143
  %v376 = vunpack.c.0.s8 %v144
  %v377 = vunpack.c.1.s8 %v141
  %v378 = vunpack.c.1.s8 %v142
  %v379 = vunpack.c.1.s8 %v143
  %v380 = vunpack.c.1.s8 %v144
  %v381 = vunpack.c.2.s8 %v141
  %v382 = vunpack.c.2.s8 %v142
  %v383 = vunpack.c.2.s8 %v143
  %v384 = vunpack.c.2.s8 %v144
  %v385 = vunpack.c.3.s8 %v141
  %v386 = vunpack.c.3.s8 %v142
  %v387 = vunpack.c.3.s8 %v143
  %v388 = vunpack.c.3.s8 %v144
  %v389 = vunpack.c.0.s8 %v145
  %v390 = vunpack.c.0.s8 %v146
  %v391 = vunpack.c.0.s8 %v147
  %v392 = vunpack.c.0.s8 %v148
  %v393 = vunpack.c.1.s8 %v145
  %v394 = vunpack.c.1.s8 %v146
  %v395 = vunpack.c.1.s8 %v147
  %v396 = vunpack.c.1.s8 %v148
  %v397 = vunpack.c.2.s8 %v145
  %v398 = vunpack.c.2.s8 %v146
  %v399 = vunpack.c.2.s8 %v147
  %v400 = vunpack.c.2.s8 %v148
  %v401 = vunpack.c.3.s8 %v145
  %v402 = vunpack.c.3.s8 %v146
  %v403 = vunpack.c.3.s8 %v147
  %v404 = vunpack.c.3.s8 %v148
  %v405 = vcvt.s32.f32 %v149
  %v406 = vcvt.s32.f32 %v150
  %v407 = vcvt.s32.f32 %v151
  %v408 = vcvt.s32.f32 %v152
  %v409 = vcvt.s32.f32 %v153
  %v410 = vcvt.s32.f32 %v154
  %v411 = vcvt.s32.f32 %v155
  %v412 = vcvt.s32.f32 %v156
  %v413 = vcvt.s32.f32 %v157
  %v414 = vcvt.s32.f32 %v158
  %v415 = vcvt.s32.f32 %v159
  %v416 = vcvt.s32.f32 %v160
  %v417 = vcvt.s32.f32 %v161
  %v418 = vcvt.s32.f32 %v162
  %v419 = vcvt.s32.f32 %v163
  %v420 = vcvt.s32.f32 %v164
  %v421 = vcvt.s32.f32 %v165
  %v422 = vcvt.s32.f32 %v166
  %v423 = vcvt.s32.f32 %v167
  %v424 = vcvt.s32.f32 %v168
  %v425 = vcvt.s32.f32 %v169
  %v426 = vcvt.s32.f32 %v170
  %v427 = vcvt.s32.f32 %v171
  %v428 = vcvt.s32.f32 %v172
  %v429 = vcvt.s32.f32 %v173
  %v430 = vcvt.s32.f32 %v174
  %v431 = vcvt.s32.f32 %v175
  %v432 = vcvt.s32.f32 %v176
  %v433 = vcvt.s32.f32 %v177
  %v434 = vcvt.s32.f32 %v178
  %v435 = vcvt.s32.f32 %v179
  %v436 = vcvt.s32.f32 %v180
  %v437 = vcvt.s32.f32 %v181
  %v438 = vcvt.s32.f32 %v182
  %v439 = vcvt.s32.f32 %v183
  %v440 = vcvt.s32.f32 %v184
  %v441 = vcvt.s32.f32 %v185
  %v442 = vcvt.s32.f32 %v186
  %v443 = vcvt.s32.f32 %v187
  %v444 = vcvt.s32.f32 %v188
  %v445 = vcvt.s32.f32 %v189
  %v446 = vcvt.s32.f32 %v190
  %v447 = vcvt.s32.f32 %v191
  %v448 = vcvt.s32.f32 %v192
  %v449 = vcvt.s32.f32 %v193
  %v450 = vcvt.s32.f32 %v194
  %v451 = vcvt.s32.f32 %v195
  %v452 = vcvt.s32.f32 %v196
  %v453 = vcvt.s32.f32 %v197
  %v454 = vcvt.s32.f32 %v198
  %v455 = vcvt.s32.f32 %v199
  %v456 = vcvt.s32.f32 %v200
  %v457 = vcvt.s32.f32 %v201
  %v458 = vcvt.s32.f32 %v202
  %v459 = vcvt.s32.f32 %v203
  %v460 = vcvt.s32.f32 %v204
  %v461 = vcvt.s32.f32 %v205
  %v462 = vcvt.s32.f32 %v206
  %v463 = vcvt.s32.f32 %v207
  %v464 = vcvt.s32.f32 %v208
  %v465 = vcvt.s32.f32 %v209
  %v466 = vcvt.s32.f32 %v210
  %v467 = vcvt.s32.f32 %v211
  %v468 = vcvt.s32.f32 %v212
  %v469 = vcvt.s32.f32 %v213
  %v470 = vcvt.s32.f32 %v214
  %v471 = vcvt.s32.f32 %v215
  %v472 = vcvt.s32.f32 %v216
  %v473 = vcvt.s32.f32 %v217
  %v474 = vcvt.s32.f32 %v218
  %v475 = vcvt.s32.f32 %v219
  %v476 = vcvt.s32.f32 %v220
  %v477 = vcvt.s32.f32 %v221
  %v478 = vcvt.s32.f32 %v222
  %v479 = vcvt.s32.f32 %v223
  %v480 = vcvt.s32.f32 %v224
  %v481 = vcvt.s32.f32 %v225
  %v482 = vcvt.s32.f32 %v226
  %v483 = vcvt.s32.f32 %v227
  %v484 = vcvt.s32.f32 %v228
  %v485 = vcvt.s32.f32 %v229
  %v486 = vcvt.s32.f32 %v230
  %v487 = vcvt.s32.f32 %v231
  %v488 = vcvt.s32.f32 %v232
  %v489 = vcvt.s32.f32 %v233
  %v490 = vcvt.s32.f32 %v234
  %v491 = vcvt.s32.f32 %v235
  %v492 = vcvt.s32.f32 %v236
  %v493 = vcvt.s32.f32 %v237
  %v494 = vcvt.s32.f32 %v238
  %v495 = vcvt.s32.f32 %v239
  %v496 = vcvt.s32.f32 %v240
  %v497 = vcvt.s32.f32 %v241
  %v498 = vcvt.s32.f32 %v242
  %v499 = vcvt.s32.f32 %v243
  %v500 = vcvt.s32.f32 %v244
  %v501 = vcvt.s32.f32 %v245
  %v502 = vcvt.s32.f32 %v246
  %v503 = vcvt.s32.f32 %v247
  %v504 = vcvt.s32.f32 %v248
  %v505 = vcvt.s32.f32 %v249
  %v506 = vcvt.s32.f32 %v250
  %v507 = vcvt.s32.f32 %v251
  %v508 = vcvt.s32.f32 %v252
  %v509 = vcvt.s32.f32 %v253
  %v510 = vcvt.s32.f32 %v254
  %v511 = vcvt.s32.f32 %v255
  %v512 = vcvt.s32.f32 %v256
  %v513 = vcvt.s32.f32 %v257
  %v514 = vcvt.s32.f32 %v258
  %v515 = vcvt.s32.f32 %v259
  %v516 = vcvt.s32.f32 %v260
  %v517 = vcvt.s32.f32 %v261
  %v518 = vcvt.s32.f32 %v262
  %v519 = vcvt.s32.f32 %v263
  %v520 = vcvt.s32.f32 %v264
  %v521 = vcvt.s32.f32 %v265
  %v522 = vcvt.s32.f32 %v266
  %v523 = vcvt.s32.f32 %v267
  %v524 = vcvt.s32.f32 %v268
  %v525 = vcvt.s32.f32 %v269
  %v526 = vcvt.s32.f32 %v270
  %v527 = vcvt.s32.f32 %v271
  %v528 = vcvt.s32.f32 %v272
  %v529 = vcvt.s32.f32 %v273
  %v530 = vcvt.s32.f32 %v274
  %v531 = vcvt.s32.f32 %v275
  %v532 = vcvt.s32.f32 %v276
  %v533 = vcvt.s32.f32 %v277
  %v534 = vcvt.s32.f32 %v278
  %v535 = vcvt.s32.f32 %v279
  %v536 = vcvt.s32.f32 %v280
  %v537 = vcvt.s32.f32 %v281
  %v538 = vcvt.s32.f32 %v282
  %v539 = vcvt.s32.f32 %v283
  %v540 = vcvt.s32.f32 %v284
  %v541 = vcvt.s32.f32 %v285
  %v542 = vcvt.s32.f32 %v286
  %v543 = vcvt.s32.f32 %v287
  %v544 = vcvt.s32.f32 %v288
  %v545 = vcvt.s32.f32 %v289
  %v546 = vcvt.s32.f32 %v290
  %v547 = vcvt.s32.f32 %v291
  %v548 = vcvt.s32.f32 %v292
  %v549 = vcvt.s32.f32 %v293
  %v550 = vcvt.s32.f32 %v294
  %v551 = vcvt.s32.f32 %v295
  %v552 = vcvt.s32.f32 %v296
  %v553 = vcvt.s32.f32 %v297
  %v554 = vcvt.s32.f32 %v298
  %v555 = vcvt.s32.f32 %v299
  %v556 = vcvt.s32.f32 %v300
  %v557 = vcvt.s32.f32 %v301
  %v558 = vcvt.s32.f32 %v302
  %v559 = vcvt.s32.f32 %v303
  %v560 = vcvt.s32.f32 %v304
  %v561 = vcvt.s32.f32 %v305
  %v562 = vcvt.s32.f32 %v306
  %v563 = vcvt.s32.f32 %v307
  %v564 = vcvt.s32.f32 %v308
  %v565 = vcvt.s32.f32 %v309
  %v566 = vcvt.s32.f32 %v310
  %v567 = vcvt.s32.f32 %v311
  %v568 = vcvt.s32.f32 %v312
  %v569 = vcvt.s32.f32 %v313
  %v570 = vcvt.s32.f32 %v314
  %v571 = vcvt.s32.f32 %v315
  %v572 = vcvt.s32.f32 %v316
  %v573 = vcvt.s32.f32 %v317
  %v574 = vcvt.s32.f32 %v318
  %v575 = vcvt.s32.f32 %v319
  %v576 = vcvt.s32.f32 %v320
  %v577 = vcvt.s32.f32 %v321
  %v578 = vcvt.s32.f32 %v322
  %v579 = vcvt.s32.f32 %v323
  %v580 = vcvt.s32.f32 %v324
  %v581 = vcvt.s32.f32 %v325
  %v582 = vcvt.s32.f32 %v326
  %v583 = vcvt.s32.f32 %v327
  %v584 = vcvt.s32.f32 %v328
  %v585 = vcvt.s32.f32 %v329
  %v586 = vcvt.s32.f32 %v330
  %v587 = vcvt.s32.f32 %v331
  %v588 = vcvt.s32.f32 %v332
  %v589 = vcvt.s32.f32 %v333
  %v590 = vcvt.s32.f32 %v334
  %v591 = vcvt.s32.f32 %v335
  %v592 = vcvt.s32.f32 %v336
  %v593 = vcvt.s32.f32 %v337
  %v594 = vcvt.s32.f32 %v338
  %v595 = vcvt.s32.f32 %v339
  %v596 = vcvt.s32.f32 %v340
  %v597 = vcvt.s32.f32 %v341
  %v598 = vcvt.s32.f32 %v342
  %v599 = vcvt.s32.f32 %v343
  %v600 = vcvt.s32.f32 %v344
  %v601 = vcvt.s32.f32 %v345
  %v602 = vcvt.s32.f32 %v346
  %v603 = vcvt.s32.f32 %v347
  %v604 = vcvt.s32.f32 %v348
  %v605 = vcvt.s32.f32 %v349
  %v606 = vcvt.s32.f32 %v350
  %v607 = vcvt.s32.f32 %v351
  %v608 = vcvt.s32.f32 %v352
  %v609 = vcvt.s32.f32 %v353
  %v610 = vcvt.s32.f32 %v354
  %v611 = vcvt.s32.f32 %v355
  %v612 = vcvt.s32.f32 %v356
  %v613 = vcvt.s32.f32 %v357
  %v614 = vcvt.s32.f32 %v358
  %v615 = vcvt.s32.f32 %v359
  %v616 = vcvt.s32.f32 %v360
  %v617 = vcvt.s32.f32 %v361
  %v618 = vcvt.s32.f32 %v362
  %v619 = vcvt.s32.f32 %v363
  %v620 = vcvt.s32.f32 %v364
  %v621 = vcvt.s32.f32 %v365
  %v622 = vcvt.s32.f32 %v366
  %v623 = vcvt.s32.f32 %v367
  %v624 = vcvt.s32.f32 %v368
  %v625 = vcvt.s32.f32 %v369
  %v626 = vcvt.s32.f32 %v370
  %v627 = vcvt.s32.f32 %v371
  %v628 = vcvt.s32.f32 %v372
  %v629 = vcvt.s32.f32 %v373
  %v630 = vcvt.s32.f32 %v374
  %v631 = vcvt.s32.f32 %v375
  %v632 = vcvt.s32.f32 %v376
  %v633 = vcvt.s32.f32 %v377
  %v634 = vcvt.s32.f32 %v378
  %v635 = vcvt.s32.f32 %v379
  %v636 = vcvt.s32.f32 %v380
  %v637 = vcvt.s32.f32 %v381
  %v638 = vcvt.s32.f32 %v382
  %v639 = vcvt.s32.f32 %v383
  %v640 = vcvt.s32.f32 %v384
  %v641 = vcvt.s32.f32 %v385
  %v642 = vcvt.s32.f32 %v386
  %v643 = vcvt.s32.f32 %v387
  %v644 = vcvt.s32.f32 %v388
  %v645 = vcvt.s32.f32 %v389
  %v646 = vcvt.s32.f32 %v390
  %v647 = vcvt.s32.f32 %v391
  %v648 = vcvt.s32.f32 %v392
  %v649 = vcvt.s32.f32 %v393
  %v650 = vcvt.s32.f32 %v394
  %v651 = vcvt.s32.f32 %v395
  %v652 = vcvt.s32.f32 %v396
  %v653 = vcvt.s32.f32 %v397
  %v654 = vcvt.s32.f32 %v398
  %v655 = vcvt.s32.f32 %v399
  %v656 = vcvt.s32.f32 %v400
  %v657 = vcvt.s32.f32 %v401
  %v658 = vcvt.s32.f32 %v402
  %v659 = vcvt.s32.f32 %v403
  %v660 = vcvt.s32.f32 %v404
  %v661 = vpack.c.bf16 %v409, %v405
  %v662 = vpack.c.bf16 %v410, %v406
  %v663 = vpack.c.bf16 %v411, %v407
  %v664 = vpack.c.bf16 %v412, %v408
  %v665 = vpack.c.bf16 %v417, %v413
  %v666 = vpack.c.bf16 %v418, %v414
  %v667 = vpack.c.bf16 %v419, %v415
  %v668 = vpack.c.bf16 %v420, %v416
  %v669 = vpack.c.bf16 %v425, %v421
  %v670 = vpack.c.bf16 %v426, %v422
  %v671 = vpack.c.bf16 %v427, %v423
  %v672 = vpack.c.bf16 %v428, %v424
  %v673 = vpack.c.bf16 %v433, %v429
  %v674 = vpack.c.bf16 %v434, %v430
  %v675 = vpack.c.bf16 %v435, %v431
  %v676 = vpack.c.bf16 %v436, %v432
  %v677 = vpack.c.bf16 %v441, %v437
  %v678 = vpack.c.bf16 %v442, %v438
  %v679 = vpack.c.bf16 %v443, %v439
  %v680 = vpack.c.bf16 %v444, %v440
  %v681 = vpack.c.bf16 %v449, %v445
  %v682 = vpack.c.bf16 %v450, %v446
  %v683 = vpack.c.bf16 %v451, %v447
  %v684 = vpack.c.bf16 %v452, %v448
  %v685 = vpack.c.bf16 %v457, %v453
  %v686 = vpack.c.bf16 %v458, %v454
  %v687 = vpack.c.bf16 %v459, %v455
  %v688 = vpack.c.bf16 %v460, %v456
  %v689 = vpack.c.bf16 %v465, %v461
  %v690 = vpack.c.bf16 %v466, %v462
  %v691 = vpack.c.bf16 %v467, %v463
  %v692 = vpack.c.bf16 %v468, %v464
  %v693 = vpack.c.bf16 %v473, %v469
  %v694 = vpack.c.bf16 %v474, %v470
  %v695 = vpack.c.bf16 %v475, %v471
  %v696 = vpack.c.bf16 %v476, %v472
  %v697 = vpack.c.bf16 %v481, %v477
  %v698 = vpack.c.bf16 %v482, %v478
  %v699 = vpack.c.bf16 %v483, %v479
  %v700 = vpack.c.bf16 %v484, %v480
  %v701 = vpack.c.bf16 %v489, %v485
  %v702 = vpack.c.bf16 %v490, %v486
  %v703 = vpack.c.bf16 %v491, %v487
  %v704 = vpack.c.bf16 %v492, %v488
  %v705 = vpack.c.bf16 %v497, %v493
  %v706 = vpack.c.bf16 %v498, %v494
  %v707 = vpack.c.bf16 %v499, %v495
  %v708 = vpack.c.bf16 %v500, %v496
  %v709 = vpack.c.bf16 %v505, %v501
  %v710 = vpack.c.bf16 %v506, %v502
  %v711 = vpack.c.bf16 %v507, %v503
  %v712 = vpack.c.bf16 %v508, %v504
  %v713 = vpack.c.bf16 %v513, %v509
  %v714 = vpack.c.bf16 %v514, %v510
  %v715 = vpack.c.bf16 %v515, %v511
  %v716 = vpack.c.bf16 %v516, %v512
  %v717 = vpack.c.bf16 %v521, %v517
  %v718 = vpack.c.bf16 %v522, %v518
  %v719 = vpack.c.bf16 %v523, %v519
  %v720 = vpack.c.bf16 %v524, %v520
  %v721 = vpack.c.bf16 %v529, %v525
  %v722 = vpack.c.bf16 %v530, %v526
  %v723 = vpack.c.bf16 %v531, %v527
  %v724 = vpack.c.bf16 %v532, %v528
  %v725 = vpack.c.bf16 %v537, %v533
  %v726 = vpack.c.bf16 %v538, %v534
  %v727 = vpack.c.bf16 %v539, %v535
  %v728 = vpack.c.bf16 %v540, %v536
  %v729 = vpack.c.bf16 %v545, %v541
  %v730 = vpack.c.bf16 %v546, %v542
  %v731 = vpack.c.bf16 %v547, %v543
  %v732 = vpack.c.bf16 %v548, %v544
  %v733 = vpack.c.bf16 %v553, %v549
  %v734 = vpack.c.bf16 %v554, %v550
  %v735 = vpack.c.bf16 %v555, %v551
  %v736 = vpack.c.bf16 %v556, %v552
  %v737 = vpack.c.bf16 %v561, %v557
  %v738 = vpack.c.bf16 %v562, %v558
  %v739 = vpack.c.bf16 %v563, %v559
  %v740 = vpack.c.bf16 %v564, %v560
  %v741 = vpack.c.bf16 %v569, %v565
  %v742 = vpack.c.bf16 %v570, %v566
  %v743 = vpack.c.bf16 %v571, %v567
  %v744 = vpack.c.bf16 %v572, %v568
  %v745 = vpack.c.bf16 %v577, %v573
  %v746 = vpack.c.bf16 %v578, %v574
  %v747 = vpack.c.bf16 %v579, %v575
  %v748 = vpack.c.bf16 %v580, %v576
  %v749 = vpack.c.bf16 %v585, %v581
  %v750 = vpack.c.bf16 %v586, %v582
  %v751 = vpack.c.bf16 %v587, %v583
  %v752 = vpack.c.bf16 %v588, %v584
  %v753 = vpack.c.bf16 %v593, %v589
  %v754 = vpack.c.bf16 %v594, %v590
  %v755 = vpack.c.bf16 %v595, %v591
  %v756 = vpack.c.bf16 %v596, %v592
  %v757 = vpack.c.bf16 %v601, %v597
  %v758 = vpack.c.bf16 %v602, %v598
  %v759 = vpack.c.bf16 %v603, %v599
  %v760 = vpack.c.bf16 %v604, %v600
  %v761 = vpack.c.bf16 %v609, %v605
  %v762 = vpack.c.bf16 %v610, %v606
  %v763 = vpack.c.bf16 %v611, %v607
  %v764 = vpack.c.bf16 %v612, %v608
  %v765 = vpack.c.bf16 %v617, %v613
  %v766 = vpack.c.bf16 %v618, %v614
  %v767 = vpack.c.bf16 %v619, %v615
  %v768 = vpack.c.bf16 %v620, %v616
  %v769 = vpack.c.bf16 %v625, %v621
  %v770 = vpack.c.bf16 %v626, %v622
  %v771 = vpack.c.bf16 %v627, %v623
  %v772 = vpack.c.bf16 %v628, %v624
  %v773 = vpack.c.bf16 %v633, %v629
  %v774 = vpack.c.bf16 %v634, %v630
  %v775 = vpack.c.bf16 %v635, %v631
  %v776 = vpack.c.bf16 %v636, %v632
  %v777 = vpack.c.bf16 %v641, %v637
  %v778 = vpack.c.bf16 %v642, %v638
  %v779 = vpack.c.bf16 %v643, %v639
  %v780 = vpack.c.bf16 %v644, %v640
  %v781 = vpack.c.bf16 %v649, %v645
  %v782 = vpack.c.bf16 %v650, %v646
  %v783 = vpack.c.bf16 %v651, %v647
  %v784 = vpack.c.bf16 %v652, %v648
  %v785 = vpack.c.bf16 %v657, %v653
  %v786 = vpack.c.bf16 %v658, %v654
  %v787 = vpack.c.bf16 %v659, %v655
  %v788 = vpack.c.bf16 %v660, %v656
  %s789 = smul.u32 0, 512
  %s790 = sshra.s32 %s789, 3
  %s791 = sand.u32 %s789, 7
  %s792 = smul.addr %s790, 4
  %s793 = scalar_lea.vmem %s1, %s792
  %v794 = vld [vmem:[%s793] sm:$0xf]
  %v795 = vld [vmem:[%s793 + $0x4] sm:$0xf]
  %v796 = vld [vmem:[%s793 + $0x8] sm:$0xf]
  %v797 = vld [vmem:[%s793 + $0xc] sm:$0xf]
  %v798 = vld [vmem:[%s793 + $0x10] sm:$0xf]
  %v799 = vld [vmem:[%s793 + $0x14] sm:$0xf]
  %v800 = vld [vmem:[%s793 + $0x18] sm:$0xf]
  %v801 = vld [vmem:[%s793 + $0x1c] sm:$0xf]
  %v802 = vld [vmem:[%s793 + $0x20] sm:$0xf]
  %v803 = vld [vmem:[%s793 + $0x24] sm:$0xf]
  %v804 = vld [vmem:[%s793 + $0x28] sm:$0xf]
  %v805 = vld [vmem:[%s793 + $0x2c] sm:$0xf]
  %v806 = vld [vmem:[%s793 + $0x30] sm:$0xf]
  %v807 = vld [vmem:[%s793 + $0x34] sm:$0xf]
  %v808 = vld [vmem:[%s793 + $0x38] sm:$0xf]
  %v809 = vld [vmem:[%s793 + $0x3c] sm:$0xf]
  %v810 = vld [vmem:[%s793 + $0x40] sm:$0xf]
  %v811 = vld [vmem:[%s793 + $0x44] sm:$0xf]
  %v812 = vld [vmem:[%s793 + $0x48] sm:$0xf]
  %v813 = vld [vmem:[%s793 + $0x4c] sm:$0xf]
  %v814 = vld [vmem:[%s793 + $0x50] sm:$0xf]
  %v815 = vld [vmem:[%s793 + $0x54] sm:$0xf]
  %v816 = vld [vmem:[%s793 + $0x58] sm:$0xf]
  %v817 = vld [vmem:[%s793 + $0x5c] sm:$0xf]
  %v818 = vld [vmem:[%s793 + $0x60] sm:$0xf]
  %v819 = vld [vmem:[%s793 + $0x64] sm:$0xf]
  %v820 = vld [vmem:[%s793 + $0x68] sm:$0xf]
  %v821 = vld [vmem:[%s793 + $0x6c] sm:$0xf]
  %v822 = vld [vmem:[%s793 + $0x70] sm:$0xf]
  %v823 = vld [vmem:[%s793 + $0x74] sm:$0xf]
  %v824 = vld [vmem:[%s793 + $0x78] sm:$0xf]
  %v825 = vld [vmem:[%s793 + $0x7c] sm:$0xf]
  %v826 = vld [vmem:[%s793 + $0x80] sm:$0xf]
  %v827 = vld [vmem:[%s793 + $0x84] sm:$0xf]
  %v828 = vld [vmem:[%s793 + $0x88] sm:$0xf]
  %v829 = vld [vmem:[%s793 + $0x8c] sm:$0xf]
  %v830 = vld [vmem:[%s793 + $0x90] sm:$0xf]
  %v831 = vld [vmem:[%s793 + $0x94] sm:$0xf]
  %v832 = vld [vmem:[%s793 + $0x98] sm:$0xf]
  %v833 = vld [vmem:[%s793 + $0x9c] sm:$0xf]
  %v834 = vld [vmem:[%s793 + $0xa0] sm:$0xf]
  %v835 = vld [vmem:[%s793 + $0xa4] sm:$0xf]
  %v836 = vld [vmem:[%s793 + $0xa8] sm:$0xf]
  %v837 = vld [vmem:[%s793 + $0xac] sm:$0xf]
  %v838 = vld [vmem:[%s793 + $0xb0] sm:$0xf]
  %v839 = vld [vmem:[%s793 + $0xb4] sm:$0xf]
  %v840 = vld [vmem:[%s793 + $0xb8] sm:$0xf]
  %v841 = vld [vmem:[%s793 + $0xbc] sm:$0xf]
  %v842 = vld [vmem:[%s793 + $0xc0] sm:$0xf]
  %v843 = vld [vmem:[%s793 + $0xc4] sm:$0xf]
  %v844 = vld [vmem:[%s793 + $0xc8] sm:$0xf]
  %v845 = vld [vmem:[%s793 + $0xcc] sm:$0xf]
  %v846 = vld [vmem:[%s793 + $0xd0] sm:$0xf]
  %v847 = vld [vmem:[%s793 + $0xd4] sm:$0xf]
  %v848 = vld [vmem:[%s793 + $0xd8] sm:$0xf]
  %v849 = vld [vmem:[%s793 + $0xdc] sm:$0xf]
  %v850 = vld [vmem:[%s793 + $0xe0] sm:$0xf]
  %v851 = vld [vmem:[%s793 + $0xe4] sm:$0xf]
  %v852 = vld [vmem:[%s793 + $0xe8] sm:$0xf]
  %v853 = vld [vmem:[%s793 + $0xec] sm:$0xf]
  %v854 = vld [vmem:[%s793 + $0xf0] sm:$0xf]
  %v855 = vld [vmem:[%s793 + $0xf4] sm:$0xf]
  %v856 = vld [vmem:[%s793 + $0xf8] sm:$0xf]
  %v857 = vld [vmem:[%s793 + $0xfc] sm:$0xf]
  %v858 = vld [vmem:[#allocation2] sm:$0xff]
  %v859 = vld [vmem:[#allocation2 + $0x8] sm:$0xff]
  %v860 = vld [vmem:[#allocation2 + $0x10] sm:$0xff]
  %v861 = vld [vmem:[#allocation2 + $0x18] sm:$0xff]
  %v862 = vld [vmem:[#allocation2 + $0x20] sm:$0xff]
  %v863 = vld [vmem:[#allocation2 + $0x28] sm:$0xff]
  %v864 = vld [vmem:[#allocation2 + $0x30] sm:$0xff]
  %v865 = vld [vmem:[#allocation2 + $0x38] sm:$0xff]
  %v866 = vld [vmem:[#allocation2 + $0x40] sm:$0xff]
  %v867 = vld [vmem:[#allocation2 + $0x48] sm:$0xff]
  %v868 = vld [vmem:[#allocation2 + $0x50] sm:$0xff]
  %v869 = vld [vmem:[#allocation2 + $0x58] sm:$0xff]
  %v870 = vld [vmem:[#allocation2 + $0x60] sm:$0xff]
  %v871 = vld [vmem:[#allocation2 + $0x68] sm:$0xff]
  %v872 = vld [vmem:[#allocation2 + $0x70] sm:$0xff]
  %v873 = vld [vmem:[#allocation2 + $0x78] sm:$0xff]
  %v874 = vld [vmem:[#allocation2 + $0x80] sm:$0xff]
  %v875 = vld [vmem:[#allocation2 + $0x88] sm:$0xff]
  %v876 = vld [vmem:[#allocation2 + $0x90] sm:$0xff]
  %v877 = vld [vmem:[#allocation2 + $0x98] sm:$0xff]
  %v878 = vld [vmem:[#allocation2 + $0xa0] sm:$0xff]
  %v879 = vld [vmem:[#allocation2 + $0xa8] sm:$0xff]
  %v880 = vld [vmem:[#allocation2 + $0xb0] sm:$0xff]
  %v881 = vld [vmem:[#allocation2 + $0xb8] sm:$0xff]
  %v882 = vld [vmem:[#allocation2 + $0xc0] sm:$0xff]
  %v883 = vld [vmem:[#allocation2 + $0xc8] sm:$0xff]
  %v884 = vld [vmem:[#allocation2 + $0xd0] sm:$0xff]
  %v885 = vld [vmem:[#allocation2 + $0xd8] sm:$0xff]
  %v886 = vld [vmem:[#allocation2 + $0xe0] sm:$0xff]
  %v887 = vld [vmem:[#allocation2 + $0xe8] sm:$0xff]
  %v888 = vld [vmem:[#allocation2 + $0xf0] sm:$0xff]
  %v889 = vld [vmem:[#allocation2 + $0xf8] sm:$0xff]
  %v890 = vld [vmem:[#allocation2 + $0x100] sm:$0xff]
  %v891 = vld [vmem:[#allocation2 + $0x108] sm:$0xff]
  %v892 = vld [vmem:[#allocation2 + $0x110] sm:$0xff]
  %v893 = vld [vmem:[#allocation2 + $0x118] sm:$0xff]
  %v894 = vld [vmem:[#allocation2 + $0x120] sm:$0xff]
  %v895 = vld [vmem:[#allocation2 + $0x128] sm:$0xff]
  %v896 = vld [vmem:[#allocation2 + $0x130] sm:$0xff]
  %v897 = vld [vmem:[#allocation2 + $0x138] sm:$0xff]
  %v898 = vld [vmem:[#allocation2 + $0x140] sm:$0xff]
  %v899 = vld [vmem:[#allocation2 + $0x148] sm:$0xff]
  %v900 = vld [vmem:[#allocation2 + $0x150] sm:$0xff]
  %v901 = vld [vmem:[#allocation2 + $0x158] sm:$0xff]
  %v902 = vld [vmem:[#allocation2 + $0x160] sm:$0xff]
  %v903 = vld [vmem:[#allocation2 + $0x168] sm:$0xff]
  %v904 = vld [vmem:[#allocation2 + $0x170] sm:$0xff]
  %v905 = vld [vmem:[#allocation2 + $0x178] sm:$0xff]
  %v906 = vld [vmem:[#allocation2 + $0x180] sm:$0xff]
  %v907 = vld [vmem:[#allocation2 + $0x188] sm:$0xff]
  %v908 = vld [vmem:[#allocation2 + $0x190] sm:$0xff]
  %v909 = vld [vmem:[#allocation2 + $0x198] sm:$0xff]
  %v910 = vld [vmem:[#allocation2 + $0x1a0] sm:$0xff]
  %v911 = vld [vmem:[#allocation2 + $0x1a8] sm:$0xff]
  %v912 = vld [vmem:[#allocation2 + $0x1b0] sm:$0xff]
  %v913 = vld [vmem:[#allocation2 + $0x1b8] sm:$0xff]
  %v914 = vld [vmem:[#allocation2 + $0x1c0] sm:$0xff]
  %v915 = vld [vmem:[#allocation2 + $0x1c8] sm:$0xff]
  %v916 = vld [vmem:[#allocation2 + $0x1d0] sm:$0xff]
  %v917 = vld [vmem:[#allocation2 + $0x1d8] sm:$0xff]
  %v918 = vld [vmem:[#allocation2 + $0x1e0] sm:$0xff]
  %v919 = vld [vmem:[#allocation2 + $0x1e8] sm:$0xff]
  %v920 = vld [vmem:[#allocation2 + $0x1f0] sm:$0xff]
  %v921 = vld [vmem:[#allocation2 + $0x1f8] sm:$0xff]
  %v986 = vunpack.c.l.b16 %v794
  %v987 = vunpack.c.l.b16 %v795
  %v988 = vunpack.c.l.b16 %v796
  %v989 = vunpack.c.l.b16 %v797
  %v990 = vunpack.c.l.b16 %v798
  %v991 = vunpack.c.l.b16 %v799
  %v992 = vunpack.c.l.b16 %v800
  %v993 = vunpack.c.l.b16 %v801
  %v994 = vunpack.c.l.b16 %v802
  %v995 = vunpack.c.l.b16 %v803
  %v996 = vunpack.c.l.b16 %v804
  %v997 = vunpack.c.l.b16 %v805
  %v998 = vunpack.c.l.b16 %v806
  %v999 = vunpack.c.l.b16 %v807
  %v1000 = vunpack.c.l.b16 %v808
  %v1001 = vunpack.c.l.b16 %v809
  %v1002 = vunpack.c.l.b16 %v810
  %v1003 = vunpack.c.l.b16 %v811
  %v1004 = vunpack.c.l.b16 %v812
  %v1005 = vunpack.c.l.b16 %v813
  %v1006 = vunpack.c.l.b16 %v814
  %v1007 = vunpack.c.l.b16 %v815
  %v1008 = vunpack.c.l.b16 %v816
  %v1009 = vunpack.c.l.b16 %v817
  %v1010 = vunpack.c.l.b16 %v818
  %v1011 = vunpack.c.l.b16 %v819
  %v1012 = vunpack.c.l.b16 %v820
  %v1013 = vunpack.c.l.b16 %v821
  %v1014 = vunpack.c.l.b16 %v822
  %v1015 = vunpack.c.l.b16 %v823
  %v1016 = vunpack.c.l.b16 %v824
  %v1017 = vunpack.c.l.b16 %v825
  %v1018 = vunpack.c.l.b16 %v826
  %v1019 = vunpack.c.l.b16 %v827
  %v1020 = vunpack.c.l.b16 %v828
  %v1021 = vunpack.c.l.b16 %v829
  %v1022 = vunpack.c.l.b16 %v830
  %v1023 = vunpack.c.l.b16 %v831
  %v1024 = vunpack.c.l.b16 %v832
  %v1025 = vunpack.c.l.b16 %v833
  %v1026 = vunpack.c.l.b16 %v834
  %v1027 = vunpack.c.l.b16 %v835
  %v1028 = vunpack.c.l.b16 %v836
  %v1029 = vunpack.c.l.b16 %v837
  %v1030 = vunpack.c.l.b16 %v838
  %v1031 = vunpack.c.l.b16 %v839
  %v1032 = vunpack.c.l.b16 %v840
  %v1033 = vunpack.c.l.b16 %v841
  %v1034 = vunpack.c.l.b16 %v842
  %v1035 = vunpack.c.l.b16 %v843
  %v1036 = vunpack.c.l.b16 %v844
  %v1037 = vunpack.c.l.b16 %v845
  %v1038 = vunpack.c.l.b16 %v846
  %v1039 = vunpack.c.l.b16 %v847
  %v1040 = vunpack.c.l.b16 %v848
  %v1041 = vunpack.c.l.b16 %v849
  %v1042 = vunpack.c.l.b16 %v850
  %v1043 = vunpack.c.l.b16 %v851
  %v1044 = vunpack.c.l.b16 %v852
  %v1045 = vunpack.c.l.b16 %v853
  %v1046 = vunpack.c.l.b16 %v854
  %v1047 = vunpack.c.l.b16 %v855
  %v1048 = vunpack.c.l.b16 %v856
  %v1049 = vunpack.c.l.b16 %v857
  %v1050 = vpack.c.b16 %v987, %v986
  %v1051 = vpack.c.b16 %v989, %v988
  %v1052 = vpack.c.b16 %v991, %v990
  %v1053 = vpack.c.b16 %v993, %v992
  %v1054 = vpack.c.b16 %v995, %v994
  %v1055 = vpack.c.b16 %v997, %v996
  %v1056 = vpack.c.b16 %v999, %v998
  %v1057 = vpack.c.b16 %v1001, %v1000
  %v1058 = vpack.c.b16 %v1003, %v1002
  %v1059 = vpack.c.b16 %v1005, %v1004
  %v1060 = vpack.c.b16 %v1007, %v1006
  %v1061 = vpack.c.b16 %v1009, %v1008
  %v1062 = vpack.c.b16 %v1011, %v1010
  %v1063 = vpack.c.b16 %v1013, %v1012
  %v1064 = vpack.c.b16 %v1015, %v1014
  %v1065 = vpack.c.b16 %v1017, %v1016
  %v1066 = vpack.c.b16 %v1019, %v1018
  %v1067 = vpack.c.b16 %v1021, %v1020
  %v1068 = vpack.c.b16 %v1023, %v1022
  %v1069 = vpack.c.b16 %v1025, %v1024
  %v1070 = vpack.c.b16 %v1027, %v1026
  %v1071 = vpack.c.b16 %v1029, %v1028
  %v1072 = vpack.c.b16 %v1031, %v1030
  %v1073 = vpack.c.b16 %v1033, %v1032
  %v1074 = vpack.c.b16 %v1035, %v1034
  %v1075 = vpack.c.b16 %v1037, %v1036
  %v1076 = vpack.c.b16 %v1039, %v1038
  %v1077 = vpack.c.b16 %v1041, %v1040
  %v1078 = vpack.c.b16 %v1043, %v1042
  %v1079 = vpack.c.b16 %v1045, %v1044
  %v1080 = vpack.c.b16 %v1047, %v1046
  %v1081 = vpack.c.b16 %v1049, %v1048
  %1114 = vmatpush.bf16.msra.mxu0 %v1057
  %1115 = vmatpush.bf16.msra.mxu0 %v1056
  %1116 = vmatpush.bf16.msra.mxu0 %v1055
  %1117 = vmatpush.bf16.msra.mxu0 %v1054
  %1118 = vmatpush.bf16.msra.mxu0 %v1053
  %1119 = vmatpush.bf16.msra.mxu0 %v1052
  %1120 = vmatpush.bf16.msra.mxu0 %v1051
  %1121 = vmatpush.bf16.msra.mxu0 %v1050
  %1122 = vmatmul.bf16.gmra.mxu0 %v661
  %v1123 = vpop.f32.mrf.mxu0
  %v1124 = vadd.f32 0.0, %v1123
  %v1125 = vpop.f32.mrf.mxu0
  %v1126 = vadd.f32 0.0, %v1125
  %1127 = vmatmul.bf16.gmra.mxu0 %v665
  %v1128 = vpop.f32.mrf.mxu0
  %v1129 = vadd.f32 0.0, %v1128
  %v1130 = vpop.f32.mrf.mxu0
  %v1131 = vadd.f32 0.0, %v1130
  %1132 = vmatmul.bf16.gmra.mxu0 %v669
  %v1133 = vpop.f32.mrf.mxu0
  %v1134 = vadd.f32 0.0, %v1133
  %v1135 = vpop.f32.mrf.mxu0
  %v1136 = vadd.f32 0.0, %v1135
  %1137 = vmatmul.bf16.gmra.mxu0 %v673
  %v1138 = vpop.f32.mrf.mxu0
  %v1139 = vadd.f32 0.0, %v1138
  %v1140 = vpop.f32.mrf.mxu0
  %v1141 = vadd.f32 0.0, %v1140
  %1142 = vmatmul.bf16.gmra.mxu0 %v677
  %v1143 = vpop.f32.mrf.mxu0
  %v1144 = vadd.f32 0.0, %v1143
  %v1145 = vpop.f32.mrf.mxu0
  %v1146 = vadd.f32 0.0, %v1145
  %1147 = vmatmul.bf16.gmra.mxu0 %v681
  %v1148 = vpop.f32.mrf.mxu0
  %v1149 = vadd.f32 0.0, %v1148
  %v1150 = vpop.f32.mrf.mxu0
  %v1151 = vadd.f32 0.0, %v1150
  %1152 = vmatmul.bf16.gmra.mxu0 %v685
  %v1153 = vpop.f32.mrf.mxu0
  %v1154 = vadd.f32 0.0, %v1153
  %v1155 = vpop.f32.mrf.mxu0
  %v1156 = vadd.f32 0.0, %v1155
  %1157 = vmatmul.bf16.gmra.mxu0 %v689
  %v1158 = vpop.f32.mrf.mxu0
  %v1159 = vadd.f32 0.0, %v1158
  %v1160 = vpop.f32.mrf.mxu0
  %v1161 = vadd.f32 0.0, %v1160
  %1162 = vmatmul.bf16.gmra.mxu0 %v693
  %v1163 = vpop.f32.mrf.mxu0
  %v1164 = vadd.f32 0.0, %v1163
  %v1165 = vpop.f32.mrf.mxu0
  %v1166 = vadd.f32 0.0, %v1165
  %1167 = vmatmul.bf16.gmra.mxu0 %v697
  %v1168 = vpop.f32.mrf.mxu0
  %v1169 = vadd.f32 0.0, %v1168
  %v1170 = vpop.f32.mrf.mxu0
  %v1171 = vadd.f32 0.0, %v1170
  %1172 = vmatmul.bf16.gmra.mxu0 %v701
  %v1173 = vpop.f32.mrf.mxu0
  %v1174 = vadd.f32 0.0, %v1173
  %v1175 = vpop.f32.mrf.mxu0
  %v1176 = vadd.f32 0.0, %v1175
  %1177 = vmatmul.bf16.gmra.mxu0 %v705
  %v1178 = vpop.f32.mrf.mxu0
  %v1179 = vadd.f32 0.0, %v1178
  %v1180 = vpop.f32.mrf.mxu0
  %v1181 = vadd.f32 0.0, %v1180
  %1182 = vmatmul.bf16.gmra.mxu0 %v709
  %v1183 = vpop.f32.mrf.mxu0
  %v1184 = vadd.f32 0.0, %v1183
  %v1185 = vpop.f32.mrf.mxu0
  %v1186 = vadd.f32 0.0, %v1185
  %1187 = vmatmul.bf16.gmra.mxu0 %v713
  %v1188 = vpop.f32.mrf.mxu0
  %v1189 = vadd.f32 0.0, %v1188
  %v1190 = vpop.f32.mrf.mxu0
  %v1191 = vadd.f32 0.0, %v1190
  %1192 = vmatmul.bf16.gmra.mxu0 %v717
  %v1193 = vpop.f32.mrf.mxu0
  %v1194 = vadd.f32 0.0, %v1193
  %v1195 = vpop.f32.mrf.mxu0
  %v1196 = vadd.f32 0.0, %v1195
  %1197 = vmatmul.bf16.gmra.mxu0 %v721
  %v1198 = vpop.f32.mrf.mxu0
  %v1199 = vadd.f32 0.0, %v1198
  %v1200 = vpop.f32.mrf.mxu0
  %v1201 = vadd.f32 0.0, %v1200
  %1202 = vmatmul.bf16.gmra.mxu0 %v725
  %v1203 = vpop.f32.mrf.mxu0
  %v1204 = vadd.f32 0.0, %v1203
  %v1205 = vpop.f32.mrf.mxu0
  %v1206 = vadd.f32 0.0, %v1205
  %1207 = vmatmul.bf16.gmra.mxu0 %v729
  %v1208 = vpop.f32.mrf.mxu0
  %v1209 = vadd.f32 0.0, %v1208
  %v1210 = vpop.f32.mrf.mxu0
  %v1211 = vadd.f32 0.0, %v1210
  %1212 = vmatmul.bf16.gmra.mxu0 %v733
  %v1213 = vpop.f32.mrf.mxu0
  %v1214 = vadd.f32 0.0, %v1213
  %v1215 = vpop.f32.mrf.mxu0
  %v1216 = vadd.f32 0.0, %v1215
  %1217 = vmatmul.bf16.gmra.mxu0 %v737
  %v1218 = vpop.f32.mrf.mxu0
  %v1219 = vadd.f32 0.0, %v1218
  %v1220 = vpop.f32.mrf.mxu0
  %v1221 = vadd.f32 0.0, %v1220
  %1222 = vmatmul.bf16.gmra.mxu0 %v741
  %v1223 = vpop.f32.mrf.mxu0
  %v1224 = vadd.f32 0.0, %v1223
  %v1225 = vpop.f32.mrf.mxu0
  %v1226 = vadd.f32 0.0, %v1225
  %1227 = vmatmul.bf16.gmra.mxu0 %v745
  %v1228 = vpop.f32.mrf.mxu0
  %v1229 = vadd.f32 0.0, %v1228
  %v1230 = vpop.f32.mrf.mxu0
  %v1231 = vadd.f32 0.0, %v1230
  %1232 = vmatmul.bf16.gmra.mxu0 %v749
  %v1233 = vpop.f32.mrf.mxu0
  %v1234 = vadd.f32 0.0, %v1233
  %v1235 = vpop.f32.mrf.mxu0
  %v1236 = vadd.f32 0.0, %v1235
  %1237 = vmatmul.bf16.gmra.mxu0 %v753
  %v1238 = vpop.f32.mrf.mxu0
  %v1239 = vadd.f32 0.0, %v1238
  %v1240 = vpop.f32.mrf.mxu0
  %v1241 = vadd.f32 0.0, %v1240
  %1242 = vmatmul.bf16.gmra.mxu0 %v757
  %v1243 = vpop.f32.mrf.mxu0
  %v1244 = vadd.f32 0.0, %v1243
  %v1245 = vpop.f32.mrf.mxu0
  %v1246 = vadd.f32 0.0, %v1245
  %1247 = vmatmul.bf16.gmra.mxu0 %v761
  %v1248 = vpop.f32.mrf.mxu0
  %v1249 = vadd.f32 0.0, %v1248
  %v1250 = vpop.f32.mrf.mxu0
  %v1251 = vadd.f32 0.0, %v1250
  %1252 = vmatmul.bf16.gmra.mxu0 %v765
  %v1253 = vpop.f32.mrf.mxu0
  %v1254 = vadd.f32 0.0, %v1253
  %v1255 = vpop.f32.mrf.mxu0
  %v1256 = vadd.f32 0.0, %v1255
  %1257 = vmatmul.bf16.gmra.mxu0 %v769
  %v1258 = vpop.f32.mrf.mxu0
  %v1259 = vadd.f32 0.0, %v1258
  %v1260 = vpop.f32.mrf.mxu0
  %v1261 = vadd.f32 0.0, %v1260
  %1262 = vmatmul.bf16.gmra.mxu0 %v773
  %v1263 = vpop.f32.mrf.mxu0
  %v1264 = vadd.f32 0.0, %v1263
  %v1265 = vpop.f32.mrf.mxu0
  %v1266 = vadd.f32 0.0, %v1265
  %1267 = vmatmul.bf16.gmra.mxu0 %v777
  %v1268 = vpop.f32.mrf.mxu0
  %v1269 = vadd.f32 0.0, %v1268
  %v1270 = vpop.f32.mrf.mxu0
  %v1271 = vadd.f32 0.0, %v1270
  %1272 = vmatmul.bf16.gmra.mxu0 %v781
  %v1273 = vpop.f32.mrf.mxu0
  %v1274 = vadd.f32 0.0, %v1273
  %v1275 = vpop.f32.mrf.mxu0
  %v1276 = vadd.f32 0.0, %v1275
  %1277 = vmatmul.bf16.gmra.mxu0 %v785
  %v1278 = vpop.f32.mrf.mxu0
  %v1279 = vadd.f32 0.0, %v1278
  %v1280 = vpop.f32.mrf.mxu0
  %v1281 = vadd.f32 0.0, %v1280
  %1282 = vdwg.mxu0
  %1283 = vmatpush.bf16.msra.mxu0 %v1065
  %1284 = vmatpush.bf16.msra.mxu0 %v1064
  %1285 = vmatpush.bf16.msra.mxu0 %v1063
  %1286 = vmatpush.bf16.msra.mxu0 %v1062
  %1287 = vmatpush.bf16.msra.mxu0 %v1061
  %1288 = vmatpush.bf16.msra.mxu0 %v1060
  %1289 = vmatpush.bf16.msra.mxu0 %v1059
  %1290 = vmatpush.bf16.msra.mxu0 %v1058
  %1291 = vmatmul.bf16.gmra.mxu0 %v662
  %v1292 = vpop.f32.mrf.mxu0
  %v1293 = vadd.f32 %v1124, %v1292
  %v1294 = vpop.f32.mrf.mxu0
  %v1295 = vadd.f32 %v1126, %v1294
  %1296 = vmatmul.bf16.gmra.mxu0 %v666
  %v1297 = vpop.f32.mrf.mxu0
  %v1298 = vadd.f32 %v1129, %v1297
  %v1299 = vpop.f32.mrf.mxu0
  %v1300 = vadd.f32 %v1131, %v1299
  %1301 = vmatmul.bf16.gmra.mxu0 %v670
  %v1302 = vpop.f32.mrf.mxu0
  %v1303 = vadd.f32 %v1134, %v1302
  %v1304 = vpop.f32.mrf.mxu0
  %v1305 = vadd.f32 %v1136, %v1304
  %1306 = vmatmul.bf16.gmra.mxu0 %v674
  %v1307 = vpop.f32.mrf.mxu0
  %v1308 = vadd.f32 %v1139, %v1307
  %v1309 = vpop.f32.mrf.mxu0
  %v1310 = vadd.f32 %v1141, %v1309
  %1311 = vmatmul.bf16.gmra.mxu0 %v678
  %v1312 = vpop.f32.mrf.mxu0
  %v1313 = vadd.f32 %v1144, %v1312
  %v1314 = vpop.f32.mrf.mxu0
  %v1315 = vadd.f32 %v1146, %v1314
  %1316 = vmatmul.bf16.gmra.mxu0 %v682
  %v1317 = vpop.f32.mrf.mxu0
  %v1318 = vadd.f32 %v1149, %v1317
  %v1319 = vpop.f32.mrf.mxu0
  %v1320 = vadd.f32 %v1151, %v1319
  %1321 = vmatmul.bf16.gmra.mxu0 %v686
  %v1322 = vpop.f32.mrf.mxu0
  %v1323 = vadd.f32 %v1154, %v1322
  %v1324 = vpop.f32.mrf.mxu0
  %v1325 = vadd.f32 %v1156, %v1324
  %1326 = vmatmul.bf16.gmra.mxu0 %v690
  %v1327 = vpop.f32.mrf.mxu0
  %v1328 = vadd.f32 %v1159, %v1327
  %v1329 = vpop.f32.mrf.mxu0
  %v1330 = vadd.f32 %v1161, %v1329
  %1331 = vmatmul.bf16.gmra.mxu0 %v694
  %v1332 = vpop.f32.mrf.mxu0
  %v1333 = vadd.f32 %v1164, %v1332
  %v1334 = vpop.f32.mrf.mxu0
  %v1335 = vadd.f32 %v1166, %v1334
  %1336 = vmatmul.bf16.gmra.mxu0 %v698
  %v1337 = vpop.f32.mrf.mxu0
  %v1338 = vadd.f32 %v1169, %v1337
  %v1339 = vpop.f32.mrf.mxu0
  %v1340 = vadd.f32 %v1171, %v1339
  %1341 = vmatmul.bf16.gmra.mxu0 %v702
  %v1342 = vpop.f32.mrf.mxu0
  %v1343 = vadd.f32 %v1174, %v1342
  %v1344 = vpop.f32.mrf.mxu0
  %v1345 = vadd.f32 %v1176, %v1344
  %1346 = vmatmul.bf16.gmra.mxu0 %v706
  %v1347 = vpop.f32.mrf.mxu0
  %v1348 = vadd.f32 %v1179, %v1347
  %v1349 = vpop.f32.mrf.mxu0
  %v1350 = vadd.f32 %v1181, %v1349
  %1351 = vmatmul.bf16.gmra.mxu0 %v710
  %v1352 = vpop.f32.mrf.mxu0
  %v1353 = vadd.f32 %v1184, %v1352
  %v1354 = vpop.f32.mrf.mxu0
  %v1355 = vadd.f32 %v1186, %v1354
  %1356 = vmatmul.bf16.gmra.mxu0 %v714
  %v1357 = vpop.f32.mrf.mxu0
  %v1358 = vadd.f32 %v1189, %v1357
  %v1359 = vpop.f32.mrf.mxu0
  %v1360 = vadd.f32 %v1191, %v1359
  %1361 = vmatmul.bf16.gmra.mxu0 %v718
  %v1362 = vpop.f32.mrf.mxu0
  %v1363 = vadd.f32 %v1194, %v1362
  %v1364 = vpop.f32.mrf.mxu0
  %v1365 = vadd.f32 %v1196, %v1364
  %1366 = vmatmul.bf16.gmra.mxu0 %v722
  %v1367 = vpop.f32.mrf.mxu0
  %v1368 = vadd.f32 %v1199, %v1367
  %v1369 = vpop.f32.mrf.mxu0
  %v1370 = vadd.f32 %v1201, %v1369
  %1371 = vmatmul.bf16.gmra.mxu0 %v726
  %v1372 = vpop.f32.mrf.mxu0
  %v1373 = vadd.f32 %v1204, %v1372
  %v1374 = vpop.f32.mrf.mxu0
  %v1375 = vadd.f32 %v1206, %v1374
  %1376 = vmatmul.bf16.gmra.mxu0 %v730
  %v1377 = vpop.f32.mrf.mxu0
  %v1378 = vadd.f32 %v1209, %v1377
  %v1379 = vpop.f32.mrf.mxu0
  %v1380 = vadd.f32 %v1211, %v1379
  %1381 = vmatmul.bf16.gmra.mxu0 %v734
  %v1382 = vpop.f32.mrf.mxu0
  %v1383 = vadd.f32 %v1214, %v1382
  %v1384 = vpop.f32.mrf.mxu0
  %v1385 = vadd.f32 %v1216, %v1384
  %1386 = vmatmul.bf16.gmra.mxu0 %v738
  %v1387 = vpop.f32.mrf.mxu0
  %v1388 = vadd.f32 %v1219, %v1387
  %v1389 = vpop.f32.mrf.mxu0
  %v1390 = vadd.f32 %v1221, %v1389
  %1391 = vmatmul.bf16.gmra.mxu0 %v742
  %v1392 = vpop.f32.mrf.mxu0
  %v1393 = vadd.f32 %v1224, %v1392
  %v1394 = vpop.f32.mrf.mxu0
  %v1395 = vadd.f32 %v1226, %v1394
  %1396 = vmatmul.bf16.gmra.mxu0 %v746
  %v1397 = vpop.f32.mrf.mxu0
  %v1398 = vadd.f32 %v1229, %v1397
  %v1399 = vpop.f32.mrf.mxu0
  %v1400 = vadd.f32 %v1231, %v1399
  %1401 = vmatmul.bf16.gmra.mxu0 %v750
  %v1402 = vpop.f32.mrf.mxu0
  %v1403 = vadd.f32 %v1234, %v1402
  %v1404 = vpop.f32.mrf.mxu0
  %v1405 = vadd.f32 %v1236, %v1404
  %1406 = vmatmul.bf16.gmra.mxu0 %v754
  %v1407 = vpop.f32.mrf.mxu0
  %v1408 = vadd.f32 %v1239, %v1407
  %v1409 = vpop.f32.mrf.mxu0
  %v1410 = vadd.f32 %v1241, %v1409
  %1411 = vmatmul.bf16.gmra.mxu0 %v758
  %v1412 = vpop.f32.mrf.mxu0
  %v1413 = vadd.f32 %v1244, %v1412
  %v1414 = vpop.f32.mrf.mxu0
  %v1415 = vadd.f32 %v1246, %v1414
  %1416 = vmatmul.bf16.gmra.mxu0 %v762
  %v1417 = vpop.f32.mrf.mxu0
  %v1418 = vadd.f32 %v1249, %v1417
  %v1419 = vpop.f32.mrf.mxu0
  %v1420 = vadd.f32 %v1251, %v1419
  %1421 = vmatmul.bf16.gmra.mxu0 %v766
  %v1422 = vpop.f32.mrf.mxu0
  %v1423 = vadd.f32 %v1254, %v1422
  %v1424 = vpop.f32.mrf.mxu0
  %v1425 = vadd.f32 %v1256, %v1424
  %1426 = vmatmul.bf16.gmra.mxu0 %v770
  %v1427 = vpop.f32.mrf.mxu0
  %v1428 = vadd.f32 %v1259, %v1427
  %v1429 = vpop.f32.mrf.mxu0
  %v1430 = vadd.f32 %v1261, %v1429
  %1431 = vmatmul.bf16.gmra.mxu0 %v774
  %v1432 = vpop.f32.mrf.mxu0
  %v1433 = vadd.f32 %v1264, %v1432
  %v1434 = vpop.f32.mrf.mxu0
  %v1435 = vadd.f32 %v1266, %v1434
  %1436 = vmatmul.bf16.gmra.mxu0 %v778
  %v1437 = vpop.f32.mrf.mxu0
  %v1438 = vadd.f32 %v1269, %v1437
  %v1439 = vpop.f32.mrf.mxu0
  %v1440 = vadd.f32 %v1271, %v1439
  %1441 = vmatmul.bf16.gmra.mxu0 %v782
  %v1442 = vpop.f32.mrf.mxu0
  %v1443 = vadd.f32 %v1274, %v1442
  %v1444 = vpop.f32.mrf.mxu0
  %v1445 = vadd.f32 %v1276, %v1444
  %1446 = vmatmul.bf16.gmra.mxu0 %v786
  %v1447 = vpop.f32.mrf.mxu0
  %v1448 = vadd.f32 %v1279, %v1447
  %v1449 = vpop.f32.mrf.mxu0
  %v1450 = vadd.f32 %v1281, %v1449
  %1451 = vdwg.mxu0
  %1452 = vmatpush.bf16.msra.mxu0 %v1073
  %1453 = vmatpush.bf16.msra.mxu0 %v1072
  %1454 = vmatpush.bf16.msra.mxu0 %v1071
  %1455 = vmatpush.bf16.msra.mxu0 %v1070
  %1456 = vmatpush.bf16.msra.mxu0 %v1069
  %1457 = vmatpush.bf16.msra.mxu0 %v1068
  %1458 = vmatpush.bf16.msra.mxu0 %v1067
  %1459 = vmatpush.bf16.msra.mxu0 %v1066
  %1460 = vmatmul.bf16.gmra.mxu0 %v663
  %v1461 = vpop.f32.mrf.mxu0
  %v1462 = vadd.f32 %v1293, %v1461
  %v1463 = vpop.f32.mrf.mxu0
  %v1464 = vadd.f32 %v1295, %v1463
  %1465 = vmatmul.bf16.gmra.mxu0 %v667
  %v1466 = vpop.f32.mrf.mxu0
  %v1467 = vadd.f32 %v1298, %v1466
  %v1468 = vpop.f32.mrf.mxu0
  %v1469 = vadd.f32 %v1300, %v1468
  %1470 = vmatmul.bf16.gmra.mxu0 %v671
  %v1471 = vpop.f32.mrf.mxu0
  %v1472 = vadd.f32 %v1303, %v1471
  %v1473 = vpop.f32.mrf.mxu0
  %v1474 = vadd.f32 %v1305, %v1473
  %1475 = vmatmul.bf16.gmra.mxu0 %v675
  %v1476 = vpop.f32.mrf.mxu0
  %v1477 = vadd.f32 %v1308, %v1476
  %v1478 = vpop.f32.mrf.mxu0
  %v1479 = vadd.f32 %v1310, %v1478
  %1480 = vmatmul.bf16.gmra.mxu0 %v679
  %v1481 = vpop.f32.mrf.mxu0
  %v1482 = vadd.f32 %v1313, %v1481
  %v1483 = vpop.f32.mrf.mxu0
  %v1484 = vadd.f32 %v1315, %v1483
  %1485 = vmatmul.bf16.gmra.mxu0 %v683
  %v1486 = vpop.f32.mrf.mxu0
  %v1487 = vadd.f32 %v1318, %v1486
  %v1488 = vpop.f32.mrf.mxu0
  %v1489 = vadd.f32 %v1320, %v1488
  %1490 = vmatmul.bf16.gmra.mxu0 %v687
  %v1491 = vpop.f32.mrf.mxu0
  %v1492 = vadd.f32 %v1323, %v1491
  %v1493 = vpop.f32.mrf.mxu0
  %v1494 = vadd.f32 %v1325, %v1493
  %1495 = vmatmul.bf16.gmra.mxu0 %v691
  %v1496 = vpop.f32.mrf.mxu0
  %v1497 = vadd.f32 %v1328, %v1496
  %v1498 = vpop.f32.mrf.mxu0
  %v1499 = vadd.f32 %v1330, %v1498
  %1500 = vmatmul.bf16.gmra.mxu0 %v695
  %v1501 = vpop.f32.mrf.mxu0
  %v1502 = vadd.f32 %v1333, %v1501
  %v1503 = vpop.f32.mrf.mxu0
  %v1504 = vadd.f32 %v1335, %v1503
  %1505 = vmatmul.bf16.gmra.mxu0 %v699
  %v1506 = vpop.f32.mrf.mxu0
  %v1507 = vadd.f32 %v1338, %v1506
  %v1508 = vpop.f32.mrf.mxu0
  %v1509 = vadd.f32 %v1340, %v1508
  %1510 = vmatmul.bf16.gmra.mxu0 %v703
  %v1511 = vpop.f32.mrf.mxu0
  %v1512 = vadd.f32 %v1343, %v1511
  %v1513 = vpop.f32.mrf.mxu0
  %v1514 = vadd.f32 %v1345, %v1513
  %1515 = vmatmul.bf16.gmra.mxu0 %v707
  %v1516 = vpop.f32.mrf.mxu0
  %v1517 = vadd.f32 %v1348, %v1516
  %v1518 = vpop.f32.mrf.mxu0
  %v1519 = vadd.f32 %v1350, %v1518
  %1520 = vmatmul.bf16.gmra.mxu0 %v711
  %v1521 = vpop.f32.mrf.mxu0
  %v1522 = vadd.f32 %v1353, %v1521
  %v1523 = vpop.f32.mrf.mxu0
  %v1524 = vadd.f32 %v1355, %v1523
  %1525 = vmatmul.bf16.gmra.mxu0 %v715
  %v1526 = vpop.f32.mrf.mxu0
  %v1527 = vadd.f32 %v1358, %v1526
  %v1528 = vpop.f32.mrf.mxu0
  %v1529 = vadd.f32 %v1360, %v1528
  %1530 = vmatmul.bf16.gmra.mxu0 %v719
  %v1531 = vpop.f32.mrf.mxu0
  %v1532 = vadd.f32 %v1363, %v1531
  %v1533 = vpop.f32.mrf.mxu0
  %v1534 = vadd.f32 %v1365, %v1533
  %1535 = vmatmul.bf16.gmra.mxu0 %v723
  %v1536 = vpop.f32.mrf.mxu0
  %v1537 = vadd.f32 %v1368, %v1536
  %v1538 = vpop.f32.mrf.mxu0
  %v1539 = vadd.f32 %v1370, %v1538
  %1540 = vmatmul.bf16.gmra.mxu0 %v727
  %v1541 = vpop.f32.mrf.mxu0
  %v1542 = vadd.f32 %v1373, %v1541
  %v1543 = vpop.f32.mrf.mxu0
  %v1544 = vadd.f32 %v1375, %v1543
  %1545 = vmatmul.bf16.gmra.mxu0 %v731
  %v1546 = vpop.f32.mrf.mxu0
  %v1547 = vadd.f32 %v1378, %v1546
  %v1548 = vpop.f32.mrf.mxu0
  %v1549 = vadd.f32 %v1380, %v1548
  %1550 = vmatmul.bf16.gmra.mxu0 %v735
  %v1551 = vpop.f32.mrf.mxu0
  %v1552 = vadd.f32 %v1383, %v1551
  %v1553 = vpop.f32.mrf.mxu0
  %v1554 = vadd.f32 %v1385, %v1553
  %1555 = vmatmul.bf16.gmra.mxu0 %v739
  %v1556 = vpop.f32.mrf.mxu0
  %v1557 = vadd.f32 %v1388, %v1556
  %v1558 = vpop.f32.mrf.mxu0
  %v1559 = vadd.f32 %v1390, %v1558
  %1560 = vmatmul.bf16.gmra.mxu0 %v743
  %v1561 = vpop.f32.mrf.mxu0
  %v1562 = vadd.f32 %v1393, %v1561
  %v1563 = vpop.f32.mrf.mxu0
  %v1564 = vadd.f32 %v1395, %v1563
  %1565 = vmatmul.bf16.gmra.mxu0 %v747
  %v1566 = vpop.f32.mrf.mxu0
  %v1567 = vadd.f32 %v1398, %v1566
  %v1568 = vpop.f32.mrf.mxu0
  %v1569 = vadd.f32 %v1400, %v1568
  %1570 = vmatmul.bf16.gmra.mxu0 %v751
  %v1571 = vpop.f32.mrf.mxu0
  %v1572 = vadd.f32 %v1403, %v1571
  %v1573 = vpop.f32.mrf.mxu0
  %v1574 = vadd.f32 %v1405, %v1573
  %1575 = vmatmul.bf16.gmra.mxu0 %v755
  %v1576 = vpop.f32.mrf.mxu0
  %v1577 = vadd.f32 %v1408, %v1576
  %v1578 = vpop.f32.mrf.mxu0
  %v1579 = vadd.f32 %v1410, %v1578
  %1580 = vmatmul.bf16.gmra.mxu0 %v759
  %v1581 = vpop.f32.mrf.mxu0
  %v1582 = vadd.f32 %v1413, %v1581
  %v1583 = vpop.f32.mrf.mxu0
  %v1584 = vadd.f32 %v1415, %v1583
  %1585 = vmatmul.bf16.gmra.mxu0 %v763
  %v1586 = vpop.f32.mrf.mxu0
  %v1587 = vadd.f32 %v1418, %v1586
  %v1588 = vpop.f32.mrf.mxu0
  %v1589 = vadd.f32 %v1420, %v1588
  %1590 = vmatmul.bf16.gmra.mxu0 %v767
  %v1591 = vpop.f32.mrf.mxu0
  %v1592 = vadd.f32 %v1423, %v1591
  %v1593 = vpop.f32.mrf.mxu0
  %v1594 = vadd.f32 %v1425, %v1593
  %1595 = vmatmul.bf16.gmra.mxu0 %v771
  %v1596 = vpop.f32.mrf.mxu0
  %v1597 = vadd.f32 %v1428, %v1596
  %v1598 = vpop.f32.mrf.mxu0
  %v1599 = vadd.f32 %v1430, %v1598
  %1600 = vmatmul.bf16.gmra.mxu0 %v775
  %v1601 = vpop.f32.mrf.mxu0
  %v1602 = vadd.f32 %v1433, %v1601
  %v1603 = vpop.f32.mrf.mxu0
  %v1604 = vadd.f32 %v1435, %v1603
  %1605 = vmatmul.bf16.gmra.mxu0 %v779
  %v1606 = vpop.f32.mrf.mxu0
  %v1607 = vadd.f32 %v1438, %v1606
  %v1608 = vpop.f32.mrf.mxu0
  %v1609 = vadd.f32 %v1440, %v1608
  %1610 = vmatmul.bf16.gmra.mxu0 %v783
  %v1611 = vpop.f32.mrf.mxu0
  %v1612 = vadd.f32 %v1443, %v1611
  %v1613 = vpop.f32.mrf.mxu0
  %v1614 = vadd.f32 %v1445, %v1613
  %1615 = vmatmul.bf16.gmra.mxu0 %v787
  %v1616 = vpop.f32.mrf.mxu0
  %v1617 = vadd.f32 %v1448, %v1616
  %v1618 = vpop.f32.mrf.mxu0
  %v1619 = vadd.f32 %v1450, %v1618
  %1620 = vdwg.mxu0
  %1621 = vmatpush.bf16.msra.mxu0 %v1081
  %1622 = vmatpush.bf16.msra.mxu0 %v1080
  %1623 = vmatpush.bf16.msra.mxu0 %v1079
  %1624 = vmatpush.bf16.msra.mxu0 %v1078
  %1625 = vmatpush.bf16.msra.mxu0 %v1077
  %1626 = vmatpush.bf16.msra.mxu0 %v1076
  %1627 = vmatpush.bf16.msra.mxu0 %v1075
  %1628 = vmatpush.bf16.msra.mxu0 %v1074
  %1629 = vmatmul.bf16.gmra.mxu0 %v664
  %v1630 = vpop.f32.mrf.mxu0
  %v1631 = vadd.f32 %v1462, %v1630
  %v1632 = vpop.f32.mrf.mxu0
  %v1633 = vadd.f32 %v1464, %v1632
  %1634 = vmatmul.bf16.gmra.mxu0 %v668
  %v1635 = vpop.f32.mrf.mxu0
  %v1636 = vadd.f32 %v1467, %v1635
  %v1637 = vpop.f32.mrf.mxu0
  %v1638 = vadd.f32 %v1469, %v1637
  %1639 = vmatmul.bf16.gmra.mxu0 %v672
  %v1640 = vpop.f32.mrf.mxu0
  %v1641 = vadd.f32 %v1472, %v1640
  %v1642 = vpop.f32.mrf.mxu0
  %v1643 = vadd.f32 %v1474, %v1642
  %1644 = vmatmul.bf16.gmra.mxu0 %v676
  %v1645 = vpop.f32.mrf.mxu0
  %v1646 = vadd.f32 %v1477, %v1645
  %v1647 = vpop.f32.mrf.mxu0
  %v1648 = vadd.f32 %v1479, %v1647
  %1649 = vmatmul.bf16.gmra.mxu0 %v680
  %v1650 = vpop.f32.mrf.mxu0
  %v1651 = vadd.f32 %v1482, %v1650
  %v1652 = vpop.f32.mrf.mxu0
  %v1653 = vadd.f32 %v1484, %v1652
  %1654 = vmatmul.bf16.gmra.mxu0 %v684
  %v1655 = vpop.f32.mrf.mxu0
  %v1656 = vadd.f32 %v1487, %v1655
  %v1657 = vpop.f32.mrf.mxu0
  %v1658 = vadd.f32 %v1489, %v1657
  %1659 = vmatmul.bf16.gmra.mxu0 %v688
  %v1660 = vpop.f32.mrf.mxu0
  %v1661 = vadd.f32 %v1492, %v1660
  %v1662 = vpop.f32.mrf.mxu0
  %v1663 = vadd.f32 %v1494, %v1662
  %1664 = vmatmul.bf16.gmra.mxu0 %v692
  %v1665 = vpop.f32.mrf.mxu0
  %v1666 = vadd.f32 %v1497, %v1665
  %v1667 = vpop.f32.mrf.mxu0
  %v1668 = vadd.f32 %v1499, %v1667
  %1669 = vmatmul.bf16.gmra.mxu0 %v696
  %v1670 = vpop.f32.mrf.mxu0
  %v1671 = vadd.f32 %v1502, %v1670
  %v1672 = vpop.f32.mrf.mxu0
  %v1673 = vadd.f32 %v1504, %v1672
  %1674 = vmatmul.bf16.gmra.mxu0 %v700
  %v1675 = vpop.f32.mrf.mxu0
  %v1676 = vadd.f32 %v1507, %v1675
  %v1677 = vpop.f32.mrf.mxu0
  %v1678 = vadd.f32 %v1509, %v1677
  %1679 = vmatmul.bf16.gmra.mxu0 %v704
  %v1680 = vpop.f32.mrf.mxu0
  %v1681 = vadd.f32 %v1512, %v1680
  %v1682 = vpop.f32.mrf.mxu0
  %v1683 = vadd.f32 %v1514, %v1682
  %1684 = vmatmul.bf16.gmra.mxu0 %v708
  %v1685 = vpop.f32.mrf.mxu0
  %v1686 = vadd.f32 %v1517, %v1685
  %v1687 = vpop.f32.mrf.mxu0
  %v1688 = vadd.f32 %v1519, %v1687
  %1689 = vmatmul.bf16.gmra.mxu0 %v712
  %v1690 = vpop.f32.mrf.mxu0
  %v1691 = vadd.f32 %v1522, %v1690
  %v1692 = vpop.f32.mrf.mxu0
  %v1693 = vadd.f32 %v1524, %v1692
  %1694 = vmatmul.bf16.gmra.mxu0 %v716
  %v1695 = vpop.f32.mrf.mxu0
  %v1696 = vadd.f32 %v1527, %v1695
  %v1697 = vpop.f32.mrf.mxu0
  %v1698 = vadd.f32 %v1529, %v1697
  %1699 = vmatmul.bf16.gmra.mxu0 %v720
  %v1700 = vpop.f32.mrf.mxu0
  %v1701 = vadd.f32 %v1532, %v1700
  %v1702 = vpop.f32.mrf.mxu0
  %v1703 = vadd.f32 %v1534, %v1702
  %1704 = vmatmul.bf16.gmra.mxu0 %v724
  %v1705 = vpop.f32.mrf.mxu0
  %v1706 = vadd.f32 %v1537, %v1705
  %v1707 = vpop.f32.mrf.mxu0
  %v1708 = vadd.f32 %v1539, %v1707
  %1709 = vmatmul.bf16.gmra.mxu0 %v728
  %v1710 = vpop.f32.mrf.mxu0
  %v1711 = vadd.f32 %v1542, %v1710
  %v1712 = vpop.f32.mrf.mxu0
  %v1713 = vadd.f32 %v1544, %v1712
  %1714 = vmatmul.bf16.gmra.mxu0 %v732
  %v1715 = vpop.f32.mrf.mxu0
  %v1716 = vadd.f32 %v1547, %v1715
  %v1717 = vpop.f32.mrf.mxu0
  %v1718 = vadd.f32 %v1549, %v1717
  %1719 = vmatmul.bf16.gmra.mxu0 %v736
  %v1720 = vpop.f32.mrf.mxu0
  %v1721 = vadd.f32 %v1552, %v1720
  %v1722 = vpop.f32.mrf.mxu0
  %v1723 = vadd.f32 %v1554, %v1722
  %1724 = vmatmul.bf16.gmra.mxu0 %v740
  %v1725 = vpop.f32.mrf.mxu0
  %v1726 = vadd.f32 %v1557, %v1725
  %v1727 = vpop.f32.mrf.mxu0
  %v1728 = vadd.f32 %v1559, %v1727
  %1729 = vmatmul.bf16.gmra.mxu0 %v744
  %v1730 = vpop.f32.mrf.mxu0
  %v1731 = vadd.f32 %v1562, %v1730
  %v1732 = vpop.f32.mrf.mxu0
  %v1733 = vadd.f32 %v1564, %v1732
  %1734 = vmatmul.bf16.gmra.mxu0 %v748
  %v1735 = vpop.f32.mrf.mxu0
  %v1736 = vadd.f32 %v1567, %v1735
  %v1737 = vpop.f32.mrf.mxu0
  %v1738 = vadd.f32 %v1569, %v1737
  %1739 = vmatmul.bf16.gmra.mxu0 %v752
  %v1740 = vpop.f32.mrf.mxu0
  %v1741 = vadd.f32 %v1572, %v1740
  %v1742 = vpop.f32.mrf.mxu0
  %v1743 = vadd.f32 %v1574, %v1742
  %1744 = vmatmul.bf16.gmra.mxu0 %v756
  %v1745 = vpop.f32.mrf.mxu0
  %v1746 = vadd.f32 %v1577, %v1745
  %v1747 = vpop.f32.mrf.mxu0
  %v1748 = vadd.f32 %v1579, %v1747
  %1749 = vmatmul.bf16.gmra.mxu0 %v760
  %v1750 = vpop.f32.mrf.mxu0
  %v1751 = vadd.f32 %v1582, %v1750
  %v1752 = vpop.f32.mrf.mxu0
  %v1753 = vadd.f32 %v1584, %v1752
  %1754 = vmatmul.bf16.gmra.mxu0 %v764
  %v1755 = vpop.f32.mrf.mxu0
  %v1756 = vadd.f32 %v1587, %v1755
  %v1757 = vpop.f32.mrf.mxu0
  %v1758 = vadd.f32 %v1589, %v1757
  %1759 = vmatmul.bf16.gmra.mxu0 %v768
  %v1760 = vpop.f32.mrf.mxu0
  %v1761 = vadd.f32 %v1592, %v1760
  %v1762 = vpop.f32.mrf.mxu0
  %v1763 = vadd.f32 %v1594, %v1762
  %1764 = vmatmul.bf16.gmra.mxu0 %v772
  %v1765 = vpop.f32.mrf.mxu0
  %v1766 = vadd.f32 %v1597, %v1765
  %v1767 = vpop.f32.mrf.mxu0
  %v1768 = vadd.f32 %v1599, %v1767
  %1769 = vmatmul.bf16.gmra.mxu0 %v776
  %v1770 = vpop.f32.mrf.mxu0
  %v1771 = vadd.f32 %v1602, %v1770
  %v1772 = vpop.f32.mrf.mxu0
  %v1773 = vadd.f32 %v1604, %v1772
  %1774 = vmatmul.bf16.gmra.mxu0 %v780
  %v1775 = vpop.f32.mrf.mxu0
  %v1776 = vadd.f32 %v1607, %v1775
  %v1777 = vpop.f32.mrf.mxu0
  %v1778 = vadd.f32 %v1609, %v1777
  %1779 = vmatmul.bf16.gmra.mxu0 %v784
  %v1780 = vpop.f32.mrf.mxu0
  %v1781 = vadd.f32 %v1612, %v1780
  %v1782 = vpop.f32.mrf.mxu0
  %v1783 = vadd.f32 %v1614, %v1782
  %1784 = vmatmul.bf16.gmra.mxu0 %v788
  %v1785 = vpop.f32.mrf.mxu0
  %v1786 = vadd.f32 %v1617, %v1785
  %v1787 = vpop.f32.mrf.mxu0
  %v1788 = vadd.f32 %v1619, %v1787
  %1789 = vdwg.mxu0
  %v1790 = vadd.f32 %v858, %v1631
  %v1791 = vadd.f32 %v859, %v1633
  %v1792 = vadd.f32 %v860, %v1636
  %v1793 = vadd.f32 %v861, %v1638
  %v1794 = vadd.f32 %v862, %v1641
  %v1795 = vadd.f32 %v863, %v1643
  %v1796 = vadd.f32 %v864, %v1646
  %v1797 = vadd.f32 %v865, %v1648
  %v1798 = vadd.f32 %v866, %v1651
  %v1799 = vadd.f32 %v867, %v1653
  %v1800 = vadd.f32 %v868, %v1656
  %v1801 = vadd.f32 %v869, %v1658
  %v1802 = vadd.f32 %v870, %v1661
  %v1803 = vadd.f32 %v871, %v1663
  %v1804 = vadd.f32 %v872, %v1666
  %v1805 = vadd.f32 %v873, %v1668
  %v1806 = vadd.f32 %v874, %v1671
  %v1807 = vadd.f32 %v875, %v1673
  %v1808 = vadd.f32 %v876, %v1676
  %v1809 = vadd.f32 %v877, %v1678
  %v1810 = vadd.f32 %v878, %v1681
  %v1811 = vadd.f32 %v879, %v1683
  %v1812 = vadd.f32 %v880, %v1686
  %v1813 = vadd.f32 %v881, %v1688
  %v1814 = vadd.f32 %v882, %v1691
  %v1815 = vadd.f32 %v883, %v1693
  %v1816 = vadd.f32 %v884, %v1696
  %v1817 = vadd.f32 %v885, %v1698
  %v1818 = vadd.f32 %v886, %v1701
  %v1819 = vadd.f32 %v887, %v1703
  %v1820 = vadd.f32 %v888, %v1706
  %v1821 = vadd.f32 %v889, %v1708
  %v1822 = vadd.f32 %v890, %v1711
  %v1823 = vadd.f32 %v891, %v1713
  %v1824 = vadd.f32 %v892, %v1716
  %v1825 = vadd.f32 %v893, %v1718
  %v1826 = vadd.f32 %v894, %v1721
  %v1827 = vadd.f32 %v895, %v1723
  %v1828 = vadd.f32 %v896, %v1726
  %v1829 = vadd.f32 %v897, %v1728
  %v1830 = vadd.f32 %v898, %v1731
  %v1831 = vadd.f32 %v899, %v1733
  %v1832 = vadd.f32 %v900, %v1736
  %v1833 = vadd.f32 %v901, %v1738
  %v1834 = vadd.f32 %v902, %v1741
  %v1835 = vadd.f32 %v903, %v1743
  %v1836 = vadd.f32 %v904, %v1746
  %v1837 = vadd.f32 %v905, %v1748
  %v1838 = vadd.f32 %v906, %v1751
  %v1839 = vadd.f32 %v907, %v1753
  %v1840 = vadd.f32 %v908, %v1756
  %v1841 = vadd.f32 %v909, %v1758
  %v1842 = vadd.f32 %v910, %v1761
  %v1843 = vadd.f32 %v911, %v1763
  %v1844 = vadd.f32 %v912, %v1766
  %v1845 = vadd.f32 %v913, %v1768
  %v1846 = vadd.f32 %v914, %v1771
  %v1847 = vadd.f32 %v915, %v1773
  %v1848 = vadd.f32 %v916, %v1776
  %v1849 = vadd.f32 %v917, %v1778
  %v1850 = vadd.f32 %v918, %v1781
  %v1851 = vadd.f32 %v919, %v1783
  %v1852 = vadd.f32 %v920, %v1786
  %v1853 = vadd.f32 %v921, %v1788
  %1854 = vst [vmem:[#allocation2] sm:$0xff] %v1790
  %1855 = vst [vmem:[#allocation2 + $0x8] sm:$0xff] %v1791
  %1856 = vst [vmem:[#allocation2 + $0x10] sm:$0xff] %v1792
  %1857 = vst [vmem:[#allocation2 + $0x18] sm:$0xff] %v1793
  %1858 = vst [vmem:[#allocation2 + $0x20] sm:$0xff] %v1794
  %1859 = vst [vmem:[#allocation2 + $0x28] sm:$0xff] %v1795
  %1860 = vst [vmem:[#allocation2 + $0x30] sm:$0xff] %v1796
  %1861 = vst [vmem:[#allocation2 + $0x38] sm:$0xff] %v1797
  %1862 = vst [vmem:[#allocation2 + $0x40] sm:$0xff] %v1798
  %1863 = vst [vmem:[#allocation2 + $0x48] sm:$0xff] %v1799
  %1864 = vst [vmem:[#allocation2 + $0x50] sm:$0xff] %v1800
  %1865 = vst [vmem:[#allocation2 + $0x58] sm:$0xff] %v1801
  %1866 = vst [vmem:[#allocation2 + $0x60] sm:$0xff] %v1802
  %1867 = vst [vmem:[#allocation2 + $0x68] sm:$0xff] %v1803
  %1868 = vst [vmem:[#allocation2 + $0x70] sm:$0xff] %v1804
  %1869 = vst [vmem:[#allocation2 + $0x78] sm:$0xff] %v1805
  %1870 = vst [vmem:[#allocation2 + $0x80] sm:$0xff] %v1806
  %1871 = vst [vmem:[#allocation2 + $0x88] sm:$0xff] %v1807
  %1872 = vst [vmem:[#allocation2 + $0x90] sm:$0xff] %v1808
  %1873 = vst [vmem:[#allocation2 + $0x98] sm:$0xff] %v1809
  %1874 = vst [vmem:[#allocation2 + $0xa0] sm:$0xff] %v1810
  %1875 = vst [vmem:[#allocation2 + $0xa8] sm:$0xff] %v1811
  %1876 = vst [vmem:[#allocation2 + $0xb0] sm:$0xff] %v1812
  %1877 = vst [vmem:[#allocation2 + $0xb8] sm:$0xff] %v1813
  %1878 = vst [vmem:[#allocation2 + $0xc0] sm:$0xff] %v1814
  %1879 = vst [vmem:[#allocation2 + $0xc8] sm:$0xff] %v1815
  %1880 = vst [vmem:[#allocation2 + $0xd0] sm:$0xff] %v1816
  %1881 = vst [vmem:[#allocation2 + $0xd8] sm:$0xff] %v1817
  %1882 = vst [vmem:[#allocation2 + $0xe0] sm:$0xff] %v1818
  %1883 = vst [vmem:[#allocation2 + $0xe8] sm:$0xff] %v1819
  %1884 = vst [vmem:[#allocation2 + $0xf0] sm:$0xff] %v1820
  %1885 = vst [vmem:[#allocation2 + $0xf8] sm:$0xff] %v1821
  %1886 = vst [vmem:[#allocation2 + $0x100] sm:$0xff] %v1822
  %1887 = vst [vmem:[#allocation2 + $0x108] sm:$0xff] %v1823
  %1888 = vst [vmem:[#allocation2 + $0x110] sm:$0xff] %v1824
  %1889 = vst [vmem:[#allocation2 + $0x118] sm:$0xff] %v1825
  %1890 = vst [vmem:[#allocation2 + $0x120] sm:$0xff] %v1826
  %1891 = vst [vmem:[#allocation2 + $0x128] sm:$0xff] %v1827
  %1892 = vst [vmem:[#allocation2 + $0x130] sm:$0xff] %v1828
  %1893 = vst [vmem:[#allocation2 + $0x138] sm:$0xff] %v1829
  %1894 = vst [vmem:[#allocation2 + $0x140] sm:$0xff] %v1830
  %1895 = vst [vmem:[#allocation2 + $0x148] sm:$0xff] %v1831
  %1896 = vst [vmem:[#allocation2 + $0x150] sm:$0xff] %v1832
  %1897 = vst [vmem:[#allocation2 + $0x158] sm:$0xff] %v1833
  %1898 = vst [vmem:[#allocation2 + $0x160] sm:$0xff] %v1834
  %1899 = vst [vmem:[#allocation2 + $0x168] sm:$0xff] %v1835
  %1900 = vst [vmem:[#allocation2 + $0x170] sm:$0xff] %v1836
  %1901 = vst [vmem:[#allocation2 + $0x178] sm:$0xff] %v1837
  %1902 = vst [vmem:[#allocation2 + $0x180] sm:$0xff] %v1838
  %1903 = vst [vmem:[#allocation2 + $0x188] sm:$0xff] %v1839
  %1904 = vst [vmem:[#allocation2 + $0x190] sm:$0xff] %v1840
  %1905 = vst [vmem:[#allocation2 + $0x198] sm:$0xff] %v1841
  %1906 = vst [vmem:[#allocation2 + $0x1a0] sm:$0xff] %v1842
  %1907 = vst [vmem:[#allocation2 + $0x1a8] sm:$0xff] %v1843
  %1908 = vst [vmem:[#allocation2 + $0x1b0] sm:$0xff] %v1844
  %1909 = vst [vmem:[#allocation2 + $0x1b8] sm:$0xff] %v1845
  %1910 = vst [vmem:[#allocation2 + $0x1c0] sm:$0xff] %v1846
  %1911 = vst [vmem:[#allocation2 + $0x1c8] sm:$0xff] %v1847
  %1912 = vst [vmem:[#allocation2 + $0x1d0] sm:$0xff] %v1848
  %1913 = vst [vmem:[#allocation2 + $0x1d8] sm:$0xff] %v1849
  %1914 = vst [vmem:[#allocation2 + $0x1e0] sm:$0xff] %v1850
  %1915 = vst [vmem:[#allocation2 + $0x1e8] sm:$0xff] %v1851
  %1916 = vst [vmem:[#allocation2 + $0x1f0] sm:$0xff] %v1852
  %1917 = vst [vmem:[#allocation2 + $0x1f8] sm:$0xff] %v1853
  // Predicated region
  $region22: #{graphsage_forward.6} parent=0 // pred_check
    %p1918 = pneg %p17
  $region23: #{graphsage_forward.6} parent=0 // pred_check_branch
    %1920 = sbr.rel (%p1918) target = $region25
  $region24: #{graphsage_forward.6} parent=0 // pred_region
    %v1921 = vld [vmem:[%s2] sm:$0xf]
    %v1922 = vld [vmem:[%s2 + $0x4] sm:$0xf]
    %v1923 = vld [vmem:[%s2 + $0x8] sm:$0xf]
    %v1924 = vld [vmem:[%s2 + $0xc] sm:$0xf]
    %v1925 = vld [vmem:[%s2 + $0x10] sm:$0xf]
    %v1926 = vld [vmem:[%s2 + $0x14] sm:$0xf]
    %v1927 = vld [vmem:[%s2 + $0x18] sm:$0xf]
    %v1928 = vld [vmem:[%s2 + $0x1c] sm:$0xf]
    %v1929 = vld [vmem:[%s2 + $0x20] sm:$0xf]
    %v1930 = vld [vmem:[%s2 + $0x24] sm:$0xf]
    %v1931 = vld [vmem:[%s2 + $0x28] sm:$0xf]
    %v1932 = vld [vmem:[%s2 + $0x2c] sm:$0xf]
    %v1933 = vld [vmem:[%s2 + $0x30] sm:$0xf]
    %v1934 = vld [vmem:[%s2 + $0x34] sm:$0xf]
    %v1935 = vld [vmem:[%s2 + $0x38] sm:$0xf]
    %v1936 = vld [vmem:[%s2 + $0x3c] sm:$0xf]
    %v1937 = vld [vmem:[%s2 + $0x40] sm:$0xf]
    %v1938 = vld [vmem:[%s2 + $0x44] sm:$0xf]
    %v1939 = vld [vmem:[%s2 + $0x48] sm:$0xf]
    %v1940 = vld [vmem:[%s2 + $0x4c] sm:$0xf]
    %v1941 = vld [vmem:[%s2 + $0x50] sm:$0xf]
    %v1942 = vld [vmem:[%s2 + $0x54] sm:$0xf]
    %v1943 = vld [vmem:[%s2 + $0x58] sm:$0xf]
    %v1944 = vld [vmem:[%s2 + $0x5c] sm:$0xf]
    %v1945 = vld [vmem:[%s2 + $0x60] sm:$0xf]
    %v1946 = vld [vmem:[%s2 + $0x64] sm:$0xf]
    %v1947 = vld [vmem:[%s2 + $0x68] sm:$0xf]
    %v1948 = vld [vmem:[%s2 + $0x6c] sm:$0xf]
    %v1949 = vld [vmem:[%s2 + $0x70] sm:$0xf]
    %v1950 = vld [vmem:[%s2 + $0x74] sm:$0xf]
    %v1951 = vld [vmem:[%s2 + $0x78] sm:$0xf]
    %v1952 = vld [vmem:[%s2 + $0x7c] sm:$0xf]
    %v1953 = vld [vmem:[%s2 + $0x80] sm:$0xf]
    %v1954 = vld [vmem:[%s2 + $0x84] sm:$0xf]
    %v1955 = vld [vmem:[%s2 + $0x88] sm:$0xf]
    %v1956 = vld [vmem:[%s2 + $0x8c] sm:$0xf]
    %v1957 = vld [vmem:[%s2 + $0x90] sm:$0xf]
    %v1958 = vld [vmem:[%s2 + $0x94] sm:$0xf]
    %v1959 = vld [vmem:[%s2 + $0x98] sm:$0xf]
    %v1960 = vld [vmem:[%s2 + $0x9c] sm:$0xf]
    %v1961 = vld [vmem:[%s2 + $0xa0] sm:$0xf]
    %v1962 = vld [vmem:[%s2 + $0xa4] sm:$0xf]
    %v1963 = vld [vmem:[%s2 + $0xa8] sm:$0xf]
    %v1964 = vld [vmem:[%s2 + $0xac] sm:$0xf]
    %v1965 = vld [vmem:[%s2 + $0xb0] sm:$0xf]
    %v1966 = vld [vmem:[%s2 + $0xb4] sm:$0xf]
    %v1967 = vld [vmem:[%s2 + $0xb8] sm:$0xf]
    %v1968 = vld [vmem:[%s2 + $0xbc] sm:$0xf]
    %v1969 = vld [vmem:[%s2 + $0xc0] sm:$0xf]
    %v1970 = vld [vmem:[%s2 + $0xc4] sm:$0xf]
    %v1971 = vld [vmem:[%s2 + $0xc8] sm:$0xf]
    %v1972 = vld [vmem:[%s2 + $0xcc] sm:$0xf]
    %v1973 = vld [vmem:[%s2 + $0xd0] sm:$0xf]
    %v1974 = vld [vmem:[%s2 + $0xd4] sm:$0xf]
    %v1975 = vld [vmem:[%s2 + $0xd8] sm:$0xf]
    %v1976 = vld [vmem:[%s2 + $0xdc] sm:$0xf]
    %v1977 = vld [vmem:[%s2 + $0xe0] sm:$0xf]
    %v1978 = vld [vmem:[%s2 + $0xe4] sm:$0xf]
    %v1979 = vld [vmem:[%s2 + $0xe8] sm:$0xf]
    %v1980 = vld [vmem:[%s2 + $0xec] sm:$0xf]
    %v1981 = vld [vmem:[%s2 + $0xf0] sm:$0xf]
    %v1982 = vld [vmem:[%s2 + $0xf4] sm:$0xf]
    %v1983 = vld [vmem:[%s2 + $0xf8] sm:$0xf]
    %v1984 = vld [vmem:[%s2 + $0xfc] sm:$0xf]
    %v1985 = vunpack.c.l.bf16 %v1921
    %v1986 = vunpack.c.l.bf16 %v1922
    %v1987 = vunpack.c.l.bf16 %v1923
    %v1988 = vunpack.c.l.bf16 %v1924
    %v1989 = vunpack.c.l.bf16 %v1925
    %v1990 = vunpack.c.l.bf16 %v1926
    %v1991 = vunpack.c.l.bf16 %v1927
    %v1992 = vunpack.c.l.bf16 %v1928
    %v1993 = vunpack.c.l.bf16 %v1929
    %v1994 = vunpack.c.l.bf16 %v1930
    %v1995 = vunpack.c.l.bf16 %v1931
    %v1996 = vunpack.c.l.bf16 %v1932
    %v1997 = vunpack.c.l.bf16 %v1933
    %v1998 = vunpack.c.l.bf16 %v1934
    %v1999 = vunpack.c.l.bf16 %v1935
    %v2000 = vunpack.c.l.bf16 %v1936
    %v2001 = vunpack.c.l.bf16 %v1937
    %v2002 = vunpack.c.l.bf16 %v1938
    %v2003 = vunpack.c.l.bf16 %v1939
    %v2004 = vunpack.c.l.bf16 %v1940
    %v2005 = vunpack.c.l.bf16 %v1941
    %v2006 = vunpack.c.l.bf16 %v1942
    %v2007 = vunpack.c.l.bf16 %v1943
    %v2008 = vunpack.c.l.bf16 %v1944
    %v2009 = vunpack.c.l.bf16 %v1945
    %v2010 = vunpack.c.l.bf16 %v1946
    %v2011 = vunpack.c.l.bf16 %v1947
    %v2012 = vunpack.c.l.bf16 %v1948
    %v2013 = vunpack.c.l.bf16 %v1949
    %v2014 = vunpack.c.l.bf16 %v1950
    %v2015 = vunpack.c.l.bf16 %v1951
    %v2016 = vunpack.c.l.bf16 %v1952
    %v2017 = vunpack.c.l.bf16 %v1953
    %v2018 = vunpack.c.l.bf16 %v1954
    %v2019 = vunpack.c.l.bf16 %v1955
    %v2020 = vunpack.c.l.bf16 %v1956
    %v2021 = vunpack.c.l.bf16 %v1957
    %v2022 = vunpack.c.l.bf16 %v1958
    %v2023 = vunpack.c.l.bf16 %v1959
    %v2024 = vunpack.c.l.bf16 %v1960
    %v2025 = vunpack.c.l.bf16 %v1961
    %v2026 = vunpack.c.l.bf16 %v1962
    %v2027 = vunpack.c.l.bf16 %v1963
    %v2028 = vunpack.c.l.bf16 %v1964
    %v2029 = vunpack.c.l.bf16 %v1965
    %v2030 = vunpack.c.l.bf16 %v1966
    %v2031 = vunpack.c.l.bf16 %v1967
    %v2032 = vunpack.c.l.bf16 %v1968
    %v2033 = vunpack.c.l.bf16 %v1969
    %v2034 = vunpack.c.l.bf16 %v1970
    %v2035 = vunpack.c.l.bf16 %v1971
    %v2036 = vunpack.c.l.bf16 %v1972
    %v2037 = vunpack.c.l.bf16 %v1973
    %v2038 = vunpack.c.l.bf16 %v1974
    %v2039 = vunpack.c.l.bf16 %v1975
    %v2040 = vunpack.c.l.bf16 %v1976
    %v2041 = vunpack.c.l.bf16 %v1977
    %v2042 = vunpack.c.l.bf16 %v1978
    %v2043 = vunpack.c.l.bf16 %v1979
    %v2044 = vunpack.c.l.bf16 %v1980
    %v2045 = vunpack.c.l.bf16 %v1981
    %v2046 = vunpack.c.l.bf16 %v1982
    %v2047 = vunpack.c.l.bf16 %v1983
    %v2048 = vunpack.c.l.bf16 %v1984
    %v2049 = vld [vmem:[%s3] sm:$0xff]
    %v2050 = vld [vmem:[%s3 + $0x8] sm:$0xff]
    %v2051 = vld [vmem:[%s3 + $0x10] sm:$0xff]
    %v2052 = vld [vmem:[%s3 + $0x18] sm:$0xff]
    %v2053 = vld [vmem:[%s3 + $0x20] sm:$0xff]
    %v2054 = vld [vmem:[%s3 + $0x28] sm:$0xff]
    %v2055 = vld [vmem:[%s3 + $0x30] sm:$0xff]
    %v2056 = vld [vmem:[%s3 + $0x38] sm:$0xff]
    %v2057 = vld [vmem:[%s3 + $0x40] sm:$0xff]
    %v2058 = vld [vmem:[%s3 + $0x48] sm:$0xff]
    %v2059 = vld [vmem:[%s3 + $0x50] sm:$0xff]
    %v2060 = vld [vmem:[%s3 + $0x58] sm:$0xff]
    %v2061 = vld [vmem:[%s3 + $0x60] sm:$0xff]
    %v2062 = vld [vmem:[%s3 + $0x68] sm:$0xff]
    %v2063 = vld [vmem:[%s3 + $0x70] sm:$0xff]
    %v2064 = vld [vmem:[%s3 + $0x78] sm:$0xff]
    %v2065 = vld [vmem:[%s3 + $0x80] sm:$0xff]
    %v2066 = vld [vmem:[%s3 + $0x88] sm:$0xff]
    %v2067 = vld [vmem:[%s3 + $0x90] sm:$0xff]
    %v2068 = vld [vmem:[%s3 + $0x98] sm:$0xff]
    %v2069 = vld [vmem:[%s3 + $0xa0] sm:$0xff]
    %v2070 = vld [vmem:[%s3 + $0xa8] sm:$0xff]
    %v2071 = vld [vmem:[%s3 + $0xb0] sm:$0xff]
    %v2072 = vld [vmem:[%s3 + $0xb8] sm:$0xff]
    %v2073 = vld [vmem:[%s3 + $0xc0] sm:$0xff]
    %v2074 = vld [vmem:[%s3 + $0xc8] sm:$0xff]
    %v2075 = vld [vmem:[%s3 + $0xd0] sm:$0xff]
    %v2076 = vld [vmem:[%s3 + $0xd8] sm:$0xff]
    %v2077 = vld [vmem:[%s3 + $0xe0] sm:$0xff]
    %v2078 = vld [vmem:[%s3 + $0xe8] sm:$0xff]
    %v2079 = vld [vmem:[%s3 + $0xf0] sm:$0xff]
    %v2080 = vld [vmem:[%s3 + $0xf8] sm:$0xff]
    %v2081 = vld [vmem:[%s3 + $0x100] sm:$0xff]
    %v2082 = vld [vmem:[%s3 + $0x108] sm:$0xff]
    %v2083 = vld [vmem:[%s3 + $0x110] sm:$0xff]
    %v2084 = vld [vmem:[%s3 + $0x118] sm:$0xff]
    %v2085 = vld [vmem:[%s3 + $0x120] sm:$0xff]
    %v2086 = vld [vmem:[%s3 + $0x128] sm:$0xff]
    %v2087 = vld [vmem:[%s3 + $0x130] sm:$0xff]
    %v2088 = vld [vmem:[%s3 + $0x138] sm:$0xff]
    %v2089 = vld [vmem:[%s3 + $0x140] sm:$0xff]
    %v2090 = vld [vmem:[%s3 + $0x148] sm:$0xff]
    %v2091 = vld [vmem:[%s3 + $0x150] sm:$0xff]
    %v2092 = vld [vmem:[%s3 + $0x158] sm:$0xff]
    %v2093 = vld [vmem:[%s3 + $0x160] sm:$0xff]
    %v2094 = vld [vmem:[%s3 + $0x168] sm:$0xff]
    %v2095 = vld [vmem:[%s3 + $0x170] sm:$0xff]
    %v2096 = vld [vmem:[%s3 + $0x178] sm:$0xff]
    %v2097 = vld [vmem:[%s3 + $0x180] sm:$0xff]
    %v2098 = vld [vmem:[%s3 + $0x188] sm:$0xff]
    %v2099 = vld [vmem:[%s3 + $0x190] sm:$0xff]
    %v2100 = vld [vmem:[%s3 + $0x198] sm:$0xff]
    %v2101 = vld [vmem:[%s3 + $0x1a0] sm:$0xff]
    %v2102 = vld [vmem:[%s3 + $0x1a8] sm:$0xff]
    %v2103 = vld [vmem:[%s3 + $0x1b0] sm:$0xff]
    %v2104 = vld [vmem:[%s3 + $0x1b8] sm:$0xff]
    %v2105 = vld [vmem:[%s3 + $0x1c0] sm:$0xff]
    %v2106 = vld [vmem:[%s3 + $0x1c8] sm:$0xff]
    %v2107 = vld [vmem:[%s3 + $0x1d0] sm:$0xff]
    %v2108 = vld [vmem:[%s3 + $0x1d8] sm:$0xff]
    %v2109 = vld [vmem:[%s3 + $0x1e0] sm:$0xff]
    %v2110 = vld [vmem:[%s3 + $0x1e8] sm:$0xff]
    %v2111 = vld [vmem:[%s3 + $0x1f0] sm:$0xff]
    %v2112 = vld [vmem:[%s3 + $0x1f8] sm:$0xff]
    %v2113 = vld [vmem:[#allocation2] sm:$0xff]
    %v2114 = vld [vmem:[#allocation2 + $0x8] sm:$0xff]
    %v2115 = vld [vmem:[#allocation2 + $0x10] sm:$0xff]
    %v2116 = vld [vmem:[#allocation2 + $0x18] sm:$0xff]
    %v2117 = vld [vmem:[#allocation2 + $0x20] sm:$0xff]
    %v2118 = vld [vmem:[#allocation2 + $0x28] sm:$0xff]
    %v2119 = vld [vmem:[#allocation2 + $0x30] sm:$0xff]
    %v2120 = vld [vmem:[#allocation2 + $0x38] sm:$0xff]
    %v2121 = vld [vmem:[#allocation2 + $0x40] sm:$0xff]
    %v2122 = vld [vmem:[#allocation2 + $0x48] sm:$0xff]
    %v2123 = vld [vmem:[#allocation2 + $0x50] sm:$0xff]
    %v2124 = vld [vmem:[#allocation2 + $0x58] sm:$0xff]
    %v2125 = vld [vmem:[#allocation2 + $0x60] sm:$0xff]
    %v2126 = vld [vmem:[#allocation2 + $0x68] sm:$0xff]
    %v2127 = vld [vmem:[#allocation2 + $0x70] sm:$0xff]
    %v2128 = vld [vmem:[#allocation2 + $0x78] sm:$0xff]
    %v2129 = vld [vmem:[#allocation2 + $0x80] sm:$0xff]
    %v2130 = vld [vmem:[#allocation2 + $0x88] sm:$0xff]
    %v2131 = vld [vmem:[#allocation2 + $0x90] sm:$0xff]
    %v2132 = vld [vmem:[#allocation2 + $0x98] sm:$0xff]
    %v2133 = vld [vmem:[#allocation2 + $0xa0] sm:$0xff]
    %v2134 = vld [vmem:[#allocation2 + $0xa8] sm:$0xff]
    %v2135 = vld [vmem:[#allocation2 + $0xb0] sm:$0xff]
    %v2136 = vld [vmem:[#allocation2 + $0xb8] sm:$0xff]
    %v2137 = vld [vmem:[#allocation2 + $0xc0] sm:$0xff]
    %v2138 = vld [vmem:[#allocation2 + $0xc8] sm:$0xff]
    %v2139 = vld [vmem:[#allocation2 + $0xd0] sm:$0xff]
    %v2140 = vld [vmem:[#allocation2 + $0xd8] sm:$0xff]
    %v2141 = vld [vmem:[#allocation2 + $0xe0] sm:$0xff]
    %v2142 = vld [vmem:[#allocation2 + $0xe8] sm:$0xff]
    %v2143 = vld [vmem:[#allocation2 + $0xf0] sm:$0xff]
    %v2144 = vld [vmem:[#allocation2 + $0xf8] sm:$0xff]
    %v2145 = vld [vmem:[#allocation2 + $0x100] sm:$0xff]
    %v2146 = vld [vmem:[#allocation2 + $0x108] sm:$0xff]
    %v2147 = vld [vmem:[#allocation2 + $0x110] sm:$0xff]
    %v2148 = vld [vmem:[#allocation2 + $0x118] sm:$0xff]
    %v2149 = vld [vmem:[#allocation2 + $0x120] sm:$0xff]
    %v2150 = vld [vmem:[#allocation2 + $0x128] sm:$0xff]
    %v2151 = vld [vmem:[#allocation2 + $0x130] sm:$0xff]
    %v2152 = vld [vmem:[#allocation2 + $0x138] sm:$0xff]
    %v2153 = vld [vmem:[#allocation2 + $0x140] sm:$0xff]
    %v2154 = vld [vmem:[#allocation2 + $0x148] sm:$0xff]
    %v2155 = vld [vmem:[#allocation2 + $0x150] sm:$0xff]
    %v2156 = vld [vmem:[#allocation2 + $0x158] sm:$0xff]
    %v2157 = vld [vmem:[#allocation2 + $0x160] sm:$0xff]
    %v2158 = vld [vmem:[#allocation2 + $0x168] sm:$0xff]
    %v2159 = vld [vmem:[#allocation2 + $0x170] sm:$0xff]
    %v2160 = vld [vmem:[#allocation2 + $0x178] sm:$0xff]
    %v2161 = vld [vmem:[#allocation2 + $0x180] sm:$0xff]
    %v2162 = vld [vmem:[#allocation2 + $0x188] sm:$0xff]
    %v2163 = vld [vmem:[#allocation2 + $0x190] sm:$0xff]
    %v2164 = vld [vmem:[#allocation2 + $0x198] sm:$0xff]
    %v2165 = vld [vmem:[#allocation2 + $0x1a0] sm:$0xff]
    %v2166 = vld [vmem:[#allocation2 + $0x1a8] sm:$0xff]
    %v2167 = vld [vmem:[#allocation2 + $0x1b0] sm:$0xff]
    %v2168 = vld [vmem:[#allocation2 + $0x1b8] sm:$0xff]
    %v2169 = vld [vmem:[#allocation2 + $0x1c0] sm:$0xff]
    %v2170 = vld [vmem:[#allocation2 + $0x1c8] sm:$0xff]
    %v2171 = vld [vmem:[#allocation2 + $0x1d0] sm:$0xff]
    %v2172 = vld [vmem:[#allocation2 + $0x1d8] sm:$0xff]
    %v2173 = vld [vmem:[#allocation2 + $0x1e0] sm:$0xff]
    %v2174 = vld [vmem:[#allocation2 + $0x1e8] sm:$0xff]
    %v2175 = vld [vmem:[#allocation2 + $0x1f0] sm:$0xff]
    %v2176 = vld [vmem:[#allocation2 + $0x1f8] sm:$0xff]
    %2178 = vset.pattern.permute.xlu0 0
    %2179 = vperm.xlu0 %2178, %v2049
    %v2180 = vpop.permute.xlu0 %2179
    %2183 = vset.pattern.permute.xlu0 0
    %2184 = vperm.xlu0 %2183, %v2050
    %v2185 = vpop.permute.xlu0 %2184
    %2188 = vset.pattern.permute.xlu0 0
    %2189 = vperm.xlu0 %2188, %v2051
    %v2190 = vpop.permute.xlu0 %2189
    %2193 = vset.pattern.permute.xlu0 0
    %2194 = vperm.xlu0 %2193, %v2052
    %v2195 = vpop.permute.xlu0 %2194
    %2198 = vset.pattern.permute.xlu0 0
    %2199 = vperm.xlu0 %2198, %v2053
    %v2200 = vpop.permute.xlu0 %2199
    %2203 = vset.pattern.permute.xlu0 0
    %2204 = vperm.xlu0 %2203, %v2054
    %v2205 = vpop.permute.xlu0 %2204
    %2208 = vset.pattern.permute.xlu0 0
    %2209 = vperm.xlu0 %2208, %v2055
    %v2210 = vpop.permute.xlu0 %2209
    %2213 = vset.pattern.permute.xlu0 0
    %2214 = vperm.xlu0 %2213, %v2056
    %v2215 = vpop.permute.xlu0 %2214
    %2218 = vset.pattern.permute.xlu0 0
    %2219 = vperm.xlu0 %2218, %v2057
    %v2220 = vpop.permute.xlu0 %2219
    %2223 = vset.pattern.permute.xlu0 0
    %2224 = vperm.xlu0 %2223, %v2058
    %v2225 = vpop.permute.xlu0 %2224
    %2228 = vset.pattern.permute.xlu0 0
    %2229 = vperm.xlu0 %2228, %v2059
    %v2230 = vpop.permute.xlu0 %2229
    %2233 = vset.pattern.permute.xlu0 0
    %2234 = vperm.xlu0 %2233, %v2060
    %v2235 = vpop.permute.xlu0 %2234
    %2238 = vset.pattern.permute.xlu0 0
    %2239 = vperm.xlu0 %2238, %v2061
    %v2240 = vpop.permute.xlu0 %2239
    %2243 = vset.pattern.permute.xlu0 0
    %2244 = vperm.xlu0 %2243, %v2062
    %v2245 = vpop.permute.xlu0 %2244
    %2248 = vset.pattern.permute.xlu0 0
    %2249 = vperm.xlu0 %2248, %v2063
    %v2250 = vpop.permute.xlu0 %2249
    %2253 = vset.pattern.permute.xlu0 0
    %2254 = vperm.xlu0 %2253, %v2064
    %v2255 = vpop.permute.xlu0 %2254
    %2258 = vset.pattern.permute.xlu0 0
    %2259 = vperm.xlu0 %2258, %v2065
    %v2260 = vpop.permute.xlu0 %2259
    %2263 = vset.pattern.permute.xlu0 0
    %2264 = vperm.xlu0 %2263, %v2066
    %v2265 = vpop.permute.xlu0 %2264
    %2268 = vset.pattern.permute.xlu0 0
    %2269 = vperm.xlu0 %2268, %v2067
    %v2270 = vpop.permute.xlu0 %2269
    %2273 = vset.pattern.permute.xlu0 0
    %2274 = vperm.xlu0 %2273, %v2068
    %v2275 = vpop.permute.xlu0 %2274
    %2278 = vset.pattern.permute.xlu0 0
    %2279 = vperm.xlu0 %2278, %v2069
    %v2280 = vpop.permute.xlu0 %2279
    %2283 = vset.pattern.permute.xlu0 0
    %2284 = vperm.xlu0 %2283, %v2070
    %v2285 = vpop.permute.xlu0 %2284
    %2288 = vset.pattern.permute.xlu0 0
    %2289 = vperm.xlu0 %2288, %v2071
    %v2290 = vpop.permute.xlu0 %2289
    %2293 = vset.pattern.permute.xlu0 0
    %2294 = vperm.xlu0 %2293, %v2072
    %v2295 = vpop.permute.xlu0 %2294
    %2298 = vset.pattern.permute.xlu0 0
    %2299 = vperm.xlu0 %2298, %v2073
    %v2300 = vpop.permute.xlu0 %2299
    %2303 = vset.pattern.permute.xlu0 0
    %2304 = vperm.xlu0 %2303, %v2074
    %v2305 = vpop.permute.xlu0 %2304
    %2308 = vset.pattern.permute.xlu0 0
    %2309 = vperm.xlu0 %2308, %v2075
    %v2310 = vpop.permute.xlu0 %2309
    %2313 = vset.pattern.permute.xlu0 0
    %2314 = vperm.xlu0 %2313, %v2076
    %v2315 = vpop.permute.xlu0 %2314
    %2318 = vset.pattern.permute.xlu0 0
    %2319 = vperm.xlu0 %2318, %v2077
    %v2320 = vpop.permute.xlu0 %2319
    %2323 = vset.pattern.permute.xlu0 0
    %2324 = vperm.xlu0 %2323, %v2078
    %v2325 = vpop.permute.xlu0 %2324
    %2328 = vset.pattern.permute.xlu0 0
    %2329 = vperm.xlu0 %2328, %v2079
    %v2330 = vpop.permute.xlu0 %2329
    %2333 = vset.pattern.permute.xlu0 0
    %2334 = vperm.xlu0 %2333, %v2080
    %v2335 = vpop.permute.xlu0 %2334
    %2338 = vset.pattern.permute.xlu0 0
    %2339 = vperm.xlu0 %2338, %v2081
    %v2340 = vpop.permute.xlu0 %2339
    %2343 = vset.pattern.permute.xlu0 0
    %2344 = vperm.xlu0 %2343, %v2082
    %v2345 = vpop.permute.xlu0 %2344
    %2348 = vset.pattern.permute.xlu0 0
    %2349 = vperm.xlu0 %2348, %v2083
    %v2350 = vpop.permute.xlu0 %2349
    %2353 = vset.pattern.permute.xlu0 0
    %2354 = vperm.xlu0 %2353, %v2084
    %v2355 = vpop.permute.xlu0 %2354
    %2358 = vset.pattern.permute.xlu0 0
    %2359 = vperm.xlu0 %2358, %v2085
    %v2360 = vpop.permute.xlu0 %2359
    %2363 = vset.pattern.permute.xlu0 0
    %2364 = vperm.xlu0 %2363, %v2086
    %v2365 = vpop.permute.xlu0 %2364
    %2368 = vset.pattern.permute.xlu0 0
    %2369 = vperm.xlu0 %2368, %v2087
    %v2370 = vpop.permute.xlu0 %2369
    %2373 = vset.pattern.permute.xlu0 0
    %2374 = vperm.xlu0 %2373, %v2088
    %v2375 = vpop.permute.xlu0 %2374
    %2378 = vset.pattern.permute.xlu0 0
    %2379 = vperm.xlu0 %2378, %v2089
    %v2380 = vpop.permute.xlu0 %2379
    %2383 = vset.pattern.permute.xlu0 0
    %2384 = vperm.xlu0 %2383, %v2090
    %v2385 = vpop.permute.xlu0 %2384
    %2388 = vset.pattern.permute.xlu0 0
    %2389 = vperm.xlu0 %2388, %v2091
    %v2390 = vpop.permute.xlu0 %2389
    %2393 = vset.pattern.permute.xlu0 0
    %2394 = vperm.xlu0 %2393, %v2092
    %v2395 = vpop.permute.xlu0 %2394
    %2398 = vset.pattern.permute.xlu0 0
    %2399 = vperm.xlu0 %2398, %v2093
    %v2400 = vpop.permute.xlu0 %2399
    %2403 = vset.pattern.permute.xlu0 0
    %2404 = vperm.xlu0 %2403, %v2094
    %v2405 = vpop.permute.xlu0 %2404
    %2408 = vset.pattern.permute.xlu0 0
    %2409 = vperm.xlu0 %2408, %v2095
    %v2410 = vpop.permute.xlu0 %2409
    %2413 = vset.pattern.permute.xlu0 0
    %2414 = vperm.xlu0 %2413, %v2096
    %v2415 = vpop.permute.xlu0 %2414
    %2418 = vset.pattern.permute.xlu0 0
    %2419 = vperm.xlu0 %2418, %v2097
    %v2420 = vpop.permute.xlu0 %2419
    %2423 = vset.pattern.permute.xlu0 0
    %2424 = vperm.xlu0 %2423, %v2098
    %v2425 = vpop.permute.xlu0 %2424
    %2428 = vset.pattern.permute.xlu0 0
    %2429 = vperm.xlu0 %2428, %v2099
    %v2430 = vpop.permute.xlu0 %2429
    %2433 = vset.pattern.permute.xlu0 0
    %2434 = vperm.xlu0 %2433, %v2100
    %v2435 = vpop.permute.xlu0 %2434
    %2438 = vset.pattern.permute.xlu0 0
    %2439 = vperm.xlu0 %2438, %v2101
    %v2440 = vpop.permute.xlu0 %2439
    %2443 = vset.pattern.permute.xlu0 0
    %2444 = vperm.xlu0 %2443, %v2102
    %v2445 = vpop.permute.xlu0 %2444
    %2448 = vset.pattern.permute.xlu0 0
    %2449 = vperm.xlu0 %2448, %v2103
    %v2450 = vpop.permute.xlu0 %2449
    %2453 = vset.pattern.permute.xlu0 0
    %2454 = vperm.xlu0 %2453, %v2104
    %v2455 = vpop.permute.xlu0 %2454
    %2458 = vset.pattern.permute.xlu0 0
    %2459 = vperm.xlu0 %2458, %v2105
    %v2460 = vpop.permute.xlu0 %2459
    %2463 = vset.pattern.permute.xlu0 0
    %2464 = vperm.xlu0 %2463, %v2106
    %v2465 = vpop.permute.xlu0 %2464
    %2468 = vset.pattern.permute.xlu0 0
    %2469 = vperm.xlu0 %2468, %v2107
    %v2470 = vpop.permute.xlu0 %2469
    %2473 = vset.pattern.permute.xlu0 0
    %2474 = vperm.xlu0 %2473, %v2108
    %v2475 = vpop.permute.xlu0 %2474
    %2478 = vset.pattern.permute.xlu0 0
    %2479 = vperm.xlu0 %2478, %v2109
    %v2480 = vpop.permute.xlu0 %2479
    %2483 = vset.pattern.permute.xlu0 0
    %2484 = vperm.xlu0 %2483, %v2110
    %v2485 = vpop.permute.xlu0 %2484
    %2488 = vset.pattern.permute.xlu0 0
    %2489 = vperm.xlu0 %2488, %v2111
    %v2490 = vpop.permute.xlu0 %2489
    %2493 = vset.pattern.permute.xlu0 0
    %2494 = vperm.xlu0 %2493, %v2112
    %v2495 = vpop.permute.xlu0 %2494
    %v2497 = vmul.f32 %v2180, %v2113
    %v2498 = vmul.f32 %v2185, %v2114
    %v2499 = vmul.f32 %v2190, %v2115
    %v2500 = vmul.f32 %v2195, %v2116
    %v2501 = vmul.f32 %v2200, %v2117
    %v2502 = vmul.f32 %v2205, %v2118
    %v2503 = vmul.f32 %v2210, %v2119
    %v2504 = vmul.f32 %v2215, %v2120
    %v2505 = vmul.f32 %v2220, %v2121
    %v2506 = vmul.f32 %v2225, %v2122
    %v2507 = vmul.f32 %v2230, %v2123
    %v2508 = vmul.f32 %v2235, %v2124
    %v2509 = vmul.f32 %v2240, %v2125
    %v2510 = vmul.f32 %v2245, %v2126
    %v2511 = vmul.f32 %v2250, %v2127
    %v2512 = vmul.f32 %v2255, %v2128
    %v2513 = vmul.f32 %v2260, %v2129
    %v2514 = vmul.f32 %v2265, %v2130
    %v2515 = vmul.f32 %v2270, %v2131
    %v2516 = vmul.f32 %v2275, %v2132
    %v2517 = vmul.f32 %v2280, %v2133
    %v2518 = vmul.f32 %v2285, %v2134
    %v2519 = vmul.f32 %v2290, %v2135
    %v2520 = vmul.f32 %v2295, %v2136
    %v2521 = vmul.f32 %v2300, %v2137
    %v2522 = vmul.f32 %v2305, %v2138
    %v2523 = vmul.f32 %v2310, %v2139
    %v2524 = vmul.f32 %v2315, %v2140
    %v2525 = vmul.f32 %v2320, %v2141
    %v2526 = vmul.f32 %v2325, %v2142
    %v2527 = vmul.f32 %v2330, %v2143
    %v2528 = vmul.f32 %v2335, %v2144
    %v2529 = vmul.f32 %v2340, %v2145
    %v2530 = vmul.f32 %v2345, %v2146
    %v2531 = vmul.f32 %v2350, %v2147
    %v2532 = vmul.f32 %v2355, %v2148
    %v2533 = vmul.f32 %v2360, %v2149
    %v2534 = vmul.f32 %v2365, %v2150
    %v2535 = vmul.f32 %v2370, %v2151
    %v2536 = vmul.f32 %v2375, %v2152
    %v2537 = vmul.f32 %v2380, %v2153
    %v2538 = vmul.f32 %v2385, %v2154
    %v2539 = vmul.f32 %v2390, %v2155
    %v2540 = vmul.f32 %v2395, %v2156
    %v2541 = vmul.f32 %v2400, %v2157
    %v2542 = vmul.f32 %v2405, %v2158
    %v2543 = vmul.f32 %v2410, %v2159
    %v2544 = vmul.f32 %v2415, %v2160
    %v2545 = vmul.f32 %v2420, %v2161
    %v2546 = vmul.f32 %v2425, %v2162
    %v2547 = vmul.f32 %v2430, %v2163
    %v2548 = vmul.f32 %v2435, %v2164
    %v2549 = vmul.f32 %v2440, %v2165
    %v2550 = vmul.f32 %v2445, %v2166
    %v2551 = vmul.f32 %v2450, %v2167
    %v2552 = vmul.f32 %v2455, %v2168
    %v2553 = vmul.f32 %v2460, %v2169
    %v2554 = vmul.f32 %v2465, %v2170
    %v2555 = vmul.f32 %v2470, %v2171
    %v2556 = vmul.f32 %v2475, %v2172
    %v2557 = vmul.f32 %v2480, %v2173
    %v2558 = vmul.f32 %v2485, %v2174
    %v2559 = vmul.f32 %v2490, %v2175
    %v2560 = vmul.f32 %v2495, %v2176
    %v2561 = vadd.f32 %v1985, %v2497
    %v2562 = vadd.f32 %v1986, %v2498
    %v2563 = vadd.f32 %v1987, %v2499
    %v2564 = vadd.f32 %v1988, %v2500
    %v2565 = vadd.f32 %v1989, %v2501
    %v2566 = vadd.f32 %v1990, %v2502
    %v2567 = vadd.f32 %v1991, %v2503
    %v2568 = vadd.f32 %v1992, %v2504
    %v2569 = vadd.f32 %v1993, %v2505
    %v2570 = vadd.f32 %v1994, %v2506
    %v2571 = vadd.f32 %v1995, %v2507
    %v2572 = vadd.f32 %v1996, %v2508
    %v2573 = vadd.f32 %v1997, %v2509
    %v2574 = vadd.f32 %v1998, %v2510
    %v2575 = vadd.f32 %v1999, %v2511
    %v2576 = vadd.f32 %v2000, %v2512
    %v2577 = vadd.f32 %v2001, %v2513
    %v2578 = vadd.f32 %v2002, %v2514
    %v2579 = vadd.f32 %v2003, %v2515
    %v2580 = vadd.f32 %v2004, %v2516
    %v2581 = vadd.f32 %v2005, %v2517
    %v2582 = vadd.f32 %v2006, %v2518
    %v2583 = vadd.f32 %v2007, %v2519
    %v2584 = vadd.f32 %v2008, %v2520
    %v2585 = vadd.f32 %v2009, %v2521
    %v2586 = vadd.f32 %v2010, %v2522
    %v2587 = vadd.f32 %v2011, %v2523
    %v2588 = vadd.f32 %v2012, %v2524
    %v2589 = vadd.f32 %v2013, %v2525
    %v2590 = vadd.f32 %v2014, %v2526
    %v2591 = vadd.f32 %v2015, %v2527
    %v2592 = vadd.f32 %v2016, %v2528
    %v2593 = vadd.f32 %v2017, %v2529
    %v2594 = vadd.f32 %v2018, %v2530
    %v2595 = vadd.f32 %v2019, %v2531
    %v2596 = vadd.f32 %v2020, %v2532
    %v2597 = vadd.f32 %v2021, %v2533
    %v2598 = vadd.f32 %v2022, %v2534
    %v2599 = vadd.f32 %v2023, %v2535
    %v2600 = vadd.f32 %v2024, %v2536
    %v2601 = vadd.f32 %v2025, %v2537
    %v2602 = vadd.f32 %v2026, %v2538
    %v2603 = vadd.f32 %v2027, %v2539
    %v2604 = vadd.f32 %v2028, %v2540
    %v2605 = vadd.f32 %v2029, %v2541
    %v2606 = vadd.f32 %v2030, %v2542
    %v2607 = vadd.f32 %v2031, %v2543
    %v2608 = vadd.f32 %v2032, %v2544
    %v2609 = vadd.f32 %v2033, %v2545
    %v2610 = vadd.f32 %v2034, %v2546
    %v2611 = vadd.f32 %v2035, %v2547
    %v2612 = vadd.f32 %v2036, %v2548
    %v2613 = vadd.f32 %v2037, %v2549
    %v2614 = vadd.f32 %v2038, %v2550
    %v2615 = vadd.f32 %v2039, %v2551
    %v2616 = vadd.f32 %v2040, %v2552
    %v2617 = vadd.f32 %v2041, %v2553
    %v2618 = vadd.f32 %v2042, %v2554
    %v2619 = vadd.f32 %v2043, %v2555
    %v2620 = vadd.f32 %v2044, %v2556
    %v2621 = vadd.f32 %v2045, %v2557
    %v2622 = vadd.f32 %v2046, %v2558
    %v2623 = vadd.f32 %v2047, %v2559
    %v2624 = vadd.f32 %v2048, %v2560
    %v2625 = vmax.f32 %v2561, 0.0
    %v2626 = vmax.f32 %v2562, 0.0
    %v2627 = vmax.f32 %v2563, 0.0
    %v2628 = vmax.f32 %v2564, 0.0
    %v2629 = vmax.f32 %v2565, 0.0
    %v2630 = vmax.f32 %v2566, 0.0
    %v2631 = vmax.f32 %v2567, 0.0
    %v2632 = vmax.f32 %v2568, 0.0
    %v2633 = vmax.f32 %v2569, 0.0
    %v2634 = vmax.f32 %v2570, 0.0
    %v2635 = vmax.f32 %v2571, 0.0
    %v2636 = vmax.f32 %v2572, 0.0
    %v2637 = vmax.f32 %v2573, 0.0
    %v2638 = vmax.f32 %v2574, 0.0
    %v2639 = vmax.f32 %v2575, 0.0
    %v2640 = vmax.f32 %v2576, 0.0
    %v2641 = vmax.f32 %v2577, 0.0
    %v2642 = vmax.f32 %v2578, 0.0
    %v2643 = vmax.f32 %v2579, 0.0
    %v2644 = vmax.f32 %v2580, 0.0
    %v2645 = vmax.f32 %v2581, 0.0
    %v2646 = vmax.f32 %v2582, 0.0
    %v2647 = vmax.f32 %v2583, 0.0
    %v2648 = vmax.f32 %v2584, 0.0
    %v2649 = vmax.f32 %v2585, 0.0
    %v2650 = vmax.f32 %v2586, 0.0
    %v2651 = vmax.f32 %v2587, 0.0
    %v2652 = vmax.f32 %v2588, 0.0
    %v2653 = vmax.f32 %v2589, 0.0
    %v2654 = vmax.f32 %v2590, 0.0
    %v2655 = vmax.f32 %v2591, 0.0
    %v2656 = vmax.f32 %v2592, 0.0
    %v2657 = vmax.f32 %v2593, 0.0
    %v2658 = vmax.f32 %v2594, 0.0
    %v2659 = vmax.f32 %v2595, 0.0
    %v2660 = vmax.f32 %v2596, 0.0
    %v2661 = vmax.f32 %v2597, 0.0
    %v2662 = vmax.f32 %v2598, 0.0
    %v2663 = vmax.f32 %v2599, 0.0
    %v2664 = vmax.f32 %v2600, 0.0
    %v2665 = vmax.f32 %v2601, 0.0
    %v2666 = vmax.f32 %v2602, 0.0
    %v2667 = vmax.f32 %v2603, 0.0
    %v2668 = vmax.f32 %v2604, 0.0
    %v2669 = vmax.f32 %v2605, 0.0
    %v2670 = vmax.f32 %v2606, 0.0
    %v2671 = vmax.f32 %v2607, 0.0
    %v2672 = vmax.f32 %v2608, 0.0
    %v2673 = vmax.f32 %v2609, 0.0
    %v2674 = vmax.f32 %v2610, 0.0
    %v2675 = vmax.f32 %v2611, 0.0
    %v2676 = vmax.f32 %v2612, 0.0
    %v2677 = vmax.f32 %v2613, 0.0
    %v2678 = vmax.f32 %v2614, 0.0
    %v2679 = vmax.f32 %v2615, 0.0
    %v2680 = vmax.f32 %v2616, 0.0
    %v2681 = vmax.f32 %v2617, 0.0
    %v2682 = vmax.f32 %v2618, 0.0
    %v2683 = vmax.f32 %v2619, 0.0
    %v2684 = vmax.f32 %v2620, 0.0
    %v2685 = vmax.f32 %v2621, 0.0
    %v2686 = vmax.f32 %v2622, 0.0
    %v2687 = vmax.f32 %v2623, 0.0
    %v2688 = vmax.f32 %v2624, 0.0
    %v2689 = vpack.c.bf16 %v2625, %v2625
    %v2690 = vpack.c.bf16 %v2626, %v2626
    %v2691 = vpack.c.bf16 %v2627, %v2627
    %v2692 = vpack.c.bf16 %v2628, %v2628
    %v2693 = vpack.c.bf16 %v2629, %v2629
    %v2694 = vpack.c.bf16 %v2630, %v2630
    %v2695 = vpack.c.bf16 %v2631, %v2631
    %v2696 = vpack.c.bf16 %v2632, %v2632
    %v2697 = vpack.c.bf16 %v2633, %v2633
    %v2698 = vpack.c.bf16 %v2634, %v2634
    %v2699 = vpack.c.bf16 %v2635, %v2635
    %v2700 = vpack.c.bf16 %v2636, %v2636
    %v2701 = vpack.c.bf16 %v2637, %v2637
    %v2702 = vpack.c.bf16 %v2638, %v2638
    %v2703 = vpack.c.bf16 %v2639, %v2639
    %v2704 = vpack.c.bf16 %v2640, %v2640
    %v2705 = vpack.c.bf16 %v2641, %v2641
    %v2706 = vpack.c.bf16 %v2642, %v2642
    %v2707 = vpack.c.bf16 %v2643, %v2643
    %v2708 = vpack.c.bf16 %v2644, %v2644
    %v2709 = vpack.c.bf16 %v2645, %v2645
    %v2710 = vpack.c.bf16 %v2646, %v2646
    %v2711 = vpack.c.bf16 %v2647, %v2647
    %v2712 = vpack.c.bf16 %v2648, %v2648
    %v2713 = vpack.c.bf16 %v2649, %v2649
    %v2714 = vpack.c.bf16 %v2650, %v2650
    %v2715 = vpack.c.bf16 %v2651, %v2651
    %v2716 = vpack.c.bf16 %v2652, %v2652
    %v2717 = vpack.c.bf16 %v2653, %v2653
    %v2718 = vpack.c.bf16 %v2654, %v2654
    %v2719 = vpack.c.bf16 %v2655, %v2655
    %v2720 = vpack.c.bf16 %v2656, %v2656
    %v2721 = vpack.c.bf16 %v2657, %v2657
    %v2722 = vpack.c.bf16 %v2658, %v2658
    %v2723 = vpack.c.bf16 %v2659, %v2659
    %v2724 = vpack.c.bf16 %v2660, %v2660
    %v2725 = vpack.c.bf16 %v2661, %v2661
    %v2726 = vpack.c.bf16 %v2662, %v2662
    %v2727 = vpack.c.bf16 %v2663, %v2663
    %v2728 = vpack.c.bf16 %v2664, %v2664
    %v2729 = vpack.c.bf16 %v2665, %v2665
    %v2730 = vpack.c.bf16 %v2666, %v2666
    %v2731 = vpack.c.bf16 %v2667, %v2667
    %v2732 = vpack.c.bf16 %v2668, %v2668
    %v2733 = vpack.c.bf16 %v2669, %v2669
    %v2734 = vpack.c.bf16 %v2670, %v2670
    %v2735 = vpack.c.bf16 %v2671, %v2671
    %v2736 = vpack.c.bf16 %v2672, %v2672
    %v2737 = vpack.c.bf16 %v2673, %v2673
    %v2738 = vpack.c.bf16 %v2674, %v2674
    %v2739 = vpack.c.bf16 %v2675, %v2675
    %v2740 = vpack.c.bf16 %v2676, %v2676
    %v2741 = vpack.c.bf16 %v2677, %v2677
    %v2742 = vpack.c.bf16 %v2678, %v2678
    %v2743 = vpack.c.bf16 %v2679, %v2679
    %v2744 = vpack.c.bf16 %v2680, %v2680
    %v2745 = vpack.c.bf16 %v2681, %v2681
    %v2746 = vpack.c.bf16 %v2682, %v2682
    %v2747 = vpack.c.bf16 %v2683, %v2683
    %v2748 = vpack.c.bf16 %v2684, %v2684
    %v2749 = vpack.c.bf16 %v2685, %v2685
    %v2750 = vpack.c.bf16 %v2686, %v2686
    %v2751 = vpack.c.bf16 %v2687, %v2687
    %v2752 = vpack.c.bf16 %v2688, %v2688
    %2753 = vst [vmem:[%s4] sm:$0xf] %v2689
    %2754 = vst [vmem:[%s4 + $0x4] sm:$0xf] %v2690
    %2755 = vst [vmem:[%s4 + $0x8] sm:$0xf] %v2691
    %2756 = vst [vmem:[%s4 + $0xc] sm:$0xf] %v2692
    %2757 = vst [vmem:[%s4 + $0x10] sm:$0xf] %v2693
    %2758 = vst [vmem:[%s4 + $0x14] sm:$0xf] %v2694
    %2759 = vst [vmem:[%s4 + $0x18] sm:$0xf] %v2695
    %2760 = vst [vmem:[%s4 + $0x1c] sm:$0xf] %v2696
    %2761 = vst [vmem:[%s4 + $0x20] sm:$0xf] %v2697
    %2762 = vst [vmem:[%s4 + $0x24] sm:$0xf] %v2698
    %2763 = vst [vmem:[%s4 + $0x28] sm:$0xf] %v2699
    %2764 = vst [vmem:[%s4 + $0x2c] sm:$0xf] %v2700
    %2765 = vst [vmem:[%s4 + $0x30] sm:$0xf] %v2701
    %2766 = vst [vmem:[%s4 + $0x34] sm:$0xf] %v2702
    %2767 = vst [vmem:[%s4 + $0x38] sm:$0xf] %v2703
    %2768 = vst [vmem:[%s4 + $0x3c] sm:$0xf] %v2704
    %2769 = vst [vmem:[%s4 + $0x40] sm:$0xf] %v2705
    %2770 = vst [vmem:[%s4 + $0x44] sm:$0xf] %v2706
    %2771 = vst [vmem:[%s4 + $0x48] sm:$0xf] %v2707
    %2772 = vst [vmem:[%s4 + $0x4c] sm:$0xf] %v2708
    %2773 = vst [vmem:[%s4 + $0x50] sm:$0xf] %v2709
    %2774 = vst [vmem:[%s4 + $0x54] sm:$0xf] %v2710
    %2775 = vst [vmem:[%s4 + $0x58] sm:$0xf] %v2711
    %2776 = vst [vmem:[%s4 + $0x5c] sm:$0xf] %v2712
    %2777 = vst [vmem:[%s4 + $0x60] sm:$0xf] %v2713
    %2778 = vst [vmem:[%s4 + $0x64] sm:$0xf] %v2714
    %2779 = vst [vmem:[%s4 + $0x68] sm:$0xf] %v2715
    %2780 = vst [vmem:[%s4 + $0x6c] sm:$0xf] %v2716
    %2781 = vst [vmem:[%s4 + $0x70] sm:$0xf] %v2717
    %2782 = vst [vmem:[%s4 + $0x74] sm:$0xf] %v2718
    %2783 = vst [vmem:[%s4 + $0x78] sm:$0xf] %v2719
    %2784 = vst [vmem:[%s4 + $0x7c] sm:$0xf] %v2720
    %2785 = vst [vmem:[%s4 + $0x80] sm:$0xf] %v2721
    %2786 = vst [vmem:[%s4 + $0x84] sm:$0xf] %v2722
    %2787 = vst [vmem:[%s4 + $0x88] sm:$0xf] %v2723
    %2788 = vst [vmem:[%s4 + $0x8c] sm:$0xf] %v2724
    %2789 = vst [vmem:[%s4 + $0x90] sm:$0xf] %v2725
    %2790 = vst [vmem:[%s4 + $0x94] sm:$0xf] %v2726
    %2791 = vst [vmem:[%s4 + $0x98] sm:$0xf] %v2727
    %2792 = vst [vmem:[%s4 + $0x9c] sm:$0xf] %v2728
    %2793 = vst [vmem:[%s4 + $0xa0] sm:$0xf] %v2729
    %2794 = vst [vmem:[%s4 + $0xa4] sm:$0xf] %v2730
    %2795 = vst [vmem:[%s4 + $0xa8] sm:$0xf] %v2731
    %2796 = vst [vmem:[%s4 + $0xac] sm:$0xf] %v2732
    %2797 = vst [vmem:[%s4 + $0xb0] sm:$0xf] %v2733
    %2798 = vst [vmem:[%s4 + $0xb4] sm:$0xf] %v2734
    %2799 = vst [vmem:[%s4 + $0xb8] sm:$0xf] %v2735
    %2800 = vst [vmem:[%s4 + $0xbc] sm:$0xf] %v2736
    %2801 = vst [vmem:[%s4 + $0xc0] sm:$0xf] %v2737
    %2802 = vst [vmem:[%s4 + $0xc4] sm:$0xf] %v2738
    %2803 = vst [vmem:[%s4 + $0xc8] sm:$0xf] %v2739
    %2804 = vst [vmem:[%s4 + $0xcc] sm:$0xf] %v2740
    %2805 = vst [vmem:[%s4 + $0xd0] sm:$0xf] %v2741
    %2806 = vst [vmem:[%s4 + $0xd4] sm:$0xf] %v2742
    %2807 = vst [vmem:[%s4 + $0xd8] sm:$0xf] %v2743
    %2808 = vst [vmem:[%s4 + $0xdc] sm:$0xf] %v2744
    %2809 = vst [vmem:[%s4 + $0xe0] sm:$0xf] %v2745
    %2810 = vst [vmem:[%s4 + $0xe4] sm:$0xf] %v2746
    %2811 = vst [vmem:[%s4 + $0xe8] sm:$0xf] %v2747
    %2812 = vst [vmem:[%s4 + $0xec] sm:$0xf] %v2748
    %2813 = vst [vmem:[%s4 + $0xf0] sm:$0xf] %v2749
    %2814 = vst [vmem:[%s4 + $0xf4] sm:$0xf] %v2750
    %2815 = vst [vmem:[%s4 + $0xf8] sm:$0xf] %v2751
    %2816 = vst [vmem:[%s4 + $0xfc] sm:$0xf] %v2752
  $region25: #{graphsage_forward.6} parent=0 // pred_fallthru
    _
  // Predicated region
  $region26: #{graphsage_forward.6} parent=0 // pred_check
    _
  $region27: #{graphsage_forward.6} parent=0 // pred_check_branch
    %2818 = sbr.rel (0) target = $region29
  $region28: #{graphsage_forward.6} parent=0 // pred_region
    _
  $region29: #{graphsage_forward.6} parent=0 // pred_fallthru
    _
  // Predicated region
  $region30: #{graphsage_forward.6} parent=0 // pred_check
    _
  $region31: #{graphsage_forward.6} parent=0 // pred_check_branch
    %2820 = sbr.rel (0) target = $region33
  $region32: #{graphsage_forward.6} parent=0 // pred_region
    _
  $region33: #{graphsage_forward.6} parent=0 // pred_fallthru
    _

</llo_original>
